<compile_context>
chip_gen: v7x
topology: tpu7x:2x2x1
jax: 0.10.0
libtpu: 0.0.40
codegen_flags: <defaults>
</compile_context>

<pallas_src>
import functools

import jax
import jax.numpy as jnp
from jax.experimental import pallas as pl
from jax.experimental.pallas import tpu as pltpu

_INV_SQRT2 = 0.7071067811865476
_COL = 8      # left column halo in the hidden scratch (sublane-aligned interior)
_COLR = 8     # right column halo (>=3 needed; 8 keeps the zero store aligned)


def _gelu(x):
    # exact GELU (erf), same as torch nn.GELU()
    return x * 0.5 * (1.0 + jax.lax.erf(x * _INV_SQRT2))


# -----------------------------------------------------------------------------
# Fused kernel. Grid: (batch, row-strip). Hidden activation stays in VMEM.
# -----------------------------------------------------------------------------
def _mlp_fused_kernel(x_ref, w1_ref, s1_ref, b1_ref, wdw_ref, dwb_ref,
                      s2_ref, b2_ref, w2_ref, b3_ref, o_ref, hpad_ref,
                      *, TH, H, W):
    s = pl.program_id(1)
    r0 = s * TH                      # strip start row inside the 3-row-padded x
    if TH % 8 == 0:
        r0 = pl.multiple_of(r0, 8)
    n_rows = TH + 6
    Cin = x_ref.shape[-1]
    Ch = w1_ref.shape[-1]
    Cout = o_ref.shape[-1]

    # ---- fc1 (1x1 conv as ONE full-width matmul) + GELU + BN1 -----------------
    xwin = x_ref[:, pl.ds(r0, n_rows), :, :].reshape(n_rows * W, Cin)
    h = jnp.dot(xwin, w1_ref[...], preferred_element_type=jnp.float32)
    h = _gelu(h) * s1_ref[...] + b1_ref[...]
    # Halo rows outside the image must contribute ZEROS to the depthwise conv
    # (zero padding applies to the hidden map; BN(GELU(0)) != 0) -> mask them.
    img_row = jax.lax.broadcasted_iota(jnp.int32, (n_rows, 1, 1), 0) + (r0 - 3)
    row_ok = (img_row >= 0) & (img_row < H)
    h = jnp.where(row_ok, h.reshape(n_rows, W, Ch), 0.0)

    # ---- stage into VMEM scratch: zero ONLY the column halos (interior is
    #      fully overwritten); interior store starts at a sublane boundary -----
    hpad_ref[:, :_COL, :] = jnp.zeros((n_rows, _COL, Ch), jnp.float32)
    hpad_ref[:, _COL + W:, :] = jnp.zeros((n_rows, _COLR, Ch), jnp.float32)
    hpad_ref[:, _COL:_COL + W, :] = h

    # ---- depthwise 7x7 over the full hidden width (multi-scale groups are
    #      zero-embedded into the 7x7 taps; one scratch, one tap loop) ---------
    # TODO(synk): per-dy row load + pltpu.roll column shifts would cut VMEM
    # loads from k^2 to k; kept direct Ref-window loads for proven lowering.
    acc = jnp.zeros((TH, W, Ch), jnp.float32)
    for dy in range(7):                              # static, fully unrolled
        for dx in range(7):
            tap = wdw_ref[dy * 7 + dx:dy * 7 + dx + 1, :]          # (1, Ch)
            acc = acc + hpad_ref[dy:dy + TH,
                                 _COL - 3 + dx:_COL - 3 + dx + W, :] * tap

    # ---- + dwconv bias + residual, GELU, BN2 ----------------------------------
    y = acc + dwb_ref[...] + hpad_ref[3:3 + TH, _COL:_COL + W, :]
    y = _gelu(y) * s2_ref[...] + b2_ref[...]

    # ---- fc2 (ONE matmul, K = hidden; BN3 scale folded) + BN3 bias ------------
    o = jnp.dot(y.reshape(TH * W, Ch), w2_ref[...],
                preferred_element_type=jnp.float32) + b3_ref[...]
    # TODO(synk): for small Cout a lane-dense (1, TH, W*Cout) output layout
    # would avoid masked vst; needs a benchmarked in-kernel relayout.
    o_ref[...] = o.reshape(1, TH, W, Cout)


# -----------------------------------------------------------------------------
# Wrapper: NCHW in / NCHW out
# -----------------------------------------------------------------------------
def _pick_strip(H, strip_max):
    th = 1
    for cand in range(1, min(H, strip_max) + 1):
        if H % cand == 0:
            th = cand
    return th


def mlp_forward(x_nchw, p, *, strip_max=64):
    B, C, H, W = x_nchw.shape
    Ch = p["w1"].shape[1]
    TH = _pick_strip(H, strip_max)      # large strip: amortize the 6-row halo
    S = H // TH

    # NCHW -> NHWC; 3-row zero halo on the (small, C-channel) input so every
    # row strip sees its halo rows without overlapping BlockSpec windows.
    # TODO(synk): on v7x at production resolutions, switch x to
    # memory_space=pl.ANY with a manual per-strip halo DMA to bound residency.
    x = jnp.transpose(x_nchw, (0, 2, 3, 1)).astype(jnp.float32)
    x_pad = jnp.pad(x, ((0, 0), (3, 3), (0, 0), (0, 0)))

    # fold BN3 scale into fc2 weights (no nonlinearity between fc2 and BN3)
    w2f = p["w2"] * p["bn3_scale"]
    # full-width 7x7 depthwise taps (multi-scale groups zero-embedded), (49, Ch)
    wdw = p["w_dw_full"].reshape(49, Ch)

    params = [p["w1"], p["bn1_scale"], p["bn1_bias"], wdw, p["dw_bias"],
              p["bn2_scale"], p["bn2_bias"], w2f, p["bn3_bias"]]

    def const_spec(a):
        zeros = (0,) * a.ndim
        return pl.BlockSpec(a.shape, lambda b, s: zeros)

    in_specs = [pl.BlockSpec((1, H + 6, W, C), lambda b, s: (b, 0, 0, 0))]
    in_specs += [const_spec(a) for a in params]

    kernel = functools.partial(_mlp_fused_kernel, TH=TH, H=H, W=W)

    out = pl.pallas_call(
        kernel,
        out_shape=jax.ShapeDtypeStruct((B, H, W, C), jnp.float32),
        grid=(B, S),
        in_specs=in_specs,
        out_specs=pl.BlockSpec((1, TH, W, C), lambda b, s: (b, s, 0, 0)),
        scratch_shapes=[pltpu.VMEM((TH + 6, W + _COL + _COLR, Ch), jnp.float32)],
        compiler_params=pltpu.CompilerParams(
            dimension_semantics=("parallel", "parallel"),
            vmem_limit_bytes=48 * 1024 * 1024,   # fits v7x's 64 MiB VMEM
        ),
    )(x_pad, *params)

    return jnp.transpose(out, (0, 3, 1, 2))                       # -> NCHW


# -----------------------------------------------------------------------------
# Deterministic parameter initialization (synthetic weights)
# -----------------------------------------------------------------------------
def _bn_affine(key, c, eps=1e-5):
    k1, k2, k3, k4 = jax.random.split(key, 4)
    gamma = 1.0 + 0.1 * jax.random.normal(k1, (c,), jnp.float32)
    beta = 0.1 * jax.random.normal(k2, (c,), jnp.float32)
    mean = 0.1 * jax.random.normal(k3, (c,), jnp.float32)
    var = jax.random.uniform(k4, (c,), jnp.float32, 0.5, 1.5)
    scale = gamma / jnp.sqrt(var + eps)
    bias = beta - mean * scale
    return scale.reshape(1, c), bias.reshape(1, c)


def init_params(key, c_in, c_hidden):
    keys = jax.random.split(key, 10)
    p = {}
    p["w1"] = 0.1 * jax.random.normal(keys[0], (c_in, c_hidden), jnp.float32)
    p["w2"] = 0.1 * jax.random.normal(keys[1], (c_hidden, c_in), jnp.float32)
    p["bn1_scale"], p["bn1_bias"] = _bn_affine(keys[2], c_hidden)
    p["bn2_scale"], p["bn2_bias"] = _bn_affine(keys[3], c_hidden)
    p["bn3_scale"], p["bn3_bias"] = _bn_affine(keys[4], c_in)

    # multi-scale depthwise kernels: per-group (k,k,cg), zero-embedded into a
    # single full-width 7x7 tap tensor used by both the kernel and reference.
    scales = (1, 3, 5, 7)
    n = len(scales)
    chans = [c_hidden - (c_hidden // n) * (n - 1)] + [c_hidden // n] * (n - 1)
    w_full = jnp.zeros((7, 7, c_hidden), jnp.float32)
    off = 0
    for i, (k, c) in enumerate(zip(scales, chans)):
        wk = 0.1 * jax.random.normal(keys[5 + i], (k, k, c), jnp.float32)
        pad = (7 - k) // 2
        w_full = w_full.at[:, :, off:off + c].set(
            jnp.pad(wk, ((pad, pad), (pad, pad), (0, 0))))
        off += c
    p["w_dw_full"] = w_full
    p["dw_bias"] = 0.1 * jax.random.normal(keys[9], (1, c_hidden), jnp.float32)
    return p


# -----------------------------------------------------------------------------
# Pure-JAX reference for correctness check
# -----------------------------------------------------------------------------
def reference(x_nchw, p):
    x = jnp.transpose(x_nchw, (0, 2, 3, 1))
    gelu = lambda v: jax.nn.gelu(v, approximate=False)
    h = gelu(x @ p["w1"]) * p["bn1_scale"] + p["bn1_bias"]
    Ch = h.shape[-1]
    dw = jax.lax.conv_general_dilated(
        h, p["w_dw_full"].reshape(7, 7, 1, Ch),
        window_strides=(1, 1), padding="SAME",
        dimension_numbers=("NHWC", "HWIO", "NHWC"),
        feature_group_count=Ch)
    y = dw + p["dw_bias"].reshape(1, 1, 1, Ch) + h
    y = gelu(y) * p["bn2_scale"].reshape(1, 1, 1, Ch) + p["bn2_bias"].reshape(1, 1, 1, Ch)
    o = (y @ p["w2"]) * p["bn3_scale"] + p["bn3_bias"]
    return jnp.transpose(o, (0, 3, 1, 2))


if __name__ == "__main__":
    key = jax.random.PRNGKey(0)
    B, C, H, W = 2, 4, 16, 16
    hidden = 32
    kx, kp = jax.random.split(key)
    x = jax.random.normal(kx, (B, C, H, W), jnp.float32)
    params = init_params(kp, C, hidden)

    out = jax.block_until_ready(mlp_forward(x, params))
    assert out.shape == (B, C, H, W)

    ref = reference(x, params)
    err = float(jnp.max(jnp.abs(out - ref)))
    if not jnp.allclose(out, ref, rtol=1e-4, atol=1e-4):
        raise AssertionError(f"Pallas/ref mismatch, max abs err {err}")
    print("KERNEL_OK")
</pallas_src>

<mosaic_0001>
module attributes {stable_mosaic.version = 11 : i64} {
  func.func @_mlp_fused_kernel(%arg0: i32, %arg1: i32, %arg2: memref<1x22x16x4xf32, #tpu.memory_space<vmem>>, %arg3: memref<4x32xf32, #tpu.memory_space<vmem>>, %arg4: memref<1x32xf32, #tpu.memory_space<vmem>>, %arg5: memref<1x32xf32, #tpu.memory_space<vmem>>, %arg6: memref<49x32xf32, #tpu.memory_space<vmem>>, %arg7: memref<1x32xf32, #tpu.memory_space<vmem>>, %arg8: memref<1x32xf32, #tpu.memory_space<vmem>>, %arg9: memref<1x32xf32, #tpu.memory_space<vmem>>, %arg10: memref<32x4xf32, #tpu.memory_space<vmem>>, %arg11: memref<1x4xf32, #tpu.memory_space<vmem>>, %arg12: memref<1x16x16x4xf32, #tpu.memory_space<vmem>>, %arg13: memref<22x32x32xf32, #tpu.memory_space<vmem>>) attributes {dimension_semantics = [#tpu.dimension_semantics<parallel>, #tpu.dimension_semantics<parallel>], iteration_bounds = array<i64: 2, 1>, scalar_prefetch = 0 : i64, scratch_operands = 1 : i64, tpu.core_type = #tpu.core_type<tc>, window_params = [{transform_indices = @transform_0, window_bounds = array<i64: 1, 22, 16, 4>}, {pipeline_mode = #tpu.pipeline_mode<synchronous>, transform_indices = @transform_1, window_bounds = array<i64: 4, 32>}, {pipeline_mode = #tpu.pipeline_mode<synchronous>, transform_indices = @transform_2, window_bounds = array<i64: 1, 32>}, {pipeline_mode = #tpu.pipeline_mode<synchronous>, transform_indices = @transform_3, window_bounds = array<i64: 1, 32>}, {pipeline_mode = #tpu.pipeline_mode<synchronous>, transform_indices = @transform_4, window_bounds = array<i64: 49, 32>}, {pipeline_mode = #tpu.pipeline_mode<synchronous>, transform_indices = @transform_5, window_bounds = array<i64: 1, 32>}, {pipeline_mode = #tpu.pipeline_mode<synchronous>, transform_indices = @transform_6, window_bounds = array<i64: 1, 32>}, {pipeline_mode = #tpu.pipeline_mode<synchronous>, transform_indices = @transform_7, window_bounds = array<i64: 1, 32>}, {pipeline_mode = #tpu.pipeline_mode<synchronous>, transform_indices = @transform_8, window_bounds = array<i64: 32, 4>}, {pipeline_mode = #tpu.pipeline_mode<synchronous>, transform_indices = @transform_9, window_bounds = array<i64: 1, 4>}, {transform_indices = @transform_10, window_bounds = array<i64: 1, 16, 16, 4>}]} {
    %c16_i32 = arith.constant 16 : i32
    %0 = arith.muli %arg1, %c16_i32 : i32
    %1 = tpu.assume_multiple %0, 8 : i32
    %c0 = arith.constant 0 : index
    %2 = arith.index_cast %1 : i32 to index
    %c0_0 = arith.constant 0 : index
    %c0_1 = arith.constant 0 : index
    %3 = vector.load %arg2[%c0, %2, %c0_0, %c0_1] : memref<1x22x16x4xf32, #tpu.memory_space<vmem>>, vector<1x22x16x4xf32>
    %4 = vector.shape_cast %3 : vector<1x22x16x4xf32> to vector<352x4xf32>
    %c0_2 = arith.constant 0 : index
    %c0_3 = arith.constant 0 : index
    %5 = vector.load %arg3[%c0_2, %c0_3] : memref<4x32xf32, #tpu.memory_space<vmem>>, vector<4x32xf32>
    %cst = arith.constant dense<0.000000e+00> : vector<352x32xf32>
    %6 = tpu.matmul %4, %5, %cst {dimension_numbers = #tpu.dot_dimension_numbers<[1], [0], [0], [1], [0, 0, 1, 1], [], []>} : vector<352x4xf32>, vector<4x32xf32>, vector<352x32xf32> -> vector<352x32xf32>
    %cst_4 = arith.constant 5.000000e-01 : f32
    %7 = vector.broadcast %cst_4 : f32 to vector<352x32xf32>
    %8 = arith.mulf %6, %7 : vector<352x32xf32>
    %cst_5 = arith.constant 0.707106769 : f32
    %9 = vector.broadcast %cst_5 : f32 to vector<352x32xf32>
    %10 = arith.mulf %6, %9 : vector<352x32xf32>
    %11 = math.erf %10 : vector<352x32xf32>
    %cst_6 = arith.constant 1.000000e+00 : f32
    %12 = vector.broadcast %cst_6 : f32 to vector<352x32xf32>
    %13 = arith.addf %12, %11 : vector<352x32xf32>
    %14 = arith.mulf %8, %13 : vector<352x32xf32>
    %c0_7 = arith.constant 0 : index
    %c0_8 = arith.constant 0 : index
    %15 = vector.load %arg4[%c0_7, %c0_8] : memref<1x32xf32, #tpu.memory_space<vmem>>, vector<1x32xf32>
    %16 = vector.broadcast %15 : vector<1x32xf32> to vector<352x32xf32>
    %17 = arith.mulf %14, %16 : vector<352x32xf32>
    %c0_9 = arith.constant 0 : index
    %c0_10 = arith.constant 0 : index
    %18 = vector.load %arg5[%c0_9, %c0_10] : memref<1x32xf32, #tpu.memory_space<vmem>>, vector<1x32xf32>
    %19 = vector.broadcast %18 : vector<1x32xf32> to vector<352x32xf32>
    %20 = arith.addf %17, %19 : vector<352x32xf32>
    %21 = tpu.iota {dimensions = array<i32: 0>} : vector<22x1x1xi32>
    %c3_i32 = arith.constant 3 : i32
    %22 = arith.subi %1, %c3_i32 : i32
    %23 = vector.broadcast %22 : i32 to vector<22x1x1xi32>
    %24 = arith.addi %21, %23 : vector<22x1x1xi32>
    %c0_i32 = arith.constant 0 : i32
    %25 = vector.broadcast %c0_i32 : i32 to vector<22x1x1xi32>
    %26 = arith.cmpi sge, %24, %25 : vector<22x1x1xi32>
    %c16_i32_11 = arith.constant 16 : i32
    %27 = vector.broadcast %c16_i32_11 : i32 to vector<22x1x1xi32>
    %28 = arith.cmpi slt, %24, %27 : vector<22x1x1xi32>
    %29 = arith.andi %26, %28 : vector<22x1x1xi1>
    %30 = vector.shape_cast %20 : vector<352x32xf32> to vector<22x16x32xf32>
    %cst_12 = arith.constant 0.000000e+00 : f32
    %31 = vector.shape_cast %29 : vector<22x1x1xi1> to vector<22x1x1xi1>
    %32 = vector.broadcast %31 : vector<22x1x1xi1> to vector<22x16x32xi1>
    %33 = vector.broadcast %cst_12 : f32 to vector<22x16x32xf32>
    %34 = arith.select %32, %30, %33 : vector<22x16x32xi1>, vector<22x16x32xf32>
    %cst_13 = arith.constant 0.000000e+00 : f32
    %35 = vector.broadcast %cst_13 : f32 to vector<22x8x32xf32>
    %c0_14 = arith.constant 0 : index
    %c0_15 = arith.constant 0 : index
    %c0_16 = arith.constant 0 : index
    %36 = vector.load %arg13[%c0_14, %c0_15, %c0_16] : memref<22x32x32xf32, #tpu.memory_space<vmem>>, vector<22x8x32xf32>
    tpu.vector_store %arg13[%c0_14, %c0_15, %c0_16], %35 {strides = array<i32>} : memref<22x32x32xf32, #tpu.memory_space<vmem>>, vector<22x8x32xf32>,
    %cst_17 = arith.constant 0.000000e+00 : f32
    %37 = vector.broadcast %cst_17 : f32 to vector<22x8x32xf32>
    %c0_18 = arith.constant 0 : index
    %c24 = arith.constant 24 : index
    %c0_19 = arith.constant 0 : index
    %38 = vector.load %arg13[%c0_18, %c24, %c0_19] : memref<22x32x32xf32, #tpu.memory_space<vmem>>, vector<22x8x32xf32>
    tpu.vector_store %arg13[%c0_18, %c24, %c0_19], %37 {strides = array<i32>} : memref<22x32x32xf32, #tpu.memory_space<vmem>>, vector<22x8x32xf32>,
    %c0_20 = arith.constant 0 : index
    %c8 = arith.constant 8 : index
    %c0_21 = arith.constant 0 : index
    %39 = vector.load %arg13[%c0_20, %c8, %c0_21] : memref<22x32x32xf32, #tpu.memory_space<vmem>>, vector<22x16x32xf32>
    tpu.vector_store %arg13[%c0_20, %c8, %c0_21], %34 {strides = array<i32>} : memref<22x32x32xf32, #tpu.memory_space<vmem>>, vector<22x16x32xf32>,
    %cst_22 = arith.constant 0.000000e+00 : f32
    %40 = vector.broadcast %cst_22 : f32 to vector<16x16x32xf32>
    %c0_23 = arith.constant 0 : index
    %c0_24 = arith.constant 0 : index
    %41 = vector.load %arg6[%c0_23, %c0_24] : memref<49x32xf32, #tpu.memory_space<vmem>>, vector<1x32xf32>
    %c0_25 = arith.constant 0 : index
    %c5 = arith.constant 5 : index
    %c0_26 = arith.constant 0 : index
    %42 = vector.load %arg13[%c0_25, %c5, %c0_26] : memref<22x32x32xf32, #tpu.memory_space<vmem>>, vector<16x16x32xf32>
    %43 = vector.shape_cast %41 : vector<1x32xf32> to vector<1x1x32xf32>
    %44 = vector.broadcast %43 : vector<1x1x32xf32> to vector<16x16x32xf32>
    %45 = arith.mulf %42, %44 : vector<16x16x32xf32>
    %46 = arith.addf %40, %45 : vector<16x16x32xf32>
    %c1 = arith.constant 1 : index
    %c0_27 = arith.constant 0 : index
    %47 = vector.load %arg6[%c1, %c0_27] : memref<49x32xf32, #tpu.memory_space<vmem>>, vector<1x32xf32>
    %c0_28 = arith.constant 0 : index
    %c6 = arith.constant 6 : index
    %c0_29 = arith.constant 0 : index
    %48 = vector.load %arg13[%c0_28, %c6, %c0_29] : memref<22x32x32xf32, #tpu.memory_space<vmem>>, vector<16x16x32xf32>
    %49 = vector.shape_cast %47 : vector<1x32xf32> to vector<1x1x32xf32>
    %50 = vector.broadcast %49 : vector<1x1x32xf32> to vector<16x16x32xf32>
    %51 = arith.mulf %48, %50 : vector<16x16x32xf32>
    %52 = arith.addf %46, %51 : vector<16x16x32xf32>
    %c2 = arith.constant 2 : index
    %c0_30 = arith.constant 0 : index
    %53 = vector.load %arg6[%c2, %c0_30] : memref<49x32xf32, #tpu.memory_space<vmem>>, vector<1x32xf32>
    %c0_31 = arith.constant 0 : index
    %c7 = arith.constant 7 : index
    %c0_32 = arith.constant 0 : index
    %54 = vector.load %arg13[%c0_31, %c7, %c0_32] : memref<22x32x32xf32, #tpu.memory_space<vmem>>, vector<16x16x32xf32>
    %55 = vector.shape_cast %53 : vector<1x32xf32> to vector<1x1x32xf32>
    %56 = vector.broadcast %55 : vector<1x1x32xf32> to vector<16x16x32xf32>
    %57 = arith.mulf %54, %56 : vector<16x16x32xf32>
    %58 = arith.addf %52, %57 : vector<16x16x32xf32>
    %c3 = arith.constant 3 : index
    %c0_33 = arith.constant 0 : index
    %59 = vector.load %arg6[%c3, %c0_33] : memref<49x32xf32, #tpu.memory_space<vmem>>, vector<1x32xf32>
    %c0_34 = arith.constant 0 : index
    %c8_35 = arith.constant 8 : index
    %c0_36 = arith.constant 0 : index
    %60 = vector.load %arg13[%c0_34, %c8_35, %c0_36] : memref<22x32x32xf32, #tpu.memory_space<vmem>>, vector<16x16x32xf32>
    %61 = vector.shape_cast %59 : vector<1x32xf32> to vector<1x1x32xf32>
    %62 = vector.broadcast %61 : vector<1x1x32xf32> to vector<16x16x32xf32>
    %63 = arith.mulf %60, %62 : vector<16x16x32xf32>
    %64 = arith.addf %58, %63 : vector<16x16x32xf32>
    %c4 = arith.constant 4 : index
    %c0_37 = arith.constant 0 : index
    %65 = vector.load %arg6[%c4, %c0_37] : memref<49x32xf32, #tpu.memory_space<vmem>>, vector<1x32xf32>
    %c0_38 = arith.constant 0 : index
    %c9 = arith.constant 9 : index
    %c0_39 = arith.constant 0 : index
    %66 = vector.load %arg13[%c0_38, %c9, %c0_39] : memref<22x32x32xf32, #tpu.memory_space<vmem>>, vector<16x16x32xf32>
    %67 = vector.shape_cast %65 : vector<1x32xf32> to vector<1x1x32xf32>
    %68 = vector.broadcast %67 : vector<1x1x32xf32> to vector<16x16x32xf32>
    %69 = arith.mulf %66, %68 : vector<16x16x32xf32>
    %70 = arith.addf %64, %69 : vector<16x16x32xf32>
    %c5_40 = arith.constant 5 : index
    %c0_41 = arith.constant 0 : index
    %71 = vector.load %arg6[%c5_40, %c0_41] : memref<49x32xf32, #tpu.memory_space<vmem>>, vector<1x32xf32>
    %c0_42 = arith.constant 0 : index
    %c10 = arith.constant 10 : index
    %c0_43 = arith.constant 0 : index
    %72 = vector.load %arg13[%c0_42, %c10, %c0_43] : memref<22x32x32xf32, #tpu.memory_space<vmem>>, vector<16x16x32xf32>
    %73 = vector.shape_cast %71 : vector<1x32xf32> to vector<1x1x32xf32>
    %74 = vector.broadcast %73 : vector<1x1x32xf32> to vector<16x16x32xf32>
    %75 = arith.mulf %72, %74 : vector<16x16x32xf32>
    %76 = arith.addf %70, %75 : vector<16x16x32xf32>
    %c6_44 = arith.constant 6 : index
    %c0_45 = arith.constant 0 : index
    %77 = vector.load %arg6[%c6_44, %c0_45] : memref<49x32xf32, #tpu.memory_space<vmem>>, vector<1x32xf32>
    %c0_46 = arith.constant 0 : index
    %c11 = arith.constant 11 : index
    %c0_47 = arith.constant 0 : index
    %78 = vector.load %arg13[%c0_46, %c11, %c0_47] : memref<22x32x32xf32, #tpu.memory_space<vmem>>, vector<16x16x32xf32>
    %79 = vector.shape_cast %77 : vector<1x32xf32> to vector<1x1x32xf32>
    %80 = vector.broadcast %79 : vector<1x1x32xf32> to vector<16x16x32xf32>
    %81 = arith.mulf %78, %80 : vector<16x16x32xf32>
    %82 = arith.addf %76, %81 : vector<16x16x32xf32>
    %c7_48 = arith.constant 7 : index
    %c0_49 = arith.constant 0 : index
    %83 = vector.load %arg6[%c7_48, %c0_49] : memref<49x32xf32, #tpu.memory_space<vmem>>, vector<1x32xf32>
    %c1_50 = arith.constant 1 : index
    %c5_51 = arith.constant 5 : index
    %c0_52 = arith.constant 0 : index
    %84 = vector.load %arg13[%c1_50, %c5_51, %c0_52] : memref<22x32x32xf32, #tpu.memory_space<vmem>>, vector<16x16x32xf32>
    %85 = vector.shape_cast %83 : vector<1x32xf32> to vector<1x1x32xf32>
    %86 = vector.broadcast %85 : vector<1x1x32xf32> to vector<16x16x32xf32>
    %87 = arith.mulf %84, %86 : vector<16x16x32xf32>
    %88 = arith.addf %82, %87 : vector<16x16x32xf32>
    %c8_53 = arith.constant 8 : index
    %c0_54 = arith.constant 0 : index
    %89 = vector.load %arg6[%c8_53, %c0_54] : memref<49x32xf32, #tpu.memory_space<vmem>>, vector<1x32xf32>
    %c1_55 = arith.constant 1 : index
    %c6_56 = arith.constant 6 : index
    %c0_57 = arith.constant 0 : index
    %90 = vector.load %arg13[%c1_55, %c6_56, %c0_57] : memref<22x32x32xf32, #tpu.memory_space<vmem>>, vector<16x16x32xf32>
    %91 = vector.shape_cast %89 : vector<1x32xf32> to vector<1x1x32xf32>
    %92 = vector.broadcast %91 : vector<1x1x32xf32> to vector<16x16x32xf32>
    %93 = arith.mulf %90, %92 : vector<16x16x32xf32>
    %94 = arith.addf %88, %93 : vector<16x16x32xf32>
    %c9_58 = arith.constant 9 : index
    %c0_59 = arith.constant 0 : index
    %95 = vector.load %arg6[%c9_58, %c0_59] : memref<49x32xf32, #tpu.memory_space<vmem>>, vector<1x32xf32>
    %c1_60 = arith.constant 1 : index
    %c7_61 = arith.constant 7 : index
    %c0_62 = arith.constant 0 : index
    %96 = vector.load %arg13[%c1_60, %c7_61, %c0_62] : memref<22x32x32xf32, #tpu.memory_space<vmem>>, vector<16x16x32xf32>
    %97 = vector.shape_cast %95 : vector<1x32xf32> to vector<1x1x32xf32>
    %98 = vector.broadcast %97 : vector<1x1x32xf32> to vector<16x16x32xf32>
    %99 = arith.mulf %96, %98 : vector<16x16x32xf32>
    %100 = arith.addf %94, %99 : vector<16x16x32xf32>
    %c10_63 = arith.constant 10 : index
    %c0_64 = arith.constant 0 : index
    %101 = vector.load %arg6[%c10_63, %c0_64] : memref<49x32xf32, #tpu.memory_space<vmem>>, vector<1x32xf32>
    %c1_65 = arith.constant 1 : index
    %c8_66 = arith.constant 8 : index
    %c0_67 = arith.constant 0 : index
    %102 = vector.load %arg13[%c1_65, %c8_66, %c0_67] : memref<22x32x32xf32, #tpu.memory_space<vmem>>, vector<16x16x32xf32>
    %103 = vector.shape_cast %101 : vector<1x32xf32> to vector<1x1x32xf32>
    %104 = vector.broadcast %103 : vector<1x1x32xf32> to vector<16x16x32xf32>
    %105 = arith.mulf %102, %104 : vector<16x16x32xf32>
    %106 = arith.addf %100, %105 : vector<16x16x32xf32>
    %c11_68 = arith.constant 11 : index
    %c0_69 = arith.constant 0 : index
    %107 = vector.load %arg6[%c11_68, %c0_69] : memref<49x32xf32, #tpu.memory_space<vmem>>, vector<1x32xf32>
    %c1_70 = arith.constant 1 : index
    %c9_71 = arith.constant 9 : index
    %c0_72 = arith.constant 0 : index
    %108 = vector.load %arg13[%c1_70, %c9_71, %c0_72] : memref<22x32x32xf32, #tpu.memory_space<vmem>>, vector<16x16x32xf32>
    %109 = vector.shape_cast %107 : vector<1x32xf32> to vector<1x1x32xf32>
    %110 = vector.broadcast %109 : vector<1x1x32xf32> to vector<16x16x32xf32>
    %111 = arith.mulf %108, %110 : vector<16x16x32xf32>
    %112 = arith.addf %106, %111 : vector<16x16x32xf32>
    %c12 = arith.constant 12 : index
    %c0_73 = arith.constant 0 : index
    %113 = vector.load %arg6[%c12, %c0_73] : memref<49x32xf32, #tpu.memory_space<vmem>>, vector<1x32xf32>
    %c1_74 = arith.constant 1 : index
    %c10_75 = arith.constant 10 : index
    %c0_76 = arith.constant 0 : index
    %114 = vector.load %arg13[%c1_74, %c10_75, %c0_76] : memref<22x32x32xf32, #tpu.memory_space<vmem>>, vector<16x16x32xf32>
    %115 = vector.shape_cast %113 : vector<1x32xf32> to vector<1x1x32xf32>
    %116 = vector.broadcast %115 : vector<1x1x32xf32> to vector<16x16x32xf32>
    %117 = arith.mulf %114, %116 : vector<16x16x32xf32>
    %118 = arith.addf %112, %117 : vector<16x16x32xf32>
    %c13 = arith.constant 13 : index
    %c0_77 = arith.constant 0 : index
    %119 = vector.load %arg6[%c13, %c0_77] : memref<49x32xf32, #tpu.memory_space<vmem>>, vector<1x32xf32>
    %c1_78 = arith.constant 1 : index
    %c11_79 = arith.constant 11 : index
    %c0_80 = arith.constant 0 : index
    %120 = vector.load %arg13[%c1_78, %c11_79, %c0_80] : memref<22x32x32xf32, #tpu.memory_space<vmem>>, vector<16x16x32xf32>
    %121 = vector.shape_cast %119 : vector<1x32xf32> to vector<1x1x32xf32>
    %122 = vector.broadcast %121 : vector<1x1x32xf32> to vector<16x16x32xf32>
    %123 = arith.mulf %120, %122 : vector<16x16x32xf32>
    %124 = arith.addf %118, %123 : vector<16x16x32xf32>
    %c14 = arith.constant 14 : index
    %c0_81 = arith.constant 0 : index
    %125 = vector.load %arg6[%c14, %c0_81] : memref<49x32xf32, #tpu.memory_space<vmem>>, vector<1x32xf32>
    %c2_82 = arith.constant 2 : index
    %c5_83 = arith.constant 5 : index
    %c0_84 = arith.constant 0 : index
    %126 = vector.load %arg13[%c2_82, %c5_83, %c0_84] : memref<22x32x32xf32, #tpu.memory_space<vmem>>, vector<16x16x32xf32>
    %127 = vector.shape_cast %125 : vector<1x32xf32> to vector<1x1x32xf32>
    %128 = vector.broadcast %127 : vector<1x1x32xf32> to vector<16x16x32xf32>
    %129 = arith.mulf %126, %128 : vector<16x16x32xf32>
    %130 = arith.addf %124, %129 : vector<16x16x32xf32>
    %c15 = arith.constant 15 : index
    %c0_85 = arith.constant 0 : index
    %131 = vector.load %arg6[%c15, %c0_85] : memref<49x32xf32, #tpu.memory_space<vmem>>, vector<1x32xf32>
    %c2_86 = arith.constant 2 : index
    %c6_87 = arith.constant 6 : index
    %c0_88 = arith.constant 0 : index
    %132 = vector.load %arg13[%c2_86, %c6_87, %c0_88] : memref<22x32x32xf32, #tpu.memory_space<vmem>>, vector<16x16x32xf32>
    %133 = vector.shape_cast %131 : vector<1x32xf32> to vector<1x1x32xf32>
    %134 = vector.broadcast %133 : vector<1x1x32xf32> to vector<16x16x32xf32>
    %135 = arith.mulf %132, %134 : vector<16x16x32xf32>
    %136 = arith.addf %130, %135 : vector<16x16x32xf32>
    %c16 = arith.constant 16 : index
    %c0_89 = arith.constant 0 : index
    %137 = vector.load %arg6[%c16, %c0_89] : memref<49x32xf32, #tpu.memory_space<vmem>>, vector<1x32xf32>
    %c2_90 = arith.constant 2 : index
    %c7_91 = arith.constant 7 : index
    %c0_92 = arith.constant 0 : index
    %138 = vector.load %arg13[%c2_90, %c7_91, %c0_92] : memref<22x32x32xf32, #tpu.memory_space<vmem>>, vector<16x16x32xf32>
    %139 = vector.shape_cast %137 : vector<1x32xf32> to vector<1x1x32xf32>
    %140 = vector.broadcast %139 : vector<1x1x32xf32> to vector<16x16x32xf32>
    %141 = arith.mulf %138, %140 : vector<16x16x32xf32>
    %142 = arith.addf %136, %141 : vector<16x16x32xf32>
    %c17 = arith.constant 17 : index
    %c0_93 = arith.constant 0 : index
    %143 = vector.load %arg6[%c17, %c0_93] : memref<49x32xf32, #tpu.memory_space<vmem>>, vector<1x32xf32>
    %c2_94 = arith.constant 2 : index
    %c8_95 = arith.constant 8 : index
    %c0_96 = arith.constant 0 : index
    %144 = vector.load %arg13[%c2_94, %c8_95, %c0_96] : memref<22x32x32xf32, #tpu.memory_space<vmem>>, vector<16x16x32xf32>
    %145 = vector.shape_cast %143 : vector<1x32xf32> to vector<1x1x32xf32>
    %146 = vector.broadcast %145 : vector<1x1x32xf32> to vector<16x16x32xf32>
    %147 = arith.mulf %144, %146 : vector<16x16x32xf32>
    %148 = arith.addf %142, %147 : vector<16x16x32xf32>
    %c18 = arith.constant 18 : index
    %c0_97 = arith.constant 0 : index
    %149 = vector.load %arg6[%c18, %c0_97] : memref<49x32xf32, #tpu.memory_space<vmem>>, vector<1x32xf32>
    %c2_98 = arith.constant 2 : index
    %c9_99 = arith.constant 9 : index
    %c0_100 = arith.constant 0 : index
    %150 = vector.load %arg13[%c2_98, %c9_99, %c0_100] : memref<22x32x32xf32, #tpu.memory_space<vmem>>, vector<16x16x32xf32>
    %151 = vector.shape_cast %149 : vector<1x32xf32> to vector<1x1x32xf32>
    %152 = vector.broadcast %151 : vector<1x1x32xf32> to vector<16x16x32xf32>
    %153 = arith.mulf %150, %152 : vector<16x16x32xf32>
    %154 = arith.addf %148, %153 : vector<16x16x32xf32>
    %c19 = arith.constant 19 : index
    %c0_101 = arith.constant 0 : index
    %155 = vector.load %arg6[%c19, %c0_101] : memref<49x32xf32, #tpu.memory_space<vmem>>, vector<1x32xf32>
    %c2_102 = arith.constant 2 : index
    %c10_103 = arith.constant 10 : index
    %c0_104 = arith.constant 0 : index
    %156 = vector.load %arg13[%c2_102, %c10_103, %c0_104] : memref<22x32x32xf32, #tpu.memory_space<vmem>>, vector<16x16x32xf32>
    %157 = vector.shape_cast %155 : vector<1x32xf32> to vector<1x1x32xf32>
    %158 = vector.broadcast %157 : vector<1x1x32xf32> to vector<16x16x32xf32>
    %159 = arith.mulf %156, %158 : vector<16x16x32xf32>
    %160 = arith.addf %154, %159 : vector<16x16x32xf32>
    %c20 = arith.constant 20 : index
    %c0_105 = arith.constant 0 : index
    %161 = vector.load %arg6[%c20, %c0_105] : memref<49x32xf32, #tpu.memory_space<vmem>>, vector<1x32xf32>
    %c2_106 = arith.constant 2 : index
    %c11_107 = arith.constant 11 : index
    %c0_108 = arith.constant 0 : index
    %162 = vector.load %arg13[%c2_106, %c11_107, %c0_108] : memref<22x32x32xf32, #tpu.memory_space<vmem>>, vector<16x16x32xf32>
    %163 = vector.shape_cast %161 : vector<1x32xf32> to vector<1x1x32xf32>
    %164 = vector.broadcast %163 : vector<1x1x32xf32> to vector<16x16x32xf32>
    %165 = arith.mulf %162, %164 : vector<16x16x32xf32>
    %166 = arith.addf %160, %165 : vector<16x16x32xf32>
    %c21 = arith.constant 21 : index
    %c0_109 = arith.constant 0 : index
    %167 = vector.load %arg6[%c21, %c0_109] : memref<49x32xf32, #tpu.memory_space<vmem>>, vector<1x32xf32>
    %c3_110 = arith.constant 3 : index
    %c5_111 = arith.constant 5 : index
    %c0_112 = arith.constant 0 : index
    %168 = vector.load %arg13[%c3_110, %c5_111, %c0_112] : memref<22x32x32xf32, #tpu.memory_space<vmem>>, vector<16x16x32xf32>
    %169 = vector.shape_cast %167 : vector<1x32xf32> to vector<1x1x32xf32>
    %170 = vector.broadcast %169 : vector<1x1x32xf32> to vector<16x16x32xf32>
    %171 = arith.mulf %168, %170 : vector<16x16x32xf32>
    %172 = arith.addf %166, %171 : vector<16x16x32xf32>
    %c22 = arith.constant 22 : index
    %c0_113 = arith.constant 0 : index
    %173 = vector.load %arg6[%c22, %c0_113] : memref<49x32xf32, #tpu.memory_space<vmem>>, vector<1x32xf32>
    %c3_114 = arith.constant 3 : index
    %c6_115 = arith.constant 6 : index
    %c0_116 = arith.constant 0 : index
    %174 = vector.load %arg13[%c3_114, %c6_115, %c0_116] : memref<22x32x32xf32, #tpu.memory_space<vmem>>, vector<16x16x32xf32>
    %175 = vector.shape_cast %173 : vector<1x32xf32> to vector<1x1x32xf32>
    %176 = vector.broadcast %175 : vector<1x1x32xf32> to vector<16x16x32xf32>
    %177 = arith.mulf %174, %176 : vector<16x16x32xf32>
    %178 = arith.addf %172, %177 : vector<16x16x32xf32>
    %c23 = arith.constant 23 : index
    %c0_117 = arith.constant 0 : index
    %179 = vector.load %arg6[%c23, %c0_117] : memref<49x32xf32, #tpu.memory_space<vmem>>, vector<1x32xf32>
    %c3_118 = arith.constant 3 : index
    %c7_119 = arith.constant 7 : index
    %c0_120 = arith.constant 0 : index
    %180 = vector.load %arg13[%c3_118, %c7_119, %c0_120] : memref<22x32x32xf32, #tpu.memory_space<vmem>>, vector<16x16x32xf32>
    %181 = vector.shape_cast %179 : vector<1x32xf32> to vector<1x1x32xf32>
    %182 = vector.broadcast %181 : vector<1x1x32xf32> to vector<16x16x32xf32>
    %183 = arith.mulf %180, %182 : vector<16x16x32xf32>
    %184 = arith.addf %178, %183 : vector<16x16x32xf32>
    %c24_121 = arith.constant 24 : index
    %c0_122 = arith.constant 0 : index
    %185 = vector.load %arg6[%c24_121, %c0_122] : memref<49x32xf32, #tpu.memory_space<vmem>>, vector<1x32xf32>
    %c3_123 = arith.constant 3 : index
    %c8_124 = arith.constant 8 : index
    %c0_125 = arith.constant 0 : index
    %186 = vector.load %arg13[%c3_123, %c8_124, %c0_125] : memref<22x32x32xf32, #tpu.memory_space<vmem>>, vector<16x16x32xf32>
    %187 = vector.shape_cast %185 : vector<1x32xf32> to vector<1x1x32xf32>
    %188 = vector.broadcast %187 : vector<1x1x32xf32> to vector<16x16x32xf32>
    %189 = arith.mulf %186, %188 : vector<16x16x32xf32>
    %190 = arith.addf %184, %189 : vector<16x16x32xf32>
    %c25 = arith.constant 25 : index
    %c0_126 = arith.constant 0 : index
    %191 = vector.load %arg6[%c25, %c0_126] : memref<49x32xf32, #tpu.memory_space<vmem>>, vector<1x32xf32>
    %c3_127 = arith.constant 3 : index
    %c9_128 = arith.constant 9 : index
    %c0_129 = arith.constant 0 : index
    %192 = vector.load %arg13[%c3_127, %c9_128, %c0_129] : memref<22x32x32xf32, #tpu.memory_space<vmem>>, vector<16x16x32xf32>
    %193 = vector.shape_cast %191 : vector<1x32xf32> to vector<1x1x32xf32>
    %194 = vector.broadcast %193 : vector<1x1x32xf32> to vector<16x16x32xf32>
    %195 = arith.mulf %192, %194 : vector<16x16x32xf32>
    %196 = arith.addf %190, %195 : vector<16x16x32xf32>
    %c26 = arith.constant 26 : index
    %c0_130 = arith.constant 0 : index
    %197 = vector.load %arg6[%c26, %c0_130] : memref<49x32xf32, #tpu.memory_space<vmem>>, vector<1x32xf32>
    %c3_131 = arith.constant 3 : index
    %c10_132 = arith.constant 10 : index
    %c0_133 = arith.constant 0 : index
    %198 = vector.load %arg13[%c3_131, %c10_132, %c0_133] : memref<22x32x32xf32, #tpu.memory_space<vmem>>, vector<16x16x32xf32>
    %199 = vector.shape_cast %197 : vector<1x32xf32> to vector<1x1x32xf32>
    %200 = vector.broadcast %199 : vector<1x1x32xf32> to vector<16x16x32xf32>
    %201 = arith.mulf %198, %200 : vector<16x16x32xf32>
    %202 = arith.addf %196, %201 : vector<16x16x32xf32>
    %c27 = arith.constant 27 : index
    %c0_134 = arith.constant 0 : index
    %203 = vector.load %arg6[%c27, %c0_134] : memref<49x32xf32, #tpu.memory_space<vmem>>, vector<1x32xf32>
    %c3_135 = arith.constant 3 : index
    %c11_136 = arith.constant 11 : index
    %c0_137 = arith.constant 0 : index
    %204 = vector.load %arg13[%c3_135, %c11_136, %c0_137] : memref<22x32x32xf32, #tpu.memory_space<vmem>>, vector<16x16x32xf32>
    %205 = vector.shape_cast %203 : vector<1x32xf32> to vector<1x1x32xf32>
    %206 = vector.broadcast %205 : vector<1x1x32xf32> to vector<16x16x32xf32>
    %207 = arith.mulf %204, %206 : vector<16x16x32xf32>
    %208 = arith.addf %202, %207 : vector<16x16x32xf32>
    %c28 = arith.constant 28 : index
    %c0_138 = arith.constant 0 : index
    %209 = vector.load %arg6[%c28, %c0_138] : memref<49x32xf32, #tpu.memory_space<vmem>>, vector<1x32xf32>
    %c4_139 = arith.constant 4 : index
    %c5_140 = arith.constant 5 : index
    %c0_141 = arith.constant 0 : index
    %210 = vector.load %arg13[%c4_139, %c5_140, %c0_141] : memref<22x32x32xf32, #tpu.memory_space<vmem>>, vector<16x16x32xf32>
    %211 = vector.shape_cast %209 : vector<1x32xf32> to vector<1x1x32xf32>
    %212 = vector.broadcast %211 : vector<1x1x32xf32> to vector<16x16x32xf32>
    %213 = arith.mulf %210, %212 : vector<16x16x32xf32>
    %214 = arith.addf %208, %213 : vector<16x16x32xf32>
    %c29 = arith.constant 29 : index
    %c0_142 = arith.constant 0 : index
    %215 = vector.load %arg6[%c29, %c0_142] : memref<49x32xf32, #tpu.memory_space<vmem>>, vector<1x32xf32>
    %c4_143 = arith.constant 4 : index
    %c6_144 = arith.constant 6 : index
    %c0_145 = arith.constant 0 : index
    %216 = vector.load %arg13[%c4_143, %c6_144, %c0_145] : memref<22x32x32xf32, #tpu.memory_space<vmem>>, vector<16x16x32xf32>
    %217 = vector.shape_cast %215 : vector<1x32xf32> to vector<1x1x32xf32>
    %218 = vector.broadcast %217 : vector<1x1x32xf32> to vector<16x16x32xf32>
    %219 = arith.mulf %216, %218 : vector<16x16x32xf32>
    %220 = arith.addf %214, %219 : vector<16x16x32xf32>
    %c30 = arith.constant 30 : index
    %c0_146 = arith.constant 0 : index
    %221 = vector.load %arg6[%c30, %c0_146] : memref<49x32xf32, #tpu.memory_space<vmem>>, vector<1x32xf32>
    %c4_147 = arith.constant 4 : index
    %c7_148 = arith.constant 7 : index
    %c0_149 = arith.constant 0 : index
    %222 = vector.load %arg13[%c4_147, %c7_148, %c0_149] : memref<22x32x32xf32, #tpu.memory_space<vmem>>, vector<16x16x32xf32>
    %223 = vector.shape_cast %221 : vector<1x32xf32> to vector<1x1x32xf32>
    %224 = vector.broadcast %223 : vector<1x1x32xf32> to vector<16x16x32xf32>
    %225 = arith.mulf %222, %224 : vector<16x16x32xf32>
    %226 = arith.addf %220, %225 : vector<16x16x32xf32>
    %c31 = arith.constant 31 : index
    %c0_150 = arith.constant 0 : index
    %227 = vector.load %arg6[%c31, %c0_150] : memref<49x32xf32, #tpu.memory_space<vmem>>, vector<1x32xf32>
    %c4_151 = arith.constant 4 : index
    %c8_152 = arith.constant 8 : index
    %c0_153 = arith.constant 0 : index
    %228 = vector.load %arg13[%c4_151, %c8_152, %c0_153] : memref<22x32x32xf32, #tpu.memory_space<vmem>>, vector<16x16x32xf32>
    %229 = vector.shape_cast %227 : vector<1x32xf32> to vector<1x1x32xf32>
    %230 = vector.broadcast %229 : vector<1x1x32xf32> to vector<16x16x32xf32>
    %231 = arith.mulf %228, %230 : vector<16x16x32xf32>
    %232 = arith.addf %226, %231 : vector<16x16x32xf32>
    %c32 = arith.constant 32 : index
    %c0_154 = arith.constant 0 : index
    %233 = vector.load %arg6[%c32, %c0_154] : memref<49x32xf32, #tpu.memory_space<vmem>>, vector<1x32xf32>
    %c4_155 = arith.constant 4 : index
    %c9_156 = arith.constant 9 : index
    %c0_157 = arith.constant 0 : index
    %234 = vector.load %arg13[%c4_155, %c9_156, %c0_157] : memref<22x32x32xf32, #tpu.memory_space<vmem>>, vector<16x16x32xf32>
    %235 = vector.shape_cast %233 : vector<1x32xf32> to vector<1x1x32xf32>
    %236 = vector.broadcast %235 : vector<1x1x32xf32> to vector<16x16x32xf32>
    %237 = arith.mulf %234, %236 : vector<16x16x32xf32>
    %238 = arith.addf %232, %237 : vector<16x16x32xf32>
    %c33 = arith.constant 33 : index
    %c0_158 = arith.constant 0 : index
    %239 = vector.load %arg6[%c33, %c0_158] : memref<49x32xf32, #tpu.memory_space<vmem>>, vector<1x32xf32>
    %c4_159 = arith.constant 4 : index
    %c10_160 = arith.constant 10 : index
    %c0_161 = arith.constant 0 : index
    %240 = vector.load %arg13[%c4_159, %c10_160, %c0_161] : memref<22x32x32xf32, #tpu.memory_space<vmem>>, vector<16x16x32xf32>
    %241 = vector.shape_cast %239 : vector<1x32xf32> to vector<1x1x32xf32>
    %242 = vector.broadcast %241 : vector<1x1x32xf32> to vector<16x16x32xf32>
    %243 = arith.mulf %240, %242 : vector<16x16x32xf32>
    %244 = arith.addf %238, %243 : vector<16x16x32xf32>
    %c34 = arith.constant 34 : index
    %c0_162 = arith.constant 0 : index
    %245 = vector.load %arg6[%c34, %c0_162] : memref<49x32xf32, #tpu.memory_space<vmem>>, vector<1x32xf32>
    %c4_163 = arith.constant 4 : index
    %c11_164 = arith.constant 11 : index
    %c0_165 = arith.constant 0 : index
    %246 = vector.load %arg13[%c4_163, %c11_164, %c0_165] : memref<22x32x32xf32, #tpu.memory_space<vmem>>, vector<16x16x32xf32>
    %247 = vector.shape_cast %245 : vector<1x32xf32> to vector<1x1x32xf32>
    %248 = vector.broadcast %247 : vector<1x1x32xf32> to vector<16x16x32xf32>
    %249 = arith.mulf %246, %248 : vector<16x16x32xf32>
    %250 = arith.addf %244, %249 : vector<16x16x32xf32>
    %c35 = arith.constant 35 : index
    %c0_166 = arith.constant 0 : index
    %251 = vector.load %arg6[%c35, %c0_166] : memref<49x32xf32, #tpu.memory_space<vmem>>, vector<1x32xf32>
    %c5_167 = arith.constant 5 : index
    %c5_168 = arith.constant 5 : index
    %c0_169 = arith.constant 0 : index
    %252 = vector.load %arg13[%c5_167, %c5_168, %c0_169] : memref<22x32x32xf32, #tpu.memory_space<vmem>>, vector<16x16x32xf32>
    %253 = vector.shape_cast %251 : vector<1x32xf32> to vector<1x1x32xf32>
    %254 = vector.broadcast %253 : vector<1x1x32xf32> to vector<16x16x32xf32>
    %255 = arith.mulf %252, %254 : vector<16x16x32xf32>
    %256 = arith.addf %250, %255 : vector<16x16x32xf32>
    %c36 = arith.constant 36 : index
    %c0_170 = arith.constant 0 : index
    %257 = vector.load %arg6[%c36, %c0_170] : memref<49x32xf32, #tpu.memory_space<vmem>>, vector<1x32xf32>
    %c5_171 = arith.constant 5 : index
    %c6_172 = arith.constant 6 : index
    %c0_173 = arith.constant 0 : index
    %258 = vector.load %arg13[%c5_171, %c6_172, %c0_173] : memref<22x32x32xf32, #tpu.memory_space<vmem>>, vector<16x16x32xf32>
    %259 = vector.shape_cast %257 : vector<1x32xf32> to vector<1x1x32xf32>
    %260 = vector.broadcast %259 : vector<1x1x32xf32> to vector<16x16x32xf32>
    %261 = arith.mulf %258, %260 : vector<16x16x32xf32>
    %262 = arith.addf %256, %261 : vector<16x16x32xf32>
    %c37 = arith.constant 37 : index
    %c0_174 = arith.constant 0 : index
    %263 = vector.load %arg6[%c37, %c0_174] : memref<49x32xf32, #tpu.memory_space<vmem>>, vector<1x32xf32>
    %c5_175 = arith.constant 5 : index
    %c7_176 = arith.constant 7 : index
    %c0_177 = arith.constant 0 : index
    %264 = vector.load %arg13[%c5_175, %c7_176, %c0_177] : memref<22x32x32xf32, #tpu.memory_space<vmem>>, vector<16x16x32xf32>
    %265 = vector.shape_cast %263 : vector<1x32xf32> to vector<1x1x32xf32>
    %266 = vector.broadcast %265 : vector<1x1x32xf32> to vector<16x16x32xf32>
    %267 = arith.mulf %264, %266 : vector<16x16x32xf32>
    %268 = arith.addf %262, %267 : vector<16x16x32xf32>
    %c38 = arith.constant 38 : index
    %c0_178 = arith.constant 0 : index
    %269 = vector.load %arg6[%c38, %c0_178] : memref<49x32xf32, #tpu.memory_space<vmem>>, vector<1x32xf32>
    %c5_179 = arith.constant 5 : index
    %c8_180 = arith.constant 8 : index
    %c0_181 = arith.constant 0 : index
    %270 = vector.load %arg13[%c5_179, %c8_180, %c0_181] : memref<22x32x32xf32, #tpu.memory_space<vmem>>, vector<16x16x32xf32>
    %271 = vector.shape_cast %269 : vector<1x32xf32> to vector<1x1x32xf32>
    %272 = vector.broadcast %271 : vector<1x1x32xf32> to vector<16x16x32xf32>
    %273 = arith.mulf %270, %272 : vector<16x16x32xf32>
    %274 = arith.addf %268, %273 : vector<16x16x32xf32>
    %c39 = arith.constant 39 : index
    %c0_182 = arith.constant 0 : index
    %275 = vector.load %arg6[%c39, %c0_182] : memref<49x32xf32, #tpu.memory_space<vmem>>, vector<1x32xf32>
    %c5_183 = arith.constant 5 : index
    %c9_184 = arith.constant 9 : index
    %c0_185 = arith.constant 0 : index
    %276 = vector.load %arg13[%c5_183, %c9_184, %c0_185] : memref<22x32x32xf32, #tpu.memory_space<vmem>>, vector<16x16x32xf32>
    %277 = vector.shape_cast %275 : vector<1x32xf32> to vector<1x1x32xf32>
    %278 = vector.broadcast %277 : vector<1x1x32xf32> to vector<16x16x32xf32>
    %279 = arith.mulf %276, %278 : vector<16x16x32xf32>
    %280 = arith.addf %274, %279 : vector<16x16x32xf32>
    %c40 = arith.constant 40 : index
    %c0_186 = arith.constant 0 : index
    %281 = vector.load %arg6[%c40, %c0_186] : memref<49x32xf32, #tpu.memory_space<vmem>>, vector<1x32xf32>
    %c5_187 = arith.constant 5 : index
    %c10_188 = arith.constant 10 : index
    %c0_189 = arith.constant 0 : index
    %282 = vector.load %arg13[%c5_187, %c10_188, %c0_189] : memref<22x32x32xf32, #tpu.memory_space<vmem>>, vector<16x16x32xf32>
    %283 = vector.shape_cast %281 : vector<1x32xf32> to vector<1x1x32xf32>
    %284 = vector.broadcast %283 : vector<1x1x32xf32> to vector<16x16x32xf32>
    %285 = arith.mulf %282, %284 : vector<16x16x32xf32>
    %286 = arith.addf %280, %285 : vector<16x16x32xf32>
    %c41 = arith.constant 41 : index
    %c0_190 = arith.constant 0 : index
    %287 = vector.load %arg6[%c41, %c0_190] : memref<49x32xf32, #tpu.memory_space<vmem>>, vector<1x32xf32>
    %c5_191 = arith.constant 5 : index
    %c11_192 = arith.constant 11 : index
    %c0_193 = arith.constant 0 : index
    %288 = vector.load %arg13[%c5_191, %c11_192, %c0_193] : memref<22x32x32xf32, #tpu.memory_space<vmem>>, vector<16x16x32xf32>
    %289 = vector.shape_cast %287 : vector<1x32xf32> to vector<1x1x32xf32>
    %290 = vector.broadcast %289 : vector<1x1x32xf32> to vector<16x16x32xf32>
    %291 = arith.mulf %288, %290 : vector<16x16x32xf32>
    %292 = arith.addf %286, %291 : vector<16x16x32xf32>
    %c42 = arith.constant 42 : index
    %c0_194 = arith.constant 0 : index
    %293 = vector.load %arg6[%c42, %c0_194] : memref<49x32xf32, #tpu.memory_space<vmem>>, vector<1x32xf32>
    %c6_195 = arith.constant 6 : index
    %c5_196 = arith.constant 5 : index
    %c0_197 = arith.constant 0 : index
    %294 = vector.load %arg13[%c6_195, %c5_196, %c0_197] : memref<22x32x32xf32, #tpu.memory_space<vmem>>, vector<16x16x32xf32>
    %295 = vector.shape_cast %293 : vector<1x32xf32> to vector<1x1x32xf32>
    %296 = vector.broadcast %295 : vector<1x1x32xf32> to vector<16x16x32xf32>
    %297 = arith.mulf %294, %296 : vector<16x16x32xf32>
    %298 = arith.addf %292, %297 : vector<16x16x32xf32>
    %c43 = arith.constant 43 : index
    %c0_198 = arith.constant 0 : index
    %299 = vector.load %arg6[%c43, %c0_198] : memref<49x32xf32, #tpu.memory_space<vmem>>, vector<1x32xf32>
    %c6_199 = arith.constant 6 : index
    %c6_200 = arith.constant 6 : index
    %c0_201 = arith.constant 0 : index
    %300 = vector.load %arg13[%c6_199, %c6_200, %c0_201] : memref<22x32x32xf32, #tpu.memory_space<vmem>>, vector<16x16x32xf32>
    %301 = vector.shape_cast %299 : vector<1x32xf32> to vector<1x1x32xf32>
    %302 = vector.broadcast %301 : vector<1x1x32xf32> to vector<16x16x32xf32>
    %303 = arith.mulf %300, %302 : vector<16x16x32xf32>
    %304 = arith.addf %298, %303 : vector<16x16x32xf32>
    %c44 = arith.constant 44 : index
    %c0_202 = arith.constant 0 : index
    %305 = vector.load %arg6[%c44, %c0_202] : memref<49x32xf32, #tpu.memory_space<vmem>>, vector<1x32xf32>
    %c6_203 = arith.constant 6 : index
    %c7_204 = arith.constant 7 : index
    %c0_205 = arith.constant 0 : index
    %306 = vector.load %arg13[%c6_203, %c7_204, %c0_205] : memref<22x32x32xf32, #tpu.memory_space<vmem>>, vector<16x16x32xf32>
    %307 = vector.shape_cast %305 : vector<1x32xf32> to vector<1x1x32xf32>
    %308 = vector.broadcast %307 : vector<1x1x32xf32> to vector<16x16x32xf32>
    %309 = arith.mulf %306, %308 : vector<16x16x32xf32>
    %310 = arith.addf %304, %309 : vector<16x16x32xf32>
    %c45 = arith.constant 45 : index
    %c0_206 = arith.constant 0 : index
    %311 = vector.load %arg6[%c45, %c0_206] : memref<49x32xf32, #tpu.memory_space<vmem>>, vector<1x32xf32>
    %c6_207 = arith.constant 6 : index
    %c8_208 = arith.constant 8 : index
    %c0_209 = arith.constant 0 : index
    %312 = vector.load %arg13[%c6_207, %c8_208, %c0_209] : memref<22x32x32xf32, #tpu.memory_space<vmem>>, vector<16x16x32xf32>
    %313 = vector.shape_cast %311 : vector<1x32xf32> to vector<1x1x32xf32>
    %314 = vector.broadcast %313 : vector<1x1x32xf32> to vector<16x16x32xf32>
    %315 = arith.mulf %312, %314 : vector<16x16x32xf32>
    %316 = arith.addf %310, %315 : vector<16x16x32xf32>
    %c46 = arith.constant 46 : index
    %c0_210 = arith.constant 0 : index
    %317 = vector.load %arg6[%c46, %c0_210] : memref<49x32xf32, #tpu.memory_space<vmem>>, vector<1x32xf32>
    %c6_211 = arith.constant 6 : index
    %c9_212 = arith.constant 9 : index
    %c0_213 = arith.constant 0 : index
    %318 = vector.load %arg13[%c6_211, %c9_212, %c0_213] : memref<22x32x32xf32, #tpu.memory_space<vmem>>, vector<16x16x32xf32>
    %319 = vector.shape_cast %317 : vector<1x32xf32> to vector<1x1x32xf32>
    %320 = vector.broadcast %319 : vector<1x1x32xf32> to vector<16x16x32xf32>
    %321 = arith.mulf %318, %320 : vector<16x16x32xf32>
    %322 = arith.addf %316, %321 : vector<16x16x32xf32>
    %c47 = arith.constant 47 : index
    %c0_214 = arith.constant 0 : index
    %323 = vector.load %arg6[%c47, %c0_214] : memref<49x32xf32, #tpu.memory_space<vmem>>, vector<1x32xf32>
    %c6_215 = arith.constant 6 : index
    %c10_216 = arith.constant 10 : index
    %c0_217 = arith.constant 0 : index
    %324 = vector.load %arg13[%c6_215, %c10_216, %c0_217] : memref<22x32x32xf32, #tpu.memory_space<vmem>>, vector<16x16x32xf32>
    %325 = vector.shape_cast %323 : vector<1x32xf32> to vector<1x1x32xf32>
    %326 = vector.broadcast %325 : vector<1x1x32xf32> to vector<16x16x32xf32>
    %327 = arith.mulf %324, %326 : vector<16x16x32xf32>
    %328 = arith.addf %322, %327 : vector<16x16x32xf32>
    %c48 = arith.constant 48 : index
    %c0_218 = arith.constant 0 : index
    %329 = vector.load %arg6[%c48, %c0_218] : memref<49x32xf32, #tpu.memory_space<vmem>>, vector<1x32xf32>
    %c6_219 = arith.constant 6 : index
    %c11_220 = arith.constant 11 : index
    %c0_221 = arith.constant 0 : index
    %330 = vector.load %arg13[%c6_219, %c11_220, %c0_221] : memref<22x32x32xf32, #tpu.memory_space<vmem>>, vector<16x16x32xf32>
    %331 = vector.shape_cast %329 : vector<1x32xf32> to vector<1x1x32xf32>
    %332 = vector.broadcast %331 : vector<1x1x32xf32> to vector<16x16x32xf32>
    %333 = arith.mulf %330, %332 : vector<16x16x32xf32>
    %334 = arith.addf %328, %333 : vector<16x16x32xf32>
    %c0_222 = arith.constant 0 : index
    %c0_223 = arith.constant 0 : index
    %335 = vector.load %arg7[%c0_222, %c0_223] : memref<1x32xf32, #tpu.memory_space<vmem>>, vector<1x32xf32>
    %336 = vector.shape_cast %335 : vector<1x32xf32> to vector<1x1x32xf32>
    %337 = vector.broadcast %336 : vector<1x1x32xf32> to vector<16x16x32xf32>
    %338 = arith.addf %334, %337 : vector<16x16x32xf32>
    %c3_224 = arith.constant 3 : index
    %c8_225 = arith.constant 8 : index
    %c0_226 = arith.constant 0 : index
    %339 = vector.load %arg13[%c3_224, %c8_225, %c0_226] : memref<22x32x32xf32, #tpu.memory_space<vmem>>, vector<16x16x32xf32>
    %340 = arith.addf %338, %339 : vector<16x16x32xf32>
    %cst_227 = arith.constant 5.000000e-01 : f32
    %341 = vector.broadcast %cst_227 : f32 to vector<16x16x32xf32>
    %342 = arith.mulf %340, %341 : vector<16x16x32xf32>
    %cst_228 = arith.constant 0.707106769 : f32
    %343 = vector.broadcast %cst_228 : f32 to vector<16x16x32xf32>
    %344 = arith.mulf %340, %343 : vector<16x16x32xf32>
    %345 = math.erf %344 : vector<16x16x32xf32>
    %cst_229 = arith.constant 1.000000e+00 : f32
    %346 = vector.broadcast %cst_229 : f32 to vector<16x16x32xf32>
    %347 = arith.addf %346, %345 : vector<16x16x32xf32>
    %348 = arith.mulf %342, %347 : vector<16x16x32xf32>
    %c0_230 = arith.constant 0 : index
    %c0_231 = arith.constant 0 : index
    %349 = vector.load %arg8[%c0_230, %c0_231] : memref<1x32xf32, #tpu.memory_space<vmem>>, vector<1x32xf32>
    %350 = vector.shape_cast %349 : vector<1x32xf32> to vector<1x1x32xf32>
    %351 = vector.broadcast %350 : vector<1x1x32xf32> to vector<16x16x32xf32>
    %352 = arith.mulf %348, %351 : vector<16x16x32xf32>
    %c0_232 = arith.constant 0 : index
    %c0_233 = arith.constant 0 : index
    %353 = vector.load %arg9[%c0_232, %c0_233] : memref<1x32xf32, #tpu.memory_space<vmem>>, vector<1x32xf32>
    %354 = vector.shape_cast %353 : vector<1x32xf32> to vector<1x1x32xf32>
    %355 = vector.broadcast %354 : vector<1x1x32xf32> to vector<16x16x32xf32>
    %356 = arith.addf %352, %355 : vector<16x16x32xf32>
    %357 = vector.shape_cast %356 : vector<16x16x32xf32> to vector<256x32xf32>
    %c0_234 = arith.constant 0 : index
    %c0_235 = arith.constant 0 : index
    %358 = vector.load %arg10[%c0_234, %c0_235] : memref<32x4xf32, #tpu.memory_space<vmem>>, vector<32x4xf32>
    %cst_236 = arith.constant dense<0.000000e+00> : vector<256x4xf32>
    %359 = tpu.matmul %357, %358, %cst_236 {dimension_numbers = #tpu.dot_dimension_numbers<[1], [0], [0], [1], [0, 0, 1, 1], [], []>} : vector<256x32xf32>, vector<32x4xf32>, vector<256x4xf32> -> vector<256x4xf32>
    %c0_237 = arith.constant 0 : index
    %c0_238 = arith.constant 0 : index
    %360 = vector.load %arg11[%c0_237, %c0_238] : memref<1x4xf32, #tpu.memory_space<vmem>>, vector<1x4xf32>
    %361 = vector.broadcast %360 : vector<1x4xf32> to vector<256x4xf32>
    %362 = arith.addf %359, %361 : vector<256x4xf32>
    %363 = vector.shape_cast %362 : vector<256x4xf32> to vector<1x16x16x4xf32>
    %c0_239 = arith.constant 0 : index
    %c0_240 = arith.constant 0 : index
    %c0_241 = arith.constant 0 : index
    %c0_242 = arith.constant 0 : index
    %364 = vector.load %arg12[%c0_239, %c0_240, %c0_241, %c0_242] : memref<1x16x16x4xf32, #tpu.memory_space<vmem>>, vector<1x16x16x4xf32>
    tpu.vector_store %arg12[%c0_239, %c0_240, %c0_241, %c0_242], %363 {strides = array<i32>} : memref<1x16x16x4xf32, #tpu.memory_space<vmem>>, vector<1x16x16x4xf32>,
    return
  }
  func.func @transform_0(%arg0: i32, %arg1: i32) -> (i32, i32, i32, i32) {
    %c0_i32 = arith.constant 0 : i32
    %c0_i32_0 = arith.constant 0 : i32
    %c0_i32_1 = arith.constant 0 : i32
    %c0_i32_2 = arith.constant 0 : i32
    return %arg0, %c0_i32, %c0_i32_0, %c0_i32_1 : i32, i32, i32, i32
  }
  func.func @transform_1(%arg0: i32, %arg1: i32) -> (i32, i32) {
    %c0_i32 = arith.constant 0 : i32
    %c0_i32_0 = arith.constant 0 : i32
    %c0_i32_1 = arith.constant 0 : i32
    return %c0_i32, %c0_i32_0 : i32, i32
  }
  func.func @transform_2(%arg0: i32, %arg1: i32) -> (i32, i32) {
    %c0_i32 = arith.constant 0 : i32
    %c0_i32_0 = arith.constant 0 : i32
    %c0_i32_1 = arith.constant 0 : i32
    return %c0_i32, %c0_i32_0 : i32, i32
  }
  func.func @transform_3(%arg0: i32, %arg1: i32) -> (i32, i32) {
    %c0_i32 = arith.constant 0 : i32
    %c0_i32_0 = arith.constant 0 : i32
    %c0_i32_1 = arith.constant 0 : i32
    return %c0_i32, %c0_i32_0 : i32, i32
  }
  func.func @transform_4(%arg0: i32, %arg1: i32) -> (i32, i32) {
    %c0_i32 = arith.constant 0 : i32
    %c0_i32_0 = arith.constant 0 : i32
    %c0_i32_1 = arith.constant 0 : i32
    return %c0_i32, %c0_i32_0 : i32, i32
  }
  func.func @transform_5(%arg0: i32, %arg1: i32) -> (i32, i32) {
    %c0_i32 = arith.constant 0 : i32
    %c0_i32_0 = arith.constant 0 : i32
    %c0_i32_1 = arith.constant 0 : i32
    return %c0_i32, %c0_i32_0 : i32, i32
  }
  func.func @transform_6(%arg0: i32, %arg1: i32) -> (i32, i32) {
    %c0_i32 = arith.constant 0 : i32
    %c0_i32_0 = arith.constant 0 : i32
    %c0_i32_1 = arith.constant 0 : i32
    return %c0_i32, %c0_i32_0 : i32, i32
  }
  func.func @transform_7(%arg0: i32, %arg1: i32) -> (i32, i32) {
    %c0_i32 = arith.constant 0 : i32
    %c0_i32_0 = arith.constant 0 : i32
    %c0_i32_1 = arith.constant 0 : i32
    return %c0_i32, %c0_i32_0 : i32, i32
  }
  func.func @transform_8(%arg0: i32, %arg1: i32) -> (i32, i32) {
    %c0_i32 = arith.constant 0 : i32
    %c0_i32_0 = arith.constant 0 : i32
    %c0_i32_1 = arith.constant 0 : i32
    return %c0_i32, %c0_i32_0 : i32, i32
  }
  func.func @transform_9(%arg0: i32, %arg1: i32) -> (i32, i32) {
    %c0_i32 = arith.constant 0 : i32
    %c0_i32_0 = arith.constant 0 : i32
    %c0_i32_1 = arith.constant 0 : i32
    return %c0_i32, %c0_i32_0 : i32, i32
  }
  func.func @transform_10(%arg0: i32, %arg1: i32) -> (i32, i32, i32, i32) {
    %c0_i32 = arith.constant 0 : i32
    %c0_i32_0 = arith.constant 0 : i32
    %c0_i32_1 = arith.constant 0 : i32
    return %arg0, %arg1, %c0_i32, %c0_i32_0 : i32, i32, i32, i32
  }
}

</mosaic_0001>

<llo_original>
// kernel: tpu_custom_call.1
$region0: #{tpu_custom_call.1}
  #allocation0 [shape = 'u32[]', space=smem, size = 0x4, offset = 0x4, fixed_abs, tag = 'smem constant byte address 0x4 - core index']
  #allocation1 [shape = 'u32[144,128]{1,0:T(1,128)}', space=vmem, size = 0x12000, scoped, tag = 'internal scratch']
  #allocation2 [shape = 'f32[22,32,32]{2,1,0:T(8,128)}', space=vmem, size = 0x58000, scoped, tag = 'scratch operand']
  %s0 = inlined_call_operand.vmem [shape: f32[2,22,16,4], index: 0, kind: input, shape index: {}]
  %s1 = inlined_call_operand.vmem [shape: f32[4,32], index: 1, kind: input, shape index: {}]
  %s2 = inlined_call_operand.vmem [shape: f32[1,32], index: 2, kind: input, shape index: {}]
  %s3 = inlined_call_operand.vmem [shape: f32[1,32], index: 3, kind: input, shape index: {}]
  %s4 = inlined_call_operand.vmem [shape: f32[49,32], index: 4, kind: input, shape index: {}]
  %s5 = inlined_call_operand.vmem [shape: f32[1,32], index: 5, kind: input, shape index: {}]
  %s6 = inlined_call_operand.vmem [shape: f32[1,32], index: 6, kind: input, shape index: {}]
  %s7 = inlined_call_operand.vmem [shape: f32[1,32], index: 7, kind: input, shape index: {}]
  %s8 = inlined_call_operand.vmem [shape: f32[32,4], index: 8, kind: input, shape index: {}]
  %s9 = inlined_call_operand.vmem [shape: f32[1,4], index: 9, kind: input, shape index: {}]
  %s10 = inlined_call_operand.vmem [shape: f32[2,16,16,4], index: 10, kind: output, shape index: {}]
  %s11 = sld [smem:[#allocation0]]
  $region73: #{tpu_custom_call.1} parent=0
    _
  %s13 = ssub.s32 1, %s11
  %s14 = scalar_select 0, %s13, %s11
  loop: start=0, step=1, limit=4
  $region2: #{tpu_custom_call.1} parent=0 // loop_pre_header
    _
  $region3: #{tpu_custom_call.1} parent=0 // loop_header
    %s16 = sphi 0, %s20
    %p17 = scmp.ge.s32.totalorder %s16, 4
    %s23 = sphi 0, %s35
    %s24 = sphi 0, %s31
    %s25 = sphi 0, %s23
    %s26 = sphi 0, %s24
    %s27 = sphi 0, %s25
    %s28 = sphi 0, %s26
    %s38 = sphi 0, %s40
    %s41 = sphi 0, %s38
    %s42 = sphi 0, %s41
    %s58 = sphi 0, %s42
    %s62 = sphi 0, %s62
    %s64 = sphi 0, %s62
    %s65 = sphi 0, %s64
    %s79 = sphi 0, %s65
    %s83 = sphi 0, %s83
    %s85 = sphi 0, %s83
    %s86 = sphi 0, %s85
    %s100 = sphi 0, %s86
    %s104 = sphi 0, %s104
    %s106 = sphi 0, %s104
    %s107 = sphi 0, %s106
    %s121 = sphi 0, %s107
    %s125 = sphi 0, %s125
    %s127 = sphi 0, %s125
    %s128 = sphi 0, %s127
    %s142 = sphi 0, %s128
    %s146 = sphi 0, %s146
    %s148 = sphi 0, %s146
    %s149 = sphi 0, %s148
    %s163 = sphi 0, %s149
    %s167 = sphi 0, %s167
    %s169 = sphi 0, %s167
    %s170 = sphi 0, %s169
    %s184 = sphi 0, %s170
    %s188 = sphi 0, %s188
    %s190 = sphi 0, %s188
    %s191 = sphi 0, %s190
    %s205 = sphi 0, %s191
    %s209 = sphi 0, %s209
    %s211 = sphi 0, %s209
    %s212 = sphi 0, %s211
    %s226 = sphi 0, %s212
    %s230 = sphi 0, %s230
    %s232 = sphi 0, %s230
    %s233 = sphi 0, %s232
    %s247 = sphi 0, %s233
    %s255 = sphi 0, %s257
    %s258 = sphi 0, %s255
    %s259 = sphi 0, %s258
    %s275 = sphi 0, %s259
  $region4: #{tpu_custom_call.1} parent=0 // loop_header_branch
    %19 = sbr.rel (%p17) target = $region8
  $region5: #{tpu_custom_call.1} parent=0 // loop_body
    %s21 = ssub.s32 %s16, 1
    %s22 = ssub.s32 %s16, 2
    %s29 = sadd.s32 1, %s24
    %p30 = scmp.ge.s32.totalorder %s29, 1
    %s31 = scalar_select %p30, 0, %s29
    %s32 = sadd.s32 1, %s23
    %s33 = scalar_select %p30, %s32, %s23
    %p34 = scmp.ge.s32.totalorder %s33, 2
    %s35 = scalar_select %p34, 0, %s33
    %s36 = ssub.s32 %s23, %s35
    %p37 = scmp.eq.s32.totalorder %s36, 0
    %s39 = sadd.s32 %s38, 1
    %s40 = scalar_select %p37, %s38, %s39
    %p43 = pneg %p37
    %p44 = scmp.eq.s32.totalorder %s16, 1
    %p45 = por %p43, %p44
    %p46 = scmp.ne.s32.totalorder %s38, %s41
    %p47 = scmp.eq.s32.totalorder %s16, 0
    %p48 = por %p46, %p47
    %p49 = scmp.ne.s32.totalorder %s38, %s41
    %p50 = scmp.eq.s32.totalorder %s21, 1
    %p51 = por %p49, %p50
    %p52 = scmp.ne.s32.totalorder %s41, %s42
    %p53 = scmp.eq.s32.totalorder %s21, 0
    %p54 = por %p52, %p53
    %p55 = scmp.ne.s32.totalorder %s41, %s42
    %p56 = scmp.eq.s32.totalorder %s22, 1
    %p57 = por %p55, %p56
    %p59 = scmp.ne.s32.totalorder %s42, %s58
    %p60 = scmp.eq.s32.totalorder %s22, 0
    %p61 = por %p59, %p60
    %s63 = sadd.s32 %s62, 1
    %p66 = scmp.eq.s32.totalorder %s16, 1
    %p67 = scmp.ne.s32.totalorder %s62, %s64
    %p68 = scmp.eq.s32.totalorder %s16, 0
    %p69 = por %p67, %p68
    %p70 = scmp.ne.s32.totalorder %s62, %s64
    %p71 = scmp.eq.s32.totalorder %s21, 1
    %p72 = por %p70, %p71
    %p73 = scmp.ne.s32.totalorder %s64, %s65
    %p74 = scmp.eq.s32.totalorder %s21, 0
    %p75 = por %p73, %p74
    %p76 = scmp.ne.s32.totalorder %s64, %s65
    %p77 = scmp.eq.s32.totalorder %s22, 1
    %p78 = por %p76, %p77
    %p80 = scmp.ne.s32.totalorder %s65, %s79
    %p81 = scmp.eq.s32.totalorder %s22, 0
    %p82 = por %p80, %p81
    %s84 = sadd.s32 %s83, 1
    %p87 = scmp.eq.s32.totalorder %s16, 1
    %p88 = scmp.ne.s32.totalorder %s83, %s85
    %p89 = scmp.eq.s32.totalorder %s16, 0
    %p90 = por %p88, %p89
    %p91 = scmp.ne.s32.totalorder %s83, %s85
    %p92 = scmp.eq.s32.totalorder %s21, 1
    %p93 = por %p91, %p92
    %p94 = scmp.ne.s32.totalorder %s85, %s86
    %p95 = scmp.eq.s32.totalorder %s21, 0
    %p96 = por %p94, %p95
    %p97 = scmp.ne.s32.totalorder %s85, %s86
    %p98 = scmp.eq.s32.totalorder %s22, 1
    %p99 = por %p97, %p98
    %p101 = scmp.ne.s32.totalorder %s86, %s100
    %p102 = scmp.eq.s32.totalorder %s22, 0
    %p103 = por %p101, %p102
    %s105 = sadd.s32 %s104, 1
    %p108 = scmp.eq.s32.totalorder %s16, 1
    %p109 = scmp.ne.s32.totalorder %s104, %s106
    %p110 = scmp.eq.s32.totalorder %s16, 0
    %p111 = por %p109, %p110
    %p112 = scmp.ne.s32.totalorder %s104, %s106
    %p113 = scmp.eq.s32.totalorder %s21, 1
    %p114 = por %p112, %p113
    %p115 = scmp.ne.s32.totalorder %s106, %s107
    %p116 = scmp.eq.s32.totalorder %s21, 0
    %p117 = por %p115, %p116
    %p118 = scmp.ne.s32.totalorder %s106, %s107
    %p119 = scmp.eq.s32.totalorder %s22, 1
    %p120 = por %p118, %p119
    %p122 = scmp.ne.s32.totalorder %s107, %s121
    %p123 = scmp.eq.s32.totalorder %s22, 0
    %p124 = por %p122, %p123
    %s126 = sadd.s32 %s125, 1
    %p129 = scmp.eq.s32.totalorder %s16, 1
    %p130 = scmp.ne.s32.totalorder %s125, %s127
    %p131 = scmp.eq.s32.totalorder %s16, 0
    %p132 = por %p130, %p131
    %p133 = scmp.ne.s32.totalorder %s125, %s127
    %p134 = scmp.eq.s32.totalorder %s21, 1
    %p135 = por %p133, %p134
    %p136 = scmp.ne.s32.totalorder %s127, %s128
    %p137 = scmp.eq.s32.totalorder %s21, 0
    %p138 = por %p136, %p137
    %p139 = scmp.ne.s32.totalorder %s127, %s128
    %p140 = scmp.eq.s32.totalorder %s22, 1
    %p141 = por %p139, %p140
    %p143 = scmp.ne.s32.totalorder %s128, %s142
    %p144 = scmp.eq.s32.totalorder %s22, 0
    %p145 = por %p143, %p144
    %s147 = sadd.s32 %s146, 1
    %p150 = scmp.eq.s32.totalorder %s16, 1
    %p151 = scmp.ne.s32.totalorder %s146, %s148
    %p152 = scmp.eq.s32.totalorder %s16, 0
    %p153 = por %p151, %p152
    %p154 = scmp.ne.s32.totalorder %s146, %s148
    %p155 = scmp.eq.s32.totalorder %s21, 1
    %p156 = por %p154, %p155
    %p157 = scmp.ne.s32.totalorder %s148, %s149
    %p158 = scmp.eq.s32.totalorder %s21, 0
    %p159 = por %p157, %p158
    %p160 = scmp.ne.s32.totalorder %s148, %s149
    %p161 = scmp.eq.s32.totalorder %s22, 1
    %p162 = por %p160, %p161
    %p164 = scmp.ne.s32.totalorder %s149, %s163
    %p165 = scmp.eq.s32.totalorder %s22, 0
    %p166 = por %p164, %p165
    %s168 = sadd.s32 %s167, 1
    %p171 = scmp.eq.s32.totalorder %s16, 1
    %p172 = scmp.ne.s32.totalorder %s167, %s169
    %p173 = scmp.eq.s32.totalorder %s16, 0
    %p174 = por %p172, %p173
    %p175 = scmp.ne.s32.totalorder %s167, %s169
    %p176 = scmp.eq.s32.totalorder %s21, 1
    %p177 = por %p175, %p176
    %p178 = scmp.ne.s32.totalorder %s169, %s170
    %p179 = scmp.eq.s32.totalorder %s21, 0
    %p180 = por %p178, %p179
    %p181 = scmp.ne.s32.totalorder %s169, %s170
    %p182 = scmp.eq.s32.totalorder %s22, 1
    %p183 = por %p181, %p182
    %p185 = scmp.ne.s32.totalorder %s170, %s184
    %p186 = scmp.eq.s32.totalorder %s22, 0
    %p187 = por %p185, %p186
    %s189 = sadd.s32 %s188, 1
    %p192 = scmp.eq.s32.totalorder %s16, 1
    %p193 = scmp.ne.s32.totalorder %s188, %s190
    %p194 = scmp.eq.s32.totalorder %s16, 0
    %p195 = por %p193, %p194
    %p196 = scmp.ne.s32.totalorder %s188, %s190
    %p197 = scmp.eq.s32.totalorder %s21, 1
    %p198 = por %p196, %p197
    %p199 = scmp.ne.s32.totalorder %s190, %s191
    %p200 = scmp.eq.s32.totalorder %s21, 0
    %p201 = por %p199, %p200
    %p202 = scmp.ne.s32.totalorder %s190, %s191
    %p203 = scmp.eq.s32.totalorder %s22, 1
    %p204 = por %p202, %p203
    %p206 = scmp.ne.s32.totalorder %s191, %s205
    %p207 = scmp.eq.s32.totalorder %s22, 0
    %p208 = por %p206, %p207
    %s210 = sadd.s32 %s209, 1
    %p213 = scmp.eq.s32.totalorder %s16, 1
    %p214 = scmp.ne.s32.totalorder %s209, %s211
    %p215 = scmp.eq.s32.totalorder %s16, 0
    %p216 = por %p214, %p215
    %p217 = scmp.ne.s32.totalorder %s209, %s211
    %p218 = scmp.eq.s32.totalorder %s21, 1
    %p219 = por %p217, %p218
    %p220 = scmp.ne.s32.totalorder %s211, %s212
    %p221 = scmp.eq.s32.totalorder %s21, 0
    %p222 = por %p220, %p221
    %p223 = scmp.ne.s32.totalorder %s211, %s212
    %p224 = scmp.eq.s32.totalorder %s22, 1
    %p225 = por %p223, %p224
    %p227 = scmp.ne.s32.totalorder %s212, %s226
    %p228 = scmp.eq.s32.totalorder %s22, 0
    %p229 = por %p227, %p228
    %s231 = sadd.s32 %s230, 1
    %p234 = scmp.eq.s32.totalorder %s16, 1
    %p235 = scmp.ne.s32.totalorder %s230, %s232
    %p236 = scmp.eq.s32.totalorder %s16, 0
    %p237 = por %p235, %p236
    %p238 = scmp.ne.s32.totalorder %s230, %s232
    %p239 = scmp.eq.s32.totalorder %s21, 1
    %p240 = por %p238, %p239
    %p241 = scmp.ne.s32.totalorder %s232, %s233
    %p242 = scmp.eq.s32.totalorder %s21, 0
    %p243 = por %p241, %p242
    %p244 = scmp.ne.s32.totalorder %s232, %s233
    %p245 = scmp.eq.s32.totalorder %s22, 1
    %p246 = por %p244, %p245
    %p248 = scmp.ne.s32.totalorder %s233, %s247
    %p249 = scmp.eq.s32.totalorder %s22, 0
    %p250 = por %p248, %p249
    %s251 = ssub.s32 %s23, %s35
    %s252 = ssub.s32 %s24, %s31
    %s253 = sor.u32 %s251, %s252
    %p254 = scmp.eq.s32.totalorder %s253, 0
    %s256 = sadd.s32 %s255, 1
    %s257 = scalar_select %p254, %s255, %s256
    %p260 = pneg %p254
    %p261 = scmp.eq.s32.totalorder %s16, 1
    %p262 = por %p260, %p261
    %p263 = scmp.ne.s32.totalorder %s255, %s258
    %p264 = scmp.eq.s32.totalorder %s16, 0
    %p265 = por %p263, %p264
    %p266 = scmp.ne.s32.totalorder %s255, %s258
    %p267 = scmp.eq.s32.totalorder %s21, 1
    %p268 = por %p266, %p267
    %p269 = scmp.ne.s32.totalorder %s258, %s259
    %p270 = scmp.eq.s32.totalorder %s21, 0
    %p271 = por %p269, %p270
    %p272 = scmp.ne.s32.totalorder %s258, %s259
    %p273 = scmp.eq.s32.totalorder %s22, 1
    %p274 = por %p272, %p273
    %p276 = scmp.ne.s32.totalorder %s259, %s275
    %p277 = scmp.eq.s32.totalorder %s22, 0
    %p278 = por %p276, %p277
    %p279 = scmp.le.s32.totalorder 1, %s16
    %p280 = scmp.lt.s32.totalorder %s16, 3
    %p281 = pnand %p279, %p280
    %p282 = pneg %p281
    // Predicated region
    $region9: #{tpu_custom_call.1} parent=5 // pred_check
      _
    $region10: #{tpu_custom_call.1} parent=5 // pred_check_branch
      %284 = sbr.rel (%p281) target = $region12
    $region11: #{tpu_custom_call.1} parent=5 // pred_region
      %s285 = ssub.s32 %s16, 1
      // Predicated region
      $region13: #{tpu_custom_call.1} parent=11 // pred_check
        %p286 = pneg %p75
      $region14: #{tpu_custom_call.1} parent=11 // pred_check_branch
        %288 = sbr.rel (%p286) target = $region16
      $region15: #{tpu_custom_call.1} parent=11 // pred_region
        _
      $region16: #{tpu_custom_call.1} parent=11 // pred_fallthru
        _
      // Predicated region
      $region17: #{tpu_custom_call.1} parent=11 // pred_check
        %p289 = pneg %p96
      $region18: #{tpu_custom_call.1} parent=11 // pred_check_branch
        %291 = sbr.rel (%p289) target = $region20
      $region19: #{tpu_custom_call.1} parent=11 // pred_region
        _
      $region20: #{tpu_custom_call.1} parent=11 // pred_fallthru
        _
      // Predicated region
      $region21: #{tpu_custom_call.1} parent=11 // pred_check
        %p292 = pneg %p117
      $region22: #{tpu_custom_call.1} parent=11 // pred_check_branch
        %294 = sbr.rel (%p292) target = $region24
      $region23: #{tpu_custom_call.1} parent=11 // pred_region
        _
      $region24: #{tpu_custom_call.1} parent=11 // pred_fallthru
        _
      // Predicated region
      $region25: #{tpu_custom_call.1} parent=11 // pred_check
        %p295 = pneg %p138
      $region26: #{tpu_custom_call.1} parent=11 // pred_check_branch
        %297 = sbr.rel (%p295) target = $region28
      $region27: #{tpu_custom_call.1} parent=11 // pred_region
        _
      $region28: #{tpu_custom_call.1} parent=11 // pred_fallthru
        _
      // Predicated region
      $region29: #{tpu_custom_call.1} parent=11 // pred_check
        %p298 = pneg %p159
      $region30: #{tpu_custom_call.1} parent=11 // pred_check_branch
        %300 = sbr.rel (%p298) target = $region32
      $region31: #{tpu_custom_call.1} parent=11 // pred_region
        _
      $region32: #{tpu_custom_call.1} parent=11 // pred_fallthru
        _
      // Predicated region
      $region33: #{tpu_custom_call.1} parent=11 // pred_check
        %p301 = pneg %p180
      $region34: #{tpu_custom_call.1} parent=11 // pred_check_branch
        %303 = sbr.rel (%p301) target = $region36
      $region35: #{tpu_custom_call.1} parent=11 // pred_region
        _
      $region36: #{tpu_custom_call.1} parent=11 // pred_fallthru
        _
      // Predicated region
      $region37: #{tpu_custom_call.1} parent=11 // pred_check
        %p304 = pneg %p201
      $region38: #{tpu_custom_call.1} parent=11 // pred_check_branch
        %306 = sbr.rel (%p304) target = $region40
      $region39: #{tpu_custom_call.1} parent=11 // pred_region
        _
      $region40: #{tpu_custom_call.1} parent=11 // pred_fallthru
        _
      // Predicated region
      $region41: #{tpu_custom_call.1} parent=11 // pred_check
        %p307 = pneg %p222
      $region42: #{tpu_custom_call.1} parent=11 // pred_check_branch
        %309 = sbr.rel (%p307) target = $region44
      $region43: #{tpu_custom_call.1} parent=11 // pred_region
        _
      $region44: #{tpu_custom_call.1} parent=11 // pred_fallthru
        _
      // Predicated region
      $region45: #{tpu_custom_call.1} parent=11 // pred_check
        %p310 = pneg %p243
      $region46: #{tpu_custom_call.1} parent=11 // pred_check_branch
        %312 = sbr.rel (%p310) target = $region48
      $region47: #{tpu_custom_call.1} parent=11 // pred_region
        _
      $region48: #{tpu_custom_call.1} parent=11 // pred_fallthru
        _
    $region12: #{tpu_custom_call.1} parent=5 // pred_fallthru
      _
    %p313 = scmp.lt.s32.totalorder %s16, 2
    // Predicated region
    $region49: #{tpu_custom_call.1} parent=5 // pred_check
      %p314 = pneg %p313
    $region50: #{tpu_custom_call.1} parent=5 // pred_check_branch
      %316 = sbr.rel (%p314) target = $region52
    $region51: #{tpu_custom_call.1} parent=5 // pred_region
      // Predicated region
      $region53: #{tpu_custom_call.1} parent=51 // pred_check
        %p317 = pneg %p48
      $region54: #{tpu_custom_call.1} parent=51 // pred_check_branch
        %319 = sbr.rel (%p317) target = $region56
      $region55: #{tpu_custom_call.1} parent=51 // pred_region
        %p320 = scmp.lt.s32.totalorder %s23, 1
        %s321 = scalar_select %p320, %s23, 1
        %s322 = smul.addr %s321, 44
        %s323 = smul.addr %s322, 8
        %s324 = scalar_lea.vmem %s0, %s323
      $region56: #{tpu_custom_call.1} parent=51 // pred_fallthru
        _
    $region52: #{tpu_custom_call.1} parent=5 // pred_fallthru
      _
    %p325 = scmp.le.s32.totalorder 1, %s16
    %p326 = scmp.lt.s32.totalorder %s16, 3
    %p327 = pnand %p325, %p326
    %p328 = pneg %p327
    // Predicated region
    $region57: #{tpu_custom_call.1} parent=5 // pred_check
      _
    $region58: #{tpu_custom_call.1} parent=5 // pred_check_branch
      %330 = sbr.rel (%p327) target = $region60
    $region59: #{tpu_custom_call.1} parent=5 // pred_region
      %s331 = ssub.s32 %s16, 1
      %p332 = scmp.lt.s32.totalorder %s25, 1
      %s333 = scalar_select %p332, %s25, 1
      %s334 = smul.addr %s333, 44
      %s335 = smul.addr %s334, 8
      %s336 = scalar_lea.vmem %s0, %s335
      %p337 = pneg %p54
      %p338 = pneg %p51
      %p339 = pneg %p75
      %p340 = pneg %p72
      %p341 = pneg %p96
      %p342 = pneg %p93
      %p343 = pneg %p117
      %p344 = pneg %p114
      %p345 = pneg %p138
      %p346 = pneg %p135
      %p347 = pneg %p159
      %p348 = pneg %p156
      %p349 = pneg %p180
      %p350 = pneg %p177
      %p351 = pneg %p201
      %p352 = pneg %p198
      %p353 = pneg %p222
      %p354 = pneg %p219
      %p355 = pneg %p243
      %p356 = pneg %p240
      %p357 = pneg %p271
      %p358 = pneg %p268
      %s359 = smul.u32 16, %s26
      %p360 = scmp.lt.s32.totalorder %s25, 1
      %s361 = scalar_select %p360, %s25, 1
      %p362 = scmp.lt.s32.totalorder %s359, 15
      %s363 = scalar_select %p362, %s359, 15
      %s364 = smul.addr %s363, 2
      %s365 = smul.addr %s361, 32
      %s366 = sadd.s32 %s364, %s365
      %s367 = smul.addr %s366, 8
      %s368 = scalar_lea.vmem %s10, %s367
      %p369 = scmp.lt.s32.totalorder %s25, 1
      %s370 = scalar_select %p369, %s25, 1
      %s371 = smul.addr %s370, 44
      %s372 = smul.addr %s371, 8
      %s373 = scalar_lea.vmem %s0, %s372
      %s374 = smul.u32 16, %s26
      %p375 = scmp.lt.s32.totalorder %s25, 1
      %s376 = scalar_select %p375, %s25, 1
      %p377 = scmp.lt.s32.totalorder %s374, 15
      %s378 = scalar_select %p377, %s374, 15
      %s379 = smul.addr %s378, 2
      %s380 = smul.addr %s376, 32
      %s381 = sadd.s32 %s379, %s380
      %s382 = smul.addr %s381, 8
      %s383 = scalar_lea.vmem %s10, %s382
      %s384 = smul.u32 16, %s26
      %s385 = smul.u32 %s26, 16
      %s386 = smul.u32 %s385, 16
      %s387 = scalar_lea.vmem %s373, %s386
      %v388 = vld [vmem:[%s387] sm:$0xff]
      %v389 = vld [vmem:[%s387 + $0x8] sm:$0xff]
      %v390 = vld [vmem:[%s387 + $0x10] sm:$0xff]
      %v391 = vld [vmem:[%s387 + $0x18] sm:$0xff]
      %v392 = vld [vmem:[%s387 + $0x20] sm:$0xff]
      %v393 = vld [vmem:[%s387 + $0x28] sm:$0xff]
      %v394 = vld [vmem:[%s387 + $0x30] sm:$0xff]
      %v395 = vld [vmem:[%s387 + $0x38] sm:$0xff]
      %v396 = vld [vmem:[%s387 + $0x40] sm:$0xff]
      %v397 = vld [vmem:[%s387 + $0x48] sm:$0xff]
      %v398 = vld [vmem:[%s387 + $0x50] sm:$0xff]
      %v399 = vld [vmem:[%s387 + $0x58] sm:$0xff]
      %v400 = vld [vmem:[%s387 + $0x60] sm:$0xff]
      %v401 = vld [vmem:[%s387 + $0x68] sm:$0xff]
      %v402 = vld [vmem:[%s387 + $0x70] sm:$0xff]
      %v403 = vld [vmem:[%s387 + $0x78] sm:$0xff]
      %v404 = vld [vmem:[%s387 + $0x80] sm:$0xff]
      %v405 = vld [vmem:[%s387 + $0x88] sm:$0xff]
      %v406 = vld [vmem:[%s387 + $0x90] sm:$0xff]
      %v407 = vld [vmem:[%s387 + $0x98] sm:$0xff]
      %v408 = vld [vmem:[%s387 + $0xa0] sm:$0xff]
      %v409 = vld [vmem:[%s387 + $0xa8] sm:$0xff]
      %v410 = vld [vmem:[%s387 + $0xb0] sm:$0xff]
      %v411 = vld [vmem:[%s387 + $0xb8] sm:$0xff]
      %v412 = vld [vmem:[%s387 + $0xc0] sm:$0xff]
      %v413 = vld [vmem:[%s387 + $0xc8] sm:$0xff]
      %v414 = vld [vmem:[%s387 + $0xd0] sm:$0xff]
      %v415 = vld [vmem:[%s387 + $0xd8] sm:$0xff]
      %v416 = vld [vmem:[%s387 + $0xe0] sm:$0xff]
      %v417 = vld [vmem:[%s387 + $0xe8] sm:$0xff]
      %v418 = vld [vmem:[%s387 + $0xf0] sm:$0xff]
      %v419 = vld [vmem:[%s387 + $0xf8] sm:$0xff]
      %v420 = vld [vmem:[%s387 + $0x100] sm:$0xff]
      %v421 = vld [vmem:[%s387 + $0x108] sm:$0xff]
      %v422 = vld [vmem:[%s387 + $0x110] sm:$0xff]
      %v423 = vld [vmem:[%s387 + $0x118] sm:$0xff]
      %v424 = vld [vmem:[%s387 + $0x120] sm:$0xff]
      %v425 = vld [vmem:[%s387 + $0x128] sm:$0xff]
      %v426 = vld [vmem:[%s387 + $0x130] sm:$0xff]
      %v427 = vld [vmem:[%s387 + $0x138] sm:$0xff]
      %v428 = vld [vmem:[%s387 + $0x140] sm:$0xff]
      %v429 = vld [vmem:[%s387 + $0x148] sm:$0xff]
      %v430 = vld [vmem:[%s387 + $0x150] sm:$0xff]
      %v431 = vld [vmem:[%s387 + $0x158] sm:$0xff]
      %v432 = vld [vmem:[%s1] sm:$0xf]
      %vm433 = vcmask 31744
      %v435 = vsel %vm433, %v388, 0
      %v438 = vsel %vm433, %v389, 0
      %v441 = vsel %vm433, %v390, 0
      %v444 = vsel %vm433, %v391, 0
      %v447 = vsel %vm433, %v392, 0
      %v450 = vsel %vm433, %v393, 0
      %v453 = vsel %vm433, %v394, 0
      %v456 = vsel %vm433, %v395, 0
      %v459 = vsel %vm433, %v396, 0
      %v462 = vsel %vm433, %v397, 0
      %v465 = vsel %vm433, %v398, 0
      %v468 = vsel %vm433, %v399, 0
      %v471 = vsel %vm433, %v400, 0
      %v474 = vsel %vm433, %v401, 0
      %v477 = vsel %vm433, %v402, 0
      %v480 = vsel %vm433, %v403, 0
      %v483 = vsel %vm433, %v404, 0
      %v486 = vsel %vm433, %v405, 0
      %v489 = vsel %vm433, %v406, 0
      %v492 = vsel %vm433, %v407, 0
      %v495 = vsel %vm433, %v408, 0
      %v498 = vsel %vm433, %v409, 0
      %v501 = vsel %vm433, %v410, 0
      %v504 = vsel %vm433, %v411, 0
      %v507 = vsel %vm433, %v412, 0
      %v510 = vsel %vm433, %v413, 0
      %v513 = vsel %vm433, %v414, 0
      %v516 = vsel %vm433, %v415, 0
      %v519 = vsel %vm433, %v416, 0
      %v522 = vsel %vm433, %v417, 0
      %v525 = vsel %vm433, %v418, 0
      %v528 = vsel %vm433, %v419, 0
      %v531 = vsel %vm433, %v420, 0
      %v534 = vsel %vm433, %v421, 0
      %v537 = vsel %vm433, %v422, 0
      %v540 = vsel %vm433, %v423, 0
      %v543 = vsel %vm433, %v424, 0
      %v546 = vsel %vm433, %v425, 0
      %v549 = vsel %vm433, %v426, 0
      %v552 = vsel %vm433, %v427, 0
      %v555 = vsel %vm433, %v428, 0
      %v558 = vsel %vm433, %v429, 0
      %v561 = vsel %vm433, %v430, 0
      %v564 = vsel %vm433, %v431, 0
      %vm566 = vcmask 1043456
      %v568 = vsel %vm566, %v432, 0
      %570 = vmatprep.subr.mxu0 0.0
      %571 = vmatpush1.msra.mxu0 %v568
      %572 = vmatprep.subr.mxu0 0.0
      %573 = vmatpush1.msra.mxu0 0.0
      %574 = vmatprep.subr.mxu0 0.0
      %575 = vmatpush1.msra.mxu0 0.0
      %576 = vmatprep.subr.mxu0 0.0
      %577 = vmatpush1.msra.mxu0 0.0
      %578 = vmatprep.subr.mxu0 0.0
      %579 = vmatpush1.msra.mxu0 0.0
      %580 = vmatprep.subr.mxu0 0.0
      %581 = vmatpush1.msra.mxu0 0.0
      %582 = vmatprep.subr.mxu0 0.0
      %583 = vmatpush1.msra.mxu0 0.0
      %584 = vmatprep.subr.mxu0 0.0
      %585 = vmatpush1.msra.mxu0 0.0
      %586 = vmatprep.subr.mxu0 0.0
      %587 = vmatpush1.msra.mxu0 0.0
      %588 = vmatprep.subr.mxu0 0.0
      %589 = vmatpush1.msra.mxu0 0.0
      %590 = vmatprep.subr.mxu0 0.0
      %591 = vmatpush1.msra.mxu0 0.0
      %592 = vmatprep.subr.mxu0 0.0
      %593 = vmatpush1.msra.mxu0 0.0
      %594 = vmatprep.subr.mxu0 0.0
      %595 = vmatpush1.msra.mxu0 0.0
      %596 = vmatprep.subr.mxu0 0.0
      %597 = vmatpush1.msra.mxu0 0.0
      %598 = vmatprep.subr.mxu0 0.0
      %599 = vmatpush1.msra.mxu0 0.0
      %600 = vmatprep.subr.mxu0 0.0
      %601 = vmatpush1.msra.mxu0 0.0
      %602 = vmatprep.subr.mxu0 0.0
      %603 = vmatpush1.msra.mxu0 0.0
      %604 = vmatprep.subr.mxu0 0.0
      %605 = vmatpush1.msra.mxu0 0.0
      %606 = vmatprep.subr.mxu0 0.0
      %607 = vmatpush1.msra.mxu0 0.0
      %608 = vmatprep.subr.mxu0 0.0
      %609 = vmatpush1.msra.mxu0 0.0
      %610 = vmatprep.subr.mxu0 0.0
      %611 = vmatpush1.msra.mxu0 0.0
      %612 = vmatprep.subr.mxu0 0.0
      %613 = vmatpush1.msra.mxu0 0.0
      %614 = vmatprep.subr.mxu0 0.0
      %615 = vmatpush1.msra.mxu0 0.0
      %616 = vmatprep.subr.mxu0 0.0
      %617 = vmatpush1.msra.mxu0 0.0
      %618 = vmatprep.subr.mxu0 0.0
      %619 = vmatpush1.msra.mxu0 0.0
      %620 = vmatprep.subr.mxu0 0.0
      %621 = vmatpush1.msra.mxu0 0.0
      %622 = vmatprep.subr.mxu0 0.0
      %623 = vmatpush1.msra.mxu0 0.0
      %624 = vmatprep.subr.mxu0 0.0
      %625 = vmatpush1.msra.mxu0 0.0
      %626 = vmatprep.subr.mxu0 0.0
      %627 = vmatpush1.msra.mxu0 0.0
      %628 = vmatprep.subr.mxu0 0.0
      %629 = vmatpush1.msra.mxu0 0.0
      %630 = vmatprep.subr.mxu0 0.0
      %631 = vmatpush1.msra.mxu0 0.0
      %632 = vmatprep.subr.mxu0 0.0
      %633 = vmatpush1.msra.mxu0 0.0
      %634 = vmatprep.mubr.f32.mxu0 0.0
      %635 = vmatmul.mubr.f32.gmra.mrb[0].mxu0 %v435
      %v636 = vpop.f32.mrb[0].mxu0
      %v637 = vadd.f32 0.0, %v636
      %v638 = vpop.f32.mrb[0].mxu0
      %639 = vmatprep.mubr.f32.mxu0 0.0
      %640 = vmatmul.mubr.f32.gmra.mrb[0].mxu0 %v438
      %v641 = vpop.f32.mrb[0].mxu0
      %v642 = vadd.f32 0.0, %v641
      %v643 = vpop.f32.mrb[0].mxu0
      %644 = vmatprep.mubr.f32.mxu0 0.0
      %645 = vmatmul.mubr.f32.gmra.mrb[0].mxu0 %v441
      %v646 = vpop.f32.mrb[0].mxu0
      %v647 = vadd.f32 0.0, %v646
      %v648 = vpop.f32.mrb[0].mxu0
      %649 = vmatprep.mubr.f32.mxu0 0.0
      %650 = vmatmul.mubr.f32.gmra.mrb[0].mxu0 %v444
      %v651 = vpop.f32.mrb[0].mxu0
      %v652 = vadd.f32 0.0, %v651
      %v653 = vpop.f32.mrb[0].mxu0
      %654 = vmatprep.mubr.f32.mxu0 0.0
      %655 = vmatmul.mubr.f32.gmra.mrb[0].mxu0 %v447
      %v656 = vpop.f32.mrb[0].mxu0
      %v657 = vadd.f32 0.0, %v656
      %v658 = vpop.f32.mrb[0].mxu0
      %659 = vmatprep.mubr.f32.mxu0 0.0
      %660 = vmatmul.mubr.f32.gmra.mrb[0].mxu0 %v450
      %v661 = vpop.f32.mrb[0].mxu0
      %v662 = vadd.f32 0.0, %v661
      %v663 = vpop.f32.mrb[0].mxu0
      %664 = vmatprep.mubr.f32.mxu0 0.0
      %665 = vmatmul.mubr.f32.gmra.mrb[0].mxu0 %v453
      %v666 = vpop.f32.mrb[0].mxu0
      %v667 = vadd.f32 0.0, %v666
      %v668 = vpop.f32.mrb[0].mxu0
      %669 = vmatprep.mubr.f32.mxu0 0.0
      %670 = vmatmul.mubr.f32.gmra.mrb[0].mxu0 %v456
      %v671 = vpop.f32.mrb[0].mxu0
      %v672 = vadd.f32 0.0, %v671
      %v673 = vpop.f32.mrb[0].mxu0
      %674 = vmatprep.mubr.f32.mxu0 0.0
      %675 = vmatmul.mubr.f32.gmra.mrb[0].mxu0 %v459
      %v676 = vpop.f32.mrb[0].mxu0
      %v677 = vadd.f32 0.0, %v676
      %v678 = vpop.f32.mrb[0].mxu0
      %679 = vmatprep.mubr.f32.mxu0 0.0
      %680 = vmatmul.mubr.f32.gmra.mrb[0].mxu0 %v462
      %v681 = vpop.f32.mrb[0].mxu0
      %v682 = vadd.f32 0.0, %v681
      %v683 = vpop.f32.mrb[0].mxu0
      %684 = vmatprep.mubr.f32.mxu0 0.0
      %685 = vmatmul.mubr.f32.gmra.mrb[0].mxu0 %v465
      %v686 = vpop.f32.mrb[0].mxu0
      %v687 = vadd.f32 0.0, %v686
      %v688 = vpop.f32.mrb[0].mxu0
      %689 = vmatprep.mubr.f32.mxu0 0.0
      %690 = vmatmul.mubr.f32.gmra.mrb[0].mxu0 %v468
      %v691 = vpop.f32.mrb[0].mxu0
      %v692 = vadd.f32 0.0, %v691
      %v693 = vpop.f32.mrb[0].mxu0
      %694 = vmatprep.mubr.f32.mxu0 0.0
      %695 = vmatmul.mubr.f32.gmra.mrb[0].mxu0 %v471
      %v696 = vpop.f32.mrb[0].mxu0
      %v697 = vadd.f32 0.0, %v696
      %v698 = vpop.f32.mrb[0].mxu0
      %699 = vmatprep.mubr.f32.mxu0 0.0
      %700 = vmatmul.mubr.f32.gmra.mrb[0].mxu0 %v474
      %v701 = vpop.f32.mrb[0].mxu0
      %v702 = vadd.f32 0.0, %v701
      %v703 = vpop.f32.mrb[0].mxu0
      %704 = vmatprep.mubr.f32.mxu0 0.0
      %705 = vmatmul.mubr.f32.gmra.mrb[0].mxu0 %v477
      %v706 = vpop.f32.mrb[0].mxu0
      %v707 = vadd.f32 0.0, %v706
      %v708 = vpop.f32.mrb[0].mxu0
      %709 = vmatprep.mubr.f32.mxu0 0.0
      %710 = vmatmul.mubr.f32.gmra.mrb[0].mxu0 %v480
      %v711 = vpop.f32.mrb[0].mxu0
      %v712 = vadd.f32 0.0, %v711
      %v713 = vpop.f32.mrb[0].mxu0
      %714 = vmatprep.mubr.f32.mxu0 0.0
      %715 = vmatmul.mubr.f32.gmra.mrb[0].mxu0 %v483
      %v716 = vpop.f32.mrb[0].mxu0
      %v717 = vadd.f32 0.0, %v716
      %v718 = vpop.f32.mrb[0].mxu0
      %719 = vmatprep.mubr.f32.mxu0 0.0
      %720 = vmatmul.mubr.f32.gmra.mrb[0].mxu0 %v486
      %v721 = vpop.f32.mrb[0].mxu0
      %v722 = vadd.f32 0.0, %v721
      %v723 = vpop.f32.mrb[0].mxu0
      %724 = vmatprep.mubr.f32.mxu0 0.0
      %725 = vmatmul.mubr.f32.gmra.mrb[0].mxu0 %v489
      %v726 = vpop.f32.mrb[0].mxu0
      %v727 = vadd.f32 0.0, %v726
      %v728 = vpop.f32.mrb[0].mxu0
      %729 = vmatprep.mubr.f32.mxu0 0.0
      %730 = vmatmul.mubr.f32.gmra.mrb[0].mxu0 %v492
      %v731 = vpop.f32.mrb[0].mxu0
      %v732 = vadd.f32 0.0, %v731
      %v733 = vpop.f32.mrb[0].mxu0
      %734 = vmatprep.mubr.f32.mxu0 0.0
      %735 = vmatmul.mubr.f32.gmra.mrb[0].mxu0 %v495
      %v736 = vpop.f32.mrb[0].mxu0
      %v737 = vadd.f32 0.0, %v736
      %v738 = vpop.f32.mrb[0].mxu0
      %739 = vmatprep.mubr.f32.mxu0 0.0
      %740 = vmatmul.mubr.f32.gmra.mrb[0].mxu0 %v498
      %v741 = vpop.f32.mrb[0].mxu0
      %v742 = vadd.f32 0.0, %v741
      %v743 = vpop.f32.mrb[0].mxu0
      %744 = vmatprep.mubr.f32.mxu0 0.0
      %745 = vmatmul.mubr.f32.gmra.mrb[0].mxu0 %v501
      %v746 = vpop.f32.mrb[0].mxu0
      %v747 = vadd.f32 0.0, %v746
      %v748 = vpop.f32.mrb[0].mxu0
      %749 = vmatprep.mubr.f32.mxu0 0.0
      %750 = vmatmul.mubr.f32.gmra.mrb[0].mxu0 %v504
      %v751 = vpop.f32.mrb[0].mxu0
      %v752 = vadd.f32 0.0, %v751
      %v753 = vpop.f32.mrb[0].mxu0
      %754 = vmatprep.mubr.f32.mxu0 0.0
      %755 = vmatmul.mubr.f32.gmra.mrb[0].mxu0 %v507
      %v756 = vpop.f32.mrb[0].mxu0
      %v757 = vadd.f32 0.0, %v756
      %v758 = vpop.f32.mrb[0].mxu0
      %759 = vmatprep.mubr.f32.mxu0 0.0
      %760 = vmatmul.mubr.f32.gmra.mrb[0].mxu0 %v510
      %v761 = vpop.f32.mrb[0].mxu0
      %v762 = vadd.f32 0.0, %v761
      %v763 = vpop.f32.mrb[0].mxu0
      %764 = vmatprep.mubr.f32.mxu0 0.0
      %765 = vmatmul.mubr.f32.gmra.mrb[0].mxu0 %v513
      %v766 = vpop.f32.mrb[0].mxu0
      %v767 = vadd.f32 0.0, %v766
      %v768 = vpop.f32.mrb[0].mxu0
      %769 = vmatprep.mubr.f32.mxu0 0.0
      %770 = vmatmul.mubr.f32.gmra.mrb[0].mxu0 %v516
      %v771 = vpop.f32.mrb[0].mxu0
      %v772 = vadd.f32 0.0, %v771
      %v773 = vpop.f32.mrb[0].mxu0
      %774 = vmatprep.mubr.f32.mxu0 0.0
      %775 = vmatmul.mubr.f32.gmra.mrb[0].mxu0 %v519
      %v776 = vpop.f32.mrb[0].mxu0
      %v777 = vadd.f32 0.0, %v776
      %v778 = vpop.f32.mrb[0].mxu0
      %779 = vmatprep.mubr.f32.mxu0 0.0
      %780 = vmatmul.mubr.f32.gmra.mrb[0].mxu0 %v522
      %v781 = vpop.f32.mrb[0].mxu0
      %v782 = vadd.f32 0.0, %v781
      %v783 = vpop.f32.mrb[0].mxu0
      %784 = vmatprep.mubr.f32.mxu0 0.0
      %785 = vmatmul.mubr.f32.gmra.mrb[0].mxu0 %v525
      %v786 = vpop.f32.mrb[0].mxu0
      %v787 = vadd.f32 0.0, %v786
      %v788 = vpop.f32.mrb[0].mxu0
      %789 = vmatprep.mubr.f32.mxu0 0.0
      %790 = vmatmul.mubr.f32.gmra.mrb[0].mxu0 %v528
      %v791 = vpop.f32.mrb[0].mxu0
      %v792 = vadd.f32 0.0, %v791
      %v793 = vpop.f32.mrb[0].mxu0
      %794 = vmatprep.mubr.f32.mxu0 0.0
      %795 = vmatmul.mubr.f32.gmra.mrb[0].mxu0 %v531
      %v796 = vpop.f32.mrb[0].mxu0
      %v797 = vadd.f32 0.0, %v796
      %v798 = vpop.f32.mrb[0].mxu0
      %799 = vmatprep.mubr.f32.mxu0 0.0
      %800 = vmatmul.mubr.f32.gmra.mrb[0].mxu0 %v534
      %v801 = vpop.f32.mrb[0].mxu0
      %v802 = vadd.f32 0.0, %v801
      %v803 = vpop.f32.mrb[0].mxu0
      %804 = vmatprep.mubr.f32.mxu0 0.0
      %805 = vmatmul.mubr.f32.gmra.mrb[0].mxu0 %v537
      %v806 = vpop.f32.mrb[0].mxu0
      %v807 = vadd.f32 0.0, %v806
      %v808 = vpop.f32.mrb[0].mxu0
      %809 = vmatprep.mubr.f32.mxu0 0.0
      %810 = vmatmul.mubr.f32.gmra.mrb[0].mxu0 %v540
      %v811 = vpop.f32.mrb[0].mxu0
      %v812 = vadd.f32 0.0, %v811
      %v813 = vpop.f32.mrb[0].mxu0
      %814 = vmatprep.mubr.f32.mxu0 0.0
      %815 = vmatmul.mubr.f32.gmra.mrb[0].mxu0 %v543
      %v816 = vpop.f32.mrb[0].mxu0
      %v817 = vadd.f32 0.0, %v816
      %v818 = vpop.f32.mrb[0].mxu0
      %819 = vmatprep.mubr.f32.mxu0 0.0
      %820 = vmatmul.mubr.f32.gmra.mrb[0].mxu0 %v546
      %v821 = vpop.f32.mrb[0].mxu0
      %v822 = vadd.f32 0.0, %v821
      %v823 = vpop.f32.mrb[0].mxu0
      %824 = vmatprep.mubr.f32.mxu0 0.0
      %825 = vmatmul.mubr.f32.gmra.mrb[0].mxu0 %v549
      %v826 = vpop.f32.mrb[0].mxu0
      %v827 = vadd.f32 0.0, %v826
      %v828 = vpop.f32.mrb[0].mxu0
      %829 = vmatprep.mubr.f32.mxu0 0.0
      %830 = vmatmul.mubr.f32.gmra.mrb[0].mxu0 %v552
      %v831 = vpop.f32.mrb[0].mxu0
      %v832 = vadd.f32 0.0, %v831
      %v833 = vpop.f32.mrb[0].mxu0
      %834 = vmatprep.mubr.f32.mxu0 0.0
      %835 = vmatmul.mubr.f32.gmra.mrb[0].mxu0 %v555
      %v836 = vpop.f32.mrb[0].mxu0
      %v837 = vadd.f32 0.0, %v836
      %v838 = vpop.f32.mrb[0].mxu0
      %839 = vmatprep.mubr.f32.mxu0 0.0
      %840 = vmatmul.mubr.f32.gmra.mrb[0].mxu0 %v558
      %v841 = vpop.f32.mrb[0].mxu0
      %v842 = vadd.f32 0.0, %v841
      %v843 = vpop.f32.mrb[0].mxu0
      %844 = vmatprep.mubr.f32.mxu0 0.0
      %845 = vmatmul.mubr.f32.gmra.mrb[0].mxu0 %v561
      %v846 = vpop.f32.mrb[0].mxu0
      %v847 = vadd.f32 0.0, %v846
      %v848 = vpop.f32.mrb[0].mxu0
      %849 = vmatprep.mubr.f32.mxu0 0.0
      %850 = vmatmul.mubr.f32.gmra.mrb[0].mxu0 %v564
      %v851 = vpop.f32.mrb[0].mxu0
      %v852 = vadd.f32 0.0, %v851
      %v853 = vpop.f32.mrb[0].mxu0
      %854 = vdwg.mxu0
      %v855 = vmul.f32 %v637, 0.5
      %v856 = vmul.f32 %v642, 0.5
      %v857 = vmul.f32 %v647, 0.5
      %v858 = vmul.f32 %v652, 0.5
      %v859 = vmul.f32 %v657, 0.5
      %v860 = vmul.f32 %v662, 0.5
      %v861 = vmul.f32 %v667, 0.5
      %v862 = vmul.f32 %v672, 0.5
      %v863 = vmul.f32 %v677, 0.5
      %v864 = vmul.f32 %v682, 0.5
      %v865 = vmul.f32 %v687, 0.5
      %v866 = vmul.f32 %v692, 0.5
      %v867 = vmul.f32 %v697, 0.5
      %v868 = vmul.f32 %v702, 0.5
      %v869 = vmul.f32 %v707, 0.5
      %v870 = vmul.f32 %v712, 0.5
      %v871 = vmul.f32 %v717, 0.5
      %v872 = vmul.f32 %v722, 0.5
      %v873 = vmul.f32 %v727, 0.5
      %v874 = vmul.f32 %v732, 0.5
      %v875 = vmul.f32 %v737, 0.5
      %v876 = vmul.f32 %v742, 0.5
      %v877 = vmul.f32 %v747, 0.5
      %v878 = vmul.f32 %v752, 0.5
      %v879 = vmul.f32 %v757, 0.5
      %v880 = vmul.f32 %v762, 0.5
      %v881 = vmul.f32 %v767, 0.5
      %v882 = vmul.f32 %v772, 0.5
      %v883 = vmul.f32 %v777, 0.5
      %v884 = vmul.f32 %v782, 0.5
      %v885 = vmul.f32 %v787, 0.5
      %v886 = vmul.f32 %v792, 0.5
      %v887 = vmul.f32 %v797, 0.5
      %v888 = vmul.f32 %v802, 0.5
      %v889 = vmul.f32 %v807, 0.5
      %v890 = vmul.f32 %v812, 0.5
      %v891 = vmul.f32 %v817, 0.5
      %v892 = vmul.f32 %v822, 0.5
      %v893 = vmul.f32 %v827, 0.5
      %v894 = vmul.f32 %v832, 0.5
      %v895 = vmul.f32 %v837, 0.5
      %v896 = vmul.f32 %v842, 0.5
      %v897 = vmul.f32 %v847, 0.5
      %v898 = vmul.f32 %v852, 0.5
      %v899 = vmul.f32 %v637, 0.70710677
      %v900 = vmul.f32 %v642, 0.70710677
      %v901 = vmul.f32 %v647, 0.70710677
      %v902 = vmul.f32 %v652, 0.70710677
      %v903 = vmul.f32 %v657, 0.70710677
      %v904 = vmul.f32 %v662, 0.70710677
      %v905 = vmul.f32 %v667, 0.70710677
      %v906 = vmul.f32 %v672, 0.70710677
      %v907 = vmul.f32 %v677, 0.70710677
      %v908 = vmul.f32 %v682, 0.70710677
      %v909 = vmul.f32 %v687, 0.70710677
      %v910 = vmul.f32 %v692, 0.70710677
      %v911 = vmul.f32 %v697, 0.70710677
      %v912 = vmul.f32 %v702, 0.70710677
      %v913 = vmul.f32 %v707, 0.70710677
      %v914 = vmul.f32 %v712, 0.70710677
      %v915 = vmul.f32 %v717, 0.70710677
      %v916 = vmul.f32 %v722, 0.70710677
      %v917 = vmul.f32 %v727, 0.70710677
      %v918 = vmul.f32 %v732, 0.70710677
      %v919 = vmul.f32 %v737, 0.70710677
      %v920 = vmul.f32 %v742, 0.70710677
      %v921 = vmul.f32 %v747, 0.70710677
      %v922 = vmul.f32 %v752, 0.70710677
      %v923 = vmul.f32 %v757, 0.70710677
      %v924 = vmul.f32 %v762, 0.70710677
      %v925 = vmul.f32 %v767, 0.70710677
      %v926 = vmul.f32 %v772, 0.70710677
      %v927 = vmul.f32 %v777, 0.70710677
      %v928 = vmul.f32 %v782, 0.70710677
      %v929 = vmul.f32 %v787, 0.70710677
      %v930 = vmul.f32 %v792, 0.70710677
      %v931 = vmul.f32 %v797, 0.70710677
      %v932 = vmul.f32 %v802, 0.70710677
      %v933 = vmul.f32 %v807, 0.70710677
      %v934 = vmul.f32 %v812, 0.70710677
      %v935 = vmul.f32 %v817, 0.70710677
      %v936 = vmul.f32 %v822, 0.70710677
      %v937 = vmul.f32 %v827, 0.70710677
      %v938 = vmul.f32 %v832, 0.70710677
      %v939 = vmul.f32 %v837, 0.70710677
      %v940 = vmul.f32 %v842, 0.70710677
      %v941 = vmul.f32 %v847, 0.70710677
      %v942 = vmul.f32 %v852, 0.70710677
      %v943 = verf.f32.pop %v899
      %v944 = verf.f32.pop %v900
      %v945 = verf.f32.pop %v901
      %v946 = verf.f32.pop %v902
      %v947 = verf.f32.pop %v903
      %v948 = verf.f32.pop %v904
      %v949 = verf.f32.pop %v905
      %v950 = verf.f32.pop %v906
      %v951 = verf.f32.pop %v907
      %v952 = verf.f32.pop %v908
      %v953 = verf.f32.pop %v909
      %v954 = verf.f32.pop %v910
      %v955 = verf.f32.pop %v911
      %v956 = verf.f32.pop %v912
      %v957 = verf.f32.pop %v913
      %v958 = verf.f32.pop %v914
      %v959 = verf.f32.pop %v915
      %v960 = verf.f32.pop %v916
      %v961 = verf.f32.pop %v917
      %v962 = verf.f32.pop %v918
      %v963 = verf.f32.pop %v919
      %v964 = verf.f32.pop %v920
      %v965 = verf.f32.pop %v921
      %v966 = verf.f32.pop %v922
      %v967 = verf.f32.pop %v923
      %v968 = verf.f32.pop %v924
      %v969 = verf.f32.pop %v925
      %v970 = verf.f32.pop %v926
      %v971 = verf.f32.pop %v927
      %v972 = verf.f32.pop %v928
      %v973 = verf.f32.pop %v929
      %v974 = verf.f32.pop %v930
      %v975 = verf.f32.pop %v931
      %v976 = verf.f32.pop %v932
      %v977 = verf.f32.pop %v933
      %v978 = verf.f32.pop %v934
      %v979 = verf.f32.pop %v935
      %v980 = verf.f32.pop %v936
      %v981 = verf.f32.pop %v937
      %v982 = verf.f32.pop %v938
      %v983 = verf.f32.pop %v939
      %v984 = verf.f32.pop %v940
      %v985 = verf.f32.pop %v941
      %v986 = verf.f32.pop %v942
      %v987 = vadd.f32 %v943, 1.0
      %v988 = vadd.f32 %v944, 1.0
      %v989 = vadd.f32 %v945, 1.0
      %v990 = vadd.f32 %v946, 1.0
      %v991 = vadd.f32 %v947, 1.0
      %v992 = vadd.f32 %v948, 1.0
      %v993 = vadd.f32 %v949, 1.0
      %v994 = vadd.f32 %v950, 1.0
      %v995 = vadd.f32 %v951, 1.0
      %v996 = vadd.f32 %v952, 1.0
      %v997 = vadd.f32 %v953, 1.0
      %v998 = vadd.f32 %v954, 1.0
      %v999 = vadd.f32 %v955, 1.0
      %v1000 = vadd.f32 %v956, 1.0
      %v1001 = vadd.f32 %v957, 1.0
      %v1002 = vadd.f32 %v958, 1.0
      %v1003 = vadd.f32 %v959, 1.0
      %v1004 = vadd.f32 %v960, 1.0
      %v1005 = vadd.f32 %v961, 1.0
      %v1006 = vadd.f32 %v962, 1.0
      %v1007 = vadd.f32 %v963, 1.0
      %v1008 = vadd.f32 %v964, 1.0
      %v1009 = vadd.f32 %v965, 1.0
      %v1010 = vadd.f32 %v966, 1.0
      %v1011 = vadd.f32 %v967, 1.0
      %v1012 = vadd.f32 %v968, 1.0
      %v1013 = vadd.f32 %v969, 1.0
      %v1014 = vadd.f32 %v970, 1.0
      %v1015 = vadd.f32 %v971, 1.0
      %v1016 = vadd.f32 %v972, 1.0
      %v1017 = vadd.f32 %v973, 1.0
      %v1018 = vadd.f32 %v974, 1.0
      %v1019 = vadd.f32 %v975, 1.0
      %v1020 = vadd.f32 %v976, 1.0
      %v1021 = vadd.f32 %v977, 1.0
      %v1022 = vadd.f32 %v978, 1.0
      %v1023 = vadd.f32 %v979, 1.0
      %v1024 = vadd.f32 %v980, 1.0
      %v1025 = vadd.f32 %v981, 1.0
      %v1026 = vadd.f32 %v982, 1.0
      %v1027 = vadd.f32 %v983, 1.0
      %v1028 = vadd.f32 %v984, 1.0
      %v1029 = vadd.f32 %v985, 1.0
      %v1030 = vadd.f32 %v986, 1.0
      %v1031 = vmul.f32 %v855, %v987
      %v1032 = vmul.f32 %v856, %v988
      %v1033 = vmul.f32 %v857, %v989
      %v1034 = vmul.f32 %v858, %v990
      %v1035 = vmul.f32 %v859, %v991
      %v1036 = vmul.f32 %v860, %v992
      %v1037 = vmul.f32 %v861, %v993
      %v1038 = vmul.f32 %v862, %v994
      %v1039 = vmul.f32 %v863, %v995
      %v1040 = vmul.f32 %v864, %v996
      %v1041 = vmul.f32 %v865, %v997
      %v1042 = vmul.f32 %v866, %v998
      %v1043 = vmul.f32 %v867, %v999
      %v1044 = vmul.f32 %v868, %v1000
      %v1045 = vmul.f32 %v869, %v1001
      %v1046 = vmul.f32 %v870, %v1002
      %v1047 = vmul.f32 %v871, %v1003
      %v1048 = vmul.f32 %v872, %v1004
      %v1049 = vmul.f32 %v873, %v1005
      %v1050 = vmul.f32 %v874, %v1006
      %v1051 = vmul.f32 %v875, %v1007
      %v1052 = vmul.f32 %v876, %v1008
      %v1053 = vmul.f32 %v877, %v1009
      %v1054 = vmul.f32 %v878, %v1010
      %v1055 = vmul.f32 %v879, %v1011
      %v1056 = vmul.f32 %v880, %v1012
      %v1057 = vmul.f32 %v881, %v1013
      %v1058 = vmul.f32 %v882, %v1014
      %v1059 = vmul.f32 %v883, %v1015
      %v1060 = vmul.f32 %v884, %v1016
      %v1061 = vmul.f32 %v885, %v1017
      %v1062 = vmul.f32 %v886, %v1018
      %v1063 = vmul.f32 %v887, %v1019
      %v1064 = vmul.f32 %v888, %v1020
      %v1065 = vmul.f32 %v889, %v1021
      %v1066 = vmul.f32 %v890, %v1022
      %v1067 = vmul.f32 %v891, %v1023
      %v1068 = vmul.f32 %v892, %v1024
      %v1069 = vmul.f32 %v893, %v1025
      %v1070 = vmul.f32 %v894, %v1026
      %v1071 = vmul.f32 %v895, %v1027
      %v1072 = vmul.f32 %v896, %v1028
      %v1073 = vmul.f32 %v897, %v1029
      %v1074 = vmul.f32 %v898, %v1030
      %v1075 = vld [vmem:[%s2] sm:$0x1]
      %v1077 = vlaneseq
      %v1078 = vshrl.u32 %v1077, 7
      %v1079 = vsub.s32 0, %v1078
      %v1080 = vrot.slane %v1075, %v1079
      %v1082 = vmul.f32 %v1031, %v1080
      %v1083 = vmul.f32 %v1032, %v1080
      %v1084 = vmul.f32 %v1033, %v1080
      %v1085 = vmul.f32 %v1034, %v1080
      %v1086 = vmul.f32 %v1035, %v1080
      %v1087 = vmul.f32 %v1036, %v1080
      %v1088 = vmul.f32 %v1037, %v1080
      %v1089 = vmul.f32 %v1038, %v1080
      %v1090 = vmul.f32 %v1039, %v1080
      %v1091 = vmul.f32 %v1040, %v1080
      %v1092 = vmul.f32 %v1041, %v1080
      %v1093 = vmul.f32 %v1042, %v1080
      %v1094 = vmul.f32 %v1043, %v1080
      %v1095 = vmul.f32 %v1044, %v1080
      %v1096 = vmul.f32 %v1045, %v1080
      %v1097 = vmul.f32 %v1046, %v1080
      %v1098 = vmul.f32 %v1047, %v1080
      %v1099 = vmul.f32 %v1048, %v1080
      %v1100 = vmul.f32 %v1049, %v1080
      %v1101 = vmul.f32 %v1050, %v1080
      %v1102 = vmul.f32 %v1051, %v1080
      %v1103 = vmul.f32 %v1052, %v1080
      %v1104 = vmul.f32 %v1053, %v1080
      %v1105 = vmul.f32 %v1054, %v1080
      %v1106 = vmul.f32 %v1055, %v1080
      %v1107 = vmul.f32 %v1056, %v1080
      %v1108 = vmul.f32 %v1057, %v1080
      %v1109 = vmul.f32 %v1058, %v1080
      %v1110 = vmul.f32 %v1059, %v1080
      %v1111 = vmul.f32 %v1060, %v1080
      %v1112 = vmul.f32 %v1061, %v1080
      %v1113 = vmul.f32 %v1062, %v1080
      %v1114 = vmul.f32 %v1063, %v1080
      %v1115 = vmul.f32 %v1064, %v1080
      %v1116 = vmul.f32 %v1065, %v1080
      %v1117 = vmul.f32 %v1066, %v1080
      %v1118 = vmul.f32 %v1067, %v1080
      %v1119 = vmul.f32 %v1068, %v1080
      %v1120 = vmul.f32 %v1069, %v1080
      %v1121 = vmul.f32 %v1070, %v1080
      %v1122 = vmul.f32 %v1071, %v1080
      %v1123 = vmul.f32 %v1072, %v1080
      %v1124 = vmul.f32 %v1073, %v1080
      %v1125 = vmul.f32 %v1074, %v1080
      %v1126 = vld [vmem:[%s3] sm:$0x1]
      %v1128 = vlaneseq
      %v1129 = vshrl.u32 %v1128, 7
      %v1130 = vsub.s32 0, %v1129
      %v1131 = vrot.slane %v1126, %v1130
      %v1133 = vadd.f32 %v1082, %v1131
      %v1134 = vadd.f32 %v1083, %v1131
      %v1135 = vadd.f32 %v1084, %v1131
      %v1136 = vadd.f32 %v1085, %v1131
      %v1137 = vadd.f32 %v1086, %v1131
      %v1138 = vadd.f32 %v1087, %v1131
      %v1139 = vadd.f32 %v1088, %v1131
      %v1140 = vadd.f32 %v1089, %v1131
      %v1141 = vadd.f32 %v1090, %v1131
      %v1142 = vadd.f32 %v1091, %v1131
      %v1143 = vadd.f32 %v1092, %v1131
      %v1144 = vadd.f32 %v1093, %v1131
      %v1145 = vadd.f32 %v1094, %v1131
      %v1146 = vadd.f32 %v1095, %v1131
      %v1147 = vadd.f32 %v1096, %v1131
      %v1148 = vadd.f32 %v1097, %v1131
      %v1149 = vadd.f32 %v1098, %v1131
      %v1150 = vadd.f32 %v1099, %v1131
      %v1151 = vadd.f32 %v1100, %v1131
      %v1152 = vadd.f32 %v1101, %v1131
      %v1153 = vadd.f32 %v1102, %v1131
      %v1154 = vadd.f32 %v1103, %v1131
      %v1155 = vadd.f32 %v1104, %v1131
      %v1156 = vadd.f32 %v1105, %v1131
      %v1157 = vadd.f32 %v1106, %v1131
      %v1158 = vadd.f32 %v1107, %v1131
      %v1159 = vadd.f32 %v1108, %v1131
      %v1160 = vadd.f32 %v1109, %v1131
      %v1161 = vadd.f32 %v1110, %v1131
      %v1162 = vadd.f32 %v1111, %v1131
      %v1163 = vadd.f32 %v1112, %v1131
      %v1164 = vadd.f32 %v1113, %v1131
      %v1165 = vadd.f32 %v1114, %v1131
      %v1166 = vadd.f32 %v1115, %v1131
      %v1167 = vadd.f32 %v1116, %v1131
      %v1168 = vadd.f32 %v1117, %v1131
      %v1169 = vadd.f32 %v1118, %v1131
      %v1170 = vadd.f32 %v1119, %v1131
      %v1171 = vadd.f32 %v1120, %v1131
      %v1172 = vadd.f32 %v1121, %v1131
      %v1173 = vadd.f32 %v1122, %v1131
      %v1174 = vadd.f32 %v1123, %v1131
      %v1175 = vadd.f32 %v1124, %v1131
      %v1176 = vadd.f32 %v1125, %v1131
      %s1177 = ssub.s32 %s385, 3
      %v1178 = vstv %s1177
      %v1179 = vadd.s32 %v1178, 1
      %v1180 = vadd.s32 %v1178, 2
      %v1181 = vadd.s32 %v1178, 3
      %v1182 = vadd.s32 %v1178, 4
      %v1183 = vadd.s32 %v1178, 5
      %v1184 = vadd.s32 %v1178, 6
      %v1185 = vadd.s32 %v1178, 7
      %v1186 = vadd.s32 %v1178, 8
      %v1187 = vadd.s32 %v1178, 9
      %v1188 = vadd.s32 %v1178, 10
      %v1189 = vadd.s32 %v1178, 11
      %v1190 = vadd.s32 %v1178, 12
      %v1191 = vadd.s32 %v1178, 13
      %v1192 = vadd.s32 %v1178, 14
      %v1193 = vadd.s32 %v1178, 15
      %v1194 = vadd.s32 %v1178, 16
      %v1195 = vadd.s32 %v1178, 17
      %v1196 = vadd.s32 %v1178, 18
      %v1197 = vadd.s32 %v1178, 19
      %v1198 = vadd.s32 %v1178, 20
      %v1199 = vadd.s32 %v1178, 21
      %vm1200 = vcmp.ge.s32.totalorder %v1178, 0
      %vm1201 = vcmp.ge.s32.totalorder %v1179, 0
      %vm1202 = vcmp.ge.s32.totalorder %v1180, 0
      %vm1203 = vcmp.ge.s32.totalorder %v1181, 0
      %vm1204 = vcmp.ge.s32.totalorder %v1182, 0
      %vm1205 = vcmp.ge.s32.totalorder %v1183, 0
      %vm1206 = vcmp.ge.s32.totalorder %v1184, 0
      %vm1207 = vcmp.ge.s32.totalorder %v1185, 0
      %vm1208 = vcmp.ge.s32.totalorder %v1186, 0
      %vm1209 = vcmp.ge.s32.totalorder %v1187, 0
      %vm1210 = vcmp.ge.s32.totalorder %v1188, 0
      %vm1211 = vcmp.ge.s32.totalorder %v1189, 0
      %vm1212 = vcmp.ge.s32.totalorder %v1190, 0
      %vm1213 = vcmp.ge.s32.totalorder %v1191, 0
      %vm1214 = vcmp.ge.s32.totalorder %v1192, 0
      %vm1215 = vcmp.ge.s32.totalorder %v1193, 0
      %vm1216 = vcmp.ge.s32.totalorder %v1194, 0
      %vm1217 = vcmp.ge.s32.totalorder %v1195, 0
      %vm1218 = vcmp.ge.s32.totalorder %v1196, 0
      %vm1219 = vcmp.ge.s32.totalorder %v1197, 0
      %vm1220 = vcmp.ge.s32.totalorder %v1198, 0
      %vm1221 = vcmp.ge.s32.totalorder %v1199, 0
      %vm1222 = vcmp.lt.s32.totalorder %v1178, 16
      %vm1223 = vcmp.lt.s32.totalorder %v1179, 16
      %vm1224 = vcmp.lt.s32.totalorder %v1180, 16
      %vm1225 = vcmp.lt.s32.totalorder %v1181, 16
      %vm1226 = vcmp.lt.s32.totalorder %v1182, 16
      %vm1227 = vcmp.lt.s32.totalorder %v1183, 16
      %vm1228 = vcmp.lt.s32.totalorder %v1184, 16
      %vm1229 = vcmp.lt.s32.totalorder %v1185, 16
      %vm1230 = vcmp.lt.s32.totalorder %v1186, 16
      %vm1231 = vcmp.lt.s32.totalorder %v1187, 16
      %vm1232 = vcmp.lt.s32.totalorder %v1188, 16
      %vm1233 = vcmp.lt.s32.totalorder %v1189, 16
      %vm1234 = vcmp.lt.s32.totalorder %v1190, 16
      %vm1235 = vcmp.lt.s32.totalorder %v1191, 16
      %vm1236 = vcmp.lt.s32.totalorder %v1192, 16
      %vm1237 = vcmp.lt.s32.totalorder %v1193, 16
      %vm1238 = vcmp.lt.s32.totalorder %v1194, 16
      %vm1239 = vcmp.lt.s32.totalorder %v1195, 16
      %vm1240 = vcmp.lt.s32.totalorder %v1196, 16
      %vm1241 = vcmp.lt.s32.totalorder %v1197, 16
      %vm1242 = vcmp.lt.s32.totalorder %v1198, 16
      %vm1243 = vcmp.lt.s32.totalorder %v1199, 16
      %vm1244 = vmand %vm1200, %vm1222
      %vm1245 = vmand %vm1201, %vm1223
      %vm1246 = vmand %vm1202, %vm1224
      %vm1247 = vmand %vm1203, %vm1225
      %vm1248 = vmand %vm1204, %vm1226
      %vm1249 = vmand %vm1205, %vm1227
      %vm1250 = vmand %vm1206, %vm1228
      %vm1251 = vmand %vm1207, %vm1229
      %vm1252 = vmand %vm1208, %vm1230
      %vm1253 = vmand %vm1209, %vm1231
      %vm1254 = vmand %vm1210, %vm1232
      %vm1255 = vmand %vm1211, %vm1233
      %vm1256 = vmand %vm1212, %vm1234
      %vm1257 = vmand %vm1213, %vm1235
      %vm1258 = vmand %vm1214, %vm1236
      %vm1259 = vmand %vm1215, %vm1237
      %vm1260 = vmand %vm1216, %vm1238
      %vm1261 = vmand %vm1217, %vm1239
      %vm1262 = vmand %vm1218, %vm1240
      %vm1263 = vmand %vm1219, %vm1241
      %vm1264 = vmand %vm1220, %vm1242
      %vm1265 = vmand %vm1221, %vm1243
      %v1266 = vsel %vm1244, 1, 0
      %v1267 = vsel %vm1245, 1, 0
      %v1268 = vsel %vm1246, 1, 0
      %v1269 = vsel %vm1247, 1, 0
      %v1270 = vsel %vm1248, 1, 0
      %v1271 = vsel %vm1249, 1, 0
      %v1272 = vsel %vm1250, 1, 0
      %v1273 = vsel %vm1251, 1, 0
      %v1274 = vsel %vm1252, 1, 0
      %v1275 = vsel %vm1253, 1, 0
      %v1276 = vsel %vm1254, 1, 0
      %v1277 = vsel %vm1255, 1, 0
      %v1278 = vsel %vm1256, 1, 0
      %v1279 = vsel %vm1257, 1, 0
      %v1280 = vsel %vm1258, 1, 0
      %v1281 = vsel %vm1259, 1, 0
      %v1282 = vsel %vm1260, 1, 0
      %v1283 = vsel %vm1261, 1, 0
      %v1284 = vsel %vm1262, 1, 0
      %v1285 = vsel %vm1263, 1, 0
      %v1286 = vsel %vm1264, 1, 0
      %v1287 = vsel %vm1265, 1, 0
      %vm1288 = vcmp.eq.s32.totalorder %v1266, 1
      %vm1289 = vcmp.eq.s32.totalorder %v1267, 1
      %vm1290 = vcmp.eq.s32.totalorder %v1268, 1
      %vm1291 = vcmp.eq.s32.totalorder %v1269, 1
      %vm1292 = vcmp.eq.s32.totalorder %v1270, 1
      %vm1293 = vcmp.eq.s32.totalorder %v1271, 1
      %vm1294 = vcmp.eq.s32.totalorder %v1272, 1
      %vm1295 = vcmp.eq.s32.totalorder %v1273, 1
      %vm1296 = vcmp.eq.s32.totalorder %v1274, 1
      %vm1297 = vcmp.eq.s32.totalorder %v1275, 1
      %vm1298 = vcmp.eq.s32.totalorder %v1276, 1
      %vm1299 = vcmp.eq.s32.totalorder %v1277, 1
      %vm1300 = vcmp.eq.s32.totalorder %v1278, 1
      %vm1301 = vcmp.eq.s32.totalorder %v1279, 1
      %vm1302 = vcmp.eq.s32.totalorder %v1280, 1
      %vm1303 = vcmp.eq.s32.totalorder %v1281, 1
      %vm1304 = vcmp.eq.s32.totalorder %v1282, 1
      %vm1305 = vcmp.eq.s32.totalorder %v1283, 1
      %vm1306 = vcmp.eq.s32.totalorder %v1284, 1
      %vm1307 = vcmp.eq.s32.totalorder %v1285, 1
      %vm1308 = vcmp.eq.s32.totalorder %v1286, 1
      %vm1309 = vcmp.eq.s32.totalorder %v1287, 1
      %v1310 = vsel %vm1288, %v1133, 0.0
      %v1311 = vsel %vm1288, %v1134, 0.0
      %v1312 = vsel %vm1289, %v1135, 0.0
      %v1313 = vsel %vm1289, %v1136, 0.0
      %v1314 = vsel %vm1290, %v1137, 0.0
      %v1315 = vsel %vm1290, %v1138, 0.0
      %v1316 = vsel %vm1291, %v1139, 0.0
      %v1317 = vsel %vm1291, %v1140, 0.0
      %v1318 = vsel %vm1292, %v1141, 0.0
      %v1319 = vsel %vm1292, %v1142, 0.0
      %v1320 = vsel %vm1293, %v1143, 0.0
      %v1321 = vsel %vm1293, %v1144, 0.0
      %v1322 = vsel %vm1294, %v1145, 0.0
      %v1323 = vsel %vm1294, %v1146, 0.0
      %v1324 = vsel %vm1295, %v1147, 0.0
      %v1325 = vsel %vm1295, %v1148, 0.0
      %v1326 = vsel %vm1296, %v1149, 0.0
      %v1327 = vsel %vm1296, %v1150, 0.0
      %v1328 = vsel %vm1297, %v1151, 0.0
      %v1329 = vsel %vm1297, %v1152, 0.0
      %v1330 = vsel %vm1298, %v1153, 0.0
      %v1331 = vsel %vm1298, %v1154, 0.0
      %v1332 = vsel %vm1299, %v1155, 0.0
      %v1333 = vsel %vm1299, %v1156, 0.0
      %v1334 = vsel %vm1300, %v1157, 0.0
      %v1335 = vsel %vm1300, %v1158, 0.0
      %v1336 = vsel %vm1301, %v1159, 0.0
      %v1337 = vsel %vm1301, %v1160, 0.0
      %v1338 = vsel %vm1302, %v1161, 0.0
      %v1339 = vsel %vm1302, %v1162, 0.0
      %v1340 = vsel %vm1303, %v1163, 0.0
      %v1341 = vsel %vm1303, %v1164, 0.0
      %v1342 = vsel %vm1304, %v1165, 0.0
      %v1343 = vsel %vm1304, %v1166, 0.0
      %v1344 = vsel %vm1305, %v1167, 0.0
      %v1345 = vsel %vm1305, %v1168, 0.0
      %v1346 = vsel %vm1306, %v1169, 0.0
      %v1347 = vsel %vm1306, %v1170, 0.0
      %v1348 = vsel %vm1307, %v1171, 0.0
      %v1349 = vsel %vm1307, %v1172, 0.0
      %v1350 = vsel %vm1308, %v1173, 0.0
      %v1351 = vsel %vm1308, %v1174, 0.0
      %v1352 = vsel %vm1309, %v1175, 0.0
      %v1353 = vsel %vm1309, %v1176, 0.0
      %vm1354 = vcmask 261120
      %1355 = vst.msk [vmem:[#allocation2] sm:$0xff] %vm1354, 0.0
      %1356 = vst.msk [vmem:[#allocation2 + $0x20] sm:$0xff] %vm1354, 0.0
      %1357 = vst.msk [vmem:[#allocation2 + $0x40] sm:$0xff] %vm1354, 0.0
      %1358 = vst.msk [vmem:[#allocation2 + $0x60] sm:$0xff] %vm1354, 0.0
      %1359 = vst.msk [vmem:[#allocation2 + $0x80] sm:$0xff] %vm1354, 0.0
      %1360 = vst.msk [vmem:[#allocation2 + $0xa0] sm:$0xff] %vm1354, 0.0
      %1361 = vst.msk [vmem:[#allocation2 + $0xc0] sm:$0xff] %vm1354, 0.0
      %1362 = vst.msk [vmem:[#allocation2 + $0xe0] sm:$0xff] %vm1354, 0.0
      %1363 = vst.msk [vmem:[#allocation2 + $0x100] sm:$0xff] %vm1354, 0.0
      %1364 = vst.msk [vmem:[#allocation2 + $0x120] sm:$0xff] %vm1354, 0.0
      %1365 = vst.msk [vmem:[#allocation2 + $0x140] sm:$0xff] %vm1354, 0.0
      %1366 = vst.msk [vmem:[#allocation2 + $0x160] sm:$0xff] %vm1354, 0.0
      %1367 = vst.msk [vmem:[#allocation2 + $0x180] sm:$0xff] %vm1354, 0.0
      %1368 = vst.msk [vmem:[#allocation2 + $0x1a0] sm:$0xff] %vm1354, 0.0
      %1369 = vst.msk [vmem:[#allocation2 + $0x1c0] sm:$0xff] %vm1354, 0.0
      %1370 = vst.msk [vmem:[#allocation2 + $0x1e0] sm:$0xff] %vm1354, 0.0
      %1371 = vst.msk [vmem:[#allocation2 + $0x200] sm:$0xff] %vm1354, 0.0
      %1372 = vst.msk [vmem:[#allocation2 + $0x220] sm:$0xff] %vm1354, 0.0
      %1373 = vst.msk [vmem:[#allocation2 + $0x240] sm:$0xff] %vm1354, 0.0
      %1374 = vst.msk [vmem:[#allocation2 + $0x260] sm:$0xff] %vm1354, 0.0
      %1375 = vst.msk [vmem:[#allocation2 + $0x280] sm:$0xff] %vm1354, 0.0
      %1376 = vst.msk [vmem:[#allocation2 + $0x2a0] sm:$0xff] %vm1354, 0.0
      %1377 = vst.msk [vmem:[#allocation2 + $0x18] sm:$0xff] %vm1354, 0.0
      %1378 = vst.msk [vmem:[#allocation2 + $0x38] sm:$0xff] %vm1354, 0.0
      %1379 = vst.msk [vmem:[#allocation2 + $0x58] sm:$0xff] %vm1354, 0.0
      %1380 = vst.msk [vmem:[#allocation2 + $0x78] sm:$0xff] %vm1354, 0.0
      %1381 = vst.msk [vmem:[#allocation2 + $0x98] sm:$0xff] %vm1354, 0.0
      %1382 = vst.msk [vmem:[#allocation2 + $0xb8] sm:$0xff] %vm1354, 0.0
      %1383 = vst.msk [vmem:[#allocation2 + $0xd8] sm:$0xff] %vm1354, 0.0
      %1384 = vst.msk [vmem:[#allocation2 + $0xf8] sm:$0xff] %vm1354, 0.0
      %1385 = vst.msk [vmem:[#allocation2 + $0x118] sm:$0xff] %vm1354, 0.0
      %1386 = vst.msk [vmem:[#allocation2 + $0x138] sm:$0xff] %vm1354, 0.0
      %1387 = vst.msk [vmem:[#allocation2 + $0x158] sm:$0xff] %vm1354, 0.0
      %1388 = vst.msk [vmem:[#allocation2 + $0x178] sm:$0xff] %vm1354, 0.0
      %1389 = vst.msk [vmem:[#allocation2 + $0x198] sm:$0xff] %vm1354, 0.0
      %1390 = vst.msk [vmem:[#allocation2 + $0x1b8] sm:$0xff] %vm1354, 0.0
      %1391 = vst.msk [vmem:[#allocation2 + $0x1d8] sm:$0xff] %vm1354, 0.0
      %1392 = vst.msk [vmem:[#allocation2 + $0x1f8] sm:$0xff] %vm1354, 0.0
      %1393 = vst.msk [vmem:[#allocation2 + $0x218] sm:$0xff] %vm1354, 0.0
      %1394 = vst.msk [vmem:[#allocation2 + $0x238] sm:$0xff] %vm1354, 0.0
      %1395 = vst.msk [vmem:[#allocation2 + $0x258] sm:$0xff] %vm1354, 0.0
      %1396 = vst.msk [vmem:[#allocation2 + $0x278] sm:$0xff] %vm1354, 0.0
      %1397 = vst.msk [vmem:[#allocation2 + $0x298] sm:$0xff] %vm1354, 0.0
      %1398 = vst.msk [vmem:[#allocation2 + $0x2b8] sm:$0xff] %vm1354, 0.0
      %1399 = vst.msk [vmem:[#allocation2 + $0x8] sm:$0xff] %vm1354, %v1310
      %1400 = vst.msk [vmem:[#allocation2 + $0x10] sm:$0xff] %vm1354, %v1311
      %1401 = vst.msk [vmem:[#allocation2 + $0x28] sm:$0xff] %vm1354, %v1312
      %1402 = vst.msk [vmem:[#allocation2 + $0x30] sm:$0xff] %vm1354, %v1313
      %1403 = vst.msk [vmem:[#allocation2 + $0x48] sm:$0xff] %vm1354, %v1314
      %1404 = vst.msk [vmem:[#allocation2 + $0x50] sm:$0xff] %vm1354, %v1315
      %1405 = vst.msk [vmem:[#allocation2 + $0x68] sm:$0xff] %vm1354, %v1316
      %1406 = vst.msk [vmem:[#allocation2 + $0x70] sm:$0xff] %vm1354, %v1317
      %1407 = vst.msk [vmem:[#allocation2 + $0x88] sm:$0xff] %vm1354, %v1318
      %1408 = vst.msk [vmem:[#allocation2 + $0x90] sm:$0xff] %vm1354, %v1319
      %1409 = vst.msk [vmem:[#allocation2 + $0xa8] sm:$0xff] %vm1354, %v1320
      %1410 = vst.msk [vmem:[#allocation2 + $0xb0] sm:$0xff] %vm1354, %v1321
      %1411 = vst.msk [vmem:[#allocation2 + $0xc8] sm:$0xff] %vm1354, %v1322
      %1412 = vst.msk [vmem:[#allocation2 + $0xd0] sm:$0xff] %vm1354, %v1323
      %1413 = vst.msk [vmem:[#allocation2 + $0xe8] sm:$0xff] %vm1354, %v1324
      %1414 = vst.msk [vmem:[#allocation2 + $0xf0] sm:$0xff] %vm1354, %v1325
      %1415 = vst.msk [vmem:[#allocation2 + $0x108] sm:$0xff] %vm1354, %v1326
      %1416 = vst.msk [vmem:[#allocation2 + $0x110] sm:$0xff] %vm1354, %v1327
      %1417 = vst.msk [vmem:[#allocation2 + $0x128] sm:$0xff] %vm1354, %v1328
      %1418 = vst.msk [vmem:[#allocation2 + $0x130] sm:$0xff] %vm1354, %v1329
      %1419 = vst.msk [vmem:[#allocation2 + $0x148] sm:$0xff] %vm1354, %v1330
      %1420 = vst.msk [vmem:[#allocation2 + $0x150] sm:$0xff] %vm1354, %v1331
      %1421 = vst.msk [vmem:[#allocation2 + $0x168] sm:$0xff] %vm1354, %v1332
      %1422 = vst.msk [vmem:[#allocation2 + $0x170] sm:$0xff] %vm1354, %v1333
      %1423 = vst.msk [vmem:[#allocation2 + $0x188] sm:$0xff] %vm1354, %v1334
      %1424 = vst.msk [vmem:[#allocation2 + $0x190] sm:$0xff] %vm1354, %v1335
      %1425 = vst.msk [vmem:[#allocation2 + $0x1a8] sm:$0xff] %vm1354, %v1336
      %1426 = vst.msk [vmem:[#allocation2 + $0x1b0] sm:$0xff] %vm1354, %v1337
      %1427 = vst.msk [vmem:[#allocation2 + $0x1c8] sm:$0xff] %vm1354, %v1338
      %1428 = vst.msk [vmem:[#allocation2 + $0x1d0] sm:$0xff] %vm1354, %v1339
      %1429 = vst.msk [vmem:[#allocation2 + $0x1e8] sm:$0xff] %vm1354, %v1340
      %1430 = vst.msk [vmem:[#allocation2 + $0x1f0] sm:$0xff] %vm1354, %v1341
      %1431 = vst.msk [vmem:[#allocation2 + $0x208] sm:$0xff] %vm1354, %v1342
      %1432 = vst.msk [vmem:[#allocation2 + $0x210] sm:$0xff] %vm1354, %v1343
      %1433 = vst.msk [vmem:[#allocation2 + $0x228] sm:$0xff] %vm1354, %v1344
      %1434 = vst.msk [vmem:[#allocation2 + $0x230] sm:$0xff] %vm1354, %v1345
      %1435 = vst.msk [vmem:[#allocation2 + $0x248] sm:$0xff] %vm1354, %v1346
      %1436 = vst.msk [vmem:[#allocation2 + $0x250] sm:$0xff] %vm1354, %v1347
      %1437 = vst.msk [vmem:[#allocation2 + $0x268] sm:$0xff] %vm1354, %v1348
      %1438 = vst.msk [vmem:[#allocation2 + $0x270] sm:$0xff] %vm1354, %v1349
      %1439 = vst.msk [vmem:[#allocation2 + $0x288] sm:$0xff] %vm1354, %v1350
      %1440 = vst.msk [vmem:[#allocation2 + $0x290] sm:$0xff] %vm1354, %v1351
      %1441 = vst.msk [vmem:[#allocation2 + $0x2a8] sm:$0xff] %vm1354, %v1352
      %1442 = vst.msk [vmem:[#allocation2 + $0x2b0] sm:$0xff] %vm1354, %v1353
      %v1443 = vld [vmem:[%s4] sm:$0x1]
      %v1444 = vld [vmem:[#allocation2 + $0x5] sm:$0xff]
      %v1445 = vld [vmem:[#allocation2 + $0xd] sm:$0xff]
      %v1446 = vld [vmem:[#allocation2 + $0x25] sm:$0xff]
      %v1447 = vld [vmem:[#allocation2 + $0x2d] sm:$0xff]
      %v1448 = vld [vmem:[#allocation2 + $0x45] sm:$0xff]
      %v1449 = vld [vmem:[#allocation2 + $0x4d] sm:$0xff]
      %v1450 = vld [vmem:[#allocation2 + $0x65] sm:$0xff]
      %v1451 = vld [vmem:[#allocation2 + $0x6d] sm:$0xff]
      %v1452 = vld [vmem:[#allocation2 + $0x85] sm:$0xff]
      %v1453 = vld [vmem:[#allocation2 + $0x8d] sm:$0xff]
      %v1454 = vld [vmem:[#allocation2 + $0xa5] sm:$0xff]
      %v1455 = vld [vmem:[#allocation2 + $0xad] sm:$0xff]
      %v1456 = vld [vmem:[#allocation2 + $0xc5] sm:$0xff]
      %v1457 = vld [vmem:[#allocation2 + $0xcd] sm:$0xff]
      %v1458 = vld [vmem:[#allocation2 + $0xe5] sm:$0xff]
      %v1459 = vld [vmem:[#allocation2 + $0xed] sm:$0xff]
      %v1460 = vld [vmem:[#allocation2 + $0x105] sm:$0xff]
      %v1461 = vld [vmem:[#allocation2 + $0x10d] sm:$0xff]
      %v1462 = vld [vmem:[#allocation2 + $0x125] sm:$0xff]
      %v1463 = vld [vmem:[#allocation2 + $0x12d] sm:$0xff]
      %v1464 = vld [vmem:[#allocation2 + $0x145] sm:$0xff]
      %v1465 = vld [vmem:[#allocation2 + $0x14d] sm:$0xff]
      %v1466 = vld [vmem:[#allocation2 + $0x165] sm:$0xff]
      %v1467 = vld [vmem:[#allocation2 + $0x16d] sm:$0xff]
      %v1468 = vld [vmem:[#allocation2 + $0x185] sm:$0xff]
      %v1469 = vld [vmem:[#allocation2 + $0x18d] sm:$0xff]
      %v1470 = vld [vmem:[#allocation2 + $0x1a5] sm:$0xff]
      %v1471 = vld [vmem:[#allocation2 + $0x1ad] sm:$0xff]
      %v1472 = vld [vmem:[#allocation2 + $0x1c5] sm:$0xff]
      %v1473 = vld [vmem:[#allocation2 + $0x1cd] sm:$0xff]
      %v1474 = vld [vmem:[#allocation2 + $0x1e5] sm:$0xff]
      %v1475 = vld [vmem:[#allocation2 + $0x1ed] sm:$0xff]
      %v1476 = vlaneseq
      %v1477 = vshrl.u32 %v1476, 7
      %v1478 = vsub.s32 0, %v1477
      %v1479 = vrot.slane %v1443, %v1478
      %v1480 = vmul.f32 %v1444, %v1479
      %v1481 = vmul.f32 %v1445, %v1479
      %v1482 = vmul.f32 %v1446, %v1479
      %v1483 = vmul.f32 %v1447, %v1479
      %v1484 = vmul.f32 %v1448, %v1479
      %v1485 = vmul.f32 %v1449, %v1479
      %v1486 = vmul.f32 %v1450, %v1479
      %v1487 = vmul.f32 %v1451, %v1479
      %v1488 = vmul.f32 %v1452, %v1479
      %v1489 = vmul.f32 %v1453, %v1479
      %v1490 = vmul.f32 %v1454, %v1479
      %v1491 = vmul.f32 %v1455, %v1479
      %v1492 = vmul.f32 %v1456, %v1479
      %v1493 = vmul.f32 %v1457, %v1479
      %v1494 = vmul.f32 %v1458, %v1479
      %v1495 = vmul.f32 %v1459, %v1479
      %v1496 = vmul.f32 %v1460, %v1479
      %v1497 = vmul.f32 %v1461, %v1479
      %v1498 = vmul.f32 %v1462, %v1479
      %v1499 = vmul.f32 %v1463, %v1479
      %v1500 = vmul.f32 %v1464, %v1479
      %v1501 = vmul.f32 %v1465, %v1479
      %v1502 = vmul.f32 %v1466, %v1479
      %v1503 = vmul.f32 %v1467, %v1479
      %v1504 = vmul.f32 %v1468, %v1479
      %v1505 = vmul.f32 %v1469, %v1479
      %v1506 = vmul.f32 %v1470, %v1479
      %v1507 = vmul.f32 %v1471, %v1479
      %v1508 = vmul.f32 %v1472, %v1479
      %v1509 = vmul.f32 %v1473, %v1479
      %v1510 = vmul.f32 %v1474, %v1479
      %v1511 = vmul.f32 %v1475, %v1479
      %v1512 = vadd.f32 %v1480, 0.0
      %v1513 = vadd.f32 %v1481, 0.0
      %v1514 = vadd.f32 %v1482, 0.0
      %v1515 = vadd.f32 %v1483, 0.0
      %v1516 = vadd.f32 %v1484, 0.0
      %v1517 = vadd.f32 %v1485, 0.0
      %v1518 = vadd.f32 %v1486, 0.0
      %v1519 = vadd.f32 %v1487, 0.0
      %v1520 = vadd.f32 %v1488, 0.0
      %v1521 = vadd.f32 %v1489, 0.0
      %v1522 = vadd.f32 %v1490, 0.0
      %v1523 = vadd.f32 %v1491, 0.0
      %v1524 = vadd.f32 %v1492, 0.0
      %v1525 = vadd.f32 %v1493, 0.0
      %v1526 = vadd.f32 %v1494, 0.0
      %v1527 = vadd.f32 %v1495, 0.0
      %v1528 = vadd.f32 %v1496, 0.0
      %v1529 = vadd.f32 %v1497, 0.0
      %v1530 = vadd.f32 %v1498, 0.0
      %v1531 = vadd.f32 %v1499, 0.0
      %v1532 = vadd.f32 %v1500, 0.0
      %v1533 = vadd.f32 %v1501, 0.0
      %v1534 = vadd.f32 %v1502, 0.0
      %v1535 = vadd.f32 %v1503, 0.0
      %v1536 = vadd.f32 %v1504, 0.0
      %v1537 = vadd.f32 %v1505, 0.0
      %v1538 = vadd.f32 %v1506, 0.0
      %v1539 = vadd.f32 %v1507, 0.0
      %v1540 = vadd.f32 %v1508, 0.0
      %v1541 = vadd.f32 %v1509, 0.0
      %v1542 = vadd.f32 %v1510, 0.0
      %v1543 = vadd.f32 %v1511, 0.0
      %v1544 = vld [vmem:[%s4 + $0x1] sm:$0x1]
      %v1545 = vld [vmem:[#allocation2 + $0x6] sm:$0xff]
      %v1546 = vld [vmem:[#allocation2 + $0xe] sm:$0xff]
      %v1547 = vld [vmem:[#allocation2 + $0x26] sm:$0xff]
      %v1548 = vld [vmem:[#allocation2 + $0x2e] sm:$0xff]
      %v1549 = vld [vmem:[#allocation2 + $0x46] sm:$0xff]
      %v1550 = vld [vmem:[#allocation2 + $0x4e] sm:$0xff]
      %v1551 = vld [vmem:[#allocation2 + $0x66] sm:$0xff]
      %v1552 = vld [vmem:[#allocation2 + $0x6e] sm:$0xff]
      %v1553 = vld [vmem:[#allocation2 + $0x86] sm:$0xff]
      %v1554 = vld [vmem:[#allocation2 + $0x8e] sm:$0xff]
      %v1555 = vld [vmem:[#allocation2 + $0xa6] sm:$0xff]
      %v1556 = vld [vmem:[#allocation2 + $0xae] sm:$0xff]
      %v1557 = vld [vmem:[#allocation2 + $0xc6] sm:$0xff]
      %v1558 = vld [vmem:[#allocation2 + $0xce] sm:$0xff]
      %v1559 = vld [vmem:[#allocation2 + $0xe6] sm:$0xff]
      %v1560 = vld [vmem:[#allocation2 + $0xee] sm:$0xff]
      %v1561 = vld [vmem:[#allocation2 + $0x106] sm:$0xff]
      %v1562 = vld [vmem:[#allocation2 + $0x10e] sm:$0xff]
      %v1563 = vld [vmem:[#allocation2 + $0x126] sm:$0xff]
      %v1564 = vld [vmem:[#allocation2 + $0x12e] sm:$0xff]
      %v1565 = vld [vmem:[#allocation2 + $0x146] sm:$0xff]
      %v1566 = vld [vmem:[#allocation2 + $0x14e] sm:$0xff]
      %v1567 = vld [vmem:[#allocation2 + $0x166] sm:$0xff]
      %v1568 = vld [vmem:[#allocation2 + $0x16e] sm:$0xff]
      %v1569 = vld [vmem:[#allocation2 + $0x186] sm:$0xff]
      %v1570 = vld [vmem:[#allocation2 + $0x18e] sm:$0xff]
      %v1571 = vld [vmem:[#allocation2 + $0x1a6] sm:$0xff]
      %v1572 = vld [vmem:[#allocation2 + $0x1ae] sm:$0xff]
      %v1573 = vld [vmem:[#allocation2 + $0x1c6] sm:$0xff]
      %v1574 = vld [vmem:[#allocation2 + $0x1ce] sm:$0xff]
      %v1575 = vld [vmem:[#allocation2 + $0x1e6] sm:$0xff]
      %v1576 = vld [vmem:[#allocation2 + $0x1ee] sm:$0xff]
      %v1577 = vlaneseq
      %v1578 = vshrl.u32 %v1577, 7
      %v1579 = vsub.s32 0, %v1578
      %v1580 = vrot.slane %v1544, %v1579
      %v1581 = vmul.f32 %v1545, %v1580
      %v1582 = vmul.f32 %v1546, %v1580
      %v1583 = vmul.f32 %v1547, %v1580
      %v1584 = vmul.f32 %v1548, %v1580
      %v1585 = vmul.f32 %v1549, %v1580
      %v1586 = vmul.f32 %v1550, %v1580
      %v1587 = vmul.f32 %v1551, %v1580
      %v1588 = vmul.f32 %v1552, %v1580
      %v1589 = vmul.f32 %v1553, %v1580
      %v1590 = vmul.f32 %v1554, %v1580
      %v1591 = vmul.f32 %v1555, %v1580
      %v1592 = vmul.f32 %v1556, %v1580
      %v1593 = vmul.f32 %v1557, %v1580
      %v1594 = vmul.f32 %v1558, %v1580
      %v1595 = vmul.f32 %v1559, %v1580
      %v1596 = vmul.f32 %v1560, %v1580
      %v1597 = vmul.f32 %v1561, %v1580
      %v1598 = vmul.f32 %v1562, %v1580
      %v1599 = vmul.f32 %v1563, %v1580
      %v1600 = vmul.f32 %v1564, %v1580
      %v1601 = vmul.f32 %v1565, %v1580
      %v1602 = vmul.f32 %v1566, %v1580
      %v1603 = vmul.f32 %v1567, %v1580
      %v1604 = vmul.f32 %v1568, %v1580
      %v1605 = vmul.f32 %v1569, %v1580
      %v1606 = vmul.f32 %v1570, %v1580
      %v1607 = vmul.f32 %v1571, %v1580
      %v1608 = vmul.f32 %v1572, %v1580
      %v1609 = vmul.f32 %v1573, %v1580
      %v1610 = vmul.f32 %v1574, %v1580
      %v1611 = vmul.f32 %v1575, %v1580
      %v1612 = vmul.f32 %v1576, %v1580
      %v1613 = vadd.f32 %v1512, %v1581
      %v1614 = vadd.f32 %v1513, %v1582
      %v1615 = vadd.f32 %v1514, %v1583
      %v1616 = vadd.f32 %v1515, %v1584
      %v1617 = vadd.f32 %v1516, %v1585
      %v1618 = vadd.f32 %v1517, %v1586
      %v1619 = vadd.f32 %v1518, %v1587
      %v1620 = vadd.f32 %v1519, %v1588
      %v1621 = vadd.f32 %v1520, %v1589
      %v1622 = vadd.f32 %v1521, %v1590
      %v1623 = vadd.f32 %v1522, %v1591
      %v1624 = vadd.f32 %v1523, %v1592
      %v1625 = vadd.f32 %v1524, %v1593
      %v1626 = vadd.f32 %v1525, %v1594
      %v1627 = vadd.f32 %v1526, %v1595
      %v1628 = vadd.f32 %v1527, %v1596
      %v1629 = vadd.f32 %v1528, %v1597
      %v1630 = vadd.f32 %v1529, %v1598
      %v1631 = vadd.f32 %v1530, %v1599
      %v1632 = vadd.f32 %v1531, %v1600
      %v1633 = vadd.f32 %v1532, %v1601
      %v1634 = vadd.f32 %v1533, %v1602
      %v1635 = vadd.f32 %v1534, %v1603
      %v1636 = vadd.f32 %v1535, %v1604
      %v1637 = vadd.f32 %v1536, %v1605
      %v1638 = vadd.f32 %v1537, %v1606
      %v1639 = vadd.f32 %v1538, %v1607
      %v1640 = vadd.f32 %v1539, %v1608
      %v1641 = vadd.f32 %v1540, %v1609
      %v1642 = vadd.f32 %v1541, %v1610
      %v1643 = vadd.f32 %v1542, %v1611
      %v1644 = vadd.f32 %v1543, %v1612
      %v1645 = vld [vmem:[%s4 + $0x2] sm:$0x1]
      %v1646 = vld [vmem:[#allocation2 + $0x7] sm:$0xff]
      %v1647 = vld [vmem:[#allocation2 + $0xf] sm:$0xff]
      %v1648 = vld [vmem:[#allocation2 + $0x27] sm:$0xff]
      %v1649 = vld [vmem:[#allocation2 + $0x2f] sm:$0xff]
      %v1650 = vld [vmem:[#allocation2 + $0x47] sm:$0xff]
      %v1651 = vld [vmem:[#allocation2 + $0x4f] sm:$0xff]
      %v1652 = vld [vmem:[#allocation2 + $0x67] sm:$0xff]
      %v1653 = vld [vmem:[#allocation2 + $0x6f] sm:$0xff]
      %v1654 = vld [vmem:[#allocation2 + $0x87] sm:$0xff]
      %v1655 = vld [vmem:[#allocation2 + $0x8f] sm:$0xff]
      %v1656 = vld [vmem:[#allocation2 + $0xa7] sm:$0xff]
      %v1657 = vld [vmem:[#allocation2 + $0xaf] sm:$0xff]
      %v1658 = vld [vmem:[#allocation2 + $0xc7] sm:$0xff]
      %v1659 = vld [vmem:[#allocation2 + $0xcf] sm:$0xff]
      %v1660 = vld [vmem:[#allocation2 + $0xe7] sm:$0xff]
      %v1661 = vld [vmem:[#allocation2 + $0xef] sm:$0xff]
      %v1662 = vld [vmem:[#allocation2 + $0x107] sm:$0xff]
      %v1663 = vld [vmem:[#allocation2 + $0x10f] sm:$0xff]
      %v1664 = vld [vmem:[#allocation2 + $0x127] sm:$0xff]
      %v1665 = vld [vmem:[#allocation2 + $0x12f] sm:$0xff]
      %v1666 = vld [vmem:[#allocation2 + $0x147] sm:$0xff]
      %v1667 = vld [vmem:[#allocation2 + $0x14f] sm:$0xff]
      %v1668 = vld [vmem:[#allocation2 + $0x167] sm:$0xff]
      %v1669 = vld [vmem:[#allocation2 + $0x16f] sm:$0xff]
      %v1670 = vld [vmem:[#allocation2 + $0x187] sm:$0xff]
      %v1671 = vld [vmem:[#allocation2 + $0x18f] sm:$0xff]
      %v1672 = vld [vmem:[#allocation2 + $0x1a7] sm:$0xff]
      %v1673 = vld [vmem:[#allocation2 + $0x1af] sm:$0xff]
      %v1674 = vld [vmem:[#allocation2 + $0x1c7] sm:$0xff]
      %v1675 = vld [vmem:[#allocation2 + $0x1cf] sm:$0xff]
      %v1676 = vld [vmem:[#allocation2 + $0x1e7] sm:$0xff]
      %v1677 = vld [vmem:[#allocation2 + $0x1ef] sm:$0xff]
      %v1678 = vlaneseq
      %v1679 = vshrl.u32 %v1678, 7
      %v1680 = vsub.s32 0, %v1679
      %v1681 = vrot.slane %v1645, %v1680
      %v1682 = vmul.f32 %v1646, %v1681
      %v1683 = vmul.f32 %v1647, %v1681
      %v1684 = vmul.f32 %v1648, %v1681
      %v1685 = vmul.f32 %v1649, %v1681
      %v1686 = vmul.f32 %v1650, %v1681
      %v1687 = vmul.f32 %v1651, %v1681
      %v1688 = vmul.f32 %v1652, %v1681
      %v1689 = vmul.f32 %v1653, %v1681
      %v1690 = vmul.f32 %v1654, %v1681
      %v1691 = vmul.f32 %v1655, %v1681
      %v1692 = vmul.f32 %v1656, %v1681
      %v1693 = vmul.f32 %v1657, %v1681
      %v1694 = vmul.f32 %v1658, %v1681
      %v1695 = vmul.f32 %v1659, %v1681
      %v1696 = vmul.f32 %v1660, %v1681
      %v1697 = vmul.f32 %v1661, %v1681
      %v1698 = vmul.f32 %v1662, %v1681
      %v1699 = vmul.f32 %v1663, %v1681
      %v1700 = vmul.f32 %v1664, %v1681
      %v1701 = vmul.f32 %v1665, %v1681
      %v1702 = vmul.f32 %v1666, %v1681
      %v1703 = vmul.f32 %v1667, %v1681
      %v1704 = vmul.f32 %v1668, %v1681
      %v1705 = vmul.f32 %v1669, %v1681
      %v1706 = vmul.f32 %v1670, %v1681
      %v1707 = vmul.f32 %v1671, %v1681
      %v1708 = vmul.f32 %v1672, %v1681
      %v1709 = vmul.f32 %v1673, %v1681
      %v1710 = vmul.f32 %v1674, %v1681
      %v1711 = vmul.f32 %v1675, %v1681
      %v1712 = vmul.f32 %v1676, %v1681
      %v1713 = vmul.f32 %v1677, %v1681
      %v1714 = vadd.f32 %v1613, %v1682
      %v1715 = vadd.f32 %v1614, %v1683
      %v1716 = vadd.f32 %v1615, %v1684
      %v1717 = vadd.f32 %v1616, %v1685
      %v1718 = vadd.f32 %v1617, %v1686
      %v1719 = vadd.f32 %v1618, %v1687
      %v1720 = vadd.f32 %v1619, %v1688
      %v1721 = vadd.f32 %v1620, %v1689
      %v1722 = vadd.f32 %v1621, %v1690
      %v1723 = vadd.f32 %v1622, %v1691
      %v1724 = vadd.f32 %v1623, %v1692
      %v1725 = vadd.f32 %v1624, %v1693
      %v1726 = vadd.f32 %v1625, %v1694
      %v1727 = vadd.f32 %v1626, %v1695
      %v1728 = vadd.f32 %v1627, %v1696
      %v1729 = vadd.f32 %v1628, %v1697
      %v1730 = vadd.f32 %v1629, %v1698
      %v1731 = vadd.f32 %v1630, %v1699
      %v1732 = vadd.f32 %v1631, %v1700
      %v1733 = vadd.f32 %v1632, %v1701
      %v1734 = vadd.f32 %v1633, %v1702
      %v1735 = vadd.f32 %v1634, %v1703
      %v1736 = vadd.f32 %v1635, %v1704
      %v1737 = vadd.f32 %v1636, %v1705
      %v1738 = vadd.f32 %v1637, %v1706
      %v1739 = vadd.f32 %v1638, %v1707
      %v1740 = vadd.f32 %v1639, %v1708
      %v1741 = vadd.f32 %v1640, %v1709
      %v1742 = vadd.f32 %v1641, %v1710
      %v1743 = vadd.f32 %v1642, %v1711
      %v1744 = vadd.f32 %v1643, %v1712
      %v1745 = vadd.f32 %v1644, %v1713
      %v1746 = vld [vmem:[%s4 + $0x3] sm:$0x1]
      %v1747 = vld [vmem:[#allocation2 + $0x8] sm:$0xff]
      %v1748 = vld [vmem:[#allocation2 + $0x10] sm:$0xff]
      %v1749 = vld [vmem:[#allocation2 + $0x28] sm:$0xff]
      %v1750 = vld [vmem:[#allocation2 + $0x30] sm:$0xff]
      %v1751 = vld [vmem:[#allocation2 + $0x48] sm:$0xff]
      %v1752 = vld [vmem:[#allocation2 + $0x50] sm:$0xff]
      %v1753 = vld [vmem:[#allocation2 + $0x68] sm:$0xff]
      %v1754 = vld [vmem:[#allocation2 + $0x70] sm:$0xff]
      %v1755 = vld [vmem:[#allocation2 + $0x88] sm:$0xff]
      %v1756 = vld [vmem:[#allocation2 + $0x90] sm:$0xff]
      %v1757 = vld [vmem:[#allocation2 + $0xa8] sm:$0xff]
      %v1758 = vld [vmem:[#allocation2 + $0xb0] sm:$0xff]
      %v1759 = vld [vmem:[#allocation2 + $0xc8] sm:$0xff]
      %v1760 = vld [vmem:[#allocation2 + $0xd0] sm:$0xff]
      %v1761 = vld [vmem:[#allocation2 + $0xe8] sm:$0xff]
      %v1762 = vld [vmem:[#allocation2 + $0xf0] sm:$0xff]
      %v1763 = vld [vmem:[#allocation2 + $0x108] sm:$0xff]
      %v1764 = vld [vmem:[#allocation2 + $0x110] sm:$0xff]
      %v1765 = vld [vmem:[#allocation2 + $0x128] sm:$0xff]
      %v1766 = vld [vmem:[#allocation2 + $0x130] sm:$0xff]
      %v1767 = vld [vmem:[#allocation2 + $0x148] sm:$0xff]
      %v1768 = vld [vmem:[#allocation2 + $0x150] sm:$0xff]
      %v1769 = vld [vmem:[#allocation2 + $0x168] sm:$0xff]
      %v1770 = vld [vmem:[#allocation2 + $0x170] sm:$0xff]
      %v1771 = vld [vmem:[#allocation2 + $0x188] sm:$0xff]
      %v1772 = vld [vmem:[#allocation2 + $0x190] sm:$0xff]
      %v1773 = vld [vmem:[#allocation2 + $0x1a8] sm:$0xff]
      %v1774 = vld [vmem:[#allocation2 + $0x1b0] sm:$0xff]
      %v1775 = vld [vmem:[#allocation2 + $0x1c8] sm:$0xff]
      %v1776 = vld [vmem:[#allocation2 + $0x1d0] sm:$0xff]
      %v1777 = vld [vmem:[#allocation2 + $0x1e8] sm:$0xff]
      %v1778 = vld [vmem:[#allocation2 + $0x1f0] sm:$0xff]
      %v1779 = vlaneseq
      %v1780 = vshrl.u32 %v1779, 7
      %v1781 = vsub.s32 0, %v1780
      %v1782 = vrot.slane %v1746, %v1781
      %v1783 = vmul.f32 %v1747, %v1782
      %v1784 = vmul.f32 %v1748, %v1782
      %v1785 = vmul.f32 %v1749, %v1782
      %v1786 = vmul.f32 %v1750, %v1782
      %v1787 = vmul.f32 %v1751, %v1782
      %v1788 = vmul.f32 %v1752, %v1782
      %v1789 = vmul.f32 %v1753, %v1782
      %v1790 = vmul.f32 %v1754, %v1782
      %v1791 = vmul.f32 %v1755, %v1782
      %v1792 = vmul.f32 %v1756, %v1782
      %v1793 = vmul.f32 %v1757, %v1782
      %v1794 = vmul.f32 %v1758, %v1782
      %v1795 = vmul.f32 %v1759, %v1782
      %v1796 = vmul.f32 %v1760, %v1782
      %v1797 = vmul.f32 %v1761, %v1782
      %v1798 = vmul.f32 %v1762, %v1782
      %v1799 = vmul.f32 %v1763, %v1782
      %v1800 = vmul.f32 %v1764, %v1782
      %v1801 = vmul.f32 %v1765, %v1782
      %v1802 = vmul.f32 %v1766, %v1782
      %v1803 = vmul.f32 %v1767, %v1782
      %v1804 = vmul.f32 %v1768, %v1782
      %v1805 = vmul.f32 %v1769, %v1782
      %v1806 = vmul.f32 %v1770, %v1782
      %v1807 = vmul.f32 %v1771, %v1782
      %v1808 = vmul.f32 %v1772, %v1782
      %v1809 = vmul.f32 %v1773, %v1782
      %v1810 = vmul.f32 %v1774, %v1782
      %v1811 = vmul.f32 %v1775, %v1782
      %v1812 = vmul.f32 %v1776, %v1782
      %v1813 = vmul.f32 %v1777, %v1782
      %v1814 = vmul.f32 %v1778, %v1782
      %v1815 = vadd.f32 %v1714, %v1783
      %v1816 = vadd.f32 %v1715, %v1784
      %v1817 = vadd.f32 %v1716, %v1785
      %v1818 = vadd.f32 %v1717, %v1786
      %v1819 = vadd.f32 %v1718, %v1787
      %v1820 = vadd.f32 %v1719, %v1788
      %v1821 = vadd.f32 %v1720, %v1789
      %v1822 = vadd.f32 %v1721, %v1790
      %v1823 = vadd.f32 %v1722, %v1791
      %v1824 = vadd.f32 %v1723, %v1792
      %v1825 = vadd.f32 %v1724, %v1793
      %v1826 = vadd.f32 %v1725, %v1794
      %v1827 = vadd.f32 %v1726, %v1795
      %v1828 = vadd.f32 %v1727, %v1796
      %v1829 = vadd.f32 %v1728, %v1797
      %v1830 = vadd.f32 %v1729, %v1798
      %v1831 = vadd.f32 %v1730, %v1799
      %v1832 = vadd.f32 %v1731, %v1800
      %v1833 = vadd.f32 %v1732, %v1801
      %v1834 = vadd.f32 %v1733, %v1802
      %v1835 = vadd.f32 %v1734, %v1803
      %v1836 = vadd.f32 %v1735, %v1804
      %v1837 = vadd.f32 %v1736, %v1805
      %v1838 = vadd.f32 %v1737, %v1806
      %v1839 = vadd.f32 %v1738, %v1807
      %v1840 = vadd.f32 %v1739, %v1808
      %v1841 = vadd.f32 %v1740, %v1809
      %v1842 = vadd.f32 %v1741, %v1810
      %v1843 = vadd.f32 %v1742, %v1811
      %v1844 = vadd.f32 %v1743, %v1812
      %v1845 = vadd.f32 %v1744, %v1813
      %v1846 = vadd.f32 %v1745, %v1814
      %v1847 = vld [vmem:[%s4 + $0x4] sm:$0x1]
      %v1848 = vld [vmem:[#allocation2 + $0x9] sm:$0xff]
      %v1849 = vld [vmem:[#allocation2 + $0x11] sm:$0xff]
      %v1850 = vld [vmem:[#allocation2 + $0x29] sm:$0xff]
      %v1851 = vld [vmem:[#allocation2 + $0x31] sm:$0xff]
      %v1852 = vld [vmem:[#allocation2 + $0x49] sm:$0xff]
      %v1853 = vld [vmem:[#allocation2 + $0x51] sm:$0xff]
      %v1854 = vld [vmem:[#allocation2 + $0x69] sm:$0xff]
      %v1855 = vld [vmem:[#allocation2 + $0x71] sm:$0xff]
      %v1856 = vld [vmem:[#allocation2 + $0x89] sm:$0xff]
      %v1857 = vld [vmem:[#allocation2 + $0x91] sm:$0xff]
      %v1858 = vld [vmem:[#allocation2 + $0xa9] sm:$0xff]
      %v1859 = vld [vmem:[#allocation2 + $0xb1] sm:$0xff]
      %v1860 = vld [vmem:[#allocation2 + $0xc9] sm:$0xff]
      %v1861 = vld [vmem:[#allocation2 + $0xd1] sm:$0xff]
      %v1862 = vld [vmem:[#allocation2 + $0xe9] sm:$0xff]
      %v1863 = vld [vmem:[#allocation2 + $0xf1] sm:$0xff]
      %v1864 = vld [vmem:[#allocation2 + $0x109] sm:$0xff]
      %v1865 = vld [vmem:[#allocation2 + $0x111] sm:$0xff]
      %v1866 = vld [vmem:[#allocation2 + $0x129] sm:$0xff]
      %v1867 = vld [vmem:[#allocation2 + $0x131] sm:$0xff]
      %v1868 = vld [vmem:[#allocation2 + $0x149] sm:$0xff]
      %v1869 = vld [vmem:[#allocation2 + $0x151] sm:$0xff]
      %v1870 = vld [vmem:[#allocation2 + $0x169] sm:$0xff]
      %v1871 = vld [vmem:[#allocation2 + $0x171] sm:$0xff]
      %v1872 = vld [vmem:[#allocation2 + $0x189] sm:$0xff]
      %v1873 = vld [vmem:[#allocation2 + $0x191] sm:$0xff]
      %v1874 = vld [vmem:[#allocation2 + $0x1a9] sm:$0xff]
      %v1875 = vld [vmem:[#allocation2 + $0x1b1] sm:$0xff]
      %v1876 = vld [vmem:[#allocation2 + $0x1c9] sm:$0xff]
      %v1877 = vld [vmem:[#allocation2 + $0x1d1] sm:$0xff]
      %v1878 = vld [vmem:[#allocation2 + $0x1e9] sm:$0xff]
      %v1879 = vld [vmem:[#allocation2 + $0x1f1] sm:$0xff]
      %v1880 = vlaneseq
      %v1881 = vshrl.u32 %v1880, 7
      %v1882 = vsub.s32 0, %v1881
      %v1883 = vrot.slane %v1847, %v1882
      %v1884 = vmul.f32 %v1848, %v1883
      %v1885 = vmul.f32 %v1849, %v1883
      %v1886 = vmul.f32 %v1850, %v1883
      %v1887 = vmul.f32 %v1851, %v1883
      %v1888 = vmul.f32 %v1852, %v1883
      %v1889 = vmul.f32 %v1853, %v1883
      %v1890 = vmul.f32 %v1854, %v1883
      %v1891 = vmul.f32 %v1855, %v1883
      %v1892 = vmul.f32 %v1856, %v1883
      %v1893 = vmul.f32 %v1857, %v1883
      %v1894 = vmul.f32 %v1858, %v1883
      %v1895 = vmul.f32 %v1859, %v1883
      %v1896 = vmul.f32 %v1860, %v1883
      %v1897 = vmul.f32 %v1861, %v1883
      %v1898 = vmul.f32 %v1862, %v1883
      %v1899 = vmul.f32 %v1863, %v1883
      %v1900 = vmul.f32 %v1864, %v1883
      %v1901 = vmul.f32 %v1865, %v1883
      %v1902 = vmul.f32 %v1866, %v1883
      %v1903 = vmul.f32 %v1867, %v1883
      %v1904 = vmul.f32 %v1868, %v1883
      %v1905 = vmul.f32 %v1869, %v1883
      %v1906 = vmul.f32 %v1870, %v1883
      %v1907 = vmul.f32 %v1871, %v1883
      %v1908 = vmul.f32 %v1872, %v1883
      %v1909 = vmul.f32 %v1873, %v1883
      %v1910 = vmul.f32 %v1874, %v1883
      %v1911 = vmul.f32 %v1875, %v1883
      %v1912 = vmul.f32 %v1876, %v1883
      %v1913 = vmul.f32 %v1877, %v1883
      %v1914 = vmul.f32 %v1878, %v1883
      %v1915 = vmul.f32 %v1879, %v1883
      %v1916 = vadd.f32 %v1815, %v1884
      %v1917 = vadd.f32 %v1816, %v1885
      %v1918 = vadd.f32 %v1817, %v1886
      %v1919 = vadd.f32 %v1818, %v1887
      %v1920 = vadd.f32 %v1819, %v1888
      %v1921 = vadd.f32 %v1820, %v1889
      %v1922 = vadd.f32 %v1821, %v1890
      %v1923 = vadd.f32 %v1822, %v1891
      %v1924 = vadd.f32 %v1823, %v1892
      %v1925 = vadd.f32 %v1824, %v1893
      %v1926 = vadd.f32 %v1825, %v1894
      %v1927 = vadd.f32 %v1826, %v1895
      %v1928 = vadd.f32 %v1827, %v1896
      %v1929 = vadd.f32 %v1828, %v1897
      %v1930 = vadd.f32 %v1829, %v1898
      %v1931 = vadd.f32 %v1830, %v1899
      %v1932 = vadd.f32 %v1831, %v1900
      %v1933 = vadd.f32 %v1832, %v1901
      %v1934 = vadd.f32 %v1833, %v1902
      %v1935 = vadd.f32 %v1834, %v1903
      %v1936 = vadd.f32 %v1835, %v1904
      %v1937 = vadd.f32 %v1836, %v1905
      %v1938 = vadd.f32 %v1837, %v1906
      %v1939 = vadd.f32 %v1838, %v1907
      %v1940 = vadd.f32 %v1839, %v1908
      %v1941 = vadd.f32 %v1840, %v1909
      %v1942 = vadd.f32 %v1841, %v1910
      %v1943 = vadd.f32 %v1842, %v1911
      %v1944 = vadd.f32 %v1843, %v1912
      %v1945 = vadd.f32 %v1844, %v1913
      %v1946 = vadd.f32 %v1845, %v1914
      %v1947 = vadd.f32 %v1846, %v1915
      %v1948 = vld [vmem:[%s4 + $0x5] sm:$0x1]
      %v1949 = vld [vmem:[#allocation2 + $0xa] sm:$0xff]
      %v1950 = vld [vmem:[#allocation2 + $0x12] sm:$0xff]
      %v1951 = vld [vmem:[#allocation2 + $0x2a] sm:$0xff]
      %v1952 = vld [vmem:[#allocation2 + $0x32] sm:$0xff]
      %v1953 = vld [vmem:[#allocation2 + $0x4a] sm:$0xff]
      %v1954 = vld [vmem:[#allocation2 + $0x52] sm:$0xff]
      %v1955 = vld [vmem:[#allocation2 + $0x6a] sm:$0xff]
      %v1956 = vld [vmem:[#allocation2 + $0x72] sm:$0xff]
      %v1957 = vld [vmem:[#allocation2 + $0x8a] sm:$0xff]
      %v1958 = vld [vmem:[#allocation2 + $0x92] sm:$0xff]
      %v1959 = vld [vmem:[#allocation2 + $0xaa] sm:$0xff]
      %v1960 = vld [vmem:[#allocation2 + $0xb2] sm:$0xff]
      %v1961 = vld [vmem:[#allocation2 + $0xca] sm:$0xff]
      %v1962 = vld [vmem:[#allocation2 + $0xd2] sm:$0xff]
      %v1963 = vld [vmem:[#allocation2 + $0xea] sm:$0xff]
      %v1964 = vld [vmem:[#allocation2 + $0xf2] sm:$0xff]
      %v1965 = vld [vmem:[#allocation2 + $0x10a] sm:$0xff]
      %v1966 = vld [vmem:[#allocation2 + $0x112] sm:$0xff]
      %v1967 = vld [vmem:[#allocation2 + $0x12a] sm:$0xff]
      %v1968 = vld [vmem:[#allocation2 + $0x132] sm:$0xff]
      %v1969 = vld [vmem:[#allocation2 + $0x14a] sm:$0xff]
      %v1970 = vld [vmem:[#allocation2 + $0x152] sm:$0xff]
      %v1971 = vld [vmem:[#allocation2 + $0x16a] sm:$0xff]
      %v1972 = vld [vmem:[#allocation2 + $0x172] sm:$0xff]
      %v1973 = vld [vmem:[#allocation2 + $0x18a] sm:$0xff]
      %v1974 = vld [vmem:[#allocation2 + $0x192] sm:$0xff]
      %v1975 = vld [vmem:[#allocation2 + $0x1aa] sm:$0xff]
      %v1976 = vld [vmem:[#allocation2 + $0x1b2] sm:$0xff]
      %v1977 = vld [vmem:[#allocation2 + $0x1ca] sm:$0xff]
      %v1978 = vld [vmem:[#allocation2 + $0x1d2] sm:$0xff]
      %v1979 = vld [vmem:[#allocation2 + $0x1ea] sm:$0xff]
      %v1980 = vld [vmem:[#allocation2 + $0x1f2] sm:$0xff]
      %v1981 = vlaneseq
      %v1982 = vshrl.u32 %v1981, 7
      %v1983 = vsub.s32 0, %v1982
      %v1984 = vrot.slane %v1948, %v1983
      %v1985 = vmul.f32 %v1949, %v1984
      %v1986 = vmul.f32 %v1950, %v1984
      %v1987 = vmul.f32 %v1951, %v1984
      %v1988 = vmul.f32 %v1952, %v1984
      %v1989 = vmul.f32 %v1953, %v1984
      %v1990 = vmul.f32 %v1954, %v1984
      %v1991 = vmul.f32 %v1955, %v1984
      %v1992 = vmul.f32 %v1956, %v1984
      %v1993 = vmul.f32 %v1957, %v1984
      %v1994 = vmul.f32 %v1958, %v1984
      %v1995 = vmul.f32 %v1959, %v1984
      %v1996 = vmul.f32 %v1960, %v1984
      %v1997 = vmul.f32 %v1961, %v1984
      %v1998 = vmul.f32 %v1962, %v1984
      %v1999 = vmul.f32 %v1963, %v1984
      %v2000 = vmul.f32 %v1964, %v1984
      %v2001 = vmul.f32 %v1965, %v1984
      %v2002 = vmul.f32 %v1966, %v1984
      %v2003 = vmul.f32 %v1967, %v1984
      %v2004 = vmul.f32 %v1968, %v1984
      %v2005 = vmul.f32 %v1969, %v1984
      %v2006 = vmul.f32 %v1970, %v1984
      %v2007 = vmul.f32 %v1971, %v1984
      %v2008 = vmul.f32 %v1972, %v1984
      %v2009 = vmul.f32 %v1973, %v1984
      %v2010 = vmul.f32 %v1974, %v1984
      %v2011 = vmul.f32 %v1975, %v1984
      %v2012 = vmul.f32 %v1976, %v1984
      %v2013 = vmul.f32 %v1977, %v1984
      %v2014 = vmul.f32 %v1978, %v1984
      %v2015 = vmul.f32 %v1979, %v1984
      %v2016 = vmul.f32 %v1980, %v1984
      %v2017 = vadd.f32 %v1916, %v1985
      %v2018 = vadd.f32 %v1917, %v1986
      %v2019 = vadd.f32 %v1918, %v1987
      %v2020 = vadd.f32 %v1919, %v1988
      %v2021 = vadd.f32 %v1920, %v1989
      %v2022 = vadd.f32 %v1921, %v1990
      %v2023 = vadd.f32 %v1922, %v1991
      %v2024 = vadd.f32 %v1923, %v1992
      %v2025 = vadd.f32 %v1924, %v1993
      %v2026 = vadd.f32 %v1925, %v1994
      %v2027 = vadd.f32 %v1926, %v1995
      %v2028 = vadd.f32 %v1927, %v1996
      %v2029 = vadd.f32 %v1928, %v1997
      %v2030 = vadd.f32 %v1929, %v1998
      %v2031 = vadd.f32 %v1930, %v1999
      %v2032 = vadd.f32 %v1931, %v2000
      %v2033 = vadd.f32 %v1932, %v2001
      %v2034 = vadd.f32 %v1933, %v2002
      %v2035 = vadd.f32 %v1934, %v2003
      %v2036 = vadd.f32 %v1935, %v2004
      %v2037 = vadd.f32 %v1936, %v2005
      %v2038 = vadd.f32 %v1937, %v2006
      %v2039 = vadd.f32 %v1938, %v2007
      %v2040 = vadd.f32 %v1939, %v2008
      %v2041 = vadd.f32 %v1940, %v2009
      %v2042 = vadd.f32 %v1941, %v2010
      %v2043 = vadd.f32 %v1942, %v2011
      %v2044 = vadd.f32 %v1943, %v2012
      %v2045 = vadd.f32 %v1944, %v2013
      %v2046 = vadd.f32 %v1945, %v2014
      %v2047 = vadd.f32 %v1946, %v2015
      %v2048 = vadd.f32 %v1947, %v2016
      %v2049 = vld [vmem:[%s4 + $0x6] sm:$0x1]
      %v2050 = vld [vmem:[#allocation2 + $0xb] sm:$0xff]
      %v2051 = vld [vmem:[#allocation2 + $0x13] sm:$0xff]
      %v2052 = vld [vmem:[#allocation2 + $0x2b] sm:$0xff]
      %v2053 = vld [vmem:[#allocation2 + $0x33] sm:$0xff]
      %v2054 = vld [vmem:[#allocation2 + $0x4b] sm:$0xff]
      %v2055 = vld [vmem:[#allocation2 + $0x53] sm:$0xff]
      %v2056 = vld [vmem:[#allocation2 + $0x6b] sm:$0xff]
      %v2057 = vld [vmem:[#allocation2 + $0x73] sm:$0xff]
      %v2058 = vld [vmem:[#allocation2 + $0x8b] sm:$0xff]
      %v2059 = vld [vmem:[#allocation2 + $0x93] sm:$0xff]
      %v2060 = vld [vmem:[#allocation2 + $0xab] sm:$0xff]
      %v2061 = vld [vmem:[#allocation2 + $0xb3] sm:$0xff]
      %v2062 = vld [vmem:[#allocation2 + $0xcb] sm:$0xff]
      %v2063 = vld [vmem:[#allocation2 + $0xd3] sm:$0xff]
      %v2064 = vld [vmem:[#allocation2 + $0xeb] sm:$0xff]
      %v2065 = vld [vmem:[#allocation2 + $0xf3] sm:$0xff]
      %v2066 = vld [vmem:[#allocation2 + $0x10b] sm:$0xff]
      %v2067 = vld [vmem:[#allocation2 + $0x113] sm:$0xff]
      %v2068 = vld [vmem:[#allocation2 + $0x12b] sm:$0xff]
      %v2069 = vld [vmem:[#allocation2 + $0x133] sm:$0xff]
      %v2070 = vld [vmem:[#allocation2 + $0x14b] sm:$0xff]
      %v2071 = vld [vmem:[#allocation2 + $0x153] sm:$0xff]
      %v2072 = vld [vmem:[#allocation2 + $0x16b] sm:$0xff]
      %v2073 = vld [vmem:[#allocation2 + $0x173] sm:$0xff]
      %v2074 = vld [vmem:[#allocation2 + $0x18b] sm:$0xff]
      %v2075 = vld [vmem:[#allocation2 + $0x193] sm:$0xff]
      %v2076 = vld [vmem:[#allocation2 + $0x1ab] sm:$0xff]
      %v2077 = vld [vmem:[#allocation2 + $0x1b3] sm:$0xff]
      %v2078 = vld [vmem:[#allocation2 + $0x1cb] sm:$0xff]
      %v2079 = vld [vmem:[#allocation2 + $0x1d3] sm:$0xff]
      %v2080 = vld [vmem:[#allocation2 + $0x1eb] sm:$0xff]
      %v2081 = vld [vmem:[#allocation2 + $0x1f3] sm:$0xff]
      %v2082 = vlaneseq
      %v2083 = vshrl.u32 %v2082, 7
      %v2084 = vsub.s32 0, %v2083
      %v2085 = vrot.slane %v2049, %v2084
      %v2086 = vmul.f32 %v2050, %v2085
      %v2087 = vmul.f32 %v2051, %v2085
      %v2088 = vmul.f32 %v2052, %v2085
      %v2089 = vmul.f32 %v2053, %v2085
      %v2090 = vmul.f32 %v2054, %v2085
      %v2091 = vmul.f32 %v2055, %v2085
      %v2092 = vmul.f32 %v2056, %v2085
      %v2093 = vmul.f32 %v2057, %v2085
      %v2094 = vmul.f32 %v2058, %v2085
      %v2095 = vmul.f32 %v2059, %v2085
      %v2096 = vmul.f32 %v2060, %v2085
      %v2097 = vmul.f32 %v2061, %v2085
      %v2098 = vmul.f32 %v2062, %v2085
      %v2099 = vmul.f32 %v2063, %v2085
      %v2100 = vmul.f32 %v2064, %v2085
      %v2101 = vmul.f32 %v2065, %v2085
      %v2102 = vmul.f32 %v2066, %v2085
      %v2103 = vmul.f32 %v2067, %v2085
      %v2104 = vmul.f32 %v2068, %v2085
      %v2105 = vmul.f32 %v2069, %v2085
      %v2106 = vmul.f32 %v2070, %v2085
      %v2107 = vmul.f32 %v2071, %v2085
      %v2108 = vmul.f32 %v2072, %v2085
      %v2109 = vmul.f32 %v2073, %v2085
      %v2110 = vmul.f32 %v2074, %v2085
      %v2111 = vmul.f32 %v2075, %v2085
      %v2112 = vmul.f32 %v2076, %v2085
      %v2113 = vmul.f32 %v2077, %v2085
      %v2114 = vmul.f32 %v2078, %v2085
      %v2115 = vmul.f32 %v2079, %v2085
      %v2116 = vmul.f32 %v2080, %v2085
      %v2117 = vmul.f32 %v2081, %v2085
      %v2118 = vadd.f32 %v2017, %v2086
      %v2119 = vadd.f32 %v2018, %v2087
      %v2120 = vadd.f32 %v2019, %v2088
      %v2121 = vadd.f32 %v2020, %v2089
      %v2122 = vadd.f32 %v2021, %v2090
      %v2123 = vadd.f32 %v2022, %v2091
      %v2124 = vadd.f32 %v2023, %v2092
      %v2125 = vadd.f32 %v2024, %v2093
      %v2126 = vadd.f32 %v2025, %v2094
      %v2127 = vadd.f32 %v2026, %v2095
      %v2128 = vadd.f32 %v2027, %v2096
      %v2129 = vadd.f32 %v2028, %v2097
      %v2130 = vadd.f32 %v2029, %v2098
      %v2131 = vadd.f32 %v2030, %v2099
      %v2132 = vadd.f32 %v2031, %v2100
      %v2133 = vadd.f32 %v2032, %v2101
      %v2134 = vadd.f32 %v2033, %v2102
      %v2135 = vadd.f32 %v2034, %v2103
      %v2136 = vadd.f32 %v2035, %v2104
      %v2137 = vadd.f32 %v2036, %v2105
      %v2138 = vadd.f32 %v2037, %v2106
      %v2139 = vadd.f32 %v2038, %v2107
      %v2140 = vadd.f32 %v2039, %v2108
      %v2141 = vadd.f32 %v2040, %v2109
      %v2142 = vadd.f32 %v2041, %v2110
      %v2143 = vadd.f32 %v2042, %v2111
      %v2144 = vadd.f32 %v2043, %v2112
      %v2145 = vadd.f32 %v2044, %v2113
      %v2146 = vadd.f32 %v2045, %v2114
      %v2147 = vadd.f32 %v2046, %v2115
      %v2148 = vadd.f32 %v2047, %v2116
      %v2149 = vadd.f32 %v2048, %v2117
      %v2150 = vld [vmem:[%s4 + $0x7] sm:$0x1]
      %s2151 = scalar_lea.vmem [#allocation2], 32
      %v2152 = vld [vmem:[%s2151 + $0x5] sm:$0xff]
      %v2153 = vld [vmem:[%s2151 + $0xd] sm:$0xff]
      %v2154 = vld [vmem:[%s2151 + $0x25] sm:$0xff]
      %v2155 = vld [vmem:[%s2151 + $0x2d] sm:$0xff]
      %v2156 = vld [vmem:[%s2151 + $0x45] sm:$0xff]
      %v2157 = vld [vmem:[%s2151 + $0x4d] sm:$0xff]
      %v2158 = vld [vmem:[%s2151 + $0x65] sm:$0xff]
      %v2159 = vld [vmem:[%s2151 + $0x6d] sm:$0xff]
      %v2160 = vld [vmem:[%s2151 + $0x85] sm:$0xff]
      %v2161 = vld [vmem:[%s2151 + $0x8d] sm:$0xff]
      %v2162 = vld [vmem:[%s2151 + $0xa5] sm:$0xff]
      %v2163 = vld [vmem:[%s2151 + $0xad] sm:$0xff]
      %v2164 = vld [vmem:[%s2151 + $0xc5] sm:$0xff]
      %v2165 = vld [vmem:[%s2151 + $0xcd] sm:$0xff]
      %v2166 = vld [vmem:[%s2151 + $0xe5] sm:$0xff]
      %v2167 = vld [vmem:[%s2151 + $0xed] sm:$0xff]
      %v2168 = vld [vmem:[%s2151 + $0x105] sm:$0xff]
      %v2169 = vld [vmem:[%s2151 + $0x10d] sm:$0xff]
      %v2170 = vld [vmem:[%s2151 + $0x125] sm:$0xff]
      %v2171 = vld [vmem:[%s2151 + $0x12d] sm:$0xff]
      %v2172 = vld [vmem:[%s2151 + $0x145] sm:$0xff]
      %v2173 = vld [vmem:[%s2151 + $0x14d] sm:$0xff]
      %v2174 = vld [vmem:[%s2151 + $0x165] sm:$0xff]
      %v2175 = vld [vmem:[%s2151 + $0x16d] sm:$0xff]
      %v2176 = vld [vmem:[%s2151 + $0x185] sm:$0xff]
      %v2177 = vld [vmem:[%s2151 + $0x18d] sm:$0xff]
      %v2178 = vld [vmem:[%s2151 + $0x1a5] sm:$0xff]
      %v2179 = vld [vmem:[%s2151 + $0x1ad] sm:$0xff]
      %v2180 = vld [vmem:[%s2151 + $0x1c5] sm:$0xff]
      %v2181 = vld [vmem:[%s2151 + $0x1cd] sm:$0xff]
      %v2182 = vld [vmem:[%s2151 + $0x1e5] sm:$0xff]
      %v2183 = vld [vmem:[%s2151 + $0x1ed] sm:$0xff]
      %v2184 = vlaneseq
      %v2185 = vshrl.u32 %v2184, 7
      %v2186 = vsub.s32 0, %v2185
      %v2187 = vrot.slane %v2150, %v2186
      %v2188 = vmul.f32 %v2152, %v2187
      %v2189 = vmul.f32 %v2153, %v2187
      %v2190 = vmul.f32 %v2154, %v2187
      %v2191 = vmul.f32 %v2155, %v2187
      %v2192 = vmul.f32 %v2156, %v2187
      %v2193 = vmul.f32 %v2157, %v2187
      %v2194 = vmul.f32 %v2158, %v2187
      %v2195 = vmul.f32 %v2159, %v2187
      %v2196 = vmul.f32 %v2160, %v2187
      %v2197 = vmul.f32 %v2161, %v2187
      %v2198 = vmul.f32 %v2162, %v2187
      %v2199 = vmul.f32 %v2163, %v2187
      %v2200 = vmul.f32 %v2164, %v2187
      %v2201 = vmul.f32 %v2165, %v2187
      %v2202 = vmul.f32 %v2166, %v2187
      %v2203 = vmul.f32 %v2167, %v2187
      %v2204 = vmul.f32 %v2168, %v2187
      %v2205 = vmul.f32 %v2169, %v2187
      %v2206 = vmul.f32 %v2170, %v2187
      %v2207 = vmul.f32 %v2171, %v2187
      %v2208 = vmul.f32 %v2172, %v2187
      %v2209 = vmul.f32 %v2173, %v2187
      %v2210 = vmul.f32 %v2174, %v2187
      %v2211 = vmul.f32 %v2175, %v2187
      %v2212 = vmul.f32 %v2176, %v2187
      %v2213 = vmul.f32 %v2177, %v2187
      %v2214 = vmul.f32 %v2178, %v2187
      %v2215 = vmul.f32 %v2179, %v2187
      %v2216 = vmul.f32 %v2180, %v2187
      %v2217 = vmul.f32 %v2181, %v2187
      %v2218 = vmul.f32 %v2182, %v2187
      %v2219 = vmul.f32 %v2183, %v2187
      %v2220 = vadd.f32 %v2118, %v2188
      %v2221 = vadd.f32 %v2119, %v2189
      %v2222 = vadd.f32 %v2120, %v2190
      %v2223 = vadd.f32 %v2121, %v2191
      %v2224 = vadd.f32 %v2122, %v2192
      %v2225 = vadd.f32 %v2123, %v2193
      %v2226 = vadd.f32 %v2124, %v2194
      %v2227 = vadd.f32 %v2125, %v2195
      %v2228 = vadd.f32 %v2126, %v2196
      %v2229 = vadd.f32 %v2127, %v2197
      %v2230 = vadd.f32 %v2128, %v2198
      %v2231 = vadd.f32 %v2129, %v2199
      %v2232 = vadd.f32 %v2130, %v2200
      %v2233 = vadd.f32 %v2131, %v2201
      %v2234 = vadd.f32 %v2132, %v2202
      %v2235 = vadd.f32 %v2133, %v2203
      %v2236 = vadd.f32 %v2134, %v2204
      %v2237 = vadd.f32 %v2135, %v2205
      %v2238 = vadd.f32 %v2136, %v2206
      %v2239 = vadd.f32 %v2137, %v2207
      %v2240 = vadd.f32 %v2138, %v2208
      %v2241 = vadd.f32 %v2139, %v2209
      %v2242 = vadd.f32 %v2140, %v2210
      %v2243 = vadd.f32 %v2141, %v2211
      %v2244 = vadd.f32 %v2142, %v2212
      %v2245 = vadd.f32 %v2143, %v2213
      %v2246 = vadd.f32 %v2144, %v2214
      %v2247 = vadd.f32 %v2145, %v2215
      %v2248 = vadd.f32 %v2146, %v2216
      %v2249 = vadd.f32 %v2147, %v2217
      %v2250 = vadd.f32 %v2148, %v2218
      %v2251 = vadd.f32 %v2149, %v2219
      %v2252 = vld [vmem:[%s4 + $0x8] sm:$0x1]
      %v2253 = vld [vmem:[%s2151 + $0x6] sm:$0xff]
      %v2254 = vld [vmem:[%s2151 + $0xe] sm:$0xff]
      %v2255 = vld [vmem:[%s2151 + $0x26] sm:$0xff]
      %v2256 = vld [vmem:[%s2151 + $0x2e] sm:$0xff]
      %v2257 = vld [vmem:[%s2151 + $0x46] sm:$0xff]
      %v2258 = vld [vmem:[%s2151 + $0x4e] sm:$0xff]
      %v2259 = vld [vmem:[%s2151 + $0x66] sm:$0xff]
      %v2260 = vld [vmem:[%s2151 + $0x6e] sm:$0xff]
      %v2261 = vld [vmem:[%s2151 + $0x86] sm:$0xff]
      %v2262 = vld [vmem:[%s2151 + $0x8e] sm:$0xff]
      %v2263 = vld [vmem:[%s2151 + $0xa6] sm:$0xff]
      %v2264 = vld [vmem:[%s2151 + $0xae] sm:$0xff]
      %v2265 = vld [vmem:[%s2151 + $0xc6] sm:$0xff]
      %v2266 = vld [vmem:[%s2151 + $0xce] sm:$0xff]
      %v2267 = vld [vmem:[%s2151 + $0xe6] sm:$0xff]
      %v2268 = vld [vmem:[%s2151 + $0xee] sm:$0xff]
      %v2269 = vld [vmem:[%s2151 + $0x106] sm:$0xff]
      %v2270 = vld [vmem:[%s2151 + $0x10e] sm:$0xff]
      %v2271 = vld [vmem:[%s2151 + $0x126] sm:$0xff]
      %v2272 = vld [vmem:[%s2151 + $0x12e] sm:$0xff]
      %v2273 = vld [vmem:[%s2151 + $0x146] sm:$0xff]
      %v2274 = vld [vmem:[%s2151 + $0x14e] sm:$0xff]
      %v2275 = vld [vmem:[%s2151 + $0x166] sm:$0xff]
      %v2276 = vld [vmem:[%s2151 + $0x16e] sm:$0xff]
      %v2277 = vld [vmem:[%s2151 + $0x186] sm:$0xff]
      %v2278 = vld [vmem:[%s2151 + $0x18e] sm:$0xff]
      %v2279 = vld [vmem:[%s2151 + $0x1a6] sm:$0xff]
      %v2280 = vld [vmem:[%s2151 + $0x1ae] sm:$0xff]
      %v2281 = vld [vmem:[%s2151 + $0x1c6] sm:$0xff]
      %v2282 = vld [vmem:[%s2151 + $0x1ce] sm:$0xff]
      %v2283 = vld [vmem:[%s2151 + $0x1e6] sm:$0xff]
      %v2284 = vld [vmem:[%s2151 + $0x1ee] sm:$0xff]
      %v2285 = vlaneseq
      %v2286 = vshrl.u32 %v2285, 7
      %v2287 = vsub.s32 0, %v2286
      %v2288 = vrot.slane %v2252, %v2287
      %v2289 = vmul.f32 %v2253, %v2288
      %v2290 = vmul.f32 %v2254, %v2288
      %v2291 = vmul.f32 %v2255, %v2288
      %v2292 = vmul.f32 %v2256, %v2288
      %v2293 = vmul.f32 %v2257, %v2288
      %v2294 = vmul.f32 %v2258, %v2288
      %v2295 = vmul.f32 %v2259, %v2288
      %v2296 = vmul.f32 %v2260, %v2288
      %v2297 = vmul.f32 %v2261, %v2288
      %v2298 = vmul.f32 %v2262, %v2288
      %v2299 = vmul.f32 %v2263, %v2288
      %v2300 = vmul.f32 %v2264, %v2288
      %v2301 = vmul.f32 %v2265, %v2288
      %v2302 = vmul.f32 %v2266, %v2288
      %v2303 = vmul.f32 %v2267, %v2288
      %v2304 = vmul.f32 %v2268, %v2288
      %v2305 = vmul.f32 %v2269, %v2288
      %v2306 = vmul.f32 %v2270, %v2288
      %v2307 = vmul.f32 %v2271, %v2288
      %v2308 = vmul.f32 %v2272, %v2288
      %v2309 = vmul.f32 %v2273, %v2288
      %v2310 = vmul.f32 %v2274, %v2288
      %v2311 = vmul.f32 %v2275, %v2288
      %v2312 = vmul.f32 %v2276, %v2288
      %v2313 = vmul.f32 %v2277, %v2288
      %v2314 = vmul.f32 %v2278, %v2288
      %v2315 = vmul.f32 %v2279, %v2288
      %v2316 = vmul.f32 %v2280, %v2288
      %v2317 = vmul.f32 %v2281, %v2288
      %v2318 = vmul.f32 %v2282, %v2288
      %v2319 = vmul.f32 %v2283, %v2288
      %v2320 = vmul.f32 %v2284, %v2288
      %v2321 = vadd.f32 %v2220, %v2289
      %v2322 = vadd.f32 %v2221, %v2290
      %v2323 = vadd.f32 %v2222, %v2291
      %v2324 = vadd.f32 %v2223, %v2292
      %v2325 = vadd.f32 %v2224, %v2293
      %v2326 = vadd.f32 %v2225, %v2294
      %v2327 = vadd.f32 %v2226, %v2295
      %v2328 = vadd.f32 %v2227, %v2296
      %v2329 = vadd.f32 %v2228, %v2297
      %v2330 = vadd.f32 %v2229, %v2298
      %v2331 = vadd.f32 %v2230, %v2299
      %v2332 = vadd.f32 %v2231, %v2300
      %v2333 = vadd.f32 %v2232, %v2301
      %v2334 = vadd.f32 %v2233, %v2302
      %v2335 = vadd.f32 %v2234, %v2303
      %v2336 = vadd.f32 %v2235, %v2304
      %v2337 = vadd.f32 %v2236, %v2305
      %v2338 = vadd.f32 %v2237, %v2306
      %v2339 = vadd.f32 %v2238, %v2307
      %v2340 = vadd.f32 %v2239, %v2308
      %v2341 = vadd.f32 %v2240, %v2309
      %v2342 = vadd.f32 %v2241, %v2310
      %v2343 = vadd.f32 %v2242, %v2311
      %v2344 = vadd.f32 %v2243, %v2312
      %v2345 = vadd.f32 %v2244, %v2313
      %v2346 = vadd.f32 %v2245, %v2314
      %v2347 = vadd.f32 %v2246, %v2315
      %v2348 = vadd.f32 %v2247, %v2316
      %v2349 = vadd.f32 %v2248, %v2317
      %v2350 = vadd.f32 %v2249, %v2318
      %v2351 = vadd.f32 %v2250, %v2319
      %v2352 = vadd.f32 %v2251, %v2320
      %v2353 = vld [vmem:[%s4 + $0x9] sm:$0x1]
      %v2354 = vld [vmem:[%s2151 + $0x7] sm:$0xff]
      %v2355 = vld [vmem:[%s2151 + $0xf] sm:$0xff]
      %v2356 = vld [vmem:[%s2151 + $0x27] sm:$0xff]
      %v2357 = vld [vmem:[%s2151 + $0x2f] sm:$0xff]
      %v2358 = vld [vmem:[%s2151 + $0x47] sm:$0xff]
      %v2359 = vld [vmem:[%s2151 + $0x4f] sm:$0xff]
      %v2360 = vld [vmem:[%s2151 + $0x67] sm:$0xff]
      %v2361 = vld [vmem:[%s2151 + $0x6f] sm:$0xff]
      %v2362 = vld [vmem:[%s2151 + $0x87] sm:$0xff]
      %v2363 = vld [vmem:[%s2151 + $0x8f] sm:$0xff]
      %v2364 = vld [vmem:[%s2151 + $0xa7] sm:$0xff]
      %v2365 = vld [vmem:[%s2151 + $0xaf] sm:$0xff]
      %v2366 = vld [vmem:[%s2151 + $0xc7] sm:$0xff]
      %v2367 = vld [vmem:[%s2151 + $0xcf] sm:$0xff]
      %v2368 = vld [vmem:[%s2151 + $0xe7] sm:$0xff]
      %v2369 = vld [vmem:[%s2151 + $0xef] sm:$0xff]
      %v2370 = vld [vmem:[%s2151 + $0x107] sm:$0xff]
      %v2371 = vld [vmem:[%s2151 + $0x10f] sm:$0xff]
      %v2372 = vld [vmem:[%s2151 + $0x127] sm:$0xff]
      %v2373 = vld [vmem:[%s2151 + $0x12f] sm:$0xff]
      %v2374 = vld [vmem:[%s2151 + $0x147] sm:$0xff]
      %v2375 = vld [vmem:[%s2151 + $0x14f] sm:$0xff]
      %v2376 = vld [vmem:[%s2151 + $0x167] sm:$0xff]
      %v2377 = vld [vmem:[%s2151 + $0x16f] sm:$0xff]
      %v2378 = vld [vmem:[%s2151 + $0x187] sm:$0xff]
      %v2379 = vld [vmem:[%s2151 + $0x18f] sm:$0xff]
      %v2380 = vld [vmem:[%s2151 + $0x1a7] sm:$0xff]
      %v2381 = vld [vmem:[%s2151 + $0x1af] sm:$0xff]
      %v2382 = vld [vmem:[%s2151 + $0x1c7] sm:$0xff]
      %v2383 = vld [vmem:[%s2151 + $0x1cf] sm:$0xff]
      %v2384 = vld [vmem:[%s2151 + $0x1e7] sm:$0xff]
      %v2385 = vld [vmem:[%s2151 + $0x1ef] sm:$0xff]
      %v2386 = vlaneseq
      %v2387 = vshrl.u32 %v2386, 7
      %v2388 = vsub.s32 0, %v2387
      %v2389 = vrot.slane %v2353, %v2388
      %v2390 = vmul.f32 %v2354, %v2389
      %v2391 = vmul.f32 %v2355, %v2389
      %v2392 = vmul.f32 %v2356, %v2389
      %v2393 = vmul.f32 %v2357, %v2389
      %v2394 = vmul.f32 %v2358, %v2389
      %v2395 = vmul.f32 %v2359, %v2389
      %v2396 = vmul.f32 %v2360, %v2389
      %v2397 = vmul.f32 %v2361, %v2389
      %v2398 = vmul.f32 %v2362, %v2389
      %v2399 = vmul.f32 %v2363, %v2389
      %v2400 = vmul.f32 %v2364, %v2389
      %v2401 = vmul.f32 %v2365, %v2389
      %v2402 = vmul.f32 %v2366, %v2389
      %v2403 = vmul.f32 %v2367, %v2389
      %v2404 = vmul.f32 %v2368, %v2389
      %v2405 = vmul.f32 %v2369, %v2389
      %v2406 = vmul.f32 %v2370, %v2389
      %v2407 = vmul.f32 %v2371, %v2389
      %v2408 = vmul.f32 %v2372, %v2389
      %v2409 = vmul.f32 %v2373, %v2389
      %v2410 = vmul.f32 %v2374, %v2389
      %v2411 = vmul.f32 %v2375, %v2389
      %v2412 = vmul.f32 %v2376, %v2389
      %v2413 = vmul.f32 %v2377, %v2389
      %v2414 = vmul.f32 %v2378, %v2389
      %v2415 = vmul.f32 %v2379, %v2389
      %v2416 = vmul.f32 %v2380, %v2389
      %v2417 = vmul.f32 %v2381, %v2389
      %v2418 = vmul.f32 %v2382, %v2389
      %v2419 = vmul.f32 %v2383, %v2389
      %v2420 = vmul.f32 %v2384, %v2389
      %v2421 = vmul.f32 %v2385, %v2389
      %v2422 = vadd.f32 %v2321, %v2390
      %v2423 = vadd.f32 %v2322, %v2391
      %v2424 = vadd.f32 %v2323, %v2392
      %v2425 = vadd.f32 %v2324, %v2393
      %v2426 = vadd.f32 %v2325, %v2394
      %v2427 = vadd.f32 %v2326, %v2395
      %v2428 = vadd.f32 %v2327, %v2396
      %v2429 = vadd.f32 %v2328, %v2397
      %v2430 = vadd.f32 %v2329, %v2398
      %v2431 = vadd.f32 %v2330, %v2399
      %v2432 = vadd.f32 %v2331, %v2400
      %v2433 = vadd.f32 %v2332, %v2401
      %v2434 = vadd.f32 %v2333, %v2402
      %v2435 = vadd.f32 %v2334, %v2403
      %v2436 = vadd.f32 %v2335, %v2404
      %v2437 = vadd.f32 %v2336, %v2405
      %v2438 = vadd.f32 %v2337, %v2406
      %v2439 = vadd.f32 %v2338, %v2407
      %v2440 = vadd.f32 %v2339, %v2408
      %v2441 = vadd.f32 %v2340, %v2409
      %v2442 = vadd.f32 %v2341, %v2410
      %v2443 = vadd.f32 %v2342, %v2411
      %v2444 = vadd.f32 %v2343, %v2412
      %v2445 = vadd.f32 %v2344, %v2413
      %v2446 = vadd.f32 %v2345, %v2414
      %v2447 = vadd.f32 %v2346, %v2415
      %v2448 = vadd.f32 %v2347, %v2416
      %v2449 = vadd.f32 %v2348, %v2417
      %v2450 = vadd.f32 %v2349, %v2418
      %v2451 = vadd.f32 %v2350, %v2419
      %v2452 = vadd.f32 %v2351, %v2420
      %v2453 = vadd.f32 %v2352, %v2421
      %v2454 = vld [vmem:[%s4 + $0xa] sm:$0x1]
      %v2455 = vld [vmem:[%s2151 + $0x8] sm:$0xff]
      %v2456 = vld [vmem:[%s2151 + $0x10] sm:$0xff]
      %v2457 = vld [vmem:[%s2151 + $0x28] sm:$0xff]
      %v2458 = vld [vmem:[%s2151 + $0x30] sm:$0xff]
      %v2459 = vld [vmem:[%s2151 + $0x48] sm:$0xff]
      %v2460 = vld [vmem:[%s2151 + $0x50] sm:$0xff]
      %v2461 = vld [vmem:[%s2151 + $0x68] sm:$0xff]
      %v2462 = vld [vmem:[%s2151 + $0x70] sm:$0xff]
      %v2463 = vld [vmem:[%s2151 + $0x88] sm:$0xff]
      %v2464 = vld [vmem:[%s2151 + $0x90] sm:$0xff]
      %v2465 = vld [vmem:[%s2151 + $0xa8] sm:$0xff]
      %v2466 = vld [vmem:[%s2151 + $0xb0] sm:$0xff]
      %v2467 = vld [vmem:[%s2151 + $0xc8] sm:$0xff]
      %v2468 = vld [vmem:[%s2151 + $0xd0] sm:$0xff]
      %v2469 = vld [vmem:[%s2151 + $0xe8] sm:$0xff]
      %v2470 = vld [vmem:[%s2151 + $0xf0] sm:$0xff]
      %v2471 = vld [vmem:[%s2151 + $0x108] sm:$0xff]
      %v2472 = vld [vmem:[%s2151 + $0x110] sm:$0xff]
      %v2473 = vld [vmem:[%s2151 + $0x128] sm:$0xff]
      %v2474 = vld [vmem:[%s2151 + $0x130] sm:$0xff]
      %v2475 = vld [vmem:[%s2151 + $0x148] sm:$0xff]
      %v2476 = vld [vmem:[%s2151 + $0x150] sm:$0xff]
      %v2477 = vld [vmem:[%s2151 + $0x168] sm:$0xff]
      %v2478 = vld [vmem:[%s2151 + $0x170] sm:$0xff]
      %v2479 = vld [vmem:[%s2151 + $0x188] sm:$0xff]
      %v2480 = vld [vmem:[%s2151 + $0x190] sm:$0xff]
      %v2481 = vld [vmem:[%s2151 + $0x1a8] sm:$0xff]
      %v2482 = vld [vmem:[%s2151 + $0x1b0] sm:$0xff]
      %v2483 = vld [vmem:[%s2151 + $0x1c8] sm:$0xff]
      %v2484 = vld [vmem:[%s2151 + $0x1d0] sm:$0xff]
      %v2485 = vld [vmem:[%s2151 + $0x1e8] sm:$0xff]
      %v2486 = vld [vmem:[%s2151 + $0x1f0] sm:$0xff]
      %v2487 = vlaneseq
      %v2488 = vshrl.u32 %v2487, 7
      %v2489 = vsub.s32 0, %v2488
      %v2490 = vrot.slane %v2454, %v2489
      %v2491 = vmul.f32 %v2455, %v2490
      %v2492 = vmul.f32 %v2456, %v2490
      %v2493 = vmul.f32 %v2457, %v2490
      %v2494 = vmul.f32 %v2458, %v2490
      %v2495 = vmul.f32 %v2459, %v2490
      %v2496 = vmul.f32 %v2460, %v2490
      %v2497 = vmul.f32 %v2461, %v2490
      %v2498 = vmul.f32 %v2462, %v2490
      %v2499 = vmul.f32 %v2463, %v2490
      %v2500 = vmul.f32 %v2464, %v2490
      %v2501 = vmul.f32 %v2465, %v2490
      %v2502 = vmul.f32 %v2466, %v2490
      %v2503 = vmul.f32 %v2467, %v2490
      %v2504 = vmul.f32 %v2468, %v2490
      %v2505 = vmul.f32 %v2469, %v2490
      %v2506 = vmul.f32 %v2470, %v2490
      %v2507 = vmul.f32 %v2471, %v2490
      %v2508 = vmul.f32 %v2472, %v2490
      %v2509 = vmul.f32 %v2473, %v2490
      %v2510 = vmul.f32 %v2474, %v2490
      %v2511 = vmul.f32 %v2475, %v2490
      %v2512 = vmul.f32 %v2476, %v2490
      %v2513 = vmul.f32 %v2477, %v2490
      %v2514 = vmul.f32 %v2478, %v2490
      %v2515 = vmul.f32 %v2479, %v2490
      %v2516 = vmul.f32 %v2480, %v2490
      %v2517 = vmul.f32 %v2481, %v2490
      %v2518 = vmul.f32 %v2482, %v2490
      %v2519 = vmul.f32 %v2483, %v2490
      %v2520 = vmul.f32 %v2484, %v2490
      %v2521 = vmul.f32 %v2485, %v2490
      %v2522 = vmul.f32 %v2486, %v2490
      %v2523 = vadd.f32 %v2422, %v2491
      %v2524 = vadd.f32 %v2423, %v2492
      %v2525 = vadd.f32 %v2424, %v2493
      %v2526 = vadd.f32 %v2425, %v2494
      %v2527 = vadd.f32 %v2426, %v2495
      %v2528 = vadd.f32 %v2427, %v2496
      %v2529 = vadd.f32 %v2428, %v2497
      %v2530 = vadd.f32 %v2429, %v2498
      %v2531 = vadd.f32 %v2430, %v2499
      %v2532 = vadd.f32 %v2431, %v2500
      %v2533 = vadd.f32 %v2432, %v2501
      %v2534 = vadd.f32 %v2433, %v2502
      %v2535 = vadd.f32 %v2434, %v2503
      %v2536 = vadd.f32 %v2435, %v2504
      %v2537 = vadd.f32 %v2436, %v2505
      %v2538 = vadd.f32 %v2437, %v2506
      %v2539 = vadd.f32 %v2438, %v2507
      %v2540 = vadd.f32 %v2439, %v2508
      %v2541 = vadd.f32 %v2440, %v2509
      %v2542 = vadd.f32 %v2441, %v2510
      %v2543 = vadd.f32 %v2442, %v2511
      %v2544 = vadd.f32 %v2443, %v2512
      %v2545 = vadd.f32 %v2444, %v2513
      %v2546 = vadd.f32 %v2445, %v2514
      %v2547 = vadd.f32 %v2446, %v2515
      %v2548 = vadd.f32 %v2447, %v2516
      %v2549 = vadd.f32 %v2448, %v2517
      %v2550 = vadd.f32 %v2449, %v2518
      %v2551 = vadd.f32 %v2450, %v2519
      %v2552 = vadd.f32 %v2451, %v2520
      %v2553 = vadd.f32 %v2452, %v2521
      %v2554 = vadd.f32 %v2453, %v2522
      %v2555 = vld [vmem:[%s4 + $0xb] sm:$0x1]
      %v2556 = vld [vmem:[%s2151 + $0x9] sm:$0xff]
      %v2557 = vld [vmem:[%s2151 + $0x11] sm:$0xff]
      %v2558 = vld [vmem:[%s2151 + $0x29] sm:$0xff]
      %v2559 = vld [vmem:[%s2151 + $0x31] sm:$0xff]
      %v2560 = vld [vmem:[%s2151 + $0x49] sm:$0xff]
      %v2561 = vld [vmem:[%s2151 + $0x51] sm:$0xff]
      %v2562 = vld [vmem:[%s2151 + $0x69] sm:$0xff]
      %v2563 = vld [vmem:[%s2151 + $0x71] sm:$0xff]
      %v2564 = vld [vmem:[%s2151 + $0x89] sm:$0xff]
      %v2565 = vld [vmem:[%s2151 + $0x91] sm:$0xff]
      %v2566 = vld [vmem:[%s2151 + $0xa9] sm:$0xff]
      %v2567 = vld [vmem:[%s2151 + $0xb1] sm:$0xff]
      %v2568 = vld [vmem:[%s2151 + $0xc9] sm:$0xff]
      %v2569 = vld [vmem:[%s2151 + $0xd1] sm:$0xff]
      %v2570 = vld [vmem:[%s2151 + $0xe9] sm:$0xff]
      %v2571 = vld [vmem:[%s2151 + $0xf1] sm:$0xff]
      %v2572 = vld [vmem:[%s2151 + $0x109] sm:$0xff]
      %v2573 = vld [vmem:[%s2151 + $0x111] sm:$0xff]
      %v2574 = vld [vmem:[%s2151 + $0x129] sm:$0xff]
      %v2575 = vld [vmem:[%s2151 + $0x131] sm:$0xff]
      %v2576 = vld [vmem:[%s2151 + $0x149] sm:$0xff]
      %v2577 = vld [vmem:[%s2151 + $0x151] sm:$0xff]
      %v2578 = vld [vmem:[%s2151 + $0x169] sm:$0xff]
      %v2579 = vld [vmem:[%s2151 + $0x171] sm:$0xff]
      %v2580 = vld [vmem:[%s2151 + $0x189] sm:$0xff]
      %v2581 = vld [vmem:[%s2151 + $0x191] sm:$0xff]
      %v2582 = vld [vmem:[%s2151 + $0x1a9] sm:$0xff]
      %v2583 = vld [vmem:[%s2151 + $0x1b1] sm:$0xff]
      %v2584 = vld [vmem:[%s2151 + $0x1c9] sm:$0xff]
      %v2585 = vld [vmem:[%s2151 + $0x1d1] sm:$0xff]
      %v2586 = vld [vmem:[%s2151 + $0x1e9] sm:$0xff]
      %v2587 = vld [vmem:[%s2151 + $0x1f1] sm:$0xff]
      %v2588 = vlaneseq
      %v2589 = vshrl.u32 %v2588, 7
      %v2590 = vsub.s32 0, %v2589
      %v2591 = vrot.slane %v2555, %v2590
      %v2592 = vmul.f32 %v2556, %v2591
      %v2593 = vmul.f32 %v2557, %v2591
      %v2594 = vmul.f32 %v2558, %v2591
      %v2595 = vmul.f32 %v2559, %v2591
      %v2596 = vmul.f32 %v2560, %v2591
      %v2597 = vmul.f32 %v2561, %v2591
      %v2598 = vmul.f32 %v2562, %v2591
      %v2599 = vmul.f32 %v2563, %v2591
      %v2600 = vmul.f32 %v2564, %v2591
      %v2601 = vmul.f32 %v2565, %v2591
      %v2602 = vmul.f32 %v2566, %v2591
      %v2603 = vmul.f32 %v2567, %v2591
      %v2604 = vmul.f32 %v2568, %v2591
      %v2605 = vmul.f32 %v2569, %v2591
      %v2606 = vmul.f32 %v2570, %v2591
      %v2607 = vmul.f32 %v2571, %v2591
      %v2608 = vmul.f32 %v2572, %v2591
      %v2609 = vmul.f32 %v2573, %v2591
      %v2610 = vmul.f32 %v2574, %v2591
      %v2611 = vmul.f32 %v2575, %v2591
      %v2612 = vmul.f32 %v2576, %v2591
      %v2613 = vmul.f32 %v2577, %v2591
      %v2614 = vmul.f32 %v2578, %v2591
      %v2615 = vmul.f32 %v2579, %v2591
      %v2616 = vmul.f32 %v2580, %v2591
      %v2617 = vmul.f32 %v2581, %v2591
      %v2618 = vmul.f32 %v2582, %v2591
      %v2619 = vmul.f32 %v2583, %v2591
      %v2620 = vmul.f32 %v2584, %v2591
      %v2621 = vmul.f32 %v2585, %v2591
      %v2622 = vmul.f32 %v2586, %v2591
      %v2623 = vmul.f32 %v2587, %v2591
      %v2624 = vadd.f32 %v2523, %v2592
      %v2625 = vadd.f32 %v2524, %v2593
      %v2626 = vadd.f32 %v2525, %v2594
      %v2627 = vadd.f32 %v2526, %v2595
      %v2628 = vadd.f32 %v2527, %v2596
      %v2629 = vadd.f32 %v2528, %v2597
      %v2630 = vadd.f32 %v2529, %v2598
      %v2631 = vadd.f32 %v2530, %v2599
      %v2632 = vadd.f32 %v2531, %v2600
      %v2633 = vadd.f32 %v2532, %v2601
      %v2634 = vadd.f32 %v2533, %v2602
      %v2635 = vadd.f32 %v2534, %v2603
      %v2636 = vadd.f32 %v2535, %v2604
      %v2637 = vadd.f32 %v2536, %v2605
      %v2638 = vadd.f32 %v2537, %v2606
      %v2639 = vadd.f32 %v2538, %v2607
      %v2640 = vadd.f32 %v2539, %v2608
      %v2641 = vadd.f32 %v2540, %v2609
      %v2642 = vadd.f32 %v2541, %v2610
      %v2643 = vadd.f32 %v2542, %v2611
      %v2644 = vadd.f32 %v2543, %v2612
      %v2645 = vadd.f32 %v2544, %v2613
      %v2646 = vadd.f32 %v2545, %v2614
      %v2647 = vadd.f32 %v2546, %v2615
      %v2648 = vadd.f32 %v2547, %v2616
      %v2649 = vadd.f32 %v2548, %v2617
      %v2650 = vadd.f32 %v2549, %v2618
      %v2651 = vadd.f32 %v2550, %v2619
      %v2652 = vadd.f32 %v2551, %v2620
      %v2653 = vadd.f32 %v2552, %v2621
      %v2654 = vadd.f32 %v2553, %v2622
      %v2655 = vadd.f32 %v2554, %v2623
      %v2656 = vld [vmem:[%s4 + $0xc] sm:$0x1]
      %v2657 = vld [vmem:[%s2151 + $0xa] sm:$0xff]
      %v2658 = vld [vmem:[%s2151 + $0x12] sm:$0xff]
      %v2659 = vld [vmem:[%s2151 + $0x2a] sm:$0xff]
      %v2660 = vld [vmem:[%s2151 + $0x32] sm:$0xff]
      %v2661 = vld [vmem:[%s2151 + $0x4a] sm:$0xff]
      %v2662 = vld [vmem:[%s2151 + $0x52] sm:$0xff]
      %v2663 = vld [vmem:[%s2151 + $0x6a] sm:$0xff]
      %v2664 = vld [vmem:[%s2151 + $0x72] sm:$0xff]
      %v2665 = vld [vmem:[%s2151 + $0x8a] sm:$0xff]
      %v2666 = vld [vmem:[%s2151 + $0x92] sm:$0xff]
      %v2667 = vld [vmem:[%s2151 + $0xaa] sm:$0xff]
      %v2668 = vld [vmem:[%s2151 + $0xb2] sm:$0xff]
      %v2669 = vld [vmem:[%s2151 + $0xca] sm:$0xff]
      %v2670 = vld [vmem:[%s2151 + $0xd2] sm:$0xff]
      %v2671 = vld [vmem:[%s2151 + $0xea] sm:$0xff]
      %v2672 = vld [vmem:[%s2151 + $0xf2] sm:$0xff]
      %v2673 = vld [vmem:[%s2151 + $0x10a] sm:$0xff]
      %v2674 = vld [vmem:[%s2151 + $0x112] sm:$0xff]
      %v2675 = vld [vmem:[%s2151 + $0x12a] sm:$0xff]
      %v2676 = vld [vmem:[%s2151 + $0x132] sm:$0xff]
      %v2677 = vld [vmem:[%s2151 + $0x14a] sm:$0xff]
      %v2678 = vld [vmem:[%s2151 + $0x152] sm:$0xff]
      %v2679 = vld [vmem:[%s2151 + $0x16a] sm:$0xff]
      %v2680 = vld [vmem:[%s2151 + $0x172] sm:$0xff]
      %v2681 = vld [vmem:[%s2151 + $0x18a] sm:$0xff]
      %v2682 = vld [vmem:[%s2151 + $0x192] sm:$0xff]
      %v2683 = vld [vmem:[%s2151 + $0x1aa] sm:$0xff]
      %v2684 = vld [vmem:[%s2151 + $0x1b2] sm:$0xff]
      %v2685 = vld [vmem:[%s2151 + $0x1ca] sm:$0xff]
      %v2686 = vld [vmem:[%s2151 + $0x1d2] sm:$0xff]
      %v2687 = vld [vmem:[%s2151 + $0x1ea] sm:$0xff]
      %v2688 = vld [vmem:[%s2151 + $0x1f2] sm:$0xff]
      %v2689 = vlaneseq
      %v2690 = vshrl.u32 %v2689, 7
      %v2691 = vsub.s32 0, %v2690
      %v2692 = vrot.slane %v2656, %v2691
      %v2693 = vmul.f32 %v2657, %v2692
      %v2694 = vmul.f32 %v2658, %v2692
      %v2695 = vmul.f32 %v2659, %v2692
      %v2696 = vmul.f32 %v2660, %v2692
      %v2697 = vmul.f32 %v2661, %v2692
      %v2698 = vmul.f32 %v2662, %v2692
      %v2699 = vmul.f32 %v2663, %v2692
      %v2700 = vmul.f32 %v2664, %v2692
      %v2701 = vmul.f32 %v2665, %v2692
      %v2702 = vmul.f32 %v2666, %v2692
      %v2703 = vmul.f32 %v2667, %v2692
      %v2704 = vmul.f32 %v2668, %v2692
      %v2705 = vmul.f32 %v2669, %v2692
      %v2706 = vmul.f32 %v2670, %v2692
      %v2707 = vmul.f32 %v2671, %v2692
      %v2708 = vmul.f32 %v2672, %v2692
      %v2709 = vmul.f32 %v2673, %v2692
      %v2710 = vmul.f32 %v2674, %v2692
      %v2711 = vmul.f32 %v2675, %v2692
      %v2712 = vmul.f32 %v2676, %v2692
      %v2713 = vmul.f32 %v2677, %v2692
      %v2714 = vmul.f32 %v2678, %v2692
      %v2715 = vmul.f32 %v2679, %v2692
      %v2716 = vmul.f32 %v2680, %v2692
      %v2717 = vmul.f32 %v2681, %v2692
      %v2718 = vmul.f32 %v2682, %v2692
      %v2719 = vmul.f32 %v2683, %v2692
      %v2720 = vmul.f32 %v2684, %v2692
      %v2721 = vmul.f32 %v2685, %v2692
      %v2722 = vmul.f32 %v2686, %v2692
      %v2723 = vmul.f32 %v2687, %v2692
      %v2724 = vmul.f32 %v2688, %v2692
      %v2725 = vadd.f32 %v2624, %v2693
      %v2726 = vadd.f32 %v2625, %v2694
      %v2727 = vadd.f32 %v2626, %v2695
      %v2728 = vadd.f32 %v2627, %v2696
      %v2729 = vadd.f32 %v2628, %v2697
      %v2730 = vadd.f32 %v2629, %v2698
      %v2731 = vadd.f32 %v2630, %v2699
      %v2732 = vadd.f32 %v2631, %v2700
      %v2733 = vadd.f32 %v2632, %v2701
      %v2734 = vadd.f32 %v2633, %v2702
      %v2735 = vadd.f32 %v2634, %v2703
      %v2736 = vadd.f32 %v2635, %v2704
      %v2737 = vadd.f32 %v2636, %v2705
      %v2738 = vadd.f32 %v2637, %v2706
      %v2739 = vadd.f32 %v2638, %v2707
      %v2740 = vadd.f32 %v2639, %v2708
      %v2741 = vadd.f32 %v2640, %v2709
      %v2742 = vadd.f32 %v2641, %v2710
      %v2743 = vadd.f32 %v2642, %v2711
      %v2744 = vadd.f32 %v2643, %v2712
      %v2745 = vadd.f32 %v2644, %v2713
      %v2746 = vadd.f32 %v2645, %v2714
      %v2747 = vadd.f32 %v2646, %v2715
      %v2748 = vadd.f32 %v2647, %v2716
      %v2749 = vadd.f32 %v2648, %v2717
      %v2750 = vadd.f32 %v2649, %v2718
      %v2751 = vadd.f32 %v2650, %v2719
      %v2752 = vadd.f32 %v2651, %v2720
      %v2753 = vadd.f32 %v2652, %v2721
      %v2754 = vadd.f32 %v2653, %v2722
      %v2755 = vadd.f32 %v2654, %v2723
      %v2756 = vadd.f32 %v2655, %v2724
      %v2757 = vld [vmem:[%s4 + $0xd] sm:$0x1]
      %v2758 = vld [vmem:[%s2151 + $0xb] sm:$0xff]
      %v2759 = vld [vmem:[%s2151 + $0x13] sm:$0xff]
      %v2760 = vld [vmem:[%s2151 + $0x2b] sm:$0xff]
      %v2761 = vld [vmem:[%s2151 + $0x33] sm:$0xff]
      %v2762 = vld [vmem:[%s2151 + $0x4b] sm:$0xff]
      %v2763 = vld [vmem:[%s2151 + $0x53] sm:$0xff]
      %v2764 = vld [vmem:[%s2151 + $0x6b] sm:$0xff]
      %v2765 = vld [vmem:[%s2151 + $0x73] sm:$0xff]
      %v2766 = vld [vmem:[%s2151 + $0x8b] sm:$0xff]
      %v2767 = vld [vmem:[%s2151 + $0x93] sm:$0xff]
      %v2768 = vld [vmem:[%s2151 + $0xab] sm:$0xff]
      %v2769 = vld [vmem:[%s2151 + $0xb3] sm:$0xff]
      %v2770 = vld [vmem:[%s2151 + $0xcb] sm:$0xff]
      %v2771 = vld [vmem:[%s2151 + $0xd3] sm:$0xff]
      %v2772 = vld [vmem:[%s2151 + $0xeb] sm:$0xff]
      %v2773 = vld [vmem:[%s2151 + $0xf3] sm:$0xff]
      %v2774 = vld [vmem:[%s2151 + $0x10b] sm:$0xff]
      %v2775 = vld [vmem:[%s2151 + $0x113] sm:$0xff]
      %v2776 = vld [vmem:[%s2151 + $0x12b] sm:$0xff]
      %v2777 = vld [vmem:[%s2151 + $0x133] sm:$0xff]
      %v2778 = vld [vmem:[%s2151 + $0x14b] sm:$0xff]
      %v2779 = vld [vmem:[%s2151 + $0x153] sm:$0xff]
      %v2780 = vld [vmem:[%s2151 + $0x16b] sm:$0xff]
      %v2781 = vld [vmem:[%s2151 + $0x173] sm:$0xff]
      %v2782 = vld [vmem:[%s2151 + $0x18b] sm:$0xff]
      %v2783 = vld [vmem:[%s2151 + $0x193] sm:$0xff]
      %v2784 = vld [vmem:[%s2151 + $0x1ab] sm:$0xff]
      %v2785 = vld [vmem:[%s2151 + $0x1b3] sm:$0xff]
      %v2786 = vld [vmem:[%s2151 + $0x1cb] sm:$0xff]
      %v2787 = vld [vmem:[%s2151 + $0x1d3] sm:$0xff]
      %v2788 = vld [vmem:[%s2151 + $0x1eb] sm:$0xff]
      %v2789 = vld [vmem:[%s2151 + $0x1f3] sm:$0xff]
      %v2790 = vlaneseq
      %v2791 = vshrl.u32 %v2790, 7
      %v2792 = vsub.s32 0, %v2791
      %v2793 = vrot.slane %v2757, %v2792
      %v2794 = vmul.f32 %v2758, %v2793
      %v2795 = vmul.f32 %v2759, %v2793
      %v2796 = vmul.f32 %v2760, %v2793
      %v2797 = vmul.f32 %v2761, %v2793
      %v2798 = vmul.f32 %v2762, %v2793
      %v2799 = vmul.f32 %v2763, %v2793
      %v2800 = vmul.f32 %v2764, %v2793
      %v2801 = vmul.f32 %v2765, %v2793
      %v2802 = vmul.f32 %v2766, %v2793
      %v2803 = vmul.f32 %v2767, %v2793
      %v2804 = vmul.f32 %v2768, %v2793
      %v2805 = vmul.f32 %v2769, %v2793
      %v2806 = vmul.f32 %v2770, %v2793
      %v2807 = vmul.f32 %v2771, %v2793
      %v2808 = vmul.f32 %v2772, %v2793
      %v2809 = vmul.f32 %v2773, %v2793
      %v2810 = vmul.f32 %v2774, %v2793
      %v2811 = vmul.f32 %v2775, %v2793
      %v2812 = vmul.f32 %v2776, %v2793
      %v2813 = vmul.f32 %v2777, %v2793
      %v2814 = vmul.f32 %v2778, %v2793
      %v2815 = vmul.f32 %v2779, %v2793
      %v2816 = vmul.f32 %v2780, %v2793
      %v2817 = vmul.f32 %v2781, %v2793
      %v2818 = vmul.f32 %v2782, %v2793
      %v2819 = vmul.f32 %v2783, %v2793
      %v2820 = vmul.f32 %v2784, %v2793
      %v2821 = vmul.f32 %v2785, %v2793
      %v2822 = vmul.f32 %v2786, %v2793
      %v2823 = vmul.f32 %v2787, %v2793
      %v2824 = vmul.f32 %v2788, %v2793
      %v2825 = vmul.f32 %v2789, %v2793
      %v2826 = vadd.f32 %v2725, %v2794
      %v2827 = vadd.f32 %v2726, %v2795
      %v2828 = vadd.f32 %v2727, %v2796
      %v2829 = vadd.f32 %v2728, %v2797
      %v2830 = vadd.f32 %v2729, %v2798
      %v2831 = vadd.f32 %v2730, %v2799
      %v2832 = vadd.f32 %v2731, %v2800
      %v2833 = vadd.f32 %v2732, %v2801
      %v2834 = vadd.f32 %v2733, %v2802
      %v2835 = vadd.f32 %v2734, %v2803
      %v2836 = vadd.f32 %v2735, %v2804
      %v2837 = vadd.f32 %v2736, %v2805
      %v2838 = vadd.f32 %v2737, %v2806
      %v2839 = vadd.f32 %v2738, %v2807
      %v2840 = vadd.f32 %v2739, %v2808
      %v2841 = vadd.f32 %v2740, %v2809
      %v2842 = vadd.f32 %v2741, %v2810
      %v2843 = vadd.f32 %v2742, %v2811
      %v2844 = vadd.f32 %v2743, %v2812
      %v2845 = vadd.f32 %v2744, %v2813
      %v2846 = vadd.f32 %v2745, %v2814
      %v2847 = vadd.f32 %v2746, %v2815
      %v2848 = vadd.f32 %v2747, %v2816
      %v2849 = vadd.f32 %v2748, %v2817
      %v2850 = vadd.f32 %v2749, %v2818
      %v2851 = vadd.f32 %v2750, %v2819
      %v2852 = vadd.f32 %v2751, %v2820
      %v2853 = vadd.f32 %v2752, %v2821
      %v2854 = vadd.f32 %v2753, %v2822
      %v2855 = vadd.f32 %v2754, %v2823
      %v2856 = vadd.f32 %v2755, %v2824
      %v2857 = vadd.f32 %v2756, %v2825
      %v2858 = vld [vmem:[%s4 + $0xe] sm:$0x1]
      %s2859 = scalar_lea.vmem [#allocation2], 64
      %v2860 = vld [vmem:[%s2859 + $0x5] sm:$0xff]
      %v2861 = vld [vmem:[%s2859 + $0xd] sm:$0xff]
      %v2862 = vld [vmem:[%s2859 + $0x25] sm:$0xff]
      %v2863 = vld [vmem:[%s2859 + $0x2d] sm:$0xff]
      %v2864 = vld [vmem:[%s2859 + $0x45] sm:$0xff]
      %v2865 = vld [vmem:[%s2859 + $0x4d] sm:$0xff]
      %v2866 = vld [vmem:[%s2859 + $0x65] sm:$0xff]
      %v2867 = vld [vmem:[%s2859 + $0x6d] sm:$0xff]
      %v2868 = vld [vmem:[%s2859 + $0x85] sm:$0xff]
      %v2869 = vld [vmem:[%s2859 + $0x8d] sm:$0xff]
      %v2870 = vld [vmem:[%s2859 + $0xa5] sm:$0xff]
      %v2871 = vld [vmem:[%s2859 + $0xad] sm:$0xff]
      %v2872 = vld [vmem:[%s2859 + $0xc5] sm:$0xff]
      %v2873 = vld [vmem:[%s2859 + $0xcd] sm:$0xff]
      %v2874 = vld [vmem:[%s2859 + $0xe5] sm:$0xff]
      %v2875 = vld [vmem:[%s2859 + $0xed] sm:$0xff]
      %v2876 = vld [vmem:[%s2859 + $0x105] sm:$0xff]
      %v2877 = vld [vmem:[%s2859 + $0x10d] sm:$0xff]
      %v2878 = vld [vmem:[%s2859 + $0x125] sm:$0xff]
      %v2879 = vld [vmem:[%s2859 + $0x12d] sm:$0xff]
      %v2880 = vld [vmem:[%s2859 + $0x145] sm:$0xff]
      %v2881 = vld [vmem:[%s2859 + $0x14d] sm:$0xff]
      %v2882 = vld [vmem:[%s2859 + $0x165] sm:$0xff]
      %v2883 = vld [vmem:[%s2859 + $0x16d] sm:$0xff]
      %v2884 = vld [vmem:[%s2859 + $0x185] sm:$0xff]
      %v2885 = vld [vmem:[%s2859 + $0x18d] sm:$0xff]
      %v2886 = vld [vmem:[%s2859 + $0x1a5] sm:$0xff]
      %v2887 = vld [vmem:[%s2859 + $0x1ad] sm:$0xff]
      %v2888 = vld [vmem:[%s2859 + $0x1c5] sm:$0xff]
      %v2889 = vld [vmem:[%s2859 + $0x1cd] sm:$0xff]
      %v2890 = vld [vmem:[%s2859 + $0x1e5] sm:$0xff]
      %v2891 = vld [vmem:[%s2859 + $0x1ed] sm:$0xff]
      %v2892 = vlaneseq
      %v2893 = vshrl.u32 %v2892, 7
      %v2894 = vsub.s32 0, %v2893
      %v2895 = vrot.slane %v2858, %v2894
      %v2896 = vmul.f32 %v2860, %v2895
      %v2897 = vmul.f32 %v2861, %v2895
      %v2898 = vmul.f32 %v2862, %v2895
      %v2899 = vmul.f32 %v2863, %v2895
      %v2900 = vmul.f32 %v2864, %v2895
      %v2901 = vmul.f32 %v2865, %v2895
      %v2902 = vmul.f32 %v2866, %v2895
      %v2903 = vmul.f32 %v2867, %v2895
      %v2904 = vmul.f32 %v2868, %v2895
      %v2905 = vmul.f32 %v2869, %v2895
      %v2906 = vmul.f32 %v2870, %v2895
      %v2907 = vmul.f32 %v2871, %v2895
      %v2908 = vmul.f32 %v2872, %v2895
      %v2909 = vmul.f32 %v2873, %v2895
      %v2910 = vmul.f32 %v2874, %v2895
      %v2911 = vmul.f32 %v2875, %v2895
      %v2912 = vmul.f32 %v2876, %v2895
      %v2913 = vmul.f32 %v2877, %v2895
      %v2914 = vmul.f32 %v2878, %v2895
      %v2915 = vmul.f32 %v2879, %v2895
      %v2916 = vmul.f32 %v2880, %v2895
      %v2917 = vmul.f32 %v2881, %v2895
      %v2918 = vmul.f32 %v2882, %v2895
      %v2919 = vmul.f32 %v2883, %v2895
      %v2920 = vmul.f32 %v2884, %v2895
      %v2921 = vmul.f32 %v2885, %v2895
      %v2922 = vmul.f32 %v2886, %v2895
      %v2923 = vmul.f32 %v2887, %v2895
      %v2924 = vmul.f32 %v2888, %v2895
      %v2925 = vmul.f32 %v2889, %v2895
      %v2926 = vmul.f32 %v2890, %v2895
      %v2927 = vmul.f32 %v2891, %v2895
      %v2928 = vadd.f32 %v2826, %v2896
      %v2929 = vadd.f32 %v2827, %v2897
      %v2930 = vadd.f32 %v2828, %v2898
      %v2931 = vadd.f32 %v2829, %v2899
      %v2932 = vadd.f32 %v2830, %v2900
      %v2933 = vadd.f32 %v2831, %v2901
      %v2934 = vadd.f32 %v2832, %v2902
      %v2935 = vadd.f32 %v2833, %v2903
      %v2936 = vadd.f32 %v2834, %v2904
      %v2937 = vadd.f32 %v2835, %v2905
      %v2938 = vadd.f32 %v2836, %v2906
      %v2939 = vadd.f32 %v2837, %v2907
      %v2940 = vadd.f32 %v2838, %v2908
      %v2941 = vadd.f32 %v2839, %v2909
      %v2942 = vadd.f32 %v2840, %v2910
      %v2943 = vadd.f32 %v2841, %v2911
      %v2944 = vadd.f32 %v2842, %v2912
      %v2945 = vadd.f32 %v2843, %v2913
      %v2946 = vadd.f32 %v2844, %v2914
      %v2947 = vadd.f32 %v2845, %v2915
      %v2948 = vadd.f32 %v2846, %v2916
      %v2949 = vadd.f32 %v2847, %v2917
      %v2950 = vadd.f32 %v2848, %v2918
      %v2951 = vadd.f32 %v2849, %v2919
      %v2952 = vadd.f32 %v2850, %v2920
      %v2953 = vadd.f32 %v2851, %v2921
      %v2954 = vadd.f32 %v2852, %v2922
      %v2955 = vadd.f32 %v2853, %v2923
      %v2956 = vadd.f32 %v2854, %v2924
      %v2957 = vadd.f32 %v2855, %v2925
      %v2958 = vadd.f32 %v2856, %v2926
      %v2959 = vadd.f32 %v2857, %v2927
      %v2960 = vld [vmem:[%s4 + $0xf] sm:$0x1]
      %v2961 = vld [vmem:[%s2859 + $0x6] sm:$0xff]
      %v2962 = vld [vmem:[%s2859 + $0xe] sm:$0xff]
      %v2963 = vld [vmem:[%s2859 + $0x26] sm:$0xff]
      %v2964 = vld [vmem:[%s2859 + $0x2e] sm:$0xff]
      %v2965 = vld [vmem:[%s2859 + $0x46] sm:$0xff]
      %v2966 = vld [vmem:[%s2859 + $0x4e] sm:$0xff]
      %v2967 = vld [vmem:[%s2859 + $0x66] sm:$0xff]
      %v2968 = vld [vmem:[%s2859 + $0x6e] sm:$0xff]
      %v2969 = vld [vmem:[%s2859 + $0x86] sm:$0xff]
      %v2970 = vld [vmem:[%s2859 + $0x8e] sm:$0xff]
      %v2971 = vld [vmem:[%s2859 + $0xa6] sm:$0xff]
      %v2972 = vld [vmem:[%s2859 + $0xae] sm:$0xff]
      %v2973 = vld [vmem:[%s2859 + $0xc6] sm:$0xff]
      %v2974 = vld [vmem:[%s2859 + $0xce] sm:$0xff]
      %v2975 = vld [vmem:[%s2859 + $0xe6] sm:$0xff]
      %v2976 = vld [vmem:[%s2859 + $0xee] sm:$0xff]
      %v2977 = vld [vmem:[%s2859 + $0x106] sm:$0xff]
      %v2978 = vld [vmem:[%s2859 + $0x10e] sm:$0xff]
      %v2979 = vld [vmem:[%s2859 + $0x126] sm:$0xff]
      %v2980 = vld [vmem:[%s2859 + $0x12e] sm:$0xff]
      %v2981 = vld [vmem:[%s2859 + $0x146] sm:$0xff]
      %v2982 = vld [vmem:[%s2859 + $0x14e] sm:$0xff]
      %v2983 = vld [vmem:[%s2859 + $0x166] sm:$0xff]
      %v2984 = vld [vmem:[%s2859 + $0x16e] sm:$0xff]
      %v2985 = vld [vmem:[%s2859 + $0x186] sm:$0xff]
      %v2986 = vld [vmem:[%s2859 + $0x18e] sm:$0xff]
      %v2987 = vld [vmem:[%s2859 + $0x1a6] sm:$0xff]
      %v2988 = vld [vmem:[%s2859 + $0x1ae] sm:$0xff]
      %v2989 = vld [vmem:[%s2859 + $0x1c6] sm:$0xff]
      %v2990 = vld [vmem:[%s2859 + $0x1ce] sm:$0xff]
      %v2991 = vld [vmem:[%s2859 + $0x1e6] sm:$0xff]
      %v2992 = vld [vmem:[%s2859 + $0x1ee] sm:$0xff]
      %v2993 = vlaneseq
      %v2994 = vshrl.u32 %v2993, 7
      %v2995 = vsub.s32 0, %v2994
      %v2996 = vrot.slane %v2960, %v2995
      %v2997 = vmul.f32 %v2961, %v2996
      %v2998 = vmul.f32 %v2962, %v2996
      %v2999 = vmul.f32 %v2963, %v2996
      %v3000 = vmul.f32 %v2964, %v2996
      %v3001 = vmul.f32 %v2965, %v2996
      %v3002 = vmul.f32 %v2966, %v2996
      %v3003 = vmul.f32 %v2967, %v2996
      %v3004 = vmul.f32 %v2968, %v2996
      %v3005 = vmul.f32 %v2969, %v2996
      %v3006 = vmul.f32 %v2970, %v2996
      %v3007 = vmul.f32 %v2971, %v2996
      %v3008 = vmul.f32 %v2972, %v2996
      %v3009 = vmul.f32 %v2973, %v2996
      %v3010 = vmul.f32 %v2974, %v2996
      %v3011 = vmul.f32 %v2975, %v2996
      %v3012 = vmul.f32 %v2976, %v2996
      %v3013 = vmul.f32 %v2977, %v2996
      %v3014 = vmul.f32 %v2978, %v2996
      %v3015 = vmul.f32 %v2979, %v2996
      %v3016 = vmul.f32 %v2980, %v2996
      %v3017 = vmul.f32 %v2981, %v2996
      %v3018 = vmul.f32 %v2982, %v2996
      %v3019 = vmul.f32 %v2983, %v2996
      %v3020 = vmul.f32 %v2984, %v2996
      %v3021 = vmul.f32 %v2985, %v2996
      %v3022 = vmul.f32 %v2986, %v2996
      %v3023 = vmul.f32 %v2987, %v2996
      %v3024 = vmul.f32 %v2988, %v2996
      %v3025 = vmul.f32 %v2989, %v2996
      %v3026 = vmul.f32 %v2990, %v2996
      %v3027 = vmul.f32 %v2991, %v2996
      %v3028 = vmul.f32 %v2992, %v2996
      %v3029 = vadd.f32 %v2928, %v2997
      %v3030 = vadd.f32 %v2929, %v2998
      %v3031 = vadd.f32 %v2930, %v2999
      %v3032 = vadd.f32 %v2931, %v3000
      %v3033 = vadd.f32 %v2932, %v3001
      %v3034 = vadd.f32 %v2933, %v3002
      %v3035 = vadd.f32 %v2934, %v3003
      %v3036 = vadd.f32 %v2935, %v3004
      %v3037 = vadd.f32 %v2936, %v3005
      %v3038 = vadd.f32 %v2937, %v3006
      %v3039 = vadd.f32 %v2938, %v3007
      %v3040 = vadd.f32 %v2939, %v3008
      %v3041 = vadd.f32 %v2940, %v3009
      %v3042 = vadd.f32 %v2941, %v3010
      %v3043 = vadd.f32 %v2942, %v3011
      %v3044 = vadd.f32 %v2943, %v3012
      %v3045 = vadd.f32 %v2944, %v3013
      %v3046 = vadd.f32 %v2945, %v3014
      %v3047 = vadd.f32 %v2946, %v3015
      %v3048 = vadd.f32 %v2947, %v3016
      %v3049 = vadd.f32 %v2948, %v3017
      %v3050 = vadd.f32 %v2949, %v3018
      %v3051 = vadd.f32 %v2950, %v3019
      %v3052 = vadd.f32 %v2951, %v3020
      %v3053 = vadd.f32 %v2952, %v3021
      %v3054 = vadd.f32 %v2953, %v3022
      %v3055 = vadd.f32 %v2954, %v3023
      %v3056 = vadd.f32 %v2955, %v3024
      %v3057 = vadd.f32 %v2956, %v3025
      %v3058 = vadd.f32 %v2957, %v3026
      %v3059 = vadd.f32 %v2958, %v3027
      %v3060 = vadd.f32 %v2959, %v3028
      %v3061 = vld [vmem:[%s4 + $0x10] sm:$0x1]
      %v3062 = vld [vmem:[%s2859 + $0x7] sm:$0xff]
      %v3063 = vld [vmem:[%s2859 + $0xf] sm:$0xff]
      %v3064 = vld [vmem:[%s2859 + $0x27] sm:$0xff]
      %v3065 = vld [vmem:[%s2859 + $0x2f] sm:$0xff]
      %v3066 = vld [vmem:[%s2859 + $0x47] sm:$0xff]
      %v3067 = vld [vmem:[%s2859 + $0x4f] sm:$0xff]
      %v3068 = vld [vmem:[%s2859 + $0x67] sm:$0xff]
      %v3069 = vld [vmem:[%s2859 + $0x6f] sm:$0xff]
      %v3070 = vld [vmem:[%s2859 + $0x87] sm:$0xff]
      %v3071 = vld [vmem:[%s2859 + $0x8f] sm:$0xff]
      %v3072 = vld [vmem:[%s2859 + $0xa7] sm:$0xff]
      %v3073 = vld [vmem:[%s2859 + $0xaf] sm:$0xff]
      %v3074 = vld [vmem:[%s2859 + $0xc7] sm:$0xff]
      %v3075 = vld [vmem:[%s2859 + $0xcf] sm:$0xff]
      %v3076 = vld [vmem:[%s2859 + $0xe7] sm:$0xff]
      %v3077 = vld [vmem:[%s2859 + $0xef] sm:$0xff]
      %v3078 = vld [vmem:[%s2859 + $0x107] sm:$0xff]
      %v3079 = vld [vmem:[%s2859 + $0x10f] sm:$0xff]
      %v3080 = vld [vmem:[%s2859 + $0x127] sm:$0xff]
      %v3081 = vld [vmem:[%s2859 + $0x12f] sm:$0xff]
      %v3082 = vld [vmem:[%s2859 + $0x147] sm:$0xff]
      %v3083 = vld [vmem:[%s2859 + $0x14f] sm:$0xff]
      %v3084 = vld [vmem:[%s2859 + $0x167] sm:$0xff]
      %v3085 = vld [vmem:[%s2859 + $0x16f] sm:$0xff]
      %v3086 = vld [vmem:[%s2859 + $0x187] sm:$0xff]
      %v3087 = vld [vmem:[%s2859 + $0x18f] sm:$0xff]
      %v3088 = vld [vmem:[%s2859 + $0x1a7] sm:$0xff]
      %v3089 = vld [vmem:[%s2859 + $0x1af] sm:$0xff]
      %v3090 = vld [vmem:[%s2859 + $0x1c7] sm:$0xff]
      %v3091 = vld [vmem:[%s2859 + $0x1cf] sm:$0xff]
      %v3092 = vld [vmem:[%s2859 + $0x1e7] sm:$0xff]
      %v3093 = vld [vmem:[%s2859 + $0x1ef] sm:$0xff]
      %v3094 = vlaneseq
      %v3095 = vshrl.u32 %v3094, 7
      %v3096 = vsub.s32 0, %v3095
      %v3097 = vrot.slane %v3061, %v3096
      %v3098 = vmul.f32 %v3062, %v3097
      %v3099 = vmul.f32 %v3063, %v3097
      %v3100 = vmul.f32 %v3064, %v3097
      %v3101 = vmul.f32 %v3065, %v3097
      %v3102 = vmul.f32 %v3066, %v3097
      %v3103 = vmul.f32 %v3067, %v3097
      %v3104 = vmul.f32 %v3068, %v3097
      %v3105 = vmul.f32 %v3069, %v3097
      %v3106 = vmul.f32 %v3070, %v3097
      %v3107 = vmul.f32 %v3071, %v3097
      %v3108 = vmul.f32 %v3072, %v3097
      %v3109 = vmul.f32 %v3073, %v3097
      %v3110 = vmul.f32 %v3074, %v3097
      %v3111 = vmul.f32 %v3075, %v3097
      %v3112 = vmul.f32 %v3076, %v3097
      %v3113 = vmul.f32 %v3077, %v3097
      %v3114 = vmul.f32 %v3078, %v3097
      %v3115 = vmul.f32 %v3079, %v3097
      %v3116 = vmul.f32 %v3080, %v3097
      %v3117 = vmul.f32 %v3081, %v3097
      %v3118 = vmul.f32 %v3082, %v3097
      %v3119 = vmul.f32 %v3083, %v3097
      %v3120 = vmul.f32 %v3084, %v3097
      %v3121 = vmul.f32 %v3085, %v3097
      %v3122 = vmul.f32 %v3086, %v3097
      %v3123 = vmul.f32 %v3087, %v3097
      %v3124 = vmul.f32 %v3088, %v3097
      %v3125 = vmul.f32 %v3089, %v3097
      %v3126 = vmul.f32 %v3090, %v3097
      %v3127 = vmul.f32 %v3091, %v3097
      %v3128 = vmul.f32 %v3092, %v3097
      %v3129 = vmul.f32 %v3093, %v3097
      %v3130 = vadd.f32 %v3029, %v3098
      %v3131 = vadd.f32 %v3030, %v3099
      %v3132 = vadd.f32 %v3031, %v3100
      %v3133 = vadd.f32 %v3032, %v3101
      %v3134 = vadd.f32 %v3033, %v3102
      %v3135 = vadd.f32 %v3034, %v3103
      %v3136 = vadd.f32 %v3035, %v3104
      %v3137 = vadd.f32 %v3036, %v3105
      %v3138 = vadd.f32 %v3037, %v3106
      %v3139 = vadd.f32 %v3038, %v3107
      %v3140 = vadd.f32 %v3039, %v3108
      %v3141 = vadd.f32 %v3040, %v3109
      %v3142 = vadd.f32 %v3041, %v3110
      %v3143 = vadd.f32 %v3042, %v3111
      %v3144 = vadd.f32 %v3043, %v3112
      %v3145 = vadd.f32 %v3044, %v3113
      %v3146 = vadd.f32 %v3045, %v3114
      %v3147 = vadd.f32 %v3046, %v3115
      %v3148 = vadd.f32 %v3047, %v3116
      %v3149 = vadd.f32 %v3048, %v3117
      %v3150 = vadd.f32 %v3049, %v3118
      %v3151 = vadd.f32 %v3050, %v3119
      %v3152 = vadd.f32 %v3051, %v3120
      %v3153 = vadd.f32 %v3052, %v3121
      %v3154 = vadd.f32 %v3053, %v3122
      %v3155 = vadd.f32 %v3054, %v3123
      %v3156 = vadd.f32 %v3055, %v3124
      %v3157 = vadd.f32 %v3056, %v3125
      %v3158 = vadd.f32 %v3057, %v3126
      %v3159 = vadd.f32 %v3058, %v3127
      %v3160 = vadd.f32 %v3059, %v3128
      %v3161 = vadd.f32 %v3060, %v3129
      %v3162 = vld [vmem:[%s4 + $0x11] sm:$0x1]
      %v3163 = vld [vmem:[%s2859 + $0x8] sm:$0xff]
      %v3164 = vld [vmem:[%s2859 + $0x10] sm:$0xff]
      %v3165 = vld [vmem:[%s2859 + $0x28] sm:$0xff]
      %v3166 = vld [vmem:[%s2859 + $0x30] sm:$0xff]
      %v3167 = vld [vmem:[%s2859 + $0x48] sm:$0xff]
      %v3168 = vld [vmem:[%s2859 + $0x50] sm:$0xff]
      %v3169 = vld [vmem:[%s2859 + $0x68] sm:$0xff]
      %v3170 = vld [vmem:[%s2859 + $0x70] sm:$0xff]
      %v3171 = vld [vmem:[%s2859 + $0x88] sm:$0xff]
      %v3172 = vld [vmem:[%s2859 + $0x90] sm:$0xff]
      %v3173 = vld [vmem:[%s2859 + $0xa8] sm:$0xff]
      %v3174 = vld [vmem:[%s2859 + $0xb0] sm:$0xff]
      %v3175 = vld [vmem:[%s2859 + $0xc8] sm:$0xff]
      %v3176 = vld [vmem:[%s2859 + $0xd0] sm:$0xff]
      %v3177 = vld [vmem:[%s2859 + $0xe8] sm:$0xff]
      %v3178 = vld [vmem:[%s2859 + $0xf0] sm:$0xff]
      %v3179 = vld [vmem:[%s2859 + $0x108] sm:$0xff]
      %v3180 = vld [vmem:[%s2859 + $0x110] sm:$0xff]
      %v3181 = vld [vmem:[%s2859 + $0x128] sm:$0xff]
      %v3182 = vld [vmem:[%s2859 + $0x130] sm:$0xff]
      %v3183 = vld [vmem:[%s2859 + $0x148] sm:$0xff]
      %v3184 = vld [vmem:[%s2859 + $0x150] sm:$0xff]
      %v3185 = vld [vmem:[%s2859 + $0x168] sm:$0xff]
      %v3186 = vld [vmem:[%s2859 + $0x170] sm:$0xff]
      %v3187 = vld [vmem:[%s2859 + $0x188] sm:$0xff]
      %v3188 = vld [vmem:[%s2859 + $0x190] sm:$0xff]
      %v3189 = vld [vmem:[%s2859 + $0x1a8] sm:$0xff]
      %v3190 = vld [vmem:[%s2859 + $0x1b0] sm:$0xff]
      %v3191 = vld [vmem:[%s2859 + $0x1c8] sm:$0xff]
      %v3192 = vld [vmem:[%s2859 + $0x1d0] sm:$0xff]
      %v3193 = vld [vmem:[%s2859 + $0x1e8] sm:$0xff]
      %v3194 = vld [vmem:[%s2859 + $0x1f0] sm:$0xff]
      %v3195 = vlaneseq
      %v3196 = vshrl.u32 %v3195, 7
      %v3197 = vsub.s32 0, %v3196
      %v3198 = vrot.slane %v3162, %v3197
      %v3199 = vmul.f32 %v3163, %v3198
      %v3200 = vmul.f32 %v3164, %v3198
      %v3201 = vmul.f32 %v3165, %v3198
      %v3202 = vmul.f32 %v3166, %v3198
      %v3203 = vmul.f32 %v3167, %v3198
      %v3204 = vmul.f32 %v3168, %v3198
      %v3205 = vmul.f32 %v3169, %v3198
      %v3206 = vmul.f32 %v3170, %v3198
      %v3207 = vmul.f32 %v3171, %v3198
      %v3208 = vmul.f32 %v3172, %v3198
      %v3209 = vmul.f32 %v3173, %v3198
      %v3210 = vmul.f32 %v3174, %v3198
      %v3211 = vmul.f32 %v3175, %v3198
      %v3212 = vmul.f32 %v3176, %v3198
      %v3213 = vmul.f32 %v3177, %v3198
      %v3214 = vmul.f32 %v3178, %v3198
      %v3215 = vmul.f32 %v3179, %v3198
      %v3216 = vmul.f32 %v3180, %v3198
      %v3217 = vmul.f32 %v3181, %v3198
      %v3218 = vmul.f32 %v3182, %v3198
      %v3219 = vmul.f32 %v3183, %v3198
      %v3220 = vmul.f32 %v3184, %v3198
      %v3221 = vmul.f32 %v3185, %v3198
      %v3222 = vmul.f32 %v3186, %v3198
      %v3223 = vmul.f32 %v3187, %v3198
      %v3224 = vmul.f32 %v3188, %v3198
      %v3225 = vmul.f32 %v3189, %v3198
      %v3226 = vmul.f32 %v3190, %v3198
      %v3227 = vmul.f32 %v3191, %v3198
      %v3228 = vmul.f32 %v3192, %v3198
      %v3229 = vmul.f32 %v3193, %v3198
      %v3230 = vmul.f32 %v3194, %v3198
      %v3231 = vadd.f32 %v3130, %v3199
      %v3232 = vadd.f32 %v3131, %v3200
      %v3233 = vadd.f32 %v3132, %v3201
      %v3234 = vadd.f32 %v3133, %v3202
      %v3235 = vadd.f32 %v3134, %v3203
      %v3236 = vadd.f32 %v3135, %v3204
      %v3237 = vadd.f32 %v3136, %v3205
      %v3238 = vadd.f32 %v3137, %v3206
      %v3239 = vadd.f32 %v3138, %v3207
      %v3240 = vadd.f32 %v3139, %v3208
      %v3241 = vadd.f32 %v3140, %v3209
      %v3242 = vadd.f32 %v3141, %v3210
      %v3243 = vadd.f32 %v3142, %v3211
      %v3244 = vadd.f32 %v3143, %v3212
      %v3245 = vadd.f32 %v3144, %v3213
      %v3246 = vadd.f32 %v3145, %v3214
      %v3247 = vadd.f32 %v3146, %v3215
      %v3248 = vadd.f32 %v3147, %v3216
      %v3249 = vadd.f32 %v3148, %v3217
      %v3250 = vadd.f32 %v3149, %v3218
      %v3251 = vadd.f32 %v3150, %v3219
      %v3252 = vadd.f32 %v3151, %v3220
      %v3253 = vadd.f32 %v3152, %v3221
      %v3254 = vadd.f32 %v3153, %v3222
      %v3255 = vadd.f32 %v3154, %v3223
      %v3256 = vadd.f32 %v3155, %v3224
      %v3257 = vadd.f32 %v3156, %v3225
      %v3258 = vadd.f32 %v3157, %v3226
      %v3259 = vadd.f32 %v3158, %v3227
      %v3260 = vadd.f32 %v3159, %v3228
      %v3261 = vadd.f32 %v3160, %v3229
      %v3262 = vadd.f32 %v3161, %v3230
      %v3263 = vld [vmem:[%s4 + $0x12] sm:$0x1]
      %v3264 = vld [vmem:[%s2859 + $0x9] sm:$0xff]
      %v3265 = vld [vmem:[%s2859 + $0x11] sm:$0xff]
      %v3266 = vld [vmem:[%s2859 + $0x29] sm:$0xff]
      %v3267 = vld [vmem:[%s2859 + $0x31] sm:$0xff]
      %v3268 = vld [vmem:[%s2859 + $0x49] sm:$0xff]
      %v3269 = vld [vmem:[%s2859 + $0x51] sm:$0xff]
      %v3270 = vld [vmem:[%s2859 + $0x69] sm:$0xff]
      %v3271 = vld [vmem:[%s2859 + $0x71] sm:$0xff]
      %v3272 = vld [vmem:[%s2859 + $0x89] sm:$0xff]
      %v3273 = vld [vmem:[%s2859 + $0x91] sm:$0xff]
      %v3274 = vld [vmem:[%s2859 + $0xa9] sm:$0xff]
      %v3275 = vld [vmem:[%s2859 + $0xb1] sm:$0xff]
      %v3276 = vld [vmem:[%s2859 + $0xc9] sm:$0xff]
      %v3277 = vld [vmem:[%s2859 + $0xd1] sm:$0xff]
      %v3278 = vld [vmem:[%s2859 + $0xe9] sm:$0xff]
      %v3279 = vld [vmem:[%s2859 + $0xf1] sm:$0xff]
      %v3280 = vld [vmem:[%s2859 + $0x109] sm:$0xff]
      %v3281 = vld [vmem:[%s2859 + $0x111] sm:$0xff]
      %v3282 = vld [vmem:[%s2859 + $0x129] sm:$0xff]
      %v3283 = vld [vmem:[%s2859 + $0x131] sm:$0xff]
      %v3284 = vld [vmem:[%s2859 + $0x149] sm:$0xff]
      %v3285 = vld [vmem:[%s2859 + $0x151] sm:$0xff]
      %v3286 = vld [vmem:[%s2859 + $0x169] sm:$0xff]
      %v3287 = vld [vmem:[%s2859 + $0x171] sm:$0xff]
      %v3288 = vld [vmem:[%s2859 + $0x189] sm:$0xff]
      %v3289 = vld [vmem:[%s2859 + $0x191] sm:$0xff]
      %v3290 = vld [vmem:[%s2859 + $0x1a9] sm:$0xff]
      %v3291 = vld [vmem:[%s2859 + $0x1b1] sm:$0xff]
      %v3292 = vld [vmem:[%s2859 + $0x1c9] sm:$0xff]
      %v3293 = vld [vmem:[%s2859 + $0x1d1] sm:$0xff]
      %v3294 = vld [vmem:[%s2859 + $0x1e9] sm:$0xff]
      %v3295 = vld [vmem:[%s2859 + $0x1f1] sm:$0xff]
      %v3296 = vlaneseq
      %v3297 = vshrl.u32 %v3296, 7
      %v3298 = vsub.s32 0, %v3297
      %v3299 = vrot.slane %v3263, %v3298
      %v3300 = vmul.f32 %v3264, %v3299
      %v3301 = vmul.f32 %v3265, %v3299
      %v3302 = vmul.f32 %v3266, %v3299
      %v3303 = vmul.f32 %v3267, %v3299
      %v3304 = vmul.f32 %v3268, %v3299
      %v3305 = vmul.f32 %v3269, %v3299
      %v3306 = vmul.f32 %v3270, %v3299
      %v3307 = vmul.f32 %v3271, %v3299
      %v3308 = vmul.f32 %v3272, %v3299
      %v3309 = vmul.f32 %v3273, %v3299
      %v3310 = vmul.f32 %v3274, %v3299
      %v3311 = vmul.f32 %v3275, %v3299
      %v3312 = vmul.f32 %v3276, %v3299
      %v3313 = vmul.f32 %v3277, %v3299
      %v3314 = vmul.f32 %v3278, %v3299
      %v3315 = vmul.f32 %v3279, %v3299
      %v3316 = vmul.f32 %v3280, %v3299
      %v3317 = vmul.f32 %v3281, %v3299
      %v3318 = vmul.f32 %v3282, %v3299
      %v3319 = vmul.f32 %v3283, %v3299
      %v3320 = vmul.f32 %v3284, %v3299
      %v3321 = vmul.f32 %v3285, %v3299
      %v3322 = vmul.f32 %v3286, %v3299
      %v3323 = vmul.f32 %v3287, %v3299
      %v3324 = vmul.f32 %v3288, %v3299
      %v3325 = vmul.f32 %v3289, %v3299
      %v3326 = vmul.f32 %v3290, %v3299
      %v3327 = vmul.f32 %v3291, %v3299
      %v3328 = vmul.f32 %v3292, %v3299
      %v3329 = vmul.f32 %v3293, %v3299
      %v3330 = vmul.f32 %v3294, %v3299
      %v3331 = vmul.f32 %v3295, %v3299
      %v3332 = vadd.f32 %v3231, %v3300
      %v3333 = vadd.f32 %v3232, %v3301
      %v3334 = vadd.f32 %v3233, %v3302
      %v3335 = vadd.f32 %v3234, %v3303
      %v3336 = vadd.f32 %v3235, %v3304
      %v3337 = vadd.f32 %v3236, %v3305
      %v3338 = vadd.f32 %v3237, %v3306
      %v3339 = vadd.f32 %v3238, %v3307
      %v3340 = vadd.f32 %v3239, %v3308
      %v3341 = vadd.f32 %v3240, %v3309
      %v3342 = vadd.f32 %v3241, %v3310
      %v3343 = vadd.f32 %v3242, %v3311
      %v3344 = vadd.f32 %v3243, %v3312
      %v3345 = vadd.f32 %v3244, %v3313
      %v3346 = vadd.f32 %v3245, %v3314
      %v3347 = vadd.f32 %v3246, %v3315
      %v3348 = vadd.f32 %v3247, %v3316
      %v3349 = vadd.f32 %v3248, %v3317
      %v3350 = vadd.f32 %v3249, %v3318
      %v3351 = vadd.f32 %v3250, %v3319
      %v3352 = vadd.f32 %v3251, %v3320
      %v3353 = vadd.f32 %v3252, %v3321
      %v3354 = vadd.f32 %v3253, %v3322
      %v3355 = vadd.f32 %v3254, %v3323
      %v3356 = vadd.f32 %v3255, %v3324
      %v3357 = vadd.f32 %v3256, %v3325
      %v3358 = vadd.f32 %v3257, %v3326
      %v3359 = vadd.f32 %v3258, %v3327
      %v3360 = vadd.f32 %v3259, %v3328
      %v3361 = vadd.f32 %v3260, %v3329
      %v3362 = vadd.f32 %v3261, %v3330
      %v3363 = vadd.f32 %v3262, %v3331
      %v3364 = vld [vmem:[%s4 + $0x13] sm:$0x1]
      %v3365 = vld [vmem:[%s2859 + $0xa] sm:$0xff]
      %v3366 = vld [vmem:[%s2859 + $0x12] sm:$0xff]
      %v3367 = vld [vmem:[%s2859 + $0x2a] sm:$0xff]
      %v3368 = vld [vmem:[%s2859 + $0x32] sm:$0xff]
      %v3369 = vld [vmem:[%s2859 + $0x4a] sm:$0xff]
      %v3370 = vld [vmem:[%s2859 + $0x52] sm:$0xff]
      %v3371 = vld [vmem:[%s2859 + $0x6a] sm:$0xff]
      %v3372 = vld [vmem:[%s2859 + $0x72] sm:$0xff]
      %v3373 = vld [vmem:[%s2859 + $0x8a] sm:$0xff]
      %v3374 = vld [vmem:[%s2859 + $0x92] sm:$0xff]
      %v3375 = vld [vmem:[%s2859 + $0xaa] sm:$0xff]
      %v3376 = vld [vmem:[%s2859 + $0xb2] sm:$0xff]
      %v3377 = vld [vmem:[%s2859 + $0xca] sm:$0xff]
      %v3378 = vld [vmem:[%s2859 + $0xd2] sm:$0xff]
      %v3379 = vld [vmem:[%s2859 + $0xea] sm:$0xff]
      %v3380 = vld [vmem:[%s2859 + $0xf2] sm:$0xff]
      %v3381 = vld [vmem:[%s2859 + $0x10a] sm:$0xff]
      %v3382 = vld [vmem:[%s2859 + $0x112] sm:$0xff]
      %v3383 = vld [vmem:[%s2859 + $0x12a] sm:$0xff]
      %v3384 = vld [vmem:[%s2859 + $0x132] sm:$0xff]
      %v3385 = vld [vmem:[%s2859 + $0x14a] sm:$0xff]
      %v3386 = vld [vmem:[%s2859 + $0x152] sm:$0xff]
      %v3387 = vld [vmem:[%s2859 + $0x16a] sm:$0xff]
      %v3388 = vld [vmem:[%s2859 + $0x172] sm:$0xff]
      %v3389 = vld [vmem:[%s2859 + $0x18a] sm:$0xff]
      %v3390 = vld [vmem:[%s2859 + $0x192] sm:$0xff]
      %v3391 = vld [vmem:[%s2859 + $0x1aa] sm:$0xff]
      %v3392 = vld [vmem:[%s2859 + $0x1b2] sm:$0xff]
      %v3393 = vld [vmem:[%s2859 + $0x1ca] sm:$0xff]
      %v3394 = vld [vmem:[%s2859 + $0x1d2] sm:$0xff]
      %v3395 = vld [vmem:[%s2859 + $0x1ea] sm:$0xff]
      %v3396 = vld [vmem:[%s2859 + $0x1f2] sm:$0xff]
      %v3397 = vlaneseq
      %v3398 = vshrl.u32 %v3397, 7
      %v3399 = vsub.s32 0, %v3398
      %v3400 = vrot.slane %v3364, %v3399
      %v3401 = vmul.f32 %v3365, %v3400
      %v3402 = vmul.f32 %v3366, %v3400
      %v3403 = vmul.f32 %v3367, %v3400
      %v3404 = vmul.f32 %v3368, %v3400
      %v3405 = vmul.f32 %v3369, %v3400
      %v3406 = vmul.f32 %v3370, %v3400
      %v3407 = vmul.f32 %v3371, %v3400
      %v3408 = vmul.f32 %v3372, %v3400
      %v3409 = vmul.f32 %v3373, %v3400
      %v3410 = vmul.f32 %v3374, %v3400
      %v3411 = vmul.f32 %v3375, %v3400
      %v3412 = vmul.f32 %v3376, %v3400
      %v3413 = vmul.f32 %v3377, %v3400
      %v3414 = vmul.f32 %v3378, %v3400
      %v3415 = vmul.f32 %v3379, %v3400
      %v3416 = vmul.f32 %v3380, %v3400
      %v3417 = vmul.f32 %v3381, %v3400
      %v3418 = vmul.f32 %v3382, %v3400
      %v3419 = vmul.f32 %v3383, %v3400
      %v3420 = vmul.f32 %v3384, %v3400
      %v3421 = vmul.f32 %v3385, %v3400
      %v3422 = vmul.f32 %v3386, %v3400
      %v3423 = vmul.f32 %v3387, %v3400
      %v3424 = vmul.f32 %v3388, %v3400
      %v3425 = vmul.f32 %v3389, %v3400
      %v3426 = vmul.f32 %v3390, %v3400
      %v3427 = vmul.f32 %v3391, %v3400
      %v3428 = vmul.f32 %v3392, %v3400
      %v3429 = vmul.f32 %v3393, %v3400
      %v3430 = vmul.f32 %v3394, %v3400
      %v3431 = vmul.f32 %v3395, %v3400
      %v3432 = vmul.f32 %v3396, %v3400
      %v3433 = vadd.f32 %v3332, %v3401
      %v3434 = vadd.f32 %v3333, %v3402
      %v3435 = vadd.f32 %v3334, %v3403
      %v3436 = vadd.f32 %v3335, %v3404
      %v3437 = vadd.f32 %v3336, %v3405
      %v3438 = vadd.f32 %v3337, %v3406
      %v3439 = vadd.f32 %v3338, %v3407
      %v3440 = vadd.f32 %v3339, %v3408
      %v3441 = vadd.f32 %v3340, %v3409
      %v3442 = vadd.f32 %v3341, %v3410
      %v3443 = vadd.f32 %v3342, %v3411
      %v3444 = vadd.f32 %v3343, %v3412
      %v3445 = vadd.f32 %v3344, %v3413
      %v3446 = vadd.f32 %v3345, %v3414
      %v3447 = vadd.f32 %v3346, %v3415
      %v3448 = vadd.f32 %v3347, %v3416
      %v3449 = vadd.f32 %v3348, %v3417
      %v3450 = vadd.f32 %v3349, %v3418
      %v3451 = vadd.f32 %v3350, %v3419
      %v3452 = vadd.f32 %v3351, %v3420
      %v3453 = vadd.f32 %v3352, %v3421
      %v3454 = vadd.f32 %v3353, %v3422
      %v3455 = vadd.f32 %v3354, %v3423
      %v3456 = vadd.f32 %v3355, %v3424
      %v3457 = vadd.f32 %v3356, %v3425
      %v3458 = vadd.f32 %v3357, %v3426
      %v3459 = vadd.f32 %v3358, %v3427
      %v3460 = vadd.f32 %v3359, %v3428
      %v3461 = vadd.f32 %v3360, %v3429
      %v3462 = vadd.f32 %v3361, %v3430
      %v3463 = vadd.f32 %v3362, %v3431
      %v3464 = vadd.f32 %v3363, %v3432
      %v3465 = vld [vmem:[%s4 + $0x14] sm:$0x1]
      %v3466 = vld [vmem:[%s2859 + $0xb] sm:$0xff]
      %v3467 = vld [vmem:[%s2859 + $0x13] sm:$0xff]
      %v3468 = vld [vmem:[%s2859 + $0x2b] sm:$0xff]
      %v3469 = vld [vmem:[%s2859 + $0x33] sm:$0xff]
      %v3470 = vld [vmem:[%s2859 + $0x4b] sm:$0xff]
      %v3471 = vld [vmem:[%s2859 + $0x53] sm:$0xff]
      %v3472 = vld [vmem:[%s2859 + $0x6b] sm:$0xff]
      %v3473 = vld [vmem:[%s2859 + $0x73] sm:$0xff]
      %v3474 = vld [vmem:[%s2859 + $0x8b] sm:$0xff]
      %v3475 = vld [vmem:[%s2859 + $0x93] sm:$0xff]
      %v3476 = vld [vmem:[%s2859 + $0xab] sm:$0xff]
      %v3477 = vld [vmem:[%s2859 + $0xb3] sm:$0xff]
      %v3478 = vld [vmem:[%s2859 + $0xcb] sm:$0xff]
      %v3479 = vld [vmem:[%s2859 + $0xd3] sm:$0xff]
      %v3480 = vld [vmem:[%s2859 + $0xeb] sm:$0xff]
      %v3481 = vld [vmem:[%s2859 + $0xf3] sm:$0xff]
      %v3482 = vld [vmem:[%s2859 + $0x10b] sm:$0xff]
      %v3483 = vld [vmem:[%s2859 + $0x113] sm:$0xff]
      %v3484 = vld [vmem:[%s2859 + $0x12b] sm:$0xff]
      %v3485 = vld [vmem:[%s2859 + $0x133] sm:$0xff]
      %v3486 = vld [vmem:[%s2859 + $0x14b] sm:$0xff]
      %v3487 = vld [vmem:[%s2859 + $0x153] sm:$0xff]
      %v3488 = vld [vmem:[%s2859 + $0x16b] sm:$0xff]
      %v3489 = vld [vmem:[%s2859 + $0x173] sm:$0xff]
      %v3490 = vld [vmem:[%s2859 + $0x18b] sm:$0xff]
      %v3491 = vld [vmem:[%s2859 + $0x193] sm:$0xff]
      %v3492 = vld [vmem:[%s2859 + $0x1ab] sm:$0xff]
      %v3493 = vld [vmem:[%s2859 + $0x1b3] sm:$0xff]
      %v3494 = vld [vmem:[%s2859 + $0x1cb] sm:$0xff]
      %v3495 = vld [vmem:[%s2859 + $0x1d3] sm:$0xff]
      %v3496 = vld [vmem:[%s2859 + $0x1eb] sm:$0xff]
      %v3497 = vld [vmem:[%s2859 + $0x1f3] sm:$0xff]
      %v3498 = vlaneseq
      %v3499 = vshrl.u32 %v3498, 7
      %v3500 = vsub.s32 0, %v3499
      %v3501 = vrot.slane %v3465, %v3500
      %v3502 = vmul.f32 %v3466, %v3501
      %v3503 = vmul.f32 %v3467, %v3501
      %v3504 = vmul.f32 %v3468, %v3501
      %v3505 = vmul.f32 %v3469, %v3501
      %v3506 = vmul.f32 %v3470, %v3501
      %v3507 = vmul.f32 %v3471, %v3501
      %v3508 = vmul.f32 %v3472, %v3501
      %v3509 = vmul.f32 %v3473, %v3501
      %v3510 = vmul.f32 %v3474, %v3501
      %v3511 = vmul.f32 %v3475, %v3501
      %v3512 = vmul.f32 %v3476, %v3501
      %v3513 = vmul.f32 %v3477, %v3501
      %v3514 = vmul.f32 %v3478, %v3501
      %v3515 = vmul.f32 %v3479, %v3501
      %v3516 = vmul.f32 %v3480, %v3501
      %v3517 = vmul.f32 %v3481, %v3501
      %v3518 = vmul.f32 %v3482, %v3501
      %v3519 = vmul.f32 %v3483, %v3501
      %v3520 = vmul.f32 %v3484, %v3501
      %v3521 = vmul.f32 %v3485, %v3501
      %v3522 = vmul.f32 %v3486, %v3501
      %v3523 = vmul.f32 %v3487, %v3501
      %v3524 = vmul.f32 %v3488, %v3501
      %v3525 = vmul.f32 %v3489, %v3501
      %v3526 = vmul.f32 %v3490, %v3501
      %v3527 = vmul.f32 %v3491, %v3501
      %v3528 = vmul.f32 %v3492, %v3501
      %v3529 = vmul.f32 %v3493, %v3501
      %v3530 = vmul.f32 %v3494, %v3501
      %v3531 = vmul.f32 %v3495, %v3501
      %v3532 = vmul.f32 %v3496, %v3501
      %v3533 = vmul.f32 %v3497, %v3501
      %v3534 = vadd.f32 %v3433, %v3502
      %v3535 = vadd.f32 %v3434, %v3503
      %v3536 = vadd.f32 %v3435, %v3504
      %v3537 = vadd.f32 %v3436, %v3505
      %v3538 = vadd.f32 %v3437, %v3506
      %v3539 = vadd.f32 %v3438, %v3507
      %v3540 = vadd.f32 %v3439, %v3508
      %v3541 = vadd.f32 %v3440, %v3509
      %v3542 = vadd.f32 %v3441, %v3510
      %v3543 = vadd.f32 %v3442, %v3511
      %v3544 = vadd.f32 %v3443, %v3512
      %v3545 = vadd.f32 %v3444, %v3513
      %v3546 = vadd.f32 %v3445, %v3514
      %v3547 = vadd.f32 %v3446, %v3515
      %v3548 = vadd.f32 %v3447, %v3516
      %v3549 = vadd.f32 %v3448, %v3517
      %v3550 = vadd.f32 %v3449, %v3518
      %v3551 = vadd.f32 %v3450, %v3519
      %v3552 = vadd.f32 %v3451, %v3520
      %v3553 = vadd.f32 %v3452, %v3521
      %v3554 = vadd.f32 %v3453, %v3522
      %v3555 = vadd.f32 %v3454, %v3523
      %v3556 = vadd.f32 %v3455, %v3524
      %v3557 = vadd.f32 %v3456, %v3525
      %v3558 = vadd.f32 %v3457, %v3526
      %v3559 = vadd.f32 %v3458, %v3527
      %v3560 = vadd.f32 %v3459, %v3528
      %v3561 = vadd.f32 %v3460, %v3529
      %v3562 = vadd.f32 %v3461, %v3530
      %v3563 = vadd.f32 %v3462, %v3531
      %v3564 = vadd.f32 %v3463, %v3532
      %v3565 = vadd.f32 %v3464, %v3533
      %v3566 = vld [vmem:[%s4 + $0x15] sm:$0x1]
      %s3567 = scalar_lea.vmem [#allocation2], 96
      %v3568 = vld [vmem:[%s3567 + $0x5] sm:$0xff]
      %v3569 = vld [vmem:[%s3567 + $0xd] sm:$0xff]
      %v3570 = vld [vmem:[%s3567 + $0x25] sm:$0xff]
      %v3571 = vld [vmem:[%s3567 + $0x2d] sm:$0xff]
      %v3572 = vld [vmem:[%s3567 + $0x45] sm:$0xff]
      %v3573 = vld [vmem:[%s3567 + $0x4d] sm:$0xff]
      %v3574 = vld [vmem:[%s3567 + $0x65] sm:$0xff]
      %v3575 = vld [vmem:[%s3567 + $0x6d] sm:$0xff]
      %v3576 = vld [vmem:[%s3567 + $0x85] sm:$0xff]
      %v3577 = vld [vmem:[%s3567 + $0x8d] sm:$0xff]
      %v3578 = vld [vmem:[%s3567 + $0xa5] sm:$0xff]
      %v3579 = vld [vmem:[%s3567 + $0xad] sm:$0xff]
      %v3580 = vld [vmem:[%s3567 + $0xc5] sm:$0xff]
      %v3581 = vld [vmem:[%s3567 + $0xcd] sm:$0xff]
      %v3582 = vld [vmem:[%s3567 + $0xe5] sm:$0xff]
      %v3583 = vld [vmem:[%s3567 + $0xed] sm:$0xff]
      %v3584 = vld [vmem:[%s3567 + $0x105] sm:$0xff]
      %v3585 = vld [vmem:[%s3567 + $0x10d] sm:$0xff]
      %v3586 = vld [vmem:[%s3567 + $0x125] sm:$0xff]
      %v3587 = vld [vmem:[%s3567 + $0x12d] sm:$0xff]
      %v3588 = vld [vmem:[%s3567 + $0x145] sm:$0xff]
      %v3589 = vld [vmem:[%s3567 + $0x14d] sm:$0xff]
      %v3590 = vld [vmem:[%s3567 + $0x165] sm:$0xff]
      %v3591 = vld [vmem:[%s3567 + $0x16d] sm:$0xff]
      %v3592 = vld [vmem:[%s3567 + $0x185] sm:$0xff]
      %v3593 = vld [vmem:[%s3567 + $0x18d] sm:$0xff]
      %v3594 = vld [vmem:[%s3567 + $0x1a5] sm:$0xff]
      %v3595 = vld [vmem:[%s3567 + $0x1ad] sm:$0xff]
      %v3596 = vld [vmem:[%s3567 + $0x1c5] sm:$0xff]
      %v3597 = vld [vmem:[%s3567 + $0x1cd] sm:$0xff]
      %v3598 = vld [vmem:[%s3567 + $0x1e5] sm:$0xff]
      %v3599 = vld [vmem:[%s3567 + $0x1ed] sm:$0xff]
      %v3600 = vlaneseq
      %v3601 = vshrl.u32 %v3600, 7
      %v3602 = vsub.s32 0, %v3601
      %v3603 = vrot.slane %v3566, %v3602
      %v3604 = vmul.f32 %v3568, %v3603
      %v3605 = vmul.f32 %v3569, %v3603
      %v3606 = vmul.f32 %v3570, %v3603
      %v3607 = vmul.f32 %v3571, %v3603
      %v3608 = vmul.f32 %v3572, %v3603
      %v3609 = vmul.f32 %v3573, %v3603
      %v3610 = vmul.f32 %v3574, %v3603
      %v3611 = vmul.f32 %v3575, %v3603
      %v3612 = vmul.f32 %v3576, %v3603
      %v3613 = vmul.f32 %v3577, %v3603
      %v3614 = vmul.f32 %v3578, %v3603
      %v3615 = vmul.f32 %v3579, %v3603
      %v3616 = vmul.f32 %v3580, %v3603
      %v3617 = vmul.f32 %v3581, %v3603
      %v3618 = vmul.f32 %v3582, %v3603
      %v3619 = vmul.f32 %v3583, %v3603
      %v3620 = vmul.f32 %v3584, %v3603
      %v3621 = vmul.f32 %v3585, %v3603
      %v3622 = vmul.f32 %v3586, %v3603
      %v3623 = vmul.f32 %v3587, %v3603
      %v3624 = vmul.f32 %v3588, %v3603
      %v3625 = vmul.f32 %v3589, %v3603
      %v3626 = vmul.f32 %v3590, %v3603
      %v3627 = vmul.f32 %v3591, %v3603
      %v3628 = vmul.f32 %v3592, %v3603
      %v3629 = vmul.f32 %v3593, %v3603
      %v3630 = vmul.f32 %v3594, %v3603
      %v3631 = vmul.f32 %v3595, %v3603
      %v3632 = vmul.f32 %v3596, %v3603
      %v3633 = vmul.f32 %v3597, %v3603
      %v3634 = vmul.f32 %v3598, %v3603
      %v3635 = vmul.f32 %v3599, %v3603
      %v3636 = vadd.f32 %v3534, %v3604
      %v3637 = vadd.f32 %v3535, %v3605
      %v3638 = vadd.f32 %v3536, %v3606
      %v3639 = vadd.f32 %v3537, %v3607
      %v3640 = vadd.f32 %v3538, %v3608
      %v3641 = vadd.f32 %v3539, %v3609
      %v3642 = vadd.f32 %v3540, %v3610
      %v3643 = vadd.f32 %v3541, %v3611
      %v3644 = vadd.f32 %v3542, %v3612
      %v3645 = vadd.f32 %v3543, %v3613
      %v3646 = vadd.f32 %v3544, %v3614
      %v3647 = vadd.f32 %v3545, %v3615
      %v3648 = vadd.f32 %v3546, %v3616
      %v3649 = vadd.f32 %v3547, %v3617
      %v3650 = vadd.f32 %v3548, %v3618
      %v3651 = vadd.f32 %v3549, %v3619
      %v3652 = vadd.f32 %v3550, %v3620
      %v3653 = vadd.f32 %v3551, %v3621
      %v3654 = vadd.f32 %v3552, %v3622
      %v3655 = vadd.f32 %v3553, %v3623
      %v3656 = vadd.f32 %v3554, %v3624
      %v3657 = vadd.f32 %v3555, %v3625
      %v3658 = vadd.f32 %v3556, %v3626
      %v3659 = vadd.f32 %v3557, %v3627
      %v3660 = vadd.f32 %v3558, %v3628
      %v3661 = vadd.f32 %v3559, %v3629
      %v3662 = vadd.f32 %v3560, %v3630
      %v3663 = vadd.f32 %v3561, %v3631
      %v3664 = vadd.f32 %v3562, %v3632
      %v3665 = vadd.f32 %v3563, %v3633
      %v3666 = vadd.f32 %v3564, %v3634
      %v3667 = vadd.f32 %v3565, %v3635
      %v3668 = vld [vmem:[%s4 + $0x16] sm:$0x1]
      %v3669 = vld [vmem:[%s3567 + $0x6] sm:$0xff]
      %v3670 = vld [vmem:[%s3567 + $0xe] sm:$0xff]
      %v3671 = vld [vmem:[%s3567 + $0x26] sm:$0xff]
      %v3672 = vld [vmem:[%s3567 + $0x2e] sm:$0xff]
      %v3673 = vld [vmem:[%s3567 + $0x46] sm:$0xff]
      %v3674 = vld [vmem:[%s3567 + $0x4e] sm:$0xff]
      %v3675 = vld [vmem:[%s3567 + $0x66] sm:$0xff]
      %v3676 = vld [vmem:[%s3567 + $0x6e] sm:$0xff]
      %v3677 = vld [vmem:[%s3567 + $0x86] sm:$0xff]
      %v3678 = vld [vmem:[%s3567 + $0x8e] sm:$0xff]
      %v3679 = vld [vmem:[%s3567 + $0xa6] sm:$0xff]
      %v3680 = vld [vmem:[%s3567 + $0xae] sm:$0xff]
      %v3681 = vld [vmem:[%s3567 + $0xc6] sm:$0xff]
      %v3682 = vld [vmem:[%s3567 + $0xce] sm:$0xff]
      %v3683 = vld [vmem:[%s3567 + $0xe6] sm:$0xff]
      %v3684 = vld [vmem:[%s3567 + $0xee] sm:$0xff]
      %v3685 = vld [vmem:[%s3567 + $0x106] sm:$0xff]
      %v3686 = vld [vmem:[%s3567 + $0x10e] sm:$0xff]
      %v3687 = vld [vmem:[%s3567 + $0x126] sm:$0xff]
      %v3688 = vld [vmem:[%s3567 + $0x12e] sm:$0xff]
      %v3689 = vld [vmem:[%s3567 + $0x146] sm:$0xff]
      %v3690 = vld [vmem:[%s3567 + $0x14e] sm:$0xff]
      %v3691 = vld [vmem:[%s3567 + $0x166] sm:$0xff]
      %v3692 = vld [vmem:[%s3567 + $0x16e] sm:$0xff]
      %v3693 = vld [vmem:[%s3567 + $0x186] sm:$0xff]
      %v3694 = vld [vmem:[%s3567 + $0x18e] sm:$0xff]
      %v3695 = vld [vmem:[%s3567 + $0x1a6] sm:$0xff]
      %v3696 = vld [vmem:[%s3567 + $0x1ae] sm:$0xff]
      %v3697 = vld [vmem:[%s3567 + $0x1c6] sm:$0xff]
      %v3698 = vld [vmem:[%s3567 + $0x1ce] sm:$0xff]
      %v3699 = vld [vmem:[%s3567 + $0x1e6] sm:$0xff]
      %v3700 = vld [vmem:[%s3567 + $0x1ee] sm:$0xff]
      %v3701 = vlaneseq
      %v3702 = vshrl.u32 %v3701, 7
      %v3703 = vsub.s32 0, %v3702
      %v3704 = vrot.slane %v3668, %v3703
      %v3705 = vmul.f32 %v3669, %v3704
      %v3706 = vmul.f32 %v3670, %v3704
      %v3707 = vmul.f32 %v3671, %v3704
      %v3708 = vmul.f32 %v3672, %v3704
      %v3709 = vmul.f32 %v3673, %v3704
      %v3710 = vmul.f32 %v3674, %v3704
      %v3711 = vmul.f32 %v3675, %v3704
      %v3712 = vmul.f32 %v3676, %v3704
      %v3713 = vmul.f32 %v3677, %v3704
      %v3714 = vmul.f32 %v3678, %v3704
      %v3715 = vmul.f32 %v3679, %v3704
      %v3716 = vmul.f32 %v3680, %v3704
      %v3717 = vmul.f32 %v3681, %v3704
      %v3718 = vmul.f32 %v3682, %v3704
      %v3719 = vmul.f32 %v3683, %v3704
      %v3720 = vmul.f32 %v3684, %v3704
      %v3721 = vmul.f32 %v3685, %v3704
      %v3722 = vmul.f32 %v3686, %v3704
      %v3723 = vmul.f32 %v3687, %v3704
      %v3724 = vmul.f32 %v3688, %v3704
      %v3725 = vmul.f32 %v3689, %v3704
      %v3726 = vmul.f32 %v3690, %v3704
      %v3727 = vmul.f32 %v3691, %v3704
      %v3728 = vmul.f32 %v3692, %v3704
      %v3729 = vmul.f32 %v3693, %v3704
      %v3730 = vmul.f32 %v3694, %v3704
      %v3731 = vmul.f32 %v3695, %v3704
      %v3732 = vmul.f32 %v3696, %v3704
      %v3733 = vmul.f32 %v3697, %v3704
      %v3734 = vmul.f32 %v3698, %v3704
      %v3735 = vmul.f32 %v3699, %v3704
      %v3736 = vmul.f32 %v3700, %v3704
      %v3737 = vadd.f32 %v3636, %v3705
      %v3738 = vadd.f32 %v3637, %v3706
      %v3739 = vadd.f32 %v3638, %v3707
      %v3740 = vadd.f32 %v3639, %v3708
      %v3741 = vadd.f32 %v3640, %v3709
      %v3742 = vadd.f32 %v3641, %v3710
      %v3743 = vadd.f32 %v3642, %v3711
      %v3744 = vadd.f32 %v3643, %v3712
      %v3745 = vadd.f32 %v3644, %v3713
      %v3746 = vadd.f32 %v3645, %v3714
      %v3747 = vadd.f32 %v3646, %v3715
      %v3748 = vadd.f32 %v3647, %v3716
      %v3749 = vadd.f32 %v3648, %v3717
      %v3750 = vadd.f32 %v3649, %v3718
      %v3751 = vadd.f32 %v3650, %v3719
      %v3752 = vadd.f32 %v3651, %v3720
      %v3753 = vadd.f32 %v3652, %v3721
      %v3754 = vadd.f32 %v3653, %v3722
      %v3755 = vadd.f32 %v3654, %v3723
      %v3756 = vadd.f32 %v3655, %v3724
      %v3757 = vadd.f32 %v3656, %v3725
      %v3758 = vadd.f32 %v3657, %v3726
      %v3759 = vadd.f32 %v3658, %v3727
      %v3760 = vadd.f32 %v3659, %v3728
      %v3761 = vadd.f32 %v3660, %v3729
      %v3762 = vadd.f32 %v3661, %v3730
      %v3763 = vadd.f32 %v3662, %v3731
      %v3764 = vadd.f32 %v3663, %v3732
      %v3765 = vadd.f32 %v3664, %v3733
      %v3766 = vadd.f32 %v3665, %v3734
      %v3767 = vadd.f32 %v3666, %v3735
      %v3768 = vadd.f32 %v3667, %v3736
      %v3769 = vld [vmem:[%s4 + $0x17] sm:$0x1]
      %v3770 = vld [vmem:[%s3567 + $0x7] sm:$0xff]
      %v3771 = vld [vmem:[%s3567 + $0xf] sm:$0xff]
      %v3772 = vld [vmem:[%s3567 + $0x27] sm:$0xff]
      %v3773 = vld [vmem:[%s3567 + $0x2f] sm:$0xff]
      %v3774 = vld [vmem:[%s3567 + $0x47] sm:$0xff]
      %v3775 = vld [vmem:[%s3567 + $0x4f] sm:$0xff]
      %v3776 = vld [vmem:[%s3567 + $0x67] sm:$0xff]
      %v3777 = vld [vmem:[%s3567 + $0x6f] sm:$0xff]
      %v3778 = vld [vmem:[%s3567 + $0x87] sm:$0xff]
      %v3779 = vld [vmem:[%s3567 + $0x8f] sm:$0xff]
      %v3780 = vld [vmem:[%s3567 + $0xa7] sm:$0xff]
      %v3781 = vld [vmem:[%s3567 + $0xaf] sm:$0xff]
      %v3782 = vld [vmem:[%s3567 + $0xc7] sm:$0xff]
      %v3783 = vld [vmem:[%s3567 + $0xcf] sm:$0xff]
      %v3784 = vld [vmem:[%s3567 + $0xe7] sm:$0xff]
      %v3785 = vld [vmem:[%s3567 + $0xef] sm:$0xff]
      %v3786 = vld [vmem:[%s3567 + $0x107] sm:$0xff]
      %v3787 = vld [vmem:[%s3567 + $0x10f] sm:$0xff]
      %v3788 = vld [vmem:[%s3567 + $0x127] sm:$0xff]
      %v3789 = vld [vmem:[%s3567 + $0x12f] sm:$0xff]
      %v3790 = vld [vmem:[%s3567 + $0x147] sm:$0xff]
      %v3791 = vld [vmem:[%s3567 + $0x14f] sm:$0xff]
      %v3792 = vld [vmem:[%s3567 + $0x167] sm:$0xff]
      %v3793 = vld [vmem:[%s3567 + $0x16f] sm:$0xff]
      %v3794 = vld [vmem:[%s3567 + $0x187] sm:$0xff]
      %v3795 = vld [vmem:[%s3567 + $0x18f] sm:$0xff]
      %v3796 = vld [vmem:[%s3567 + $0x1a7] sm:$0xff]
      %v3797 = vld [vmem:[%s3567 + $0x1af] sm:$0xff]
      %v3798 = vld [vmem:[%s3567 + $0x1c7] sm:$0xff]
      %v3799 = vld [vmem:[%s3567 + $0x1cf] sm:$0xff]
      %v3800 = vld [vmem:[%s3567 + $0x1e7] sm:$0xff]
      %v3801 = vld [vmem:[%s3567 + $0x1ef] sm:$0xff]
      %v3802 = vlaneseq
      %v3803 = vshrl.u32 %v3802, 7
      %v3804 = vsub.s32 0, %v3803
      %v3805 = vrot.slane %v3769, %v3804
      %v3806 = vmul.f32 %v3770, %v3805
      %v3807 = vmul.f32 %v3771, %v3805
      %v3808 = vmul.f32 %v3772, %v3805
      %v3809 = vmul.f32 %v3773, %v3805
      %v3810 = vmul.f32 %v3774, %v3805
      %v3811 = vmul.f32 %v3775, %v3805
      %v3812 = vmul.f32 %v3776, %v3805
      %v3813 = vmul.f32 %v3777, %v3805
      %v3814 = vmul.f32 %v3778, %v3805
      %v3815 = vmul.f32 %v3779, %v3805
      %v3816 = vmul.f32 %v3780, %v3805
      %v3817 = vmul.f32 %v3781, %v3805
      %v3818 = vmul.f32 %v3782, %v3805
      %v3819 = vmul.f32 %v3783, %v3805
      %v3820 = vmul.f32 %v3784, %v3805
      %v3821 = vmul.f32 %v3785, %v3805
      %v3822 = vmul.f32 %v3786, %v3805
      %v3823 = vmul.f32 %v3787, %v3805
      %v3824 = vmul.f32 %v3788, %v3805
      %v3825 = vmul.f32 %v3789, %v3805
      %v3826 = vmul.f32 %v3790, %v3805
      %v3827 = vmul.f32 %v3791, %v3805
      %v3828 = vmul.f32 %v3792, %v3805
      %v3829 = vmul.f32 %v3793, %v3805
      %v3830 = vmul.f32 %v3794, %v3805
      %v3831 = vmul.f32 %v3795, %v3805
      %v3832 = vmul.f32 %v3796, %v3805
      %v3833 = vmul.f32 %v3797, %v3805
      %v3834 = vmul.f32 %v3798, %v3805
      %v3835 = vmul.f32 %v3799, %v3805
      %v3836 = vmul.f32 %v3800, %v3805
      %v3837 = vmul.f32 %v3801, %v3805
      %v3838 = vadd.f32 %v3737, %v3806
      %v3839 = vadd.f32 %v3738, %v3807
      %v3840 = vadd.f32 %v3739, %v3808
      %v3841 = vadd.f32 %v3740, %v3809
      %v3842 = vadd.f32 %v3741, %v3810
      %v3843 = vadd.f32 %v3742, %v3811
      %v3844 = vadd.f32 %v3743, %v3812
      %v3845 = vadd.f32 %v3744, %v3813
      %v3846 = vadd.f32 %v3745, %v3814
      %v3847 = vadd.f32 %v3746, %v3815
      %v3848 = vadd.f32 %v3747, %v3816
      %v3849 = vadd.f32 %v3748, %v3817
      %v3850 = vadd.f32 %v3749, %v3818
      %v3851 = vadd.f32 %v3750, %v3819
      %v3852 = vadd.f32 %v3751, %v3820
      %v3853 = vadd.f32 %v3752, %v3821
      %v3854 = vadd.f32 %v3753, %v3822
      %v3855 = vadd.f32 %v3754, %v3823
      %v3856 = vadd.f32 %v3755, %v3824
      %v3857 = vadd.f32 %v3756, %v3825
      %v3858 = vadd.f32 %v3757, %v3826
      %v3859 = vadd.f32 %v3758, %v3827
      %v3860 = vadd.f32 %v3759, %v3828
      %v3861 = vadd.f32 %v3760, %v3829
      %v3862 = vadd.f32 %v3761, %v3830
      %v3863 = vadd.f32 %v3762, %v3831
      %v3864 = vadd.f32 %v3763, %v3832
      %v3865 = vadd.f32 %v3764, %v3833
      %v3866 = vadd.f32 %v3765, %v3834
      %v3867 = vadd.f32 %v3766, %v3835
      %v3868 = vadd.f32 %v3767, %v3836
      %v3869 = vadd.f32 %v3768, %v3837
      %v3870 = vld [vmem:[%s4 + $0x18] sm:$0x1]
      %v3871 = vld [vmem:[%s3567 + $0x8] sm:$0xff]
      %v3872 = vld [vmem:[%s3567 + $0x10] sm:$0xff]
      %v3873 = vld [vmem:[%s3567 + $0x28] sm:$0xff]
      %v3874 = vld [vmem:[%s3567 + $0x30] sm:$0xff]
      %v3875 = vld [vmem:[%s3567 + $0x48] sm:$0xff]
      %v3876 = vld [vmem:[%s3567 + $0x50] sm:$0xff]
      %v3877 = vld [vmem:[%s3567 + $0x68] sm:$0xff]
      %v3878 = vld [vmem:[%s3567 + $0x70] sm:$0xff]
      %v3879 = vld [vmem:[%s3567 + $0x88] sm:$0xff]
      %v3880 = vld [vmem:[%s3567 + $0x90] sm:$0xff]
      %v3881 = vld [vmem:[%s3567 + $0xa8] sm:$0xff]
      %v3882 = vld [vmem:[%s3567 + $0xb0] sm:$0xff]
      %v3883 = vld [vmem:[%s3567 + $0xc8] sm:$0xff]
      %v3884 = vld [vmem:[%s3567 + $0xd0] sm:$0xff]
      %v3885 = vld [vmem:[%s3567 + $0xe8] sm:$0xff]
      %v3886 = vld [vmem:[%s3567 + $0xf0] sm:$0xff]
      %v3887 = vld [vmem:[%s3567 + $0x108] sm:$0xff]
      %v3888 = vld [vmem:[%s3567 + $0x110] sm:$0xff]
      %v3889 = vld [vmem:[%s3567 + $0x128] sm:$0xff]
      %v3890 = vld [vmem:[%s3567 + $0x130] sm:$0xff]
      %v3891 = vld [vmem:[%s3567 + $0x148] sm:$0xff]
      %v3892 = vld [vmem:[%s3567 + $0x150] sm:$0xff]
      %v3893 = vld [vmem:[%s3567 + $0x168] sm:$0xff]
      %v3894 = vld [vmem:[%s3567 + $0x170] sm:$0xff]
      %v3895 = vld [vmem:[%s3567 + $0x188] sm:$0xff]
      %v3896 = vld [vmem:[%s3567 + $0x190] sm:$0xff]
      %v3897 = vld [vmem:[%s3567 + $0x1a8] sm:$0xff]
      %v3898 = vld [vmem:[%s3567 + $0x1b0] sm:$0xff]
      %v3899 = vld [vmem:[%s3567 + $0x1c8] sm:$0xff]
      %v3900 = vld [vmem:[%s3567 + $0x1d0] sm:$0xff]
      %v3901 = vld [vmem:[%s3567 + $0x1e8] sm:$0xff]
      %v3902 = vld [vmem:[%s3567 + $0x1f0] sm:$0xff]
      %v3903 = vlaneseq
      %v3904 = vshrl.u32 %v3903, 7
      %v3905 = vsub.s32 0, %v3904
      %v3906 = vrot.slane %v3870, %v3905
      %v3907 = vmul.f32 %v3871, %v3906
      %v3908 = vmul.f32 %v3872, %v3906
      %v3909 = vmul.f32 %v3873, %v3906
      %v3910 = vmul.f32 %v3874, %v3906
      %v3911 = vmul.f32 %v3875, %v3906
      %v3912 = vmul.f32 %v3876, %v3906
      %v3913 = vmul.f32 %v3877, %v3906
      %v3914 = vmul.f32 %v3878, %v3906
      %v3915 = vmul.f32 %v3879, %v3906
      %v3916 = vmul.f32 %v3880, %v3906
      %v3917 = vmul.f32 %v3881, %v3906
      %v3918 = vmul.f32 %v3882, %v3906
      %v3919 = vmul.f32 %v3883, %v3906
      %v3920 = vmul.f32 %v3884, %v3906
      %v3921 = vmul.f32 %v3885, %v3906
      %v3922 = vmul.f32 %v3886, %v3906
      %v3923 = vmul.f32 %v3887, %v3906
      %v3924 = vmul.f32 %v3888, %v3906
      %v3925 = vmul.f32 %v3889, %v3906
      %v3926 = vmul.f32 %v3890, %v3906
      %v3927 = vmul.f32 %v3891, %v3906
      %v3928 = vmul.f32 %v3892, %v3906
      %v3929 = vmul.f32 %v3893, %v3906
      %v3930 = vmul.f32 %v3894, %v3906
      %v3931 = vmul.f32 %v3895, %v3906
      %v3932 = vmul.f32 %v3896, %v3906
      %v3933 = vmul.f32 %v3897, %v3906
      %v3934 = vmul.f32 %v3898, %v3906
      %v3935 = vmul.f32 %v3899, %v3906
      %v3936 = vmul.f32 %v3900, %v3906
      %v3937 = vmul.f32 %v3901, %v3906
      %v3938 = vmul.f32 %v3902, %v3906
      %v3939 = vadd.f32 %v3838, %v3907
      %v3940 = vadd.f32 %v3839, %v3908
      %v3941 = vadd.f32 %v3840, %v3909
      %v3942 = vadd.f32 %v3841, %v3910
      %v3943 = vadd.f32 %v3842, %v3911
      %v3944 = vadd.f32 %v3843, %v3912
      %v3945 = vadd.f32 %v3844, %v3913
      %v3946 = vadd.f32 %v3845, %v3914
      %v3947 = vadd.f32 %v3846, %v3915
      %v3948 = vadd.f32 %v3847, %v3916
      %v3949 = vadd.f32 %v3848, %v3917
      %v3950 = vadd.f32 %v3849, %v3918
      %v3951 = vadd.f32 %v3850, %v3919
      %v3952 = vadd.f32 %v3851, %v3920
      %v3953 = vadd.f32 %v3852, %v3921
      %v3954 = vadd.f32 %v3853, %v3922
      %v3955 = vadd.f32 %v3854, %v3923
      %v3956 = vadd.f32 %v3855, %v3924
      %v3957 = vadd.f32 %v3856, %v3925
      %v3958 = vadd.f32 %v3857, %v3926
      %v3959 = vadd.f32 %v3858, %v3927
      %v3960 = vadd.f32 %v3859, %v3928
      %v3961 = vadd.f32 %v3860, %v3929
      %v3962 = vadd.f32 %v3861, %v3930
      %v3963 = vadd.f32 %v3862, %v3931
      %v3964 = vadd.f32 %v3863, %v3932
      %v3965 = vadd.f32 %v3864, %v3933
      %v3966 = vadd.f32 %v3865, %v3934
      %v3967 = vadd.f32 %v3866, %v3935
      %v3968 = vadd.f32 %v3867, %v3936
      %v3969 = vadd.f32 %v3868, %v3937
      %v3970 = vadd.f32 %v3869, %v3938
      %v3971 = vld [vmem:[%s4 + $0x19] sm:$0x1]
      %v3972 = vld [vmem:[%s3567 + $0x9] sm:$0xff]
      %v3973 = vld [vmem:[%s3567 + $0x11] sm:$0xff]
      %v3974 = vld [vmem:[%s3567 + $0x29] sm:$0xff]
      %v3975 = vld [vmem:[%s3567 + $0x31] sm:$0xff]
      %v3976 = vld [vmem:[%s3567 + $0x49] sm:$0xff]
      %v3977 = vld [vmem:[%s3567 + $0x51] sm:$0xff]
      %v3978 = vld [vmem:[%s3567 + $0x69] sm:$0xff]
      %v3979 = vld [vmem:[%s3567 + $0x71] sm:$0xff]
      %v3980 = vld [vmem:[%s3567 + $0x89] sm:$0xff]
      %v3981 = vld [vmem:[%s3567 + $0x91] sm:$0xff]
      %v3982 = vld [vmem:[%s3567 + $0xa9] sm:$0xff]
      %v3983 = vld [vmem:[%s3567 + $0xb1] sm:$0xff]
      %v3984 = vld [vmem:[%s3567 + $0xc9] sm:$0xff]
      %v3985 = vld [vmem:[%s3567 + $0xd1] sm:$0xff]
      %v3986 = vld [vmem:[%s3567 + $0xe9] sm:$0xff]
      %v3987 = vld [vmem:[%s3567 + $0xf1] sm:$0xff]
      %v3988 = vld [vmem:[%s3567 + $0x109] sm:$0xff]
      %v3989 = vld [vmem:[%s3567 + $0x111] sm:$0xff]
      %v3990 = vld [vmem:[%s3567 + $0x129] sm:$0xff]
      %v3991 = vld [vmem:[%s3567 + $0x131] sm:$0xff]
      %v3992 = vld [vmem:[%s3567 + $0x149] sm:$0xff]
      %v3993 = vld [vmem:[%s3567 + $0x151] sm:$0xff]
      %v3994 = vld [vmem:[%s3567 + $0x169] sm:$0xff]
      %v3995 = vld [vmem:[%s3567 + $0x171] sm:$0xff]
      %v3996 = vld [vmem:[%s3567 + $0x189] sm:$0xff]
      %v3997 = vld [vmem:[%s3567 + $0x191] sm:$0xff]
      %v3998 = vld [vmem:[%s3567 + $0x1a9] sm:$0xff]
      %v3999 = vld [vmem:[%s3567 + $0x1b1] sm:$0xff]
      %v4000 = vld [vmem:[%s3567 + $0x1c9] sm:$0xff]
      %v4001 = vld [vmem:[%s3567 + $0x1d1] sm:$0xff]
      %v4002 = vld [vmem:[%s3567 + $0x1e9] sm:$0xff]
      %v4003 = vld [vmem:[%s3567 + $0x1f1] sm:$0xff]
      %v4004 = vlaneseq
      %v4005 = vshrl.u32 %v4004, 7
      %v4006 = vsub.s32 0, %v4005
      %v4007 = vrot.slane %v3971, %v4006
      %v4008 = vmul.f32 %v3972, %v4007
      %v4009 = vmul.f32 %v3973, %v4007
      %v4010 = vmul.f32 %v3974, %v4007
      %v4011 = vmul.f32 %v3975, %v4007
      %v4012 = vmul.f32 %v3976, %v4007
      %v4013 = vmul.f32 %v3977, %v4007
      %v4014 = vmul.f32 %v3978, %v4007
      %v4015 = vmul.f32 %v3979, %v4007
      %v4016 = vmul.f32 %v3980, %v4007
      %v4017 = vmul.f32 %v3981, %v4007
      %v4018 = vmul.f32 %v3982, %v4007
      %v4019 = vmul.f32 %v3983, %v4007
      %v4020 = vmul.f32 %v3984, %v4007
      %v4021 = vmul.f32 %v3985, %v4007
      %v4022 = vmul.f32 %v3986, %v4007
      %v4023 = vmul.f32 %v3987, %v4007
      %v4024 = vmul.f32 %v3988, %v4007
      %v4025 = vmul.f32 %v3989, %v4007
      %v4026 = vmul.f32 %v3990, %v4007
      %v4027 = vmul.f32 %v3991, %v4007
      %v4028 = vmul.f32 %v3992, %v4007
      %v4029 = vmul.f32 %v3993, %v4007
      %v4030 = vmul.f32 %v3994, %v4007
      %v4031 = vmul.f32 %v3995, %v4007
      %v4032 = vmul.f32 %v3996, %v4007
      %v4033 = vmul.f32 %v3997, %v4007
      %v4034 = vmul.f32 %v3998, %v4007
      %v4035 = vmul.f32 %v3999, %v4007
      %v4036 = vmul.f32 %v4000, %v4007
      %v4037 = vmul.f32 %v4001, %v4007
      %v4038 = vmul.f32 %v4002, %v4007
      %v4039 = vmul.f32 %v4003, %v4007
      %v4040 = vadd.f32 %v3939, %v4008
      %v4041 = vadd.f32 %v3940, %v4009
      %v4042 = vadd.f32 %v3941, %v4010
      %v4043 = vadd.f32 %v3942, %v4011
      %v4044 = vadd.f32 %v3943, %v4012
      %v4045 = vadd.f32 %v3944, %v4013
      %v4046 = vadd.f32 %v3945, %v4014
      %v4047 = vadd.f32 %v3946, %v4015
      %v4048 = vadd.f32 %v3947, %v4016
      %v4049 = vadd.f32 %v3948, %v4017
      %v4050 = vadd.f32 %v3949, %v4018
      %v4051 = vadd.f32 %v3950, %v4019
      %v4052 = vadd.f32 %v3951, %v4020
      %v4053 = vadd.f32 %v3952, %v4021
      %v4054 = vadd.f32 %v3953, %v4022
      %v4055 = vadd.f32 %v3954, %v4023
      %v4056 = vadd.f32 %v3955, %v4024
      %v4057 = vadd.f32 %v3956, %v4025
      %v4058 = vadd.f32 %v3957, %v4026
      %v4059 = vadd.f32 %v3958, %v4027
      %v4060 = vadd.f32 %v3959, %v4028
      %v4061 = vadd.f32 %v3960, %v4029
      %v4062 = vadd.f32 %v3961, %v4030
      %v4063 = vadd.f32 %v3962, %v4031
      %v4064 = vadd.f32 %v3963, %v4032
      %v4065 = vadd.f32 %v3964, %v4033
      %v4066 = vadd.f32 %v3965, %v4034
      %v4067 = vadd.f32 %v3966, %v4035
      %v4068 = vadd.f32 %v3967, %v4036
      %v4069 = vadd.f32 %v3968, %v4037
      %v4070 = vadd.f32 %v3969, %v4038
      %v4071 = vadd.f32 %v3970, %v4039
      %v4072 = vld [vmem:[%s4 + $0x1a] sm:$0x1]
      %v4073 = vld [vmem:[%s3567 + $0xa] sm:$0xff]
      %v4074 = vld [vmem:[%s3567 + $0x12] sm:$0xff]
      %v4075 = vld [vmem:[%s3567 + $0x2a] sm:$0xff]
      %v4076 = vld [vmem:[%s3567 + $0x32] sm:$0xff]
      %v4077 = vld [vmem:[%s3567 + $0x4a] sm:$0xff]
      %v4078 = vld [vmem:[%s3567 + $0x52] sm:$0xff]
      %v4079 = vld [vmem:[%s3567 + $0x6a] sm:$0xff]
      %v4080 = vld [vmem:[%s3567 + $0x72] sm:$0xff]
      %v4081 = vld [vmem:[%s3567 + $0x8a] sm:$0xff]
      %v4082 = vld [vmem:[%s3567 + $0x92] sm:$0xff]
      %v4083 = vld [vmem:[%s3567 + $0xaa] sm:$0xff]
      %v4084 = vld [vmem:[%s3567 + $0xb2] sm:$0xff]
      %v4085 = vld [vmem:[%s3567 + $0xca] sm:$0xff]
      %v4086 = vld [vmem:[%s3567 + $0xd2] sm:$0xff]
      %v4087 = vld [vmem:[%s3567 + $0xea] sm:$0xff]
      %v4088 = vld [vmem:[%s3567 + $0xf2] sm:$0xff]
      %v4089 = vld [vmem:[%s3567 + $0x10a] sm:$0xff]
      %v4090 = vld [vmem:[%s3567 + $0x112] sm:$0xff]
      %v4091 = vld [vmem:[%s3567 + $0x12a] sm:$0xff]
      %v4092 = vld [vmem:[%s3567 + $0x132] sm:$0xff]
      %v4093 = vld [vmem:[%s3567 + $0x14a] sm:$0xff]
      %v4094 = vld [vmem:[%s3567 + $0x152] sm:$0xff]
      %v4095 = vld [vmem:[%s3567 + $0x16a] sm:$0xff]
      %v4096 = vld [vmem:[%s3567 + $0x172] sm:$0xff]
      %v4097 = vld [vmem:[%s3567 + $0x18a] sm:$0xff]
      %v4098 = vld [vmem:[%s3567 + $0x192] sm:$0xff]
      %v4099 = vld [vmem:[%s3567 + $0x1aa] sm:$0xff]
      %v4100 = vld [vmem:[%s3567 + $0x1b2] sm:$0xff]
      %v4101 = vld [vmem:[%s3567 + $0x1ca] sm:$0xff]
      %v4102 = vld [vmem:[%s3567 + $0x1d2] sm:$0xff]
      %v4103 = vld [vmem:[%s3567 + $0x1ea] sm:$0xff]
      %v4104 = vld [vmem:[%s3567 + $0x1f2] sm:$0xff]
      %v4105 = vlaneseq
      %v4106 = vshrl.u32 %v4105, 7
      %v4107 = vsub.s32 0, %v4106
      %v4108 = vrot.slane %v4072, %v4107
      %v4109 = vmul.f32 %v4073, %v4108
      %v4110 = vmul.f32 %v4074, %v4108
      %v4111 = vmul.f32 %v4075, %v4108
      %v4112 = vmul.f32 %v4076, %v4108
      %v4113 = vmul.f32 %v4077, %v4108
      %v4114 = vmul.f32 %v4078, %v4108
      %v4115 = vmul.f32 %v4079, %v4108
      %v4116 = vmul.f32 %v4080, %v4108
      %v4117 = vmul.f32 %v4081, %v4108
      %v4118 = vmul.f32 %v4082, %v4108
      %v4119 = vmul.f32 %v4083, %v4108
      %v4120 = vmul.f32 %v4084, %v4108
      %v4121 = vmul.f32 %v4085, %v4108
      %v4122 = vmul.f32 %v4086, %v4108
      %v4123 = vmul.f32 %v4087, %v4108
      %v4124 = vmul.f32 %v4088, %v4108
      %v4125 = vmul.f32 %v4089, %v4108
      %v4126 = vmul.f32 %v4090, %v4108
      %v4127 = vmul.f32 %v4091, %v4108
      %v4128 = vmul.f32 %v4092, %v4108
      %v4129 = vmul.f32 %v4093, %v4108
      %v4130 = vmul.f32 %v4094, %v4108
      %v4131 = vmul.f32 %v4095, %v4108
      %v4132 = vmul.f32 %v4096, %v4108
      %v4133 = vmul.f32 %v4097, %v4108
      %v4134 = vmul.f32 %v4098, %v4108
      %v4135 = vmul.f32 %v4099, %v4108
      %v4136 = vmul.f32 %v4100, %v4108
      %v4137 = vmul.f32 %v4101, %v4108
      %v4138 = vmul.f32 %v4102, %v4108
      %v4139 = vmul.f32 %v4103, %v4108
      %v4140 = vmul.f32 %v4104, %v4108
      %v4141 = vadd.f32 %v4040, %v4109
      %v4142 = vadd.f32 %v4041, %v4110
      %v4143 = vadd.f32 %v4042, %v4111
      %v4144 = vadd.f32 %v4043, %v4112
      %v4145 = vadd.f32 %v4044, %v4113
      %v4146 = vadd.f32 %v4045, %v4114
      %v4147 = vadd.f32 %v4046, %v4115
      %v4148 = vadd.f32 %v4047, %v4116
      %v4149 = vadd.f32 %v4048, %v4117
      %v4150 = vadd.f32 %v4049, %v4118
      %v4151 = vadd.f32 %v4050, %v4119
      %v4152 = vadd.f32 %v4051, %v4120
      %v4153 = vadd.f32 %v4052, %v4121
      %v4154 = vadd.f32 %v4053, %v4122
      %v4155 = vadd.f32 %v4054, %v4123
      %v4156 = vadd.f32 %v4055, %v4124
      %v4157 = vadd.f32 %v4056, %v4125
      %v4158 = vadd.f32 %v4057, %v4126
      %v4159 = vadd.f32 %v4058, %v4127
      %v4160 = vadd.f32 %v4059, %v4128
      %v4161 = vadd.f32 %v4060, %v4129
      %v4162 = vadd.f32 %v4061, %v4130
      %v4163 = vadd.f32 %v4062, %v4131
      %v4164 = vadd.f32 %v4063, %v4132
      %v4165 = vadd.f32 %v4064, %v4133
      %v4166 = vadd.f32 %v4065, %v4134
      %v4167 = vadd.f32 %v4066, %v4135
      %v4168 = vadd.f32 %v4067, %v4136
      %v4169 = vadd.f32 %v4068, %v4137
      %v4170 = vadd.f32 %v4069, %v4138
      %v4171 = vadd.f32 %v4070, %v4139
      %v4172 = vadd.f32 %v4071, %v4140
      %v4173 = vld [vmem:[%s4 + $0x1b] sm:$0x1]
      %v4174 = vld [vmem:[%s3567 + $0xb] sm:$0xff]
      %v4175 = vld [vmem:[%s3567 + $0x13] sm:$0xff]
      %v4176 = vld [vmem:[%s3567 + $0x2b] sm:$0xff]
      %v4177 = vld [vmem:[%s3567 + $0x33] sm:$0xff]
      %v4178 = vld [vmem:[%s3567 + $0x4b] sm:$0xff]
      %v4179 = vld [vmem:[%s3567 + $0x53] sm:$0xff]
      %v4180 = vld [vmem:[%s3567 + $0x6b] sm:$0xff]
      %v4181 = vld [vmem:[%s3567 + $0x73] sm:$0xff]
      %v4182 = vld [vmem:[%s3567 + $0x8b] sm:$0xff]
      %v4183 = vld [vmem:[%s3567 + $0x93] sm:$0xff]
      %v4184 = vld [vmem:[%s3567 + $0xab] sm:$0xff]
      %v4185 = vld [vmem:[%s3567 + $0xb3] sm:$0xff]
      %v4186 = vld [vmem:[%s3567 + $0xcb] sm:$0xff]
      %v4187 = vld [vmem:[%s3567 + $0xd3] sm:$0xff]
      %v4188 = vld [vmem:[%s3567 + $0xeb] sm:$0xff]
      %v4189 = vld [vmem:[%s3567 + $0xf3] sm:$0xff]
      %v4190 = vld [vmem:[%s3567 + $0x10b] sm:$0xff]
      %v4191 = vld [vmem:[%s3567 + $0x113] sm:$0xff]
      %v4192 = vld [vmem:[%s3567 + $0x12b] sm:$0xff]
      %v4193 = vld [vmem:[%s3567 + $0x133] sm:$0xff]
      %v4194 = vld [vmem:[%s3567 + $0x14b] sm:$0xff]
      %v4195 = vld [vmem:[%s3567 + $0x153] sm:$0xff]
      %v4196 = vld [vmem:[%s3567 + $0x16b] sm:$0xff]
      %v4197 = vld [vmem:[%s3567 + $0x173] sm:$0xff]
      %v4198 = vld [vmem:[%s3567 + $0x18b] sm:$0xff]
      %v4199 = vld [vmem:[%s3567 + $0x193] sm:$0xff]
      %v4200 = vld [vmem:[%s3567 + $0x1ab] sm:$0xff]
      %v4201 = vld [vmem:[%s3567 + $0x1b3] sm:$0xff]
      %v4202 = vld [vmem:[%s3567 + $0x1cb] sm:$0xff]
      %v4203 = vld [vmem:[%s3567 + $0x1d3] sm:$0xff]
      %v4204 = vld [vmem:[%s3567 + $0x1eb] sm:$0xff]
      %v4205 = vld [vmem:[%s3567 + $0x1f3] sm:$0xff]
      %v4206 = vlaneseq
      %v4207 = vshrl.u32 %v4206, 7
      %v4208 = vsub.s32 0, %v4207
      %v4209 = vrot.slane %v4173, %v4208
      %v4210 = vmul.f32 %v4174, %v4209
      %v4211 = vmul.f32 %v4175, %v4209
      %v4212 = vmul.f32 %v4176, %v4209
      %v4213 = vmul.f32 %v4177, %v4209
      %v4214 = vmul.f32 %v4178, %v4209
      %v4215 = vmul.f32 %v4179, %v4209
      %v4216 = vmul.f32 %v4180, %v4209
      %v4217 = vmul.f32 %v4181, %v4209
      %v4218 = vmul.f32 %v4182, %v4209
      %v4219 = vmul.f32 %v4183, %v4209
      %v4220 = vmul.f32 %v4184, %v4209
      %v4221 = vmul.f32 %v4185, %v4209
      %v4222 = vmul.f32 %v4186, %v4209
      %v4223 = vmul.f32 %v4187, %v4209
      %v4224 = vmul.f32 %v4188, %v4209
      %v4225 = vmul.f32 %v4189, %v4209
      %v4226 = vmul.f32 %v4190, %v4209
      %v4227 = vmul.f32 %v4191, %v4209
      %v4228 = vmul.f32 %v4192, %v4209
      %v4229 = vmul.f32 %v4193, %v4209
      %v4230 = vmul.f32 %v4194, %v4209
      %v4231 = vmul.f32 %v4195, %v4209
      %v4232 = vmul.f32 %v4196, %v4209
      %v4233 = vmul.f32 %v4197, %v4209
      %v4234 = vmul.f32 %v4198, %v4209
      %v4235 = vmul.f32 %v4199, %v4209
      %v4236 = vmul.f32 %v4200, %v4209
      %v4237 = vmul.f32 %v4201, %v4209
      %v4238 = vmul.f32 %v4202, %v4209
      %v4239 = vmul.f32 %v4203, %v4209
      %v4240 = vmul.f32 %v4204, %v4209
      %v4241 = vmul.f32 %v4205, %v4209
      %v4242 = vadd.f32 %v4141, %v4210
      %v4243 = vadd.f32 %v4142, %v4211
      %v4244 = vadd.f32 %v4143, %v4212
      %v4245 = vadd.f32 %v4144, %v4213
      %v4246 = vadd.f32 %v4145, %v4214
      %v4247 = vadd.f32 %v4146, %v4215
      %v4248 = vadd.f32 %v4147, %v4216
      %v4249 = vadd.f32 %v4148, %v4217
      %v4250 = vadd.f32 %v4149, %v4218
      %v4251 = vadd.f32 %v4150, %v4219
      %v4252 = vadd.f32 %v4151, %v4220
      %v4253 = vadd.f32 %v4152, %v4221
      %v4254 = vadd.f32 %v4153, %v4222
      %v4255 = vadd.f32 %v4154, %v4223
      %v4256 = vadd.f32 %v4155, %v4224
      %v4257 = vadd.f32 %v4156, %v4225
      %v4258 = vadd.f32 %v4157, %v4226
      %v4259 = vadd.f32 %v4158, %v4227
      %v4260 = vadd.f32 %v4159, %v4228
      %v4261 = vadd.f32 %v4160, %v4229
      %v4262 = vadd.f32 %v4161, %v4230
      %v4263 = vadd.f32 %v4162, %v4231
      %v4264 = vadd.f32 %v4163, %v4232
      %v4265 = vadd.f32 %v4164, %v4233
      %v4266 = vadd.f32 %v4165, %v4234
      %v4267 = vadd.f32 %v4166, %v4235
      %v4268 = vadd.f32 %v4167, %v4236
      %v4269 = vadd.f32 %v4168, %v4237
      %v4270 = vadd.f32 %v4169, %v4238
      %v4271 = vadd.f32 %v4170, %v4239
      %v4272 = vadd.f32 %v4171, %v4240
      %v4273 = vadd.f32 %v4172, %v4241
      %v4274 = vld [vmem:[%s4 + $0x1c] sm:$0x1]
      %s4275 = scalar_lea.vmem [#allocation2], 128
      %v4276 = vld [vmem:[%s4275 + $0x5] sm:$0xff]
      %v4277 = vld [vmem:[%s4275 + $0xd] sm:$0xff]
      %v4278 = vld [vmem:[%s4275 + $0x25] sm:$0xff]
      %v4279 = vld [vmem:[%s4275 + $0x2d] sm:$0xff]
      %v4280 = vld [vmem:[%s4275 + $0x45] sm:$0xff]
      %v4281 = vld [vmem:[%s4275 + $0x4d] sm:$0xff]
      %v4282 = vld [vmem:[%s4275 + $0x65] sm:$0xff]
      %v4283 = vld [vmem:[%s4275 + $0x6d] sm:$0xff]
      %v4284 = vld [vmem:[%s4275 + $0x85] sm:$0xff]
      %v4285 = vld [vmem:[%s4275 + $0x8d] sm:$0xff]
      %v4286 = vld [vmem:[%s4275 + $0xa5] sm:$0xff]
      %v4287 = vld [vmem:[%s4275 + $0xad] sm:$0xff]
      %v4288 = vld [vmem:[%s4275 + $0xc5] sm:$0xff]
      %v4289 = vld [vmem:[%s4275 + $0xcd] sm:$0xff]
      %v4290 = vld [vmem:[%s4275 + $0xe5] sm:$0xff]
      %v4291 = vld [vmem:[%s4275 + $0xed] sm:$0xff]
      %v4292 = vld [vmem:[%s4275 + $0x105] sm:$0xff]
      %v4293 = vld [vmem:[%s4275 + $0x10d] sm:$0xff]
      %v4294 = vld [vmem:[%s4275 + $0x125] sm:$0xff]
      %v4295 = vld [vmem:[%s4275 + $0x12d] sm:$0xff]
      %v4296 = vld [vmem:[%s4275 + $0x145] sm:$0xff]
      %v4297 = vld [vmem:[%s4275 + $0x14d] sm:$0xff]
      %v4298 = vld [vmem:[%s4275 + $0x165] sm:$0xff]
      %v4299 = vld [vmem:[%s4275 + $0x16d] sm:$0xff]
      %v4300 = vld [vmem:[%s4275 + $0x185] sm:$0xff]
      %v4301 = vld [vmem:[%s4275 + $0x18d] sm:$0xff]
      %v4302 = vld [vmem:[%s4275 + $0x1a5] sm:$0xff]
      %v4303 = vld [vmem:[%s4275 + $0x1ad] sm:$0xff]
      %v4304 = vld [vmem:[%s4275 + $0x1c5] sm:$0xff]
      %v4305 = vld [vmem:[%s4275 + $0x1cd] sm:$0xff]
      %v4306 = vld [vmem:[%s4275 + $0x1e5] sm:$0xff]
      %v4307 = vld [vmem:[%s4275 + $0x1ed] sm:$0xff]
      %v4308 = vlaneseq
      %v4309 = vshrl.u32 %v4308, 7
      %v4310 = vsub.s32 0, %v4309
      %v4311 = vrot.slane %v4274, %v4310
      %v4312 = vmul.f32 %v4276, %v4311
      %v4313 = vmul.f32 %v4277, %v4311
      %v4314 = vmul.f32 %v4278, %v4311
      %v4315 = vmul.f32 %v4279, %v4311
      %v4316 = vmul.f32 %v4280, %v4311
      %v4317 = vmul.f32 %v4281, %v4311
      %v4318 = vmul.f32 %v4282, %v4311
      %v4319 = vmul.f32 %v4283, %v4311
      %v4320 = vmul.f32 %v4284, %v4311
      %v4321 = vmul.f32 %v4285, %v4311
      %v4322 = vmul.f32 %v4286, %v4311
      %v4323 = vmul.f32 %v4287, %v4311
      %v4324 = vmul.f32 %v4288, %v4311
      %v4325 = vmul.f32 %v4289, %v4311
      %v4326 = vmul.f32 %v4290, %v4311
      %v4327 = vmul.f32 %v4291, %v4311
      %v4328 = vmul.f32 %v4292, %v4311
      %v4329 = vmul.f32 %v4293, %v4311
      %v4330 = vmul.f32 %v4294, %v4311
      %v4331 = vmul.f32 %v4295, %v4311
      %v4332 = vmul.f32 %v4296, %v4311
      %v4333 = vmul.f32 %v4297, %v4311
      %v4334 = vmul.f32 %v4298, %v4311
      %v4335 = vmul.f32 %v4299, %v4311
      %v4336 = vmul.f32 %v4300, %v4311
      %v4337 = vmul.f32 %v4301, %v4311
      %v4338 = vmul.f32 %v4302, %v4311
      %v4339 = vmul.f32 %v4303, %v4311
      %v4340 = vmul.f32 %v4304, %v4311
      %v4341 = vmul.f32 %v4305, %v4311
      %v4342 = vmul.f32 %v4306, %v4311
      %v4343 = vmul.f32 %v4307, %v4311
      %v4344 = vadd.f32 %v4242, %v4312
      %v4345 = vadd.f32 %v4243, %v4313
      %v4346 = vadd.f32 %v4244, %v4314
      %v4347 = vadd.f32 %v4245, %v4315
      %v4348 = vadd.f32 %v4246, %v4316
      %v4349 = vadd.f32 %v4247, %v4317
      %v4350 = vadd.f32 %v4248, %v4318
      %v4351 = vadd.f32 %v4249, %v4319
      %v4352 = vadd.f32 %v4250, %v4320
      %v4353 = vadd.f32 %v4251, %v4321
      %v4354 = vadd.f32 %v4252, %v4322
      %v4355 = vadd.f32 %v4253, %v4323
      %v4356 = vadd.f32 %v4254, %v4324
      %v4357 = vadd.f32 %v4255, %v4325
      %v4358 = vadd.f32 %v4256, %v4326
      %v4359 = vadd.f32 %v4257, %v4327
      %v4360 = vadd.f32 %v4258, %v4328
      %v4361 = vadd.f32 %v4259, %v4329
      %v4362 = vadd.f32 %v4260, %v4330
      %v4363 = vadd.f32 %v4261, %v4331
      %v4364 = vadd.f32 %v4262, %v4332
      %v4365 = vadd.f32 %v4263, %v4333
      %v4366 = vadd.f32 %v4264, %v4334
      %v4367 = vadd.f32 %v4265, %v4335
      %v4368 = vadd.f32 %v4266, %v4336
      %v4369 = vadd.f32 %v4267, %v4337
      %v4370 = vadd.f32 %v4268, %v4338
      %v4371 = vadd.f32 %v4269, %v4339
      %v4372 = vadd.f32 %v4270, %v4340
      %v4373 = vadd.f32 %v4271, %v4341
      %v4374 = vadd.f32 %v4272, %v4342
      %v4375 = vadd.f32 %v4273, %v4343
      %v4376 = vld [vmem:[%s4 + $0x1d] sm:$0x1]
      %v4377 = vld [vmem:[%s4275 + $0x6] sm:$0xff]
      %v4378 = vld [vmem:[%s4275 + $0xe] sm:$0xff]
      %v4379 = vld [vmem:[%s4275 + $0x26] sm:$0xff]
      %v4380 = vld [vmem:[%s4275 + $0x2e] sm:$0xff]
      %v4381 = vld [vmem:[%s4275 + $0x46] sm:$0xff]
      %v4382 = vld [vmem:[%s4275 + $0x4e] sm:$0xff]
      %v4383 = vld [vmem:[%s4275 + $0x66] sm:$0xff]
      %v4384 = vld [vmem:[%s4275 + $0x6e] sm:$0xff]
      %v4385 = vld [vmem:[%s4275 + $0x86] sm:$0xff]
      %v4386 = vld [vmem:[%s4275 + $0x8e] sm:$0xff]
      %v4387 = vld [vmem:[%s4275 + $0xa6] sm:$0xff]
      %v4388 = vld [vmem:[%s4275 + $0xae] sm:$0xff]
      %v4389 = vld [vmem:[%s4275 + $0xc6] sm:$0xff]
      %v4390 = vld [vmem:[%s4275 + $0xce] sm:$0xff]
      %v4391 = vld [vmem:[%s4275 + $0xe6] sm:$0xff]
      %v4392 = vld [vmem:[%s4275 + $0xee] sm:$0xff]
      %v4393 = vld [vmem:[%s4275 + $0x106] sm:$0xff]
      %v4394 = vld [vmem:[%s4275 + $0x10e] sm:$0xff]
      %v4395 = vld [vmem:[%s4275 + $0x126] sm:$0xff]
      %v4396 = vld [vmem:[%s4275 + $0x12e] sm:$0xff]
      %v4397 = vld [vmem:[%s4275 + $0x146] sm:$0xff]
      %v4398 = vld [vmem:[%s4275 + $0x14e] sm:$0xff]
      %v4399 = vld [vmem:[%s4275 + $0x166] sm:$0xff]
      %v4400 = vld [vmem:[%s4275 + $0x16e] sm:$0xff]
      %v4401 = vld [vmem:[%s4275 + $0x186] sm:$0xff]
      %v4402 = vld [vmem:[%s4275 + $0x18e] sm:$0xff]
      %v4403 = vld [vmem:[%s4275 + $0x1a6] sm:$0xff]
      %v4404 = vld [vmem:[%s4275 + $0x1ae] sm:$0xff]
      %v4405 = vld [vmem:[%s4275 + $0x1c6] sm:$0xff]
      %v4406 = vld [vmem:[%s4275 + $0x1ce] sm:$0xff]
      %v4407 = vld [vmem:[%s4275 + $0x1e6] sm:$0xff]
      %v4408 = vld [vmem:[%s4275 + $0x1ee] sm:$0xff]
      %v4409 = vlaneseq
      %v4410 = vshrl.u32 %v4409, 7
      %v4411 = vsub.s32 0, %v4410
      %v4412 = vrot.slane %v4376, %v4411
      %v4413 = vmul.f32 %v4377, %v4412
      %v4414 = vmul.f32 %v4378, %v4412
      %v4415 = vmul.f32 %v4379, %v4412
      %v4416 = vmul.f32 %v4380, %v4412
      %v4417 = vmul.f32 %v4381, %v4412
      %v4418 = vmul.f32 %v4382, %v4412
      %v4419 = vmul.f32 %v4383, %v4412
      %v4420 = vmul.f32 %v4384, %v4412
      %v4421 = vmul.f32 %v4385, %v4412
      %v4422 = vmul.f32 %v4386, %v4412
      %v4423 = vmul.f32 %v4387, %v4412
      %v4424 = vmul.f32 %v4388, %v4412
      %v4425 = vmul.f32 %v4389, %v4412
      %v4426 = vmul.f32 %v4390, %v4412
      %v4427 = vmul.f32 %v4391, %v4412
      %v4428 = vmul.f32 %v4392, %v4412
      %v4429 = vmul.f32 %v4393, %v4412
      %v4430 = vmul.f32 %v4394, %v4412
      %v4431 = vmul.f32 %v4395, %v4412
      %v4432 = vmul.f32 %v4396, %v4412
      %v4433 = vmul.f32 %v4397, %v4412
      %v4434 = vmul.f32 %v4398, %v4412
      %v4435 = vmul.f32 %v4399, %v4412
      %v4436 = vmul.f32 %v4400, %v4412
      %v4437 = vmul.f32 %v4401, %v4412
      %v4438 = vmul.f32 %v4402, %v4412
      %v4439 = vmul.f32 %v4403, %v4412
      %v4440 = vmul.f32 %v4404, %v4412
      %v4441 = vmul.f32 %v4405, %v4412
      %v4442 = vmul.f32 %v4406, %v4412
      %v4443 = vmul.f32 %v4407, %v4412
      %v4444 = vmul.f32 %v4408, %v4412
      %v4445 = vadd.f32 %v4344, %v4413
      %v4446 = vadd.f32 %v4345, %v4414
      %v4447 = vadd.f32 %v4346, %v4415
      %v4448 = vadd.f32 %v4347, %v4416
      %v4449 = vadd.f32 %v4348, %v4417
      %v4450 = vadd.f32 %v4349, %v4418
      %v4451 = vadd.f32 %v4350, %v4419
      %v4452 = vadd.f32 %v4351, %v4420
      %v4453 = vadd.f32 %v4352, %v4421
      %v4454 = vadd.f32 %v4353, %v4422
      %v4455 = vadd.f32 %v4354, %v4423
      %v4456 = vadd.f32 %v4355, %v4424
      %v4457 = vadd.f32 %v4356, %v4425
      %v4458 = vadd.f32 %v4357, %v4426
      %v4459 = vadd.f32 %v4358, %v4427
      %v4460 = vadd.f32 %v4359, %v4428
      %v4461 = vadd.f32 %v4360, %v4429
      %v4462 = vadd.f32 %v4361, %v4430
      %v4463 = vadd.f32 %v4362, %v4431
      %v4464 = vadd.f32 %v4363, %v4432
      %v4465 = vadd.f32 %v4364, %v4433
      %v4466 = vadd.f32 %v4365, %v4434
      %v4467 = vadd.f32 %v4366, %v4435
      %v4468 = vadd.f32 %v4367, %v4436
      %v4469 = vadd.f32 %v4368, %v4437
      %v4470 = vadd.f32 %v4369, %v4438
      %v4471 = vadd.f32 %v4370, %v4439
      %v4472 = vadd.f32 %v4371, %v4440
      %v4473 = vadd.f32 %v4372, %v4441
      %v4474 = vadd.f32 %v4373, %v4442
      %v4475 = vadd.f32 %v4374, %v4443
      %v4476 = vadd.f32 %v4375, %v4444
      %v4477 = vld [vmem:[%s4 + $0x1e] sm:$0x1]
      %v4478 = vld [vmem:[%s4275 + $0x7] sm:$0xff]
      %v4479 = vld [vmem:[%s4275 + $0xf] sm:$0xff]
      %v4480 = vld [vmem:[%s4275 + $0x27] sm:$0xff]
      %v4481 = vld [vmem:[%s4275 + $0x2f] sm:$0xff]
      %v4482 = vld [vmem:[%s4275 + $0x47] sm:$0xff]
      %v4483 = vld [vmem:[%s4275 + $0x4f] sm:$0xff]
      %v4484 = vld [vmem:[%s4275 + $0x67] sm:$0xff]
      %v4485 = vld [vmem:[%s4275 + $0x6f] sm:$0xff]
      %v4486 = vld [vmem:[%s4275 + $0x87] sm:$0xff]
      %v4487 = vld [vmem:[%s4275 + $0x8f] sm:$0xff]
      %v4488 = vld [vmem:[%s4275 + $0xa7] sm:$0xff]
      %v4489 = vld [vmem:[%s4275 + $0xaf] sm:$0xff]
      %v4490 = vld [vmem:[%s4275 + $0xc7] sm:$0xff]
      %v4491 = vld [vmem:[%s4275 + $0xcf] sm:$0xff]
      %v4492 = vld [vmem:[%s4275 + $0xe7] sm:$0xff]
      %v4493 = vld [vmem:[%s4275 + $0xef] sm:$0xff]
      %v4494 = vld [vmem:[%s4275 + $0x107] sm:$0xff]
      %v4495 = vld [vmem:[%s4275 + $0x10f] sm:$0xff]
      %v4496 = vld [vmem:[%s4275 + $0x127] sm:$0xff]
      %v4497 = vld [vmem:[%s4275 + $0x12f] sm:$0xff]
      %v4498 = vld [vmem:[%s4275 + $0x147] sm:$0xff]
      %v4499 = vld [vmem:[%s4275 + $0x14f] sm:$0xff]
      %v4500 = vld [vmem:[%s4275 + $0x167] sm:$0xff]
      %v4501 = vld [vmem:[%s4275 + $0x16f] sm:$0xff]
      %v4502 = vld [vmem:[%s4275 + $0x187] sm:$0xff]
      %v4503 = vld [vmem:[%s4275 + $0x18f] sm:$0xff]
      %v4504 = vld [vmem:[%s4275 + $0x1a7] sm:$0xff]
      %v4505 = vld [vmem:[%s4275 + $0x1af] sm:$0xff]
      %v4506 = vld [vmem:[%s4275 + $0x1c7] sm:$0xff]
      %v4507 = vld [vmem:[%s4275 + $0x1cf] sm:$0xff]
      %v4508 = vld [vmem:[%s4275 + $0x1e7] sm:$0xff]
      %v4509 = vld [vmem:[%s4275 + $0x1ef] sm:$0xff]
      %v4510 = vlaneseq
      %v4511 = vshrl.u32 %v4510, 7
      %v4512 = vsub.s32 0, %v4511
      %v4513 = vrot.slane %v4477, %v4512
      %v4514 = vmul.f32 %v4478, %v4513
      %v4515 = vmul.f32 %v4479, %v4513
      %v4516 = vmul.f32 %v4480, %v4513
      %v4517 = vmul.f32 %v4481, %v4513
      %v4518 = vmul.f32 %v4482, %v4513
      %v4519 = vmul.f32 %v4483, %v4513
      %v4520 = vmul.f32 %v4484, %v4513
      %v4521 = vmul.f32 %v4485, %v4513
      %v4522 = vmul.f32 %v4486, %v4513
      %v4523 = vmul.f32 %v4487, %v4513
      %v4524 = vmul.f32 %v4488, %v4513
      %v4525 = vmul.f32 %v4489, %v4513
      %v4526 = vmul.f32 %v4490, %v4513
      %v4527 = vmul.f32 %v4491, %v4513
      %v4528 = vmul.f32 %v4492, %v4513
      %v4529 = vmul.f32 %v4493, %v4513
      %v4530 = vmul.f32 %v4494, %v4513
      %v4531 = vmul.f32 %v4495, %v4513
      %v4532 = vmul.f32 %v4496, %v4513
      %v4533 = vmul.f32 %v4497, %v4513
      %v4534 = vmul.f32 %v4498, %v4513
      %v4535 = vmul.f32 %v4499, %v4513
      %v4536 = vmul.f32 %v4500, %v4513
      %v4537 = vmul.f32 %v4501, %v4513
      %v4538 = vmul.f32 %v4502, %v4513
      %v4539 = vmul.f32 %v4503, %v4513
      %v4540 = vmul.f32 %v4504, %v4513
      %v4541 = vmul.f32 %v4505, %v4513
      %v4542 = vmul.f32 %v4506, %v4513
      %v4543 = vmul.f32 %v4507, %v4513
      %v4544 = vmul.f32 %v4508, %v4513
      %v4545 = vmul.f32 %v4509, %v4513
      %v4546 = vadd.f32 %v4445, %v4514
      %v4547 = vadd.f32 %v4446, %v4515
      %v4548 = vadd.f32 %v4447, %v4516
      %v4549 = vadd.f32 %v4448, %v4517
      %v4550 = vadd.f32 %v4449, %v4518
      %v4551 = vadd.f32 %v4450, %v4519
      %v4552 = vadd.f32 %v4451, %v4520
      %v4553 = vadd.f32 %v4452, %v4521
      %v4554 = vadd.f32 %v4453, %v4522
      %v4555 = vadd.f32 %v4454, %v4523
      %v4556 = vadd.f32 %v4455, %v4524
      %v4557 = vadd.f32 %v4456, %v4525
      %v4558 = vadd.f32 %v4457, %v4526
      %v4559 = vadd.f32 %v4458, %v4527
      %v4560 = vadd.f32 %v4459, %v4528
      %v4561 = vadd.f32 %v4460, %v4529
      %v4562 = vadd.f32 %v4461, %v4530
      %v4563 = vadd.f32 %v4462, %v4531
      %v4564 = vadd.f32 %v4463, %v4532
      %v4565 = vadd.f32 %v4464, %v4533
      %v4566 = vadd.f32 %v4465, %v4534
      %v4567 = vadd.f32 %v4466, %v4535
      %v4568 = vadd.f32 %v4467, %v4536
      %v4569 = vadd.f32 %v4468, %v4537
      %v4570 = vadd.f32 %v4469, %v4538
      %v4571 = vadd.f32 %v4470, %v4539
      %v4572 = vadd.f32 %v4471, %v4540
      %v4573 = vadd.f32 %v4472, %v4541
      %v4574 = vadd.f32 %v4473, %v4542
      %v4575 = vadd.f32 %v4474, %v4543
      %v4576 = vadd.f32 %v4475, %v4544
      %v4577 = vadd.f32 %v4476, %v4545
      %v4578 = vld [vmem:[%s4 + $0x1f] sm:$0x1]
      %v4579 = vld [vmem:[%s4275 + $0x8] sm:$0xff]
      %v4580 = vld [vmem:[%s4275 + $0x10] sm:$0xff]
      %v4581 = vld [vmem:[%s4275 + $0x28] sm:$0xff]
      %v4582 = vld [vmem:[%s4275 + $0x30] sm:$0xff]
      %v4583 = vld [vmem:[%s4275 + $0x48] sm:$0xff]
      %v4584 = vld [vmem:[%s4275 + $0x50] sm:$0xff]
      %v4585 = vld [vmem:[%s4275 + $0x68] sm:$0xff]
      %v4586 = vld [vmem:[%s4275 + $0x70] sm:$0xff]
      %v4587 = vld [vmem:[%s4275 + $0x88] sm:$0xff]
      %v4588 = vld [vmem:[%s4275 + $0x90] sm:$0xff]
      %v4589 = vld [vmem:[%s4275 + $0xa8] sm:$0xff]
      %v4590 = vld [vmem:[%s4275 + $0xb0] sm:$0xff]
      %v4591 = vld [vmem:[%s4275 + $0xc8] sm:$0xff]
      %v4592 = vld [vmem:[%s4275 + $0xd0] sm:$0xff]
      %v4593 = vld [vmem:[%s4275 + $0xe8] sm:$0xff]
      %v4594 = vld [vmem:[%s4275 + $0xf0] sm:$0xff]
      %v4595 = vld [vmem:[%s4275 + $0x108] sm:$0xff]
      %v4596 = vld [vmem:[%s4275 + $0x110] sm:$0xff]
      %v4597 = vld [vmem:[%s4275 + $0x128] sm:$0xff]
      %v4598 = vld [vmem:[%s4275 + $0x130] sm:$0xff]
      %v4599 = vld [vmem:[%s4275 + $0x148] sm:$0xff]
      %v4600 = vld [vmem:[%s4275 + $0x150] sm:$0xff]
      %v4601 = vld [vmem:[%s4275 + $0x168] sm:$0xff]
      %v4602 = vld [vmem:[%s4275 + $0x170] sm:$0xff]
      %v4603 = vld [vmem:[%s4275 + $0x188] sm:$0xff]
      %v4604 = vld [vmem:[%s4275 + $0x190] sm:$0xff]
      %v4605 = vld [vmem:[%s4275 + $0x1a8] sm:$0xff]
      %v4606 = vld [vmem:[%s4275 + $0x1b0] sm:$0xff]
      %v4607 = vld [vmem:[%s4275 + $0x1c8] sm:$0xff]
      %v4608 = vld [vmem:[%s4275 + $0x1d0] sm:$0xff]
      %v4609 = vld [vmem:[%s4275 + $0x1e8] sm:$0xff]
      %v4610 = vld [vmem:[%s4275 + $0x1f0] sm:$0xff]
      %v4611 = vlaneseq
      %v4612 = vshrl.u32 %v4611, 7
      %v4613 = vsub.s32 0, %v4612
      %v4614 = vrot.slane %v4578, %v4613
      %v4615 = vmul.f32 %v4579, %v4614
      %v4616 = vmul.f32 %v4580, %v4614
      %v4617 = vmul.f32 %v4581, %v4614
      %v4618 = vmul.f32 %v4582, %v4614
      %v4619 = vmul.f32 %v4583, %v4614
      %v4620 = vmul.f32 %v4584, %v4614
      %v4621 = vmul.f32 %v4585, %v4614
      %v4622 = vmul.f32 %v4586, %v4614
      %v4623 = vmul.f32 %v4587, %v4614
      %v4624 = vmul.f32 %v4588, %v4614
      %v4625 = vmul.f32 %v4589, %v4614
      %v4626 = vmul.f32 %v4590, %v4614
      %v4627 = vmul.f32 %v4591, %v4614
      %v4628 = vmul.f32 %v4592, %v4614
      %v4629 = vmul.f32 %v4593, %v4614
      %v4630 = vmul.f32 %v4594, %v4614
      %v4631 = vmul.f32 %v4595, %v4614
      %v4632 = vmul.f32 %v4596, %v4614
      %v4633 = vmul.f32 %v4597, %v4614
      %v4634 = vmul.f32 %v4598, %v4614
      %v4635 = vmul.f32 %v4599, %v4614
      %v4636 = vmul.f32 %v4600, %v4614
      %v4637 = vmul.f32 %v4601, %v4614
      %v4638 = vmul.f32 %v4602, %v4614
      %v4639 = vmul.f32 %v4603, %v4614
      %v4640 = vmul.f32 %v4604, %v4614
      %v4641 = vmul.f32 %v4605, %v4614
      %v4642 = vmul.f32 %v4606, %v4614
      %v4643 = vmul.f32 %v4607, %v4614
      %v4644 = vmul.f32 %v4608, %v4614
      %v4645 = vmul.f32 %v4609, %v4614
      %v4646 = vmul.f32 %v4610, %v4614
      %v4647 = vadd.f32 %v4546, %v4615
      %v4648 = vadd.f32 %v4547, %v4616
      %v4649 = vadd.f32 %v4548, %v4617
      %v4650 = vadd.f32 %v4549, %v4618
      %v4651 = vadd.f32 %v4550, %v4619
      %v4652 = vadd.f32 %v4551, %v4620
      %v4653 = vadd.f32 %v4552, %v4621
      %v4654 = vadd.f32 %v4553, %v4622
      %v4655 = vadd.f32 %v4554, %v4623
      %v4656 = vadd.f32 %v4555, %v4624
      %v4657 = vadd.f32 %v4556, %v4625
      %v4658 = vadd.f32 %v4557, %v4626
      %v4659 = vadd.f32 %v4558, %v4627
      %v4660 = vadd.f32 %v4559, %v4628
      %v4661 = vadd.f32 %v4560, %v4629
      %v4662 = vadd.f32 %v4561, %v4630
      %v4663 = vadd.f32 %v4562, %v4631
      %v4664 = vadd.f32 %v4563, %v4632
      %v4665 = vadd.f32 %v4564, %v4633
      %v4666 = vadd.f32 %v4565, %v4634
      %v4667 = vadd.f32 %v4566, %v4635
      %v4668 = vadd.f32 %v4567, %v4636
      %v4669 = vadd.f32 %v4568, %v4637
      %v4670 = vadd.f32 %v4569, %v4638
      %v4671 = vadd.f32 %v4570, %v4639
      %v4672 = vadd.f32 %v4571, %v4640
      %v4673 = vadd.f32 %v4572, %v4641
      %v4674 = vadd.f32 %v4573, %v4642
      %v4675 = vadd.f32 %v4574, %v4643
      %v4676 = vadd.f32 %v4575, %v4644
      %v4677 = vadd.f32 %v4576, %v4645
      %v4678 = vadd.f32 %v4577, %v4646
      %v4679 = vld [vmem:[%s4 + $0x20] sm:$0x1]
      %v4680 = vld [vmem:[%s4275 + $0x9] sm:$0xff]
      %v4681 = vld [vmem:[%s4275 + $0x11] sm:$0xff]
      %v4682 = vld [vmem:[%s4275 + $0x29] sm:$0xff]
      %v4683 = vld [vmem:[%s4275 + $0x31] sm:$0xff]
      %v4684 = vld [vmem:[%s4275 + $0x49] sm:$0xff]
      %v4685 = vld [vmem:[%s4275 + $0x51] sm:$0xff]
      %v4686 = vld [vmem:[%s4275 + $0x69] sm:$0xff]
      %v4687 = vld [vmem:[%s4275 + $0x71] sm:$0xff]
      %v4688 = vld [vmem:[%s4275 + $0x89] sm:$0xff]
      %v4689 = vld [vmem:[%s4275 + $0x91] sm:$0xff]
      %v4690 = vld [vmem:[%s4275 + $0xa9] sm:$0xff]
      %v4691 = vld [vmem:[%s4275 + $0xb1] sm:$0xff]
      %v4692 = vld [vmem:[%s4275 + $0xc9] sm:$0xff]
      %v4693 = vld [vmem:[%s4275 + $0xd1] sm:$0xff]
      %v4694 = vld [vmem:[%s4275 + $0xe9] sm:$0xff]
      %v4695 = vld [vmem:[%s4275 + $0xf1] sm:$0xff]
      %v4696 = vld [vmem:[%s4275 + $0x109] sm:$0xff]
      %v4697 = vld [vmem:[%s4275 + $0x111] sm:$0xff]
      %v4698 = vld [vmem:[%s4275 + $0x129] sm:$0xff]
      %v4699 = vld [vmem:[%s4275 + $0x131] sm:$0xff]
      %v4700 = vld [vmem:[%s4275 + $0x149] sm:$0xff]
      %v4701 = vld [vmem:[%s4275 + $0x151] sm:$0xff]
      %v4702 = vld [vmem:[%s4275 + $0x169] sm:$0xff]
      %v4703 = vld [vmem:[%s4275 + $0x171] sm:$0xff]
      %v4704 = vld [vmem:[%s4275 + $0x189] sm:$0xff]
      %v4705 = vld [vmem:[%s4275 + $0x191] sm:$0xff]
      %v4706 = vld [vmem:[%s4275 + $0x1a9] sm:$0xff]
      %v4707 = vld [vmem:[%s4275 + $0x1b1] sm:$0xff]
      %v4708 = vld [vmem:[%s4275 + $0x1c9] sm:$0xff]
      %v4709 = vld [vmem:[%s4275 + $0x1d1] sm:$0xff]
      %v4710 = vld [vmem:[%s4275 + $0x1e9] sm:$0xff]
      %v4711 = vld [vmem:[%s4275 + $0x1f1] sm:$0xff]
      %v4712 = vlaneseq
      %v4713 = vshrl.u32 %v4712, 7
      %v4714 = vsub.s32 0, %v4713
      %v4715 = vrot.slane %v4679, %v4714
      %v4716 = vmul.f32 %v4680, %v4715
      %v4717 = vmul.f32 %v4681, %v4715
      %v4718 = vmul.f32 %v4682, %v4715
      %v4719 = vmul.f32 %v4683, %v4715
      %v4720 = vmul.f32 %v4684, %v4715
      %v4721 = vmul.f32 %v4685, %v4715
      %v4722 = vmul.f32 %v4686, %v4715
      %v4723 = vmul.f32 %v4687, %v4715
      %v4724 = vmul.f32 %v4688, %v4715
      %v4725 = vmul.f32 %v4689, %v4715
      %v4726 = vmul.f32 %v4690, %v4715
      %v4727 = vmul.f32 %v4691, %v4715
      %v4728 = vmul.f32 %v4692, %v4715
      %v4729 = vmul.f32 %v4693, %v4715
      %v4730 = vmul.f32 %v4694, %v4715
      %v4731 = vmul.f32 %v4695, %v4715
      %v4732 = vmul.f32 %v4696, %v4715
      %v4733 = vmul.f32 %v4697, %v4715
      %v4734 = vmul.f32 %v4698, %v4715
      %v4735 = vmul.f32 %v4699, %v4715
      %v4736 = vmul.f32 %v4700, %v4715
      %v4737 = vmul.f32 %v4701, %v4715
      %v4738 = vmul.f32 %v4702, %v4715
      %v4739 = vmul.f32 %v4703, %v4715
      %v4740 = vmul.f32 %v4704, %v4715
      %v4741 = vmul.f32 %v4705, %v4715
      %v4742 = vmul.f32 %v4706, %v4715
      %v4743 = vmul.f32 %v4707, %v4715
      %v4744 = vmul.f32 %v4708, %v4715
      %v4745 = vmul.f32 %v4709, %v4715
      %v4746 = vmul.f32 %v4710, %v4715
      %v4747 = vmul.f32 %v4711, %v4715
      %v4748 = vadd.f32 %v4647, %v4716
      %v4749 = vadd.f32 %v4648, %v4717
      %v4750 = vadd.f32 %v4649, %v4718
      %v4751 = vadd.f32 %v4650, %v4719
      %v4752 = vadd.f32 %v4651, %v4720
      %v4753 = vadd.f32 %v4652, %v4721
      %v4754 = vadd.f32 %v4653, %v4722
      %v4755 = vadd.f32 %v4654, %v4723
      %v4756 = vadd.f32 %v4655, %v4724
      %v4757 = vadd.f32 %v4656, %v4725
      %v4758 = vadd.f32 %v4657, %v4726
      %v4759 = vadd.f32 %v4658, %v4727
      %v4760 = vadd.f32 %v4659, %v4728
      %v4761 = vadd.f32 %v4660, %v4729
      %v4762 = vadd.f32 %v4661, %v4730
      %v4763 = vadd.f32 %v4662, %v4731
      %v4764 = vadd.f32 %v4663, %v4732
      %v4765 = vadd.f32 %v4664, %v4733
      %v4766 = vadd.f32 %v4665, %v4734
      %v4767 = vadd.f32 %v4666, %v4735
      %v4768 = vadd.f32 %v4667, %v4736
      %v4769 = vadd.f32 %v4668, %v4737
      %v4770 = vadd.f32 %v4669, %v4738
      %v4771 = vadd.f32 %v4670, %v4739
      %v4772 = vadd.f32 %v4671, %v4740
      %v4773 = vadd.f32 %v4672, %v4741
      %v4774 = vadd.f32 %v4673, %v4742
      %v4775 = vadd.f32 %v4674, %v4743
      %v4776 = vadd.f32 %v4675, %v4744
      %v4777 = vadd.f32 %v4676, %v4745
      %v4778 = vadd.f32 %v4677, %v4746
      %v4779 = vadd.f32 %v4678, %v4747
      %v4780 = vld [vmem:[%s4 + $0x21] sm:$0x1]
      %v4781 = vld [vmem:[%s4275 + $0xa] sm:$0xff]
      %v4782 = vld [vmem:[%s4275 + $0x12] sm:$0xff]
      %v4783 = vld [vmem:[%s4275 + $0x2a] sm:$0xff]
      %v4784 = vld [vmem:[%s4275 + $0x32] sm:$0xff]
      %v4785 = vld [vmem:[%s4275 + $0x4a] sm:$0xff]
      %v4786 = vld [vmem:[%s4275 + $0x52] sm:$0xff]
      %v4787 = vld [vmem:[%s4275 + $0x6a] sm:$0xff]
      %v4788 = vld [vmem:[%s4275 + $0x72] sm:$0xff]
      %v4789 = vld [vmem:[%s4275 + $0x8a] sm:$0xff]
      %v4790 = vld [vmem:[%s4275 + $0x92] sm:$0xff]
      %v4791 = vld [vmem:[%s4275 + $0xaa] sm:$0xff]
      %v4792 = vld [vmem:[%s4275 + $0xb2] sm:$0xff]
      %v4793 = vld [vmem:[%s4275 + $0xca] sm:$0xff]
      %v4794 = vld [vmem:[%s4275 + $0xd2] sm:$0xff]
      %v4795 = vld [vmem:[%s4275 + $0xea] sm:$0xff]
      %v4796 = vld [vmem:[%s4275 + $0xf2] sm:$0xff]
      %v4797 = vld [vmem:[%s4275 + $0x10a] sm:$0xff]
      %v4798 = vld [vmem:[%s4275 + $0x112] sm:$0xff]
      %v4799 = vld [vmem:[%s4275 + $0x12a] sm:$0xff]
      %v4800 = vld [vmem:[%s4275 + $0x132] sm:$0xff]
      %v4801 = vld [vmem:[%s4275 + $0x14a] sm:$0xff]
      %v4802 = vld [vmem:[%s4275 + $0x152] sm:$0xff]
      %v4803 = vld [vmem:[%s4275 + $0x16a] sm:$0xff]
      %v4804 = vld [vmem:[%s4275 + $0x172] sm:$0xff]
      %v4805 = vld [vmem:[%s4275 + $0x18a] sm:$0xff]
      %v4806 = vld [vmem:[%s4275 + $0x192] sm:$0xff]
      %v4807 = vld [vmem:[%s4275 + $0x1aa] sm:$0xff]
      %v4808 = vld [vmem:[%s4275 + $0x1b2] sm:$0xff]
      %v4809 = vld [vmem:[%s4275 + $0x1ca] sm:$0xff]
      %v4810 = vld [vmem:[%s4275 + $0x1d2] sm:$0xff]
      %v4811 = vld [vmem:[%s4275 + $0x1ea] sm:$0xff]
      %v4812 = vld [vmem:[%s4275 + $0x1f2] sm:$0xff]
      %v4813 = vlaneseq
      %v4814 = vshrl.u32 %v4813, 7
      %v4815 = vsub.s32 0, %v4814
      %v4816 = vrot.slane %v4780, %v4815
      %v4817 = vmul.f32 %v4781, %v4816
      %v4818 = vmul.f32 %v4782, %v4816
      %v4819 = vmul.f32 %v4783, %v4816
      %v4820 = vmul.f32 %v4784, %v4816
      %v4821 = vmul.f32 %v4785, %v4816
      %v4822 = vmul.f32 %v4786, %v4816
      %v4823 = vmul.f32 %v4787, %v4816
      %v4824 = vmul.f32 %v4788, %v4816
      %v4825 = vmul.f32 %v4789, %v4816
      %v4826 = vmul.f32 %v4790, %v4816
      %v4827 = vmul.f32 %v4791, %v4816
      %v4828 = vmul.f32 %v4792, %v4816
      %v4829 = vmul.f32 %v4793, %v4816
      %v4830 = vmul.f32 %v4794, %v4816
      %v4831 = vmul.f32 %v4795, %v4816
      %v4832 = vmul.f32 %v4796, %v4816
      %v4833 = vmul.f32 %v4797, %v4816
      %v4834 = vmul.f32 %v4798, %v4816
      %v4835 = vmul.f32 %v4799, %v4816
      %v4836 = vmul.f32 %v4800, %v4816
      %v4837 = vmul.f32 %v4801, %v4816
      %v4838 = vmul.f32 %v4802, %v4816
      %v4839 = vmul.f32 %v4803, %v4816
      %v4840 = vmul.f32 %v4804, %v4816
      %v4841 = vmul.f32 %v4805, %v4816
      %v4842 = vmul.f32 %v4806, %v4816
      %v4843 = vmul.f32 %v4807, %v4816
      %v4844 = vmul.f32 %v4808, %v4816
      %v4845 = vmul.f32 %v4809, %v4816
      %v4846 = vmul.f32 %v4810, %v4816
      %v4847 = vmul.f32 %v4811, %v4816
      %v4848 = vmul.f32 %v4812, %v4816
      %v4849 = vadd.f32 %v4748, %v4817
      %v4850 = vadd.f32 %v4749, %v4818
      %v4851 = vadd.f32 %v4750, %v4819
      %v4852 = vadd.f32 %v4751, %v4820
      %v4853 = vadd.f32 %v4752, %v4821
      %v4854 = vadd.f32 %v4753, %v4822
      %v4855 = vadd.f32 %v4754, %v4823
      %v4856 = vadd.f32 %v4755, %v4824
      %v4857 = vadd.f32 %v4756, %v4825
      %v4858 = vadd.f32 %v4757, %v4826
      %v4859 = vadd.f32 %v4758, %v4827
      %v4860 = vadd.f32 %v4759, %v4828
      %v4861 = vadd.f32 %v4760, %v4829
      %v4862 = vadd.f32 %v4761, %v4830
      %v4863 = vadd.f32 %v4762, %v4831
      %v4864 = vadd.f32 %v4763, %v4832
      %v4865 = vadd.f32 %v4764, %v4833
      %v4866 = vadd.f32 %v4765, %v4834
      %v4867 = vadd.f32 %v4766, %v4835
      %v4868 = vadd.f32 %v4767, %v4836
      %v4869 = vadd.f32 %v4768, %v4837
      %v4870 = vadd.f32 %v4769, %v4838
      %v4871 = vadd.f32 %v4770, %v4839
      %v4872 = vadd.f32 %v4771, %v4840
      %v4873 = vadd.f32 %v4772, %v4841
      %v4874 = vadd.f32 %v4773, %v4842
      %v4875 = vadd.f32 %v4774, %v4843
      %v4876 = vadd.f32 %v4775, %v4844
      %v4877 = vadd.f32 %v4776, %v4845
      %v4878 = vadd.f32 %v4777, %v4846
      %v4879 = vadd.f32 %v4778, %v4847
      %v4880 = vadd.f32 %v4779, %v4848
      %v4881 = vld [vmem:[%s4 + $0x22] sm:$0x1]
      %v4882 = vld [vmem:[%s4275 + $0xb] sm:$0xff]
      %v4883 = vld [vmem:[%s4275 + $0x13] sm:$0xff]
      %v4884 = vld [vmem:[%s4275 + $0x2b] sm:$0xff]
      %v4885 = vld [vmem:[%s4275 + $0x33] sm:$0xff]
      %v4886 = vld [vmem:[%s4275 + $0x4b] sm:$0xff]
      %v4887 = vld [vmem:[%s4275 + $0x53] sm:$0xff]
      %v4888 = vld [vmem:[%s4275 + $0x6b] sm:$0xff]
      %v4889 = vld [vmem:[%s4275 + $0x73] sm:$0xff]
      %v4890 = vld [vmem:[%s4275 + $0x8b] sm:$0xff]
      %v4891 = vld [vmem:[%s4275 + $0x93] sm:$0xff]
      %v4892 = vld [vmem:[%s4275 + $0xab] sm:$0xff]
      %v4893 = vld [vmem:[%s4275 + $0xb3] sm:$0xff]
      %v4894 = vld [vmem:[%s4275 + $0xcb] sm:$0xff]
      %v4895 = vld [vmem:[%s4275 + $0xd3] sm:$0xff]
      %v4896 = vld [vmem:[%s4275 + $0xeb] sm:$0xff]
      %v4897 = vld [vmem:[%s4275 + $0xf3] sm:$0xff]
      %v4898 = vld [vmem:[%s4275 + $0x10b] sm:$0xff]
      %v4899 = vld [vmem:[%s4275 + $0x113] sm:$0xff]
      %v4900 = vld [vmem:[%s4275 + $0x12b] sm:$0xff]
      %v4901 = vld [vmem:[%s4275 + $0x133] sm:$0xff]
      %v4902 = vld [vmem:[%s4275 + $0x14b] sm:$0xff]
      %v4903 = vld [vmem:[%s4275 + $0x153] sm:$0xff]
      %v4904 = vld [vmem:[%s4275 + $0x16b] sm:$0xff]
      %v4905 = vld [vmem:[%s4275 + $0x173] sm:$0xff]
      %v4906 = vld [vmem:[%s4275 + $0x18b] sm:$0xff]
      %v4907 = vld [vmem:[%s4275 + $0x193] sm:$0xff]
      %v4908 = vld [vmem:[%s4275 + $0x1ab] sm:$0xff]
      %v4909 = vld [vmem:[%s4275 + $0x1b3] sm:$0xff]
      %v4910 = vld [vmem:[%s4275 + $0x1cb] sm:$0xff]
      %v4911 = vld [vmem:[%s4275 + $0x1d3] sm:$0xff]
      %v4912 = vld [vmem:[%s4275 + $0x1eb] sm:$0xff]
      %v4913 = vld [vmem:[%s4275 + $0x1f3] sm:$0xff]
      %v4914 = vlaneseq
      %v4915 = vshrl.u32 %v4914, 7
      %v4916 = vsub.s32 0, %v4915
      %v4917 = vrot.slane %v4881, %v4916
      %v4918 = vmul.f32 %v4882, %v4917
      %v4919 = vmul.f32 %v4883, %v4917
      %v4920 = vmul.f32 %v4884, %v4917
      %v4921 = vmul.f32 %v4885, %v4917
      %v4922 = vmul.f32 %v4886, %v4917
      %v4923 = vmul.f32 %v4887, %v4917
      %v4924 = vmul.f32 %v4888, %v4917
      %v4925 = vmul.f32 %v4889, %v4917
      %v4926 = vmul.f32 %v4890, %v4917
      %v4927 = vmul.f32 %v4891, %v4917
      %v4928 = vmul.f32 %v4892, %v4917
      %v4929 = vmul.f32 %v4893, %v4917
      %v4930 = vmul.f32 %v4894, %v4917
      %v4931 = vmul.f32 %v4895, %v4917
      %v4932 = vmul.f32 %v4896, %v4917
      %v4933 = vmul.f32 %v4897, %v4917
      %v4934 = vmul.f32 %v4898, %v4917
      %v4935 = vmul.f32 %v4899, %v4917
      %v4936 = vmul.f32 %v4900, %v4917
      %v4937 = vmul.f32 %v4901, %v4917
      %v4938 = vmul.f32 %v4902, %v4917
      %v4939 = vmul.f32 %v4903, %v4917
      %v4940 = vmul.f32 %v4904, %v4917
      %v4941 = vmul.f32 %v4905, %v4917
      %v4942 = vmul.f32 %v4906, %v4917
      %v4943 = vmul.f32 %v4907, %v4917
      %v4944 = vmul.f32 %v4908, %v4917
      %v4945 = vmul.f32 %v4909, %v4917
      %v4946 = vmul.f32 %v4910, %v4917
      %v4947 = vmul.f32 %v4911, %v4917
      %v4948 = vmul.f32 %v4912, %v4917
      %v4949 = vmul.f32 %v4913, %v4917
      %v4950 = vadd.f32 %v4849, %v4918
      %v4951 = vadd.f32 %v4850, %v4919
      %v4952 = vadd.f32 %v4851, %v4920
      %v4953 = vadd.f32 %v4852, %v4921
      %v4954 = vadd.f32 %v4853, %v4922
      %v4955 = vadd.f32 %v4854, %v4923
      %v4956 = vadd.f32 %v4855, %v4924
      %v4957 = vadd.f32 %v4856, %v4925
      %v4958 = vadd.f32 %v4857, %v4926
      %v4959 = vadd.f32 %v4858, %v4927
      %v4960 = vadd.f32 %v4859, %v4928
      %v4961 = vadd.f32 %v4860, %v4929
      %v4962 = vadd.f32 %v4861, %v4930
      %v4963 = vadd.f32 %v4862, %v4931
      %v4964 = vadd.f32 %v4863, %v4932
      %v4965 = vadd.f32 %v4864, %v4933
      %v4966 = vadd.f32 %v4865, %v4934
      %v4967 = vadd.f32 %v4866, %v4935
      %v4968 = vadd.f32 %v4867, %v4936
      %v4969 = vadd.f32 %v4868, %v4937
      %v4970 = vadd.f32 %v4869, %v4938
      %v4971 = vadd.f32 %v4870, %v4939
      %v4972 = vadd.f32 %v4871, %v4940
      %v4973 = vadd.f32 %v4872, %v4941
      %v4974 = vadd.f32 %v4873, %v4942
      %v4975 = vadd.f32 %v4874, %v4943
      %v4976 = vadd.f32 %v4875, %v4944
      %v4977 = vadd.f32 %v4876, %v4945
      %v4978 = vadd.f32 %v4877, %v4946
      %v4979 = vadd.f32 %v4878, %v4947
      %v4980 = vadd.f32 %v4879, %v4948
      %v4981 = vadd.f32 %v4880, %v4949
      %v4982 = vld [vmem:[%s4 + $0x23] sm:$0x1]
      %s4983 = scalar_lea.vmem [#allocation2], 160
      %v4984 = vld [vmem:[%s4983 + $0x5] sm:$0xff]
      %v4985 = vld [vmem:[%s4983 + $0xd] sm:$0xff]
      %v4986 = vld [vmem:[%s4983 + $0x25] sm:$0xff]
      %v4987 = vld [vmem:[%s4983 + $0x2d] sm:$0xff]
      %v4988 = vld [vmem:[%s4983 + $0x45] sm:$0xff]
      %v4989 = vld [vmem:[%s4983 + $0x4d] sm:$0xff]
      %v4990 = vld [vmem:[%s4983 + $0x65] sm:$0xff]
      %v4991 = vld [vmem:[%s4983 + $0x6d] sm:$0xff]
      %v4992 = vld [vmem:[%s4983 + $0x85] sm:$0xff]
      %v4993 = vld [vmem:[%s4983 + $0x8d] sm:$0xff]
      %v4994 = vld [vmem:[%s4983 + $0xa5] sm:$0xff]
      %v4995 = vld [vmem:[%s4983 + $0xad] sm:$0xff]
      %v4996 = vld [vmem:[%s4983 + $0xc5] sm:$0xff]
      %v4997 = vld [vmem:[%s4983 + $0xcd] sm:$0xff]
      %v4998 = vld [vmem:[%s4983 + $0xe5] sm:$0xff]
      %v4999 = vld [vmem:[%s4983 + $0xed] sm:$0xff]
      %v5000 = vld [vmem:[%s4983 + $0x105] sm:$0xff]
      %v5001 = vld [vmem:[%s4983 + $0x10d] sm:$0xff]
      %v5002 = vld [vmem:[%s4983 + $0x125] sm:$0xff]
      %v5003 = vld [vmem:[%s4983 + $0x12d] sm:$0xff]
      %v5004 = vld [vmem:[%s4983 + $0x145] sm:$0xff]
      %v5005 = vld [vmem:[%s4983 + $0x14d] sm:$0xff]
      %v5006 = vld [vmem:[%s4983 + $0x165] sm:$0xff]
      %v5007 = vld [vmem:[%s4983 + $0x16d] sm:$0xff]
      %v5008 = vld [vmem:[%s4983 + $0x185] sm:$0xff]
      %v5009 = vld [vmem:[%s4983 + $0x18d] sm:$0xff]
      %v5010 = vld [vmem:[%s4983 + $0x1a5] sm:$0xff]
      %v5011 = vld [vmem:[%s4983 + $0x1ad] sm:$0xff]
      %v5012 = vld [vmem:[%s4983 + $0x1c5] sm:$0xff]
      %v5013 = vld [vmem:[%s4983 + $0x1cd] sm:$0xff]
      %v5014 = vld [vmem:[%s4983 + $0x1e5] sm:$0xff]
      %v5015 = vld [vmem:[%s4983 + $0x1ed] sm:$0xff]
      %v5016 = vlaneseq
      %v5017 = vshrl.u32 %v5016, 7
      %v5018 = vsub.s32 0, %v5017
      %v5019 = vrot.slane %v4982, %v5018
      %v5020 = vmul.f32 %v4984, %v5019
      %v5021 = vmul.f32 %v4985, %v5019
      %v5022 = vmul.f32 %v4986, %v5019
      %v5023 = vmul.f32 %v4987, %v5019
      %v5024 = vmul.f32 %v4988, %v5019
      %v5025 = vmul.f32 %v4989, %v5019
      %v5026 = vmul.f32 %v4990, %v5019
      %v5027 = vmul.f32 %v4991, %v5019
      %v5028 = vmul.f32 %v4992, %v5019
      %v5029 = vmul.f32 %v4993, %v5019
      %v5030 = vmul.f32 %v4994, %v5019
      %v5031 = vmul.f32 %v4995, %v5019
      %v5032 = vmul.f32 %v4996, %v5019
      %v5033 = vmul.f32 %v4997, %v5019
      %v5034 = vmul.f32 %v4998, %v5019
      %v5035 = vmul.f32 %v4999, %v5019
      %v5036 = vmul.f32 %v5000, %v5019
      %v5037 = vmul.f32 %v5001, %v5019
      %v5038 = vmul.f32 %v5002, %v5019
      %v5039 = vmul.f32 %v5003, %v5019
      %v5040 = vmul.f32 %v5004, %v5019
      %v5041 = vmul.f32 %v5005, %v5019
      %v5042 = vmul.f32 %v5006, %v5019
      %v5043 = vmul.f32 %v5007, %v5019
      %v5044 = vmul.f32 %v5008, %v5019
      %v5045 = vmul.f32 %v5009, %v5019
      %v5046 = vmul.f32 %v5010, %v5019
      %v5047 = vmul.f32 %v5011, %v5019
      %v5048 = vmul.f32 %v5012, %v5019
      %v5049 = vmul.f32 %v5013, %v5019
      %v5050 = vmul.f32 %v5014, %v5019
      %v5051 = vmul.f32 %v5015, %v5019
      %v5052 = vadd.f32 %v4950, %v5020
      %v5053 = vadd.f32 %v4951, %v5021
      %v5054 = vadd.f32 %v4952, %v5022
      %v5055 = vadd.f32 %v4953, %v5023
      %v5056 = vadd.f32 %v4954, %v5024
      %v5057 = vadd.f32 %v4955, %v5025
      %v5058 = vadd.f32 %v4956, %v5026
      %v5059 = vadd.f32 %v4957, %v5027
      %v5060 = vadd.f32 %v4958, %v5028
      %v5061 = vadd.f32 %v4959, %v5029
      %v5062 = vadd.f32 %v4960, %v5030
      %v5063 = vadd.f32 %v4961, %v5031
      %v5064 = vadd.f32 %v4962, %v5032
      %v5065 = vadd.f32 %v4963, %v5033
      %v5066 = vadd.f32 %v4964, %v5034
      %v5067 = vadd.f32 %v4965, %v5035
      %v5068 = vadd.f32 %v4966, %v5036
      %v5069 = vadd.f32 %v4967, %v5037
      %v5070 = vadd.f32 %v4968, %v5038
      %v5071 = vadd.f32 %v4969, %v5039
      %v5072 = vadd.f32 %v4970, %v5040
      %v5073 = vadd.f32 %v4971, %v5041
      %v5074 = vadd.f32 %v4972, %v5042
      %v5075 = vadd.f32 %v4973, %v5043
      %v5076 = vadd.f32 %v4974, %v5044
      %v5077 = vadd.f32 %v4975, %v5045
      %v5078 = vadd.f32 %v4976, %v5046
      %v5079 = vadd.f32 %v4977, %v5047
      %v5080 = vadd.f32 %v4978, %v5048
      %v5081 = vadd.f32 %v4979, %v5049
      %v5082 = vadd.f32 %v4980, %v5050
      %v5083 = vadd.f32 %v4981, %v5051
      %v5084 = vld [vmem:[%s4 + $0x24] sm:$0x1]
      %v5085 = vld [vmem:[%s4983 + $0x6] sm:$0xff]
      %v5086 = vld [vmem:[%s4983 + $0xe] sm:$0xff]
      %v5087 = vld [vmem:[%s4983 + $0x26] sm:$0xff]
      %v5088 = vld [vmem:[%s4983 + $0x2e] sm:$0xff]
      %v5089 = vld [vmem:[%s4983 + $0x46] sm:$0xff]
      %v5090 = vld [vmem:[%s4983 + $0x4e] sm:$0xff]
      %v5091 = vld [vmem:[%s4983 + $0x66] sm:$0xff]
      %v5092 = vld [vmem:[%s4983 + $0x6e] sm:$0xff]
      %v5093 = vld [vmem:[%s4983 + $0x86] sm:$0xff]
      %v5094 = vld [vmem:[%s4983 + $0x8e] sm:$0xff]
      %v5095 = vld [vmem:[%s4983 + $0xa6] sm:$0xff]
      %v5096 = vld [vmem:[%s4983 + $0xae] sm:$0xff]
      %v5097 = vld [vmem:[%s4983 + $0xc6] sm:$0xff]
      %v5098 = vld [vmem:[%s4983 + $0xce] sm:$0xff]
      %v5099 = vld [vmem:[%s4983 + $0xe6] sm:$0xff]
      %v5100 = vld [vmem:[%s4983 + $0xee] sm:$0xff]
      %v5101 = vld [vmem:[%s4983 + $0x106] sm:$0xff]
      %v5102 = vld [vmem:[%s4983 + $0x10e] sm:$0xff]
      %v5103 = vld [vmem:[%s4983 + $0x126] sm:$0xff]
      %v5104 = vld [vmem:[%s4983 + $0x12e] sm:$0xff]
      %v5105 = vld [vmem:[%s4983 + $0x146] sm:$0xff]
      %v5106 = vld [vmem:[%s4983 + $0x14e] sm:$0xff]
      %v5107 = vld [vmem:[%s4983 + $0x166] sm:$0xff]
      %v5108 = vld [vmem:[%s4983 + $0x16e] sm:$0xff]
      %v5109 = vld [vmem:[%s4983 + $0x186] sm:$0xff]
      %v5110 = vld [vmem:[%s4983 + $0x18e] sm:$0xff]
      %v5111 = vld [vmem:[%s4983 + $0x1a6] sm:$0xff]
      %v5112 = vld [vmem:[%s4983 + $0x1ae] sm:$0xff]
      %v5113 = vld [vmem:[%s4983 + $0x1c6] sm:$0xff]
      %v5114 = vld [vmem:[%s4983 + $0x1ce] sm:$0xff]
      %v5115 = vld [vmem:[%s4983 + $0x1e6] sm:$0xff]
      %v5116 = vld [vmem:[%s4983 + $0x1ee] sm:$0xff]
      %v5117 = vlaneseq
      %v5118 = vshrl.u32 %v5117, 7
      %v5119 = vsub.s32 0, %v5118
      %v5120 = vrot.slane %v5084, %v5119
      %v5121 = vmul.f32 %v5085, %v5120
      %v5122 = vmul.f32 %v5086, %v5120
      %v5123 = vmul.f32 %v5087, %v5120
      %v5124 = vmul.f32 %v5088, %v5120
      %v5125 = vmul.f32 %v5089, %v5120
      %v5126 = vmul.f32 %v5090, %v5120
      %v5127 = vmul.f32 %v5091, %v5120
      %v5128 = vmul.f32 %v5092, %v5120
      %v5129 = vmul.f32 %v5093, %v5120
      %v5130 = vmul.f32 %v5094, %v5120
      %v5131 = vmul.f32 %v5095, %v5120
      %v5132 = vmul.f32 %v5096, %v5120
      %v5133 = vmul.f32 %v5097, %v5120
      %v5134 = vmul.f32 %v5098, %v5120
      %v5135 = vmul.f32 %v5099, %v5120
      %v5136 = vmul.f32 %v5100, %v5120
      %v5137 = vmul.f32 %v5101, %v5120
      %v5138 = vmul.f32 %v5102, %v5120
      %v5139 = vmul.f32 %v5103, %v5120
      %v5140 = vmul.f32 %v5104, %v5120
      %v5141 = vmul.f32 %v5105, %v5120
      %v5142 = vmul.f32 %v5106, %v5120
      %v5143 = vmul.f32 %v5107, %v5120
      %v5144 = vmul.f32 %v5108, %v5120
      %v5145 = vmul.f32 %v5109, %v5120
      %v5146 = vmul.f32 %v5110, %v5120
      %v5147 = vmul.f32 %v5111, %v5120
      %v5148 = vmul.f32 %v5112, %v5120
      %v5149 = vmul.f32 %v5113, %v5120
      %v5150 = vmul.f32 %v5114, %v5120
      %v5151 = vmul.f32 %v5115, %v5120
      %v5152 = vmul.f32 %v5116, %v5120
      %v5153 = vadd.f32 %v5052, %v5121
      %v5154 = vadd.f32 %v5053, %v5122
      %v5155 = vadd.f32 %v5054, %v5123
      %v5156 = vadd.f32 %v5055, %v5124
      %v5157 = vadd.f32 %v5056, %v5125
      %v5158 = vadd.f32 %v5057, %v5126
      %v5159 = vadd.f32 %v5058, %v5127
      %v5160 = vadd.f32 %v5059, %v5128
      %v5161 = vadd.f32 %v5060, %v5129
      %v5162 = vadd.f32 %v5061, %v5130
      %v5163 = vadd.f32 %v5062, %v5131
      %v5164 = vadd.f32 %v5063, %v5132
      %v5165 = vadd.f32 %v5064, %v5133
      %v5166 = vadd.f32 %v5065, %v5134
      %v5167 = vadd.f32 %v5066, %v5135
      %v5168 = vadd.f32 %v5067, %v5136
      %v5169 = vadd.f32 %v5068, %v5137
      %v5170 = vadd.f32 %v5069, %v5138
      %v5171 = vadd.f32 %v5070, %v5139
      %v5172 = vadd.f32 %v5071, %v5140
      %v5173 = vadd.f32 %v5072, %v5141
      %v5174 = vadd.f32 %v5073, %v5142
      %v5175 = vadd.f32 %v5074, %v5143
      %v5176 = vadd.f32 %v5075, %v5144
      %v5177 = vadd.f32 %v5076, %v5145
      %v5178 = vadd.f32 %v5077, %v5146
      %v5179 = vadd.f32 %v5078, %v5147
      %v5180 = vadd.f32 %v5079, %v5148
      %v5181 = vadd.f32 %v5080, %v5149
      %v5182 = vadd.f32 %v5081, %v5150
      %v5183 = vadd.f32 %v5082, %v5151
      %v5184 = vadd.f32 %v5083, %v5152
      %v5185 = vld [vmem:[%s4 + $0x25] sm:$0x1]
      %v5186 = vld [vmem:[%s4983 + $0x7] sm:$0xff]
      %v5187 = vld [vmem:[%s4983 + $0xf] sm:$0xff]
      %v5188 = vld [vmem:[%s4983 + $0x27] sm:$0xff]
      %v5189 = vld [vmem:[%s4983 + $0x2f] sm:$0xff]
      %v5190 = vld [vmem:[%s4983 + $0x47] sm:$0xff]
      %v5191 = vld [vmem:[%s4983 + $0x4f] sm:$0xff]
      %v5192 = vld [vmem:[%s4983 + $0x67] sm:$0xff]
      %v5193 = vld [vmem:[%s4983 + $0x6f] sm:$0xff]
      %v5194 = vld [vmem:[%s4983 + $0x87] sm:$0xff]
      %v5195 = vld [vmem:[%s4983 + $0x8f] sm:$0xff]
      %v5196 = vld [vmem:[%s4983 + $0xa7] sm:$0xff]
      %v5197 = vld [vmem:[%s4983 + $0xaf] sm:$0xff]
      %v5198 = vld [vmem:[%s4983 + $0xc7] sm:$0xff]
      %v5199 = vld [vmem:[%s4983 + $0xcf] sm:$0xff]
      %v5200 = vld [vmem:[%s4983 + $0xe7] sm:$0xff]
      %v5201 = vld [vmem:[%s4983 + $0xef] sm:$0xff]
      %v5202 = vld [vmem:[%s4983 + $0x107] sm:$0xff]
      %v5203 = vld [vmem:[%s4983 + $0x10f] sm:$0xff]
      %v5204 = vld [vmem:[%s4983 + $0x127] sm:$0xff]
      %v5205 = vld [vmem:[%s4983 + $0x12f] sm:$0xff]
      %v5206 = vld [vmem:[%s4983 + $0x147] sm:$0xff]
      %v5207 = vld [vmem:[%s4983 + $0x14f] sm:$0xff]
      %v5208 = vld [vmem:[%s4983 + $0x167] sm:$0xff]
      %v5209 = vld [vmem:[%s4983 + $0x16f] sm:$0xff]
      %v5210 = vld [vmem:[%s4983 + $0x187] sm:$0xff]
      %v5211 = vld [vmem:[%s4983 + $0x18f] sm:$0xff]
      %v5212 = vld [vmem:[%s4983 + $0x1a7] sm:$0xff]
      %v5213 = vld [vmem:[%s4983 + $0x1af] sm:$0xff]
      %v5214 = vld [vmem:[%s4983 + $0x1c7] sm:$0xff]
      %v5215 = vld [vmem:[%s4983 + $0x1cf] sm:$0xff]
      %v5216 = vld [vmem:[%s4983 + $0x1e7] sm:$0xff]
      %v5217 = vld [vmem:[%s4983 + $0x1ef] sm:$0xff]
      %v5218 = vlaneseq
      %v5219 = vshrl.u32 %v5218, 7
      %v5220 = vsub.s32 0, %v5219
      %v5221 = vrot.slane %v5185, %v5220
      %v5222 = vmul.f32 %v5186, %v5221
      %v5223 = vmul.f32 %v5187, %v5221
      %v5224 = vmul.f32 %v5188, %v5221
      %v5225 = vmul.f32 %v5189, %v5221
      %v5226 = vmul.f32 %v5190, %v5221
      %v5227 = vmul.f32 %v5191, %v5221
      %v5228 = vmul.f32 %v5192, %v5221
      %v5229 = vmul.f32 %v5193, %v5221
      %v5230 = vmul.f32 %v5194, %v5221
      %v5231 = vmul.f32 %v5195, %v5221
      %v5232 = vmul.f32 %v5196, %v5221
      %v5233 = vmul.f32 %v5197, %v5221
      %v5234 = vmul.f32 %v5198, %v5221
      %v5235 = vmul.f32 %v5199, %v5221
      %v5236 = vmul.f32 %v5200, %v5221
      %v5237 = vmul.f32 %v5201, %v5221
      %v5238 = vmul.f32 %v5202, %v5221
      %v5239 = vmul.f32 %v5203, %v5221
      %v5240 = vmul.f32 %v5204, %v5221
      %v5241 = vmul.f32 %v5205, %v5221
      %v5242 = vmul.f32 %v5206, %v5221
      %v5243 = vmul.f32 %v5207, %v5221
      %v5244 = vmul.f32 %v5208, %v5221
      %v5245 = vmul.f32 %v5209, %v5221
      %v5246 = vmul.f32 %v5210, %v5221
      %v5247 = vmul.f32 %v5211, %v5221
      %v5248 = vmul.f32 %v5212, %v5221
      %v5249 = vmul.f32 %v5213, %v5221
      %v5250 = vmul.f32 %v5214, %v5221
      %v5251 = vmul.f32 %v5215, %v5221
      %v5252 = vmul.f32 %v5216, %v5221
      %v5253 = vmul.f32 %v5217, %v5221
      %v5254 = vadd.f32 %v5153, %v5222
      %v5255 = vadd.f32 %v5154, %v5223
      %v5256 = vadd.f32 %v5155, %v5224
      %v5257 = vadd.f32 %v5156, %v5225
      %v5258 = vadd.f32 %v5157, %v5226
      %v5259 = vadd.f32 %v5158, %v5227
      %v5260 = vadd.f32 %v5159, %v5228
      %v5261 = vadd.f32 %v5160, %v5229
      %v5262 = vadd.f32 %v5161, %v5230
      %v5263 = vadd.f32 %v5162, %v5231
      %v5264 = vadd.f32 %v5163, %v5232
      %v5265 = vadd.f32 %v5164, %v5233
      %v5266 = vadd.f32 %v5165, %v5234
      %v5267 = vadd.f32 %v5166, %v5235
      %v5268 = vadd.f32 %v5167, %v5236
      %v5269 = vadd.f32 %v5168, %v5237
      %v5270 = vadd.f32 %v5169, %v5238
      %v5271 = vadd.f32 %v5170, %v5239
      %v5272 = vadd.f32 %v5171, %v5240
      %v5273 = vadd.f32 %v5172, %v5241
      %v5274 = vadd.f32 %v5173, %v5242
      %v5275 = vadd.f32 %v5174, %v5243
      %v5276 = vadd.f32 %v5175, %v5244
      %v5277 = vadd.f32 %v5176, %v5245
      %v5278 = vadd.f32 %v5177, %v5246
      %v5279 = vadd.f32 %v5178, %v5247
      %v5280 = vadd.f32 %v5179, %v5248
      %v5281 = vadd.f32 %v5180, %v5249
      %v5282 = vadd.f32 %v5181, %v5250
      %v5283 = vadd.f32 %v5182, %v5251
      %v5284 = vadd.f32 %v5183, %v5252
      %v5285 = vadd.f32 %v5184, %v5253
      %v5286 = vld [vmem:[%s4 + $0x26] sm:$0x1]
      %v5287 = vld [vmem:[%s4983 + $0x8] sm:$0xff]
      %v5288 = vld [vmem:[%s4983 + $0x10] sm:$0xff]
      %v5289 = vld [vmem:[%s4983 + $0x28] sm:$0xff]
      %v5290 = vld [vmem:[%s4983 + $0x30] sm:$0xff]
      %v5291 = vld [vmem:[%s4983 + $0x48] sm:$0xff]
      %v5292 = vld [vmem:[%s4983 + $0x50] sm:$0xff]
      %v5293 = vld [vmem:[%s4983 + $0x68] sm:$0xff]
      %v5294 = vld [vmem:[%s4983 + $0x70] sm:$0xff]
      %v5295 = vld [vmem:[%s4983 + $0x88] sm:$0xff]
      %v5296 = vld [vmem:[%s4983 + $0x90] sm:$0xff]
      %v5297 = vld [vmem:[%s4983 + $0xa8] sm:$0xff]
      %v5298 = vld [vmem:[%s4983 + $0xb0] sm:$0xff]
      %v5299 = vld [vmem:[%s4983 + $0xc8] sm:$0xff]
      %v5300 = vld [vmem:[%s4983 + $0xd0] sm:$0xff]
      %v5301 = vld [vmem:[%s4983 + $0xe8] sm:$0xff]
      %v5302 = vld [vmem:[%s4983 + $0xf0] sm:$0xff]
      %v5303 = vld [vmem:[%s4983 + $0x108] sm:$0xff]
      %v5304 = vld [vmem:[%s4983 + $0x110] sm:$0xff]
      %v5305 = vld [vmem:[%s4983 + $0x128] sm:$0xff]
      %v5306 = vld [vmem:[%s4983 + $0x130] sm:$0xff]
      %v5307 = vld [vmem:[%s4983 + $0x148] sm:$0xff]
      %v5308 = vld [vmem:[%s4983 + $0x150] sm:$0xff]
      %v5309 = vld [vmem:[%s4983 + $0x168] sm:$0xff]
      %v5310 = vld [vmem:[%s4983 + $0x170] sm:$0xff]
      %v5311 = vld [vmem:[%s4983 + $0x188] sm:$0xff]
      %v5312 = vld [vmem:[%s4983 + $0x190] sm:$0xff]
      %v5313 = vld [vmem:[%s4983 + $0x1a8] sm:$0xff]
      %v5314 = vld [vmem:[%s4983 + $0x1b0] sm:$0xff]
      %v5315 = vld [vmem:[%s4983 + $0x1c8] sm:$0xff]
      %v5316 = vld [vmem:[%s4983 + $0x1d0] sm:$0xff]
      %v5317 = vld [vmem:[%s4983 + $0x1e8] sm:$0xff]
      %v5318 = vld [vmem:[%s4983 + $0x1f0] sm:$0xff]
      %v5319 = vlaneseq
      %v5320 = vshrl.u32 %v5319, 7
      %v5321 = vsub.s32 0, %v5320
      %v5322 = vrot.slane %v5286, %v5321
      %v5323 = vmul.f32 %v5287, %v5322
      %v5324 = vmul.f32 %v5288, %v5322
      %v5325 = vmul.f32 %v5289, %v5322
      %v5326 = vmul.f32 %v5290, %v5322
      %v5327 = vmul.f32 %v5291, %v5322
      %v5328 = vmul.f32 %v5292, %v5322
      %v5329 = vmul.f32 %v5293, %v5322
      %v5330 = vmul.f32 %v5294, %v5322
      %v5331 = vmul.f32 %v5295, %v5322
      %v5332 = vmul.f32 %v5296, %v5322
      %v5333 = vmul.f32 %v5297, %v5322
      %v5334 = vmul.f32 %v5298, %v5322
      %v5335 = vmul.f32 %v5299, %v5322
      %v5336 = vmul.f32 %v5300, %v5322
      %v5337 = vmul.f32 %v5301, %v5322
      %v5338 = vmul.f32 %v5302, %v5322
      %v5339 = vmul.f32 %v5303, %v5322
      %v5340 = vmul.f32 %v5304, %v5322
      %v5341 = vmul.f32 %v5305, %v5322
      %v5342 = vmul.f32 %v5306, %v5322
      %v5343 = vmul.f32 %v5307, %v5322
      %v5344 = vmul.f32 %v5308, %v5322
      %v5345 = vmul.f32 %v5309, %v5322
      %v5346 = vmul.f32 %v5310, %v5322
      %v5347 = vmul.f32 %v5311, %v5322
      %v5348 = vmul.f32 %v5312, %v5322
      %v5349 = vmul.f32 %v5313, %v5322
      %v5350 = vmul.f32 %v5314, %v5322
      %v5351 = vmul.f32 %v5315, %v5322
      %v5352 = vmul.f32 %v5316, %v5322
      %v5353 = vmul.f32 %v5317, %v5322
      %v5354 = vmul.f32 %v5318, %v5322
      %v5355 = vadd.f32 %v5254, %v5323
      %v5356 = vadd.f32 %v5255, %v5324
      %v5357 = vadd.f32 %v5256, %v5325
      %v5358 = vadd.f32 %v5257, %v5326
      %v5359 = vadd.f32 %v5258, %v5327
      %v5360 = vadd.f32 %v5259, %v5328
      %v5361 = vadd.f32 %v5260, %v5329
      %v5362 = vadd.f32 %v5261, %v5330
      %v5363 = vadd.f32 %v5262, %v5331
      %v5364 = vadd.f32 %v5263, %v5332
      %v5365 = vadd.f32 %v5264, %v5333
      %v5366 = vadd.f32 %v5265, %v5334
      %v5367 = vadd.f32 %v5266, %v5335
      %v5368 = vadd.f32 %v5267, %v5336
      %v5369 = vadd.f32 %v5268, %v5337
      %v5370 = vadd.f32 %v5269, %v5338
      %v5371 = vadd.f32 %v5270, %v5339
      %v5372 = vadd.f32 %v5271, %v5340
      %v5373 = vadd.f32 %v5272, %v5341
      %v5374 = vadd.f32 %v5273, %v5342
      %v5375 = vadd.f32 %v5274, %v5343
      %v5376 = vadd.f32 %v5275, %v5344
      %v5377 = vadd.f32 %v5276, %v5345
      %v5378 = vadd.f32 %v5277, %v5346
      %v5379 = vadd.f32 %v5278, %v5347
      %v5380 = vadd.f32 %v5279, %v5348
      %v5381 = vadd.f32 %v5280, %v5349
      %v5382 = vadd.f32 %v5281, %v5350
      %v5383 = vadd.f32 %v5282, %v5351
      %v5384 = vadd.f32 %v5283, %v5352
      %v5385 = vadd.f32 %v5284, %v5353
      %v5386 = vadd.f32 %v5285, %v5354
      %v5387 = vld [vmem:[%s4 + $0x27] sm:$0x1]
      %v5388 = vld [vmem:[%s4983 + $0x9] sm:$0xff]
      %v5389 = vld [vmem:[%s4983 + $0x11] sm:$0xff]
      %v5390 = vld [vmem:[%s4983 + $0x29] sm:$0xff]
      %v5391 = vld [vmem:[%s4983 + $0x31] sm:$0xff]
      %v5392 = vld [vmem:[%s4983 + $0x49] sm:$0xff]
      %v5393 = vld [vmem:[%s4983 + $0x51] sm:$0xff]
      %v5394 = vld [vmem:[%s4983 + $0x69] sm:$0xff]
      %v5395 = vld [vmem:[%s4983 + $0x71] sm:$0xff]
      %v5396 = vld [vmem:[%s4983 + $0x89] sm:$0xff]
      %v5397 = vld [vmem:[%s4983 + $0x91] sm:$0xff]
      %v5398 = vld [vmem:[%s4983 + $0xa9] sm:$0xff]
      %v5399 = vld [vmem:[%s4983 + $0xb1] sm:$0xff]
      %v5400 = vld [vmem:[%s4983 + $0xc9] sm:$0xff]
      %v5401 = vld [vmem:[%s4983 + $0xd1] sm:$0xff]
      %v5402 = vld [vmem:[%s4983 + $0xe9] sm:$0xff]
      %v5403 = vld [vmem:[%s4983 + $0xf1] sm:$0xff]
      %v5404 = vld [vmem:[%s4983 + $0x109] sm:$0xff]
      %v5405 = vld [vmem:[%s4983 + $0x111] sm:$0xff]
      %v5406 = vld [vmem:[%s4983 + $0x129] sm:$0xff]
      %v5407 = vld [vmem:[%s4983 + $0x131] sm:$0xff]
      %v5408 = vld [vmem:[%s4983 + $0x149] sm:$0xff]
      %v5409 = vld [vmem:[%s4983 + $0x151] sm:$0xff]
      %v5410 = vld [vmem:[%s4983 + $0x169] sm:$0xff]
      %v5411 = vld [vmem:[%s4983 + $0x171] sm:$0xff]
      %v5412 = vld [vmem:[%s4983 + $0x189] sm:$0xff]
      %v5413 = vld [vmem:[%s4983 + $0x191] sm:$0xff]
      %v5414 = vld [vmem:[%s4983 + $0x1a9] sm:$0xff]
      %v5415 = vld [vmem:[%s4983 + $0x1b1] sm:$0xff]
      %v5416 = vld [vmem:[%s4983 + $0x1c9] sm:$0xff]
      %v5417 = vld [vmem:[%s4983 + $0x1d1] sm:$0xff]
      %v5418 = vld [vmem:[%s4983 + $0x1e9] sm:$0xff]
      %v5419 = vld [vmem:[%s4983 + $0x1f1] sm:$0xff]
      %v5420 = vlaneseq
      %v5421 = vshrl.u32 %v5420, 7
      %v5422 = vsub.s32 0, %v5421
      %v5423 = vrot.slane %v5387, %v5422
      %v5424 = vmul.f32 %v5388, %v5423
      %v5425 = vmul.f32 %v5389, %v5423
      %v5426 = vmul.f32 %v5390, %v5423
      %v5427 = vmul.f32 %v5391, %v5423
      %v5428 = vmul.f32 %v5392, %v5423
      %v5429 = vmul.f32 %v5393, %v5423
      %v5430 = vmul.f32 %v5394, %v5423
      %v5431 = vmul.f32 %v5395, %v5423
      %v5432 = vmul.f32 %v5396, %v5423
      %v5433 = vmul.f32 %v5397, %v5423
      %v5434 = vmul.f32 %v5398, %v5423
      %v5435 = vmul.f32 %v5399, %v5423
      %v5436 = vmul.f32 %v5400, %v5423
      %v5437 = vmul.f32 %v5401, %v5423
      %v5438 = vmul.f32 %v5402, %v5423
      %v5439 = vmul.f32 %v5403, %v5423
      %v5440 = vmul.f32 %v5404, %v5423
      %v5441 = vmul.f32 %v5405, %v5423
      %v5442 = vmul.f32 %v5406, %v5423
      %v5443 = vmul.f32 %v5407, %v5423
      %v5444 = vmul.f32 %v5408, %v5423
      %v5445 = vmul.f32 %v5409, %v5423
      %v5446 = vmul.f32 %v5410, %v5423
      %v5447 = vmul.f32 %v5411, %v5423
      %v5448 = vmul.f32 %v5412, %v5423
      %v5449 = vmul.f32 %v5413, %v5423
      %v5450 = vmul.f32 %v5414, %v5423
      %v5451 = vmul.f32 %v5415, %v5423
      %v5452 = vmul.f32 %v5416, %v5423
      %v5453 = vmul.f32 %v5417, %v5423
      %v5454 = vmul.f32 %v5418, %v5423
      %v5455 = vmul.f32 %v5419, %v5423
      %v5456 = vadd.f32 %v5355, %v5424
      %v5457 = vadd.f32 %v5356, %v5425
      %v5458 = vadd.f32 %v5357, %v5426
      %v5459 = vadd.f32 %v5358, %v5427
      %v5460 = vadd.f32 %v5359, %v5428
      %v5461 = vadd.f32 %v5360, %v5429
      %v5462 = vadd.f32 %v5361, %v5430
      %v5463 = vadd.f32 %v5362, %v5431
      %v5464 = vadd.f32 %v5363, %v5432
      %v5465 = vadd.f32 %v5364, %v5433
      %v5466 = vadd.f32 %v5365, %v5434
      %v5467 = vadd.f32 %v5366, %v5435
      %v5468 = vadd.f32 %v5367, %v5436
      %v5469 = vadd.f32 %v5368, %v5437
      %v5470 = vadd.f32 %v5369, %v5438
      %v5471 = vadd.f32 %v5370, %v5439
      %v5472 = vadd.f32 %v5371, %v5440
      %v5473 = vadd.f32 %v5372, %v5441
      %v5474 = vadd.f32 %v5373, %v5442
      %v5475 = vadd.f32 %v5374, %v5443
      %v5476 = vadd.f32 %v5375, %v5444
      %v5477 = vadd.f32 %v5376, %v5445
      %v5478 = vadd.f32 %v5377, %v5446
      %v5479 = vadd.f32 %v5378, %v5447
      %v5480 = vadd.f32 %v5379, %v5448
      %v5481 = vadd.f32 %v5380, %v5449
      %v5482 = vadd.f32 %v5381, %v5450
      %v5483 = vadd.f32 %v5382, %v5451
      %v5484 = vadd.f32 %v5383, %v5452
      %v5485 = vadd.f32 %v5384, %v5453
      %v5486 = vadd.f32 %v5385, %v5454
      %v5487 = vadd.f32 %v5386, %v5455
      %v5488 = vld [vmem:[%s4 + $0x28] sm:$0x1]
      %v5489 = vld [vmem:[%s4983 + $0xa] sm:$0xff]
      %v5490 = vld [vmem:[%s4983 + $0x12] sm:$0xff]
      %v5491 = vld [vmem:[%s4983 + $0x2a] sm:$0xff]
      %v5492 = vld [vmem:[%s4983 + $0x32] sm:$0xff]
      %v5493 = vld [vmem:[%s4983 + $0x4a] sm:$0xff]
      %v5494 = vld [vmem:[%s4983 + $0x52] sm:$0xff]
      %v5495 = vld [vmem:[%s4983 + $0x6a] sm:$0xff]
      %v5496 = vld [vmem:[%s4983 + $0x72] sm:$0xff]
      %v5497 = vld [vmem:[%s4983 + $0x8a] sm:$0xff]
      %v5498 = vld [vmem:[%s4983 + $0x92] sm:$0xff]
      %v5499 = vld [vmem:[%s4983 + $0xaa] sm:$0xff]
      %v5500 = vld [vmem:[%s4983 + $0xb2] sm:$0xff]
      %v5501 = vld [vmem:[%s4983 + $0xca] sm:$0xff]
      %v5502 = vld [vmem:[%s4983 + $0xd2] sm:$0xff]
      %v5503 = vld [vmem:[%s4983 + $0xea] sm:$0xff]
      %v5504 = vld [vmem:[%s4983 + $0xf2] sm:$0xff]
      %v5505 = vld [vmem:[%s4983 + $0x10a] sm:$0xff]
      %v5506 = vld [vmem:[%s4983 + $0x112] sm:$0xff]
      %v5507 = vld [vmem:[%s4983 + $0x12a] sm:$0xff]
      %v5508 = vld [vmem:[%s4983 + $0x132] sm:$0xff]
      %v5509 = vld [vmem:[%s4983 + $0x14a] sm:$0xff]
      %v5510 = vld [vmem:[%s4983 + $0x152] sm:$0xff]
      %v5511 = vld [vmem:[%s4983 + $0x16a] sm:$0xff]
      %v5512 = vld [vmem:[%s4983 + $0x172] sm:$0xff]
      %v5513 = vld [vmem:[%s4983 + $0x18a] sm:$0xff]
      %v5514 = vld [vmem:[%s4983 + $0x192] sm:$0xff]
      %v5515 = vld [vmem:[%s4983 + $0x1aa] sm:$0xff]
      %v5516 = vld [vmem:[%s4983 + $0x1b2] sm:$0xff]
      %v5517 = vld [vmem:[%s4983 + $0x1ca] sm:$0xff]
      %v5518 = vld [vmem:[%s4983 + $0x1d2] sm:$0xff]
      %v5519 = vld [vmem:[%s4983 + $0x1ea] sm:$0xff]
      %v5520 = vld [vmem:[%s4983 + $0x1f2] sm:$0xff]
      %v5521 = vlaneseq
      %v5522 = vshrl.u32 %v5521, 7
      %v5523 = vsub.s32 0, %v5522
      %v5524 = vrot.slane %v5488, %v5523
      %v5525 = vmul.f32 %v5489, %v5524
      %v5526 = vmul.f32 %v5490, %v5524
      %v5527 = vmul.f32 %v5491, %v5524
      %v5528 = vmul.f32 %v5492, %v5524
      %v5529 = vmul.f32 %v5493, %v5524
      %v5530 = vmul.f32 %v5494, %v5524
      %v5531 = vmul.f32 %v5495, %v5524
      %v5532 = vmul.f32 %v5496, %v5524
      %v5533 = vmul.f32 %v5497, %v5524
      %v5534 = vmul.f32 %v5498, %v5524
      %v5535 = vmul.f32 %v5499, %v5524
      %v5536 = vmul.f32 %v5500, %v5524
      %v5537 = vmul.f32 %v5501, %v5524
      %v5538 = vmul.f32 %v5502, %v5524
      %v5539 = vmul.f32 %v5503, %v5524
      %v5540 = vmul.f32 %v5504, %v5524
      %v5541 = vmul.f32 %v5505, %v5524
      %v5542 = vmul.f32 %v5506, %v5524
      %v5543 = vmul.f32 %v5507, %v5524
      %v5544 = vmul.f32 %v5508, %v5524
      %v5545 = vmul.f32 %v5509, %v5524
      %v5546 = vmul.f32 %v5510, %v5524
      %v5547 = vmul.f32 %v5511, %v5524
      %v5548 = vmul.f32 %v5512, %v5524
      %v5549 = vmul.f32 %v5513, %v5524
      %v5550 = vmul.f32 %v5514, %v5524
      %v5551 = vmul.f32 %v5515, %v5524
      %v5552 = vmul.f32 %v5516, %v5524
      %v5553 = vmul.f32 %v5517, %v5524
      %v5554 = vmul.f32 %v5518, %v5524
      %v5555 = vmul.f32 %v5519, %v5524
      %v5556 = vmul.f32 %v5520, %v5524
      %v5557 = vadd.f32 %v5456, %v5525
      %v5558 = vadd.f32 %v5457, %v5526
      %v5559 = vadd.f32 %v5458, %v5527
      %v5560 = vadd.f32 %v5459, %v5528
      %v5561 = vadd.f32 %v5460, %v5529
      %v5562 = vadd.f32 %v5461, %v5530
      %v5563 = vadd.f32 %v5462, %v5531
      %v5564 = vadd.f32 %v5463, %v5532
      %v5565 = vadd.f32 %v5464, %v5533
      %v5566 = vadd.f32 %v5465, %v5534
      %v5567 = vadd.f32 %v5466, %v5535
      %v5568 = vadd.f32 %v5467, %v5536
      %v5569 = vadd.f32 %v5468, %v5537
      %v5570 = vadd.f32 %v5469, %v5538
      %v5571 = vadd.f32 %v5470, %v5539
      %v5572 = vadd.f32 %v5471, %v5540
      %v5573 = vadd.f32 %v5472, %v5541
      %v5574 = vadd.f32 %v5473, %v5542
      %v5575 = vadd.f32 %v5474, %v5543
      %v5576 = vadd.f32 %v5475, %v5544
      %v5577 = vadd.f32 %v5476, %v5545
      %v5578 = vadd.f32 %v5477, %v5546
      %v5579 = vadd.f32 %v5478, %v5547
      %v5580 = vadd.f32 %v5479, %v5548
      %v5581 = vadd.f32 %v5480, %v5549
      %v5582 = vadd.f32 %v5481, %v5550
      %v5583 = vadd.f32 %v5482, %v5551
      %v5584 = vadd.f32 %v5483, %v5552
      %v5585 = vadd.f32 %v5484, %v5553
      %v5586 = vadd.f32 %v5485, %v5554
      %v5587 = vadd.f32 %v5486, %v5555
      %v5588 = vadd.f32 %v5487, %v5556
      %v5589 = vld [vmem:[%s4 + $0x29] sm:$0x1]
      %v5590 = vld [vmem:[%s4983 + $0xb] sm:$0xff]
      %v5591 = vld [vmem:[%s4983 + $0x13] sm:$0xff]
      %v5592 = vld [vmem:[%s4983 + $0x2b] sm:$0xff]
      %v5593 = vld [vmem:[%s4983 + $0x33] sm:$0xff]
      %v5594 = vld [vmem:[%s4983 + $0x4b] sm:$0xff]
      %v5595 = vld [vmem:[%s4983 + $0x53] sm:$0xff]
      %v5596 = vld [vmem:[%s4983 + $0x6b] sm:$0xff]
      %v5597 = vld [vmem:[%s4983 + $0x73] sm:$0xff]
      %v5598 = vld [vmem:[%s4983 + $0x8b] sm:$0xff]
      %v5599 = vld [vmem:[%s4983 + $0x93] sm:$0xff]
      %v5600 = vld [vmem:[%s4983 + $0xab] sm:$0xff]
      %v5601 = vld [vmem:[%s4983 + $0xb3] sm:$0xff]
      %v5602 = vld [vmem:[%s4983 + $0xcb] sm:$0xff]
      %v5603 = vld [vmem:[%s4983 + $0xd3] sm:$0xff]
      %v5604 = vld [vmem:[%s4983 + $0xeb] sm:$0xff]
      %v5605 = vld [vmem:[%s4983 + $0xf3] sm:$0xff]
      %v5606 = vld [vmem:[%s4983 + $0x10b] sm:$0xff]
      %v5607 = vld [vmem:[%s4983 + $0x113] sm:$0xff]
      %v5608 = vld [vmem:[%s4983 + $0x12b] sm:$0xff]
      %v5609 = vld [vmem:[%s4983 + $0x133] sm:$0xff]
      %v5610 = vld [vmem:[%s4983 + $0x14b] sm:$0xff]
      %v5611 = vld [vmem:[%s4983 + $0x153] sm:$0xff]
      %v5612 = vld [vmem:[%s4983 + $0x16b] sm:$0xff]
      %v5613 = vld [vmem:[%s4983 + $0x173] sm:$0xff]
      %v5614 = vld [vmem:[%s4983 + $0x18b] sm:$0xff]
      %v5615 = vld [vmem:[%s4983 + $0x193] sm:$0xff]
      %v5616 = vld [vmem:[%s4983 + $0x1ab] sm:$0xff]
      %v5617 = vld [vmem:[%s4983 + $0x1b3] sm:$0xff]
      %v5618 = vld [vmem:[%s4983 + $0x1cb] sm:$0xff]
      %v5619 = vld [vmem:[%s4983 + $0x1d3] sm:$0xff]
      %v5620 = vld [vmem:[%s4983 + $0x1eb] sm:$0xff]
      %v5621 = vld [vmem:[%s4983 + $0x1f3] sm:$0xff]
      %v5622 = vlaneseq
      %v5623 = vshrl.u32 %v5622, 7
      %v5624 = vsub.s32 0, %v5623
      %v5625 = vrot.slane %v5589, %v5624
      %v5626 = vmul.f32 %v5590, %v5625
      %v5627 = vmul.f32 %v5591, %v5625
      %v5628 = vmul.f32 %v5592, %v5625
      %v5629 = vmul.f32 %v5593, %v5625
      %v5630 = vmul.f32 %v5594, %v5625
      %v5631 = vmul.f32 %v5595, %v5625
      %v5632 = vmul.f32 %v5596, %v5625
      %v5633 = vmul.f32 %v5597, %v5625
      %v5634 = vmul.f32 %v5598, %v5625
      %v5635 = vmul.f32 %v5599, %v5625
      %v5636 = vmul.f32 %v5600, %v5625
      %v5637 = vmul.f32 %v5601, %v5625
      %v5638 = vmul.f32 %v5602, %v5625
      %v5639 = vmul.f32 %v5603, %v5625
      %v5640 = vmul.f32 %v5604, %v5625
      %v5641 = vmul.f32 %v5605, %v5625
      %v5642 = vmul.f32 %v5606, %v5625
      %v5643 = vmul.f32 %v5607, %v5625
      %v5644 = vmul.f32 %v5608, %v5625
      %v5645 = vmul.f32 %v5609, %v5625
      %v5646 = vmul.f32 %v5610, %v5625
      %v5647 = vmul.f32 %v5611, %v5625
      %v5648 = vmul.f32 %v5612, %v5625
      %v5649 = vmul.f32 %v5613, %v5625
      %v5650 = vmul.f32 %v5614, %v5625
      %v5651 = vmul.f32 %v5615, %v5625
      %v5652 = vmul.f32 %v5616, %v5625
      %v5653 = vmul.f32 %v5617, %v5625
      %v5654 = vmul.f32 %v5618, %v5625
      %v5655 = vmul.f32 %v5619, %v5625
      %v5656 = vmul.f32 %v5620, %v5625
      %v5657 = vmul.f32 %v5621, %v5625
      %v5658 = vadd.f32 %v5557, %v5626
      %v5659 = vadd.f32 %v5558, %v5627
      %v5660 = vadd.f32 %v5559, %v5628
      %v5661 = vadd.f32 %v5560, %v5629
      %v5662 = vadd.f32 %v5561, %v5630
      %v5663 = vadd.f32 %v5562, %v5631
      %v5664 = vadd.f32 %v5563, %v5632
      %v5665 = vadd.f32 %v5564, %v5633
      %v5666 = vadd.f32 %v5565, %v5634
      %v5667 = vadd.f32 %v5566, %v5635
      %v5668 = vadd.f32 %v5567, %v5636
      %v5669 = vadd.f32 %v5568, %v5637
      %v5670 = vadd.f32 %v5569, %v5638
      %v5671 = vadd.f32 %v5570, %v5639
      %v5672 = vadd.f32 %v5571, %v5640
      %v5673 = vadd.f32 %v5572, %v5641
      %v5674 = vadd.f32 %v5573, %v5642
      %v5675 = vadd.f32 %v5574, %v5643
      %v5676 = vadd.f32 %v5575, %v5644
      %v5677 = vadd.f32 %v5576, %v5645
      %v5678 = vadd.f32 %v5577, %v5646
      %v5679 = vadd.f32 %v5578, %v5647
      %v5680 = vadd.f32 %v5579, %v5648
      %v5681 = vadd.f32 %v5580, %v5649
      %v5682 = vadd.f32 %v5581, %v5650
      %v5683 = vadd.f32 %v5582, %v5651
      %v5684 = vadd.f32 %v5583, %v5652
      %v5685 = vadd.f32 %v5584, %v5653
      %v5686 = vadd.f32 %v5585, %v5654
      %v5687 = vadd.f32 %v5586, %v5655
      %v5688 = vadd.f32 %v5587, %v5656
      %v5689 = vadd.f32 %v5588, %v5657
      %v5690 = vld [vmem:[%s4 + $0x2a] sm:$0x1]
      %s5691 = scalar_lea.vmem [#allocation2], 192
      %v5692 = vld [vmem:[%s5691 + $0x5] sm:$0xff]
      %v5693 = vld [vmem:[%s5691 + $0xd] sm:$0xff]
      %v5694 = vld [vmem:[%s5691 + $0x25] sm:$0xff]
      %v5695 = vld [vmem:[%s5691 + $0x2d] sm:$0xff]
      %v5696 = vld [vmem:[%s5691 + $0x45] sm:$0xff]
      %v5697 = vld [vmem:[%s5691 + $0x4d] sm:$0xff]
      %v5698 = vld [vmem:[%s5691 + $0x65] sm:$0xff]
      %v5699 = vld [vmem:[%s5691 + $0x6d] sm:$0xff]
      %v5700 = vld [vmem:[%s5691 + $0x85] sm:$0xff]
      %v5701 = vld [vmem:[%s5691 + $0x8d] sm:$0xff]
      %v5702 = vld [vmem:[%s5691 + $0xa5] sm:$0xff]
      %v5703 = vld [vmem:[%s5691 + $0xad] sm:$0xff]
      %v5704 = vld [vmem:[%s5691 + $0xc5] sm:$0xff]
      %v5705 = vld [vmem:[%s5691 + $0xcd] sm:$0xff]
      %v5706 = vld [vmem:[%s5691 + $0xe5] sm:$0xff]
      %v5707 = vld [vmem:[%s5691 + $0xed] sm:$0xff]
      %v5708 = vld [vmem:[%s5691 + $0x105] sm:$0xff]
      %v5709 = vld [vmem:[%s5691 + $0x10d] sm:$0xff]
      %v5710 = vld [vmem:[%s5691 + $0x125] sm:$0xff]
      %v5711 = vld [vmem:[%s5691 + $0x12d] sm:$0xff]
      %v5712 = vld [vmem:[%s5691 + $0x145] sm:$0xff]
      %v5713 = vld [vmem:[%s5691 + $0x14d] sm:$0xff]
      %v5714 = vld [vmem:[%s5691 + $0x165] sm:$0xff]
      %v5715 = vld [vmem:[%s5691 + $0x16d] sm:$0xff]
      %v5716 = vld [vmem:[%s5691 + $0x185] sm:$0xff]
      %v5717 = vld [vmem:[%s5691 + $0x18d] sm:$0xff]
      %v5718 = vld [vmem:[%s5691 + $0x1a5] sm:$0xff]
      %v5719 = vld [vmem:[%s5691 + $0x1ad] sm:$0xff]
      %v5720 = vld [vmem:[%s5691 + $0x1c5] sm:$0xff]
      %v5721 = vld [vmem:[%s5691 + $0x1cd] sm:$0xff]
      %v5722 = vld [vmem:[%s5691 + $0x1e5] sm:$0xff]
      %v5723 = vld [vmem:[%s5691 + $0x1ed] sm:$0xff]
      %v5724 = vlaneseq
      %v5725 = vshrl.u32 %v5724, 7
      %v5726 = vsub.s32 0, %v5725
      %v5727 = vrot.slane %v5690, %v5726
      %v5728 = vmul.f32 %v5692, %v5727
      %v5729 = vmul.f32 %v5693, %v5727
      %v5730 = vmul.f32 %v5694, %v5727
      %v5731 = vmul.f32 %v5695, %v5727
      %v5732 = vmul.f32 %v5696, %v5727
      %v5733 = vmul.f32 %v5697, %v5727
      %v5734 = vmul.f32 %v5698, %v5727
      %v5735 = vmul.f32 %v5699, %v5727
      %v5736 = vmul.f32 %v5700, %v5727
      %v5737 = vmul.f32 %v5701, %v5727
      %v5738 = vmul.f32 %v5702, %v5727
      %v5739 = vmul.f32 %v5703, %v5727
      %v5740 = vmul.f32 %v5704, %v5727
      %v5741 = vmul.f32 %v5705, %v5727
      %v5742 = vmul.f32 %v5706, %v5727
      %v5743 = vmul.f32 %v5707, %v5727
      %v5744 = vmul.f32 %v5708, %v5727
      %v5745 = vmul.f32 %v5709, %v5727
      %v5746 = vmul.f32 %v5710, %v5727
      %v5747 = vmul.f32 %v5711, %v5727
      %v5748 = vmul.f32 %v5712, %v5727
      %v5749 = vmul.f32 %v5713, %v5727
      %v5750 = vmul.f32 %v5714, %v5727
      %v5751 = vmul.f32 %v5715, %v5727
      %v5752 = vmul.f32 %v5716, %v5727
      %v5753 = vmul.f32 %v5717, %v5727
      %v5754 = vmul.f32 %v5718, %v5727
      %v5755 = vmul.f32 %v5719, %v5727
      %v5756 = vmul.f32 %v5720, %v5727
      %v5757 = vmul.f32 %v5721, %v5727
      %v5758 = vmul.f32 %v5722, %v5727
      %v5759 = vmul.f32 %v5723, %v5727
      %v5760 = vadd.f32 %v5658, %v5728
      %v5761 = vadd.f32 %v5659, %v5729
      %v5762 = vadd.f32 %v5660, %v5730
      %v5763 = vadd.f32 %v5661, %v5731
      %v5764 = vadd.f32 %v5662, %v5732
      %v5765 = vadd.f32 %v5663, %v5733
      %v5766 = vadd.f32 %v5664, %v5734
      %v5767 = vadd.f32 %v5665, %v5735
      %v5768 = vadd.f32 %v5666, %v5736
      %v5769 = vadd.f32 %v5667, %v5737
      %v5770 = vadd.f32 %v5668, %v5738
      %v5771 = vadd.f32 %v5669, %v5739
      %v5772 = vadd.f32 %v5670, %v5740
      %v5773 = vadd.f32 %v5671, %v5741
      %v5774 = vadd.f32 %v5672, %v5742
      %v5775 = vadd.f32 %v5673, %v5743
      %v5776 = vadd.f32 %v5674, %v5744
      %v5777 = vadd.f32 %v5675, %v5745
      %v5778 = vadd.f32 %v5676, %v5746
      %v5779 = vadd.f32 %v5677, %v5747
      %v5780 = vadd.f32 %v5678, %v5748
      %v5781 = vadd.f32 %v5679, %v5749
      %v5782 = vadd.f32 %v5680, %v5750
      %v5783 = vadd.f32 %v5681, %v5751
      %v5784 = vadd.f32 %v5682, %v5752
      %v5785 = vadd.f32 %v5683, %v5753
      %v5786 = vadd.f32 %v5684, %v5754
      %v5787 = vadd.f32 %v5685, %v5755
      %v5788 = vadd.f32 %v5686, %v5756
      %v5789 = vadd.f32 %v5687, %v5757
      %v5790 = vadd.f32 %v5688, %v5758
      %v5791 = vadd.f32 %v5689, %v5759
      %v5792 = vld [vmem:[%s4 + $0x2b] sm:$0x1]
      %v5793 = vld [vmem:[%s5691 + $0x6] sm:$0xff]
      %v5794 = vld [vmem:[%s5691 + $0xe] sm:$0xff]
      %v5795 = vld [vmem:[%s5691 + $0x26] sm:$0xff]
      %v5796 = vld [vmem:[%s5691 + $0x2e] sm:$0xff]
      %v5797 = vld [vmem:[%s5691 + $0x46] sm:$0xff]
      %v5798 = vld [vmem:[%s5691 + $0x4e] sm:$0xff]
      %v5799 = vld [vmem:[%s5691 + $0x66] sm:$0xff]
      %v5800 = vld [vmem:[%s5691 + $0x6e] sm:$0xff]
      %v5801 = vld [vmem:[%s5691 + $0x86] sm:$0xff]
      %v5802 = vld [vmem:[%s5691 + $0x8e] sm:$0xff]
      %v5803 = vld [vmem:[%s5691 + $0xa6] sm:$0xff]
      %v5804 = vld [vmem:[%s5691 + $0xae] sm:$0xff]
      %v5805 = vld [vmem:[%s5691 + $0xc6] sm:$0xff]
      %v5806 = vld [vmem:[%s5691 + $0xce] sm:$0xff]
      %v5807 = vld [vmem:[%s5691 + $0xe6] sm:$0xff]
      %v5808 = vld [vmem:[%s5691 + $0xee] sm:$0xff]
      %v5809 = vld [vmem:[%s5691 + $0x106] sm:$0xff]
      %v5810 = vld [vmem:[%s5691 + $0x10e] sm:$0xff]
      %v5811 = vld [vmem:[%s5691 + $0x126] sm:$0xff]
      %v5812 = vld [vmem:[%s5691 + $0x12e] sm:$0xff]
      %v5813 = vld [vmem:[%s5691 + $0x146] sm:$0xff]
      %v5814 = vld [vmem:[%s5691 + $0x14e] sm:$0xff]
      %v5815 = vld [vmem:[%s5691 + $0x166] sm:$0xff]
      %v5816 = vld [vmem:[%s5691 + $0x16e] sm:$0xff]
      %v5817 = vld [vmem:[%s5691 + $0x186] sm:$0xff]
      %v5818 = vld [vmem:[%s5691 + $0x18e] sm:$0xff]
      %v5819 = vld [vmem:[%s5691 + $0x1a6] sm:$0xff]
      %v5820 = vld [vmem:[%s5691 + $0x1ae] sm:$0xff]
      %v5821 = vld [vmem:[%s5691 + $0x1c6] sm:$0xff]
      %v5822 = vld [vmem:[%s5691 + $0x1ce] sm:$0xff]
      %v5823 = vld [vmem:[%s5691 + $0x1e6] sm:$0xff]
      %v5824 = vld [vmem:[%s5691 + $0x1ee] sm:$0xff]
      %v5825 = vlaneseq
      %v5826 = vshrl.u32 %v5825, 7
      %v5827 = vsub.s32 0, %v5826
      %v5828 = vrot.slane %v5792, %v5827
      %v5829 = vmul.f32 %v5793, %v5828
      %v5830 = vmul.f32 %v5794, %v5828
      %v5831 = vmul.f32 %v5795, %v5828
      %v5832 = vmul.f32 %v5796, %v5828
      %v5833 = vmul.f32 %v5797, %v5828
      %v5834 = vmul.f32 %v5798, %v5828
      %v5835 = vmul.f32 %v5799, %v5828
      %v5836 = vmul.f32 %v5800, %v5828
      %v5837 = vmul.f32 %v5801, %v5828
      %v5838 = vmul.f32 %v5802, %v5828
      %v5839 = vmul.f32 %v5803, %v5828
      %v5840 = vmul.f32 %v5804, %v5828
      %v5841 = vmul.f32 %v5805, %v5828
      %v5842 = vmul.f32 %v5806, %v5828
      %v5843 = vmul.f32 %v5807, %v5828
      %v5844 = vmul.f32 %v5808, %v5828
      %v5845 = vmul.f32 %v5809, %v5828
      %v5846 = vmul.f32 %v5810, %v5828
      %v5847 = vmul.f32 %v5811, %v5828
      %v5848 = vmul.f32 %v5812, %v5828
      %v5849 = vmul.f32 %v5813, %v5828
      %v5850 = vmul.f32 %v5814, %v5828
      %v5851 = vmul.f32 %v5815, %v5828
      %v5852 = vmul.f32 %v5816, %v5828
      %v5853 = vmul.f32 %v5817, %v5828
      %v5854 = vmul.f32 %v5818, %v5828
      %v5855 = vmul.f32 %v5819, %v5828
      %v5856 = vmul.f32 %v5820, %v5828
      %v5857 = vmul.f32 %v5821, %v5828
      %v5858 = vmul.f32 %v5822, %v5828
      %v5859 = vmul.f32 %v5823, %v5828
      %v5860 = vmul.f32 %v5824, %v5828
      %v5861 = vadd.f32 %v5760, %v5829
      %v5862 = vadd.f32 %v5761, %v5830
      %v5863 = vadd.f32 %v5762, %v5831
      %v5864 = vadd.f32 %v5763, %v5832
      %v5865 = vadd.f32 %v5764, %v5833
      %v5866 = vadd.f32 %v5765, %v5834
      %v5867 = vadd.f32 %v5766, %v5835
      %v5868 = vadd.f32 %v5767, %v5836
      %v5869 = vadd.f32 %v5768, %v5837
      %v5870 = vadd.f32 %v5769, %v5838
      %v5871 = vadd.f32 %v5770, %v5839
      %v5872 = vadd.f32 %v5771, %v5840
      %v5873 = vadd.f32 %v5772, %v5841
      %v5874 = vadd.f32 %v5773, %v5842
      %v5875 = vadd.f32 %v5774, %v5843
      %v5876 = vadd.f32 %v5775, %v5844
      %v5877 = vadd.f32 %v5776, %v5845
      %v5878 = vadd.f32 %v5777, %v5846
      %v5879 = vadd.f32 %v5778, %v5847
      %v5880 = vadd.f32 %v5779, %v5848
      %v5881 = vadd.f32 %v5780, %v5849
      %v5882 = vadd.f32 %v5781, %v5850
      %v5883 = vadd.f32 %v5782, %v5851
      %v5884 = vadd.f32 %v5783, %v5852
      %v5885 = vadd.f32 %v5784, %v5853
      %v5886 = vadd.f32 %v5785, %v5854
      %v5887 = vadd.f32 %v5786, %v5855
      %v5888 = vadd.f32 %v5787, %v5856
      %v5889 = vadd.f32 %v5788, %v5857
      %v5890 = vadd.f32 %v5789, %v5858
      %v5891 = vadd.f32 %v5790, %v5859
      %v5892 = vadd.f32 %v5791, %v5860
      %v5893 = vld [vmem:[%s4 + $0x2c] sm:$0x1]
      %v5894 = vld [vmem:[%s5691 + $0x7] sm:$0xff]
      %v5895 = vld [vmem:[%s5691 + $0xf] sm:$0xff]
      %v5896 = vld [vmem:[%s5691 + $0x27] sm:$0xff]
      %v5897 = vld [vmem:[%s5691 + $0x2f] sm:$0xff]
      %v5898 = vld [vmem:[%s5691 + $0x47] sm:$0xff]
      %v5899 = vld [vmem:[%s5691 + $0x4f] sm:$0xff]
      %v5900 = vld [vmem:[%s5691 + $0x67] sm:$0xff]
      %v5901 = vld [vmem:[%s5691 + $0x6f] sm:$0xff]
      %v5902 = vld [vmem:[%s5691 + $0x87] sm:$0xff]
      %v5903 = vld [vmem:[%s5691 + $0x8f] sm:$0xff]
      %v5904 = vld [vmem:[%s5691 + $0xa7] sm:$0xff]
      %v5905 = vld [vmem:[%s5691 + $0xaf] sm:$0xff]
      %v5906 = vld [vmem:[%s5691 + $0xc7] sm:$0xff]
      %v5907 = vld [vmem:[%s5691 + $0xcf] sm:$0xff]
      %v5908 = vld [vmem:[%s5691 + $0xe7] sm:$0xff]
      %v5909 = vld [vmem:[%s5691 + $0xef] sm:$0xff]
      %v5910 = vld [vmem:[%s5691 + $0x107] sm:$0xff]
      %v5911 = vld [vmem:[%s5691 + $0x10f] sm:$0xff]
      %v5912 = vld [vmem:[%s5691 + $0x127] sm:$0xff]
      %v5913 = vld [vmem:[%s5691 + $0x12f] sm:$0xff]
      %v5914 = vld [vmem:[%s5691 + $0x147] sm:$0xff]
      %v5915 = vld [vmem:[%s5691 + $0x14f] sm:$0xff]
      %v5916 = vld [vmem:[%s5691 + $0x167] sm:$0xff]
      %v5917 = vld [vmem:[%s5691 + $0x16f] sm:$0xff]
      %v5918 = vld [vmem:[%s5691 + $0x187] sm:$0xff]
      %v5919 = vld [vmem:[%s5691 + $0x18f] sm:$0xff]
      %v5920 = vld [vmem:[%s5691 + $0x1a7] sm:$0xff]
      %v5921 = vld [vmem:[%s5691 + $0x1af] sm:$0xff]
      %v5922 = vld [vmem:[%s5691 + $0x1c7] sm:$0xff]
      %v5923 = vld [vmem:[%s5691 + $0x1cf] sm:$0xff]
      %v5924 = vld [vmem:[%s5691 + $0x1e7] sm:$0xff]
      %v5925 = vld [vmem:[%s5691 + $0x1ef] sm:$0xff]
      %v5926 = vlaneseq
      %v5927 = vshrl.u32 %v5926, 7
      %v5928 = vsub.s32 0, %v5927
      %v5929 = vrot.slane %v5893, %v5928
      %v5930 = vmul.f32 %v5894, %v5929
      %v5931 = vmul.f32 %v5895, %v5929
      %v5932 = vmul.f32 %v5896, %v5929
      %v5933 = vmul.f32 %v5897, %v5929
      %v5934 = vmul.f32 %v5898, %v5929
      %v5935 = vmul.f32 %v5899, %v5929
      %v5936 = vmul.f32 %v5900, %v5929
      %v5937 = vmul.f32 %v5901, %v5929
      %v5938 = vmul.f32 %v5902, %v5929
      %v5939 = vmul.f32 %v5903, %v5929
      %v5940 = vmul.f32 %v5904, %v5929
      %v5941 = vmul.f32 %v5905, %v5929
      %v5942 = vmul.f32 %v5906, %v5929
      %v5943 = vmul.f32 %v5907, %v5929
      %v5944 = vmul.f32 %v5908, %v5929
      %v5945 = vmul.f32 %v5909, %v5929
      %v5946 = vmul.f32 %v5910, %v5929
      %v5947 = vmul.f32 %v5911, %v5929
      %v5948 = vmul.f32 %v5912, %v5929
      %v5949 = vmul.f32 %v5913, %v5929
      %v5950 = vmul.f32 %v5914, %v5929
      %v5951 = vmul.f32 %v5915, %v5929
      %v5952 = vmul.f32 %v5916, %v5929
      %v5953 = vmul.f32 %v5917, %v5929
      %v5954 = vmul.f32 %v5918, %v5929
      %v5955 = vmul.f32 %v5919, %v5929
      %v5956 = vmul.f32 %v5920, %v5929
      %v5957 = vmul.f32 %v5921, %v5929
      %v5958 = vmul.f32 %v5922, %v5929
      %v5959 = vmul.f32 %v5923, %v5929
      %v5960 = vmul.f32 %v5924, %v5929
      %v5961 = vmul.f32 %v5925, %v5929
      %v5962 = vadd.f32 %v5861, %v5930
      %v5963 = vadd.f32 %v5862, %v5931
      %v5964 = vadd.f32 %v5863, %v5932
      %v5965 = vadd.f32 %v5864, %v5933
      %v5966 = vadd.f32 %v5865, %v5934
      %v5967 = vadd.f32 %v5866, %v5935
      %v5968 = vadd.f32 %v5867, %v5936
      %v5969 = vadd.f32 %v5868, %v5937
      %v5970 = vadd.f32 %v5869, %v5938
      %v5971 = vadd.f32 %v5870, %v5939
      %v5972 = vadd.f32 %v5871, %v5940
      %v5973 = vadd.f32 %v5872, %v5941
      %v5974 = vadd.f32 %v5873, %v5942
      %v5975 = vadd.f32 %v5874, %v5943
      %v5976 = vadd.f32 %v5875, %v5944
      %v5977 = vadd.f32 %v5876, %v5945
      %v5978 = vadd.f32 %v5877, %v5946
      %v5979 = vadd.f32 %v5878, %v5947
      %v5980 = vadd.f32 %v5879, %v5948
      %v5981 = vadd.f32 %v5880, %v5949
      %v5982 = vadd.f32 %v5881, %v5950
      %v5983 = vadd.f32 %v5882, %v5951
      %v5984 = vadd.f32 %v5883, %v5952
      %v5985 = vadd.f32 %v5884, %v5953
      %v5986 = vadd.f32 %v5885, %v5954
      %v5987 = vadd.f32 %v5886, %v5955
      %v5988 = vadd.f32 %v5887, %v5956
      %v5989 = vadd.f32 %v5888, %v5957
      %v5990 = vadd.f32 %v5889, %v5958
      %v5991 = vadd.f32 %v5890, %v5959
      %v5992 = vadd.f32 %v5891, %v5960
      %v5993 = vadd.f32 %v5892, %v5961
      %v5994 = vld [vmem:[%s4 + $0x2d] sm:$0x1]
      %v5995 = vld [vmem:[%s5691 + $0x8] sm:$0xff]
      %v5996 = vld [vmem:[%s5691 + $0x10] sm:$0xff]
      %v5997 = vld [vmem:[%s5691 + $0x28] sm:$0xff]
      %v5998 = vld [vmem:[%s5691 + $0x30] sm:$0xff]
      %v5999 = vld [vmem:[%s5691 + $0x48] sm:$0xff]
      %v6000 = vld [vmem:[%s5691 + $0x50] sm:$0xff]
      %v6001 = vld [vmem:[%s5691 + $0x68] sm:$0xff]
      %v6002 = vld [vmem:[%s5691 + $0x70] sm:$0xff]
      %v6003 = vld [vmem:[%s5691 + $0x88] sm:$0xff]
      %v6004 = vld [vmem:[%s5691 + $0x90] sm:$0xff]
      %v6005 = vld [vmem:[%s5691 + $0xa8] sm:$0xff]
      %v6006 = vld [vmem:[%s5691 + $0xb0] sm:$0xff]
      %v6007 = vld [vmem:[%s5691 + $0xc8] sm:$0xff]
      %v6008 = vld [vmem:[%s5691 + $0xd0] sm:$0xff]
      %v6009 = vld [vmem:[%s5691 + $0xe8] sm:$0xff]
      %v6010 = vld [vmem:[%s5691 + $0xf0] sm:$0xff]
      %v6011 = vld [vmem:[%s5691 + $0x108] sm:$0xff]
      %v6012 = vld [vmem:[%s5691 + $0x110] sm:$0xff]
      %v6013 = vld [vmem:[%s5691 + $0x128] sm:$0xff]
      %v6014 = vld [vmem:[%s5691 + $0x130] sm:$0xff]
      %v6015 = vld [vmem:[%s5691 + $0x148] sm:$0xff]
      %v6016 = vld [vmem:[%s5691 + $0x150] sm:$0xff]
      %v6017 = vld [vmem:[%s5691 + $0x168] sm:$0xff]
      %v6018 = vld [vmem:[%s5691 + $0x170] sm:$0xff]
      %v6019 = vld [vmem:[%s5691 + $0x188] sm:$0xff]
      %v6020 = vld [vmem:[%s5691 + $0x190] sm:$0xff]
      %v6021 = vld [vmem:[%s5691 + $0x1a8] sm:$0xff]
      %v6022 = vld [vmem:[%s5691 + $0x1b0] sm:$0xff]
      %v6023 = vld [vmem:[%s5691 + $0x1c8] sm:$0xff]
      %v6024 = vld [vmem:[%s5691 + $0x1d0] sm:$0xff]
      %v6025 = vld [vmem:[%s5691 + $0x1e8] sm:$0xff]
      %v6026 = vld [vmem:[%s5691 + $0x1f0] sm:$0xff]
      %v6027 = vlaneseq
      %v6028 = vshrl.u32 %v6027, 7
      %v6029 = vsub.s32 0, %v6028
      %v6030 = vrot.slane %v5994, %v6029
      %v6031 = vmul.f32 %v5995, %v6030
      %v6032 = vmul.f32 %v5996, %v6030
      %v6033 = vmul.f32 %v5997, %v6030
      %v6034 = vmul.f32 %v5998, %v6030
      %v6035 = vmul.f32 %v5999, %v6030
      %v6036 = vmul.f32 %v6000, %v6030
      %v6037 = vmul.f32 %v6001, %v6030
      %v6038 = vmul.f32 %v6002, %v6030
      %v6039 = vmul.f32 %v6003, %v6030
      %v6040 = vmul.f32 %v6004, %v6030
      %v6041 = vmul.f32 %v6005, %v6030
      %v6042 = vmul.f32 %v6006, %v6030
      %v6043 = vmul.f32 %v6007, %v6030
      %v6044 = vmul.f32 %v6008, %v6030
      %v6045 = vmul.f32 %v6009, %v6030
      %v6046 = vmul.f32 %v6010, %v6030
      %v6047 = vmul.f32 %v6011, %v6030
      %v6048 = vmul.f32 %v6012, %v6030
      %v6049 = vmul.f32 %v6013, %v6030
      %v6050 = vmul.f32 %v6014, %v6030
      %v6051 = vmul.f32 %v6015, %v6030
      %v6052 = vmul.f32 %v6016, %v6030
      %v6053 = vmul.f32 %v6017, %v6030
      %v6054 = vmul.f32 %v6018, %v6030
      %v6055 = vmul.f32 %v6019, %v6030
      %v6056 = vmul.f32 %v6020, %v6030
      %v6057 = vmul.f32 %v6021, %v6030
      %v6058 = vmul.f32 %v6022, %v6030
      %v6059 = vmul.f32 %v6023, %v6030
      %v6060 = vmul.f32 %v6024, %v6030
      %v6061 = vmul.f32 %v6025, %v6030
      %v6062 = vmul.f32 %v6026, %v6030
      %v6063 = vadd.f32 %v5962, %v6031
      %v6064 = vadd.f32 %v5963, %v6032
      %v6065 = vadd.f32 %v5964, %v6033
      %v6066 = vadd.f32 %v5965, %v6034
      %v6067 = vadd.f32 %v5966, %v6035
      %v6068 = vadd.f32 %v5967, %v6036
      %v6069 = vadd.f32 %v5968, %v6037
      %v6070 = vadd.f32 %v5969, %v6038
      %v6071 = vadd.f32 %v5970, %v6039
      %v6072 = vadd.f32 %v5971, %v6040
      %v6073 = vadd.f32 %v5972, %v6041
      %v6074 = vadd.f32 %v5973, %v6042
      %v6075 = vadd.f32 %v5974, %v6043
      %v6076 = vadd.f32 %v5975, %v6044
      %v6077 = vadd.f32 %v5976, %v6045
      %v6078 = vadd.f32 %v5977, %v6046
      %v6079 = vadd.f32 %v5978, %v6047
      %v6080 = vadd.f32 %v5979, %v6048
      %v6081 = vadd.f32 %v5980, %v6049
      %v6082 = vadd.f32 %v5981, %v6050
      %v6083 = vadd.f32 %v5982, %v6051
      %v6084 = vadd.f32 %v5983, %v6052
      %v6085 = vadd.f32 %v5984, %v6053
      %v6086 = vadd.f32 %v5985, %v6054
      %v6087 = vadd.f32 %v5986, %v6055
      %v6088 = vadd.f32 %v5987, %v6056
      %v6089 = vadd.f32 %v5988, %v6057
      %v6090 = vadd.f32 %v5989, %v6058
      %v6091 = vadd.f32 %v5990, %v6059
      %v6092 = vadd.f32 %v5991, %v6060
      %v6093 = vadd.f32 %v5992, %v6061
      %v6094 = vadd.f32 %v5993, %v6062
      %v6095 = vld [vmem:[%s4 + $0x2e] sm:$0x1]
      %v6096 = vld [vmem:[%s5691 + $0x9] sm:$0xff]
      %v6097 = vld [vmem:[%s5691 + $0x11] sm:$0xff]
      %v6098 = vld [vmem:[%s5691 + $0x29] sm:$0xff]
      %v6099 = vld [vmem:[%s5691 + $0x31] sm:$0xff]
      %v6100 = vld [vmem:[%s5691 + $0x49] sm:$0xff]
      %v6101 = vld [vmem:[%s5691 + $0x51] sm:$0xff]
      %v6102 = vld [vmem:[%s5691 + $0x69] sm:$0xff]
      %v6103 = vld [vmem:[%s5691 + $0x71] sm:$0xff]
      %v6104 = vld [vmem:[%s5691 + $0x89] sm:$0xff]
      %v6105 = vld [vmem:[%s5691 + $0x91] sm:$0xff]
      %v6106 = vld [vmem:[%s5691 + $0xa9] sm:$0xff]
      %v6107 = vld [vmem:[%s5691 + $0xb1] sm:$0xff]
      %v6108 = vld [vmem:[%s5691 + $0xc9] sm:$0xff]
      %v6109 = vld [vmem:[%s5691 + $0xd1] sm:$0xff]
      %v6110 = vld [vmem:[%s5691 + $0xe9] sm:$0xff]
      %v6111 = vld [vmem:[%s5691 + $0xf1] sm:$0xff]
      %v6112 = vld [vmem:[%s5691 + $0x109] sm:$0xff]
      %v6113 = vld [vmem:[%s5691 + $0x111] sm:$0xff]
      %v6114 = vld [vmem:[%s5691 + $0x129] sm:$0xff]
      %v6115 = vld [vmem:[%s5691 + $0x131] sm:$0xff]
      %v6116 = vld [vmem:[%s5691 + $0x149] sm:$0xff]
      %v6117 = vld [vmem:[%s5691 + $0x151] sm:$0xff]
      %v6118 = vld [vmem:[%s5691 + $0x169] sm:$0xff]
      %v6119 = vld [vmem:[%s5691 + $0x171] sm:$0xff]
      %v6120 = vld [vmem:[%s5691 + $0x189] sm:$0xff]
      %v6121 = vld [vmem:[%s5691 + $0x191] sm:$0xff]
      %v6122 = vld [vmem:[%s5691 + $0x1a9] sm:$0xff]
      %v6123 = vld [vmem:[%s5691 + $0x1b1] sm:$0xff]
      %v6124 = vld [vmem:[%s5691 + $0x1c9] sm:$0xff]
      %v6125 = vld [vmem:[%s5691 + $0x1d1] sm:$0xff]
      %v6126 = vld [vmem:[%s5691 + $0x1e9] sm:$0xff]
      %v6127 = vld [vmem:[%s5691 + $0x1f1] sm:$0xff]
      %v6128 = vlaneseq
      %v6129 = vshrl.u32 %v6128, 7
      %v6130 = vsub.s32 0, %v6129
      %v6131 = vrot.slane %v6095, %v6130
      %v6132 = vmul.f32 %v6096, %v6131
      %v6133 = vmul.f32 %v6097, %v6131
      %v6134 = vmul.f32 %v6098, %v6131
      %v6135 = vmul.f32 %v6099, %v6131
      %v6136 = vmul.f32 %v6100, %v6131
      %v6137 = vmul.f32 %v6101, %v6131
      %v6138 = vmul.f32 %v6102, %v6131
      %v6139 = vmul.f32 %v6103, %v6131
      %v6140 = vmul.f32 %v6104, %v6131
      %v6141 = vmul.f32 %v6105, %v6131
      %v6142 = vmul.f32 %v6106, %v6131
      %v6143 = vmul.f32 %v6107, %v6131
      %v6144 = vmul.f32 %v6108, %v6131
      %v6145 = vmul.f32 %v6109, %v6131
      %v6146 = vmul.f32 %v6110, %v6131
      %v6147 = vmul.f32 %v6111, %v6131
      %v6148 = vmul.f32 %v6112, %v6131
      %v6149 = vmul.f32 %v6113, %v6131
      %v6150 = vmul.f32 %v6114, %v6131
      %v6151 = vmul.f32 %v6115, %v6131
      %v6152 = vmul.f32 %v6116, %v6131
      %v6153 = vmul.f32 %v6117, %v6131
      %v6154 = vmul.f32 %v6118, %v6131
      %v6155 = vmul.f32 %v6119, %v6131
      %v6156 = vmul.f32 %v6120, %v6131
      %v6157 = vmul.f32 %v6121, %v6131
      %v6158 = vmul.f32 %v6122, %v6131
      %v6159 = vmul.f32 %v6123, %v6131
      %v6160 = vmul.f32 %v6124, %v6131
      %v6161 = vmul.f32 %v6125, %v6131
      %v6162 = vmul.f32 %v6126, %v6131
      %v6163 = vmul.f32 %v6127, %v6131
      %v6164 = vadd.f32 %v6063, %v6132
      %v6165 = vadd.f32 %v6064, %v6133
      %v6166 = vadd.f32 %v6065, %v6134
      %v6167 = vadd.f32 %v6066, %v6135
      %v6168 = vadd.f32 %v6067, %v6136
      %v6169 = vadd.f32 %v6068, %v6137
      %v6170 = vadd.f32 %v6069, %v6138
      %v6171 = vadd.f32 %v6070, %v6139
      %v6172 = vadd.f32 %v6071, %v6140
      %v6173 = vadd.f32 %v6072, %v6141
      %v6174 = vadd.f32 %v6073, %v6142
      %v6175 = vadd.f32 %v6074, %v6143
      %v6176 = vadd.f32 %v6075, %v6144
      %v6177 = vadd.f32 %v6076, %v6145
      %v6178 = vadd.f32 %v6077, %v6146
      %v6179 = vadd.f32 %v6078, %v6147
      %v6180 = vadd.f32 %v6079, %v6148
      %v6181 = vadd.f32 %v6080, %v6149
      %v6182 = vadd.f32 %v6081, %v6150
      %v6183 = vadd.f32 %v6082, %v6151
      %v6184 = vadd.f32 %v6083, %v6152
      %v6185 = vadd.f32 %v6084, %v6153
      %v6186 = vadd.f32 %v6085, %v6154
      %v6187 = vadd.f32 %v6086, %v6155
      %v6188 = vadd.f32 %v6087, %v6156
      %v6189 = vadd.f32 %v6088, %v6157
      %v6190 = vadd.f32 %v6089, %v6158
      %v6191 = vadd.f32 %v6090, %v6159
      %v6192 = vadd.f32 %v6091, %v6160
      %v6193 = vadd.f32 %v6092, %v6161
      %v6194 = vadd.f32 %v6093, %v6162
      %v6195 = vadd.f32 %v6094, %v6163
      %v6196 = vld [vmem:[%s4 + $0x2f] sm:$0x1]
      %v6197 = vld [vmem:[%s5691 + $0xa] sm:$0xff]
      %v6198 = vld [vmem:[%s5691 + $0x12] sm:$0xff]
      %v6199 = vld [vmem:[%s5691 + $0x2a] sm:$0xff]
      %v6200 = vld [vmem:[%s5691 + $0x32] sm:$0xff]
      %v6201 = vld [vmem:[%s5691 + $0x4a] sm:$0xff]
      %v6202 = vld [vmem:[%s5691 + $0x52] sm:$0xff]
      %v6203 = vld [vmem:[%s5691 + $0x6a] sm:$0xff]
      %v6204 = vld [vmem:[%s5691 + $0x72] sm:$0xff]
      %v6205 = vld [vmem:[%s5691 + $0x8a] sm:$0xff]
      %v6206 = vld [vmem:[%s5691 + $0x92] sm:$0xff]
      %v6207 = vld [vmem:[%s5691 + $0xaa] sm:$0xff]
      %v6208 = vld [vmem:[%s5691 + $0xb2] sm:$0xff]
      %v6209 = vld [vmem:[%s5691 + $0xca] sm:$0xff]
      %v6210 = vld [vmem:[%s5691 + $0xd2] sm:$0xff]
      %v6211 = vld [vmem:[%s5691 + $0xea] sm:$0xff]
      %v6212 = vld [vmem:[%s5691 + $0xf2] sm:$0xff]
      %v6213 = vld [vmem:[%s5691 + $0x10a] sm:$0xff]
      %v6214 = vld [vmem:[%s5691 + $0x112] sm:$0xff]
      %v6215 = vld [vmem:[%s5691 + $0x12a] sm:$0xff]
      %v6216 = vld [vmem:[%s5691 + $0x132] sm:$0xff]
      %v6217 = vld [vmem:[%s5691 + $0x14a] sm:$0xff]
      %v6218 = vld [vmem:[%s5691 + $0x152] sm:$0xff]
      %v6219 = vld [vmem:[%s5691 + $0x16a] sm:$0xff]
      %v6220 = vld [vmem:[%s5691 + $0x172] sm:$0xff]
      %v6221 = vld [vmem:[%s5691 + $0x18a] sm:$0xff]
      %v6222 = vld [vmem:[%s5691 + $0x192] sm:$0xff]
      %v6223 = vld [vmem:[%s5691 + $0x1aa] sm:$0xff]
      %v6224 = vld [vmem:[%s5691 + $0x1b2] sm:$0xff]
      %v6225 = vld [vmem:[%s5691 + $0x1ca] sm:$0xff]
      %v6226 = vld [vmem:[%s5691 + $0x1d2] sm:$0xff]
      %v6227 = vld [vmem:[%s5691 + $0x1ea] sm:$0xff]
      %v6228 = vld [vmem:[%s5691 + $0x1f2] sm:$0xff]
      %v6229 = vlaneseq
      %v6230 = vshrl.u32 %v6229, 7
      %v6231 = vsub.s32 0, %v6230
      %v6232 = vrot.slane %v6196, %v6231
      %v6233 = vmul.f32 %v6197, %v6232
      %v6234 = vmul.f32 %v6198, %v6232
      %v6235 = vmul.f32 %v6199, %v6232
      %v6236 = vmul.f32 %v6200, %v6232
      %v6237 = vmul.f32 %v6201, %v6232
      %v6238 = vmul.f32 %v6202, %v6232
      %v6239 = vmul.f32 %v6203, %v6232
      %v6240 = vmul.f32 %v6204, %v6232
      %v6241 = vmul.f32 %v6205, %v6232
      %v6242 = vmul.f32 %v6206, %v6232
      %v6243 = vmul.f32 %v6207, %v6232
      %v6244 = vmul.f32 %v6208, %v6232
      %v6245 = vmul.f32 %v6209, %v6232
      %v6246 = vmul.f32 %v6210, %v6232
      %v6247 = vmul.f32 %v6211, %v6232
      %v6248 = vmul.f32 %v6212, %v6232
      %v6249 = vmul.f32 %v6213, %v6232
      %v6250 = vmul.f32 %v6214, %v6232
      %v6251 = vmul.f32 %v6215, %v6232
      %v6252 = vmul.f32 %v6216, %v6232
      %v6253 = vmul.f32 %v6217, %v6232
      %v6254 = vmul.f32 %v6218, %v6232
      %v6255 = vmul.f32 %v6219, %v6232
      %v6256 = vmul.f32 %v6220, %v6232
      %v6257 = vmul.f32 %v6221, %v6232
      %v6258 = vmul.f32 %v6222, %v6232
      %v6259 = vmul.f32 %v6223, %v6232
      %v6260 = vmul.f32 %v6224, %v6232
      %v6261 = vmul.f32 %v6225, %v6232
      %v6262 = vmul.f32 %v6226, %v6232
      %v6263 = vmul.f32 %v6227, %v6232
      %v6264 = vmul.f32 %v6228, %v6232
      %v6265 = vadd.f32 %v6164, %v6233
      %v6266 = vadd.f32 %v6165, %v6234
      %v6267 = vadd.f32 %v6166, %v6235
      %v6268 = vadd.f32 %v6167, %v6236
      %v6269 = vadd.f32 %v6168, %v6237
      %v6270 = vadd.f32 %v6169, %v6238
      %v6271 = vadd.f32 %v6170, %v6239
      %v6272 = vadd.f32 %v6171, %v6240
      %v6273 = vadd.f32 %v6172, %v6241
      %v6274 = vadd.f32 %v6173, %v6242
      %v6275 = vadd.f32 %v6174, %v6243
      %v6276 = vadd.f32 %v6175, %v6244
      %v6277 = vadd.f32 %v6176, %v6245
      %v6278 = vadd.f32 %v6177, %v6246
      %v6279 = vadd.f32 %v6178, %v6247
      %v6280 = vadd.f32 %v6179, %v6248
      %v6281 = vadd.f32 %v6180, %v6249
      %v6282 = vadd.f32 %v6181, %v6250
      %v6283 = vadd.f32 %v6182, %v6251
      %v6284 = vadd.f32 %v6183, %v6252
      %v6285 = vadd.f32 %v6184, %v6253
      %v6286 = vadd.f32 %v6185, %v6254
      %v6287 = vadd.f32 %v6186, %v6255
      %v6288 = vadd.f32 %v6187, %v6256
      %v6289 = vadd.f32 %v6188, %v6257
      %v6290 = vadd.f32 %v6189, %v6258
      %v6291 = vadd.f32 %v6190, %v6259
      %v6292 = vadd.f32 %v6191, %v6260
      %v6293 = vadd.f32 %v6192, %v6261
      %v6294 = vadd.f32 %v6193, %v6262
      %v6295 = vadd.f32 %v6194, %v6263
      %v6296 = vadd.f32 %v6195, %v6264
      %v6297 = vld [vmem:[%s4 + $0x30] sm:$0x1]
      %v6298 = vld [vmem:[%s5691 + $0xb] sm:$0xff]
      %v6299 = vld [vmem:[%s5691 + $0x13] sm:$0xff]
      %v6300 = vld [vmem:[%s5691 + $0x2b] sm:$0xff]
      %v6301 = vld [vmem:[%s5691 + $0x33] sm:$0xff]
      %v6302 = vld [vmem:[%s5691 + $0x4b] sm:$0xff]
      %v6303 = vld [vmem:[%s5691 + $0x53] sm:$0xff]
      %v6304 = vld [vmem:[%s5691 + $0x6b] sm:$0xff]
      %v6305 = vld [vmem:[%s5691 + $0x73] sm:$0xff]
      %v6306 = vld [vmem:[%s5691 + $0x8b] sm:$0xff]
      %v6307 = vld [vmem:[%s5691 + $0x93] sm:$0xff]
      %v6308 = vld [vmem:[%s5691 + $0xab] sm:$0xff]
      %v6309 = vld [vmem:[%s5691 + $0xb3] sm:$0xff]
      %v6310 = vld [vmem:[%s5691 + $0xcb] sm:$0xff]
      %v6311 = vld [vmem:[%s5691 + $0xd3] sm:$0xff]
      %v6312 = vld [vmem:[%s5691 + $0xeb] sm:$0xff]
      %v6313 = vld [vmem:[%s5691 + $0xf3] sm:$0xff]
      %v6314 = vld [vmem:[%s5691 + $0x10b] sm:$0xff]
      %v6315 = vld [vmem:[%s5691 + $0x113] sm:$0xff]
      %v6316 = vld [vmem:[%s5691 + $0x12b] sm:$0xff]
      %v6317 = vld [vmem:[%s5691 + $0x133] sm:$0xff]
      %v6318 = vld [vmem:[%s5691 + $0x14b] sm:$0xff]
      %v6319 = vld [vmem:[%s5691 + $0x153] sm:$0xff]
      %v6320 = vld [vmem:[%s5691 + $0x16b] sm:$0xff]
      %v6321 = vld [vmem:[%s5691 + $0x173] sm:$0xff]
      %v6322 = vld [vmem:[%s5691 + $0x18b] sm:$0xff]
      %v6323 = vld [vmem:[%s5691 + $0x193] sm:$0xff]
      %v6324 = vld [vmem:[%s5691 + $0x1ab] sm:$0xff]
      %v6325 = vld [vmem:[%s5691 + $0x1b3] sm:$0xff]
      %v6326 = vld [vmem:[%s5691 + $0x1cb] sm:$0xff]
      %v6327 = vld [vmem:[%s5691 + $0x1d3] sm:$0xff]
      %v6328 = vld [vmem:[%s5691 + $0x1eb] sm:$0xff]
      %v6329 = vld [vmem:[%s5691 + $0x1f3] sm:$0xff]
      %v6330 = vlaneseq
      %v6331 = vshrl.u32 %v6330, 7
      %v6332 = vsub.s32 0, %v6331
      %v6333 = vrot.slane %v6297, %v6332
      %v6334 = vmul.f32 %v6298, %v6333
      %v6335 = vmul.f32 %v6299, %v6333
      %v6336 = vmul.f32 %v6300, %v6333
      %v6337 = vmul.f32 %v6301, %v6333
      %v6338 = vmul.f32 %v6302, %v6333
      %v6339 = vmul.f32 %v6303, %v6333
      %v6340 = vmul.f32 %v6304, %v6333
      %v6341 = vmul.f32 %v6305, %v6333
      %v6342 = vmul.f32 %v6306, %v6333
      %v6343 = vmul.f32 %v6307, %v6333
      %v6344 = vmul.f32 %v6308, %v6333
      %v6345 = vmul.f32 %v6309, %v6333
      %v6346 = vmul.f32 %v6310, %v6333
      %v6347 = vmul.f32 %v6311, %v6333
      %v6348 = vmul.f32 %v6312, %v6333
      %v6349 = vmul.f32 %v6313, %v6333
      %v6350 = vmul.f32 %v6314, %v6333
      %v6351 = vmul.f32 %v6315, %v6333
      %v6352 = vmul.f32 %v6316, %v6333
      %v6353 = vmul.f32 %v6317, %v6333
      %v6354 = vmul.f32 %v6318, %v6333
      %v6355 = vmul.f32 %v6319, %v6333
      %v6356 = vmul.f32 %v6320, %v6333
      %v6357 = vmul.f32 %v6321, %v6333
      %v6358 = vmul.f32 %v6322, %v6333
      %v6359 = vmul.f32 %v6323, %v6333
      %v6360 = vmul.f32 %v6324, %v6333
      %v6361 = vmul.f32 %v6325, %v6333
      %v6362 = vmul.f32 %v6326, %v6333
      %v6363 = vmul.f32 %v6327, %v6333
      %v6364 = vmul.f32 %v6328, %v6333
      %v6365 = vmul.f32 %v6329, %v6333
      %v6366 = vadd.f32 %v6265, %v6334
      %v6367 = vadd.f32 %v6266, %v6335
      %v6368 = vadd.f32 %v6267, %v6336
      %v6369 = vadd.f32 %v6268, %v6337
      %v6370 = vadd.f32 %v6269, %v6338
      %v6371 = vadd.f32 %v6270, %v6339
      %v6372 = vadd.f32 %v6271, %v6340
      %v6373 = vadd.f32 %v6272, %v6341
      %v6374 = vadd.f32 %v6273, %v6342
      %v6375 = vadd.f32 %v6274, %v6343
      %v6376 = vadd.f32 %v6275, %v6344
      %v6377 = vadd.f32 %v6276, %v6345
      %v6378 = vadd.f32 %v6277, %v6346
      %v6379 = vadd.f32 %v6278, %v6347
      %v6380 = vadd.f32 %v6279, %v6348
      %v6381 = vadd.f32 %v6280, %v6349
      %v6382 = vadd.f32 %v6281, %v6350
      %v6383 = vadd.f32 %v6282, %v6351
      %v6384 = vadd.f32 %v6283, %v6352
      %v6385 = vadd.f32 %v6284, %v6353
      %v6386 = vadd.f32 %v6285, %v6354
      %v6387 = vadd.f32 %v6286, %v6355
      %v6388 = vadd.f32 %v6287, %v6356
      %v6389 = vadd.f32 %v6288, %v6357
      %v6390 = vadd.f32 %v6289, %v6358
      %v6391 = vadd.f32 %v6290, %v6359
      %v6392 = vadd.f32 %v6291, %v6360
      %v6393 = vadd.f32 %v6292, %v6361
      %v6394 = vadd.f32 %v6293, %v6362
      %v6395 = vadd.f32 %v6294, %v6363
      %v6396 = vadd.f32 %v6295, %v6364
      %v6397 = vadd.f32 %v6296, %v6365
      %v6398 = vld [vmem:[%s5] sm:$0x1]
      %v6400 = vlaneseq
      %v6401 = vshrl.u32 %v6400, 7
      %v6402 = vsub.s32 0, %v6401
      %v6403 = vrot.slane %v6398, %v6402
      %v6405 = vadd.f32 %v6366, %v6403
      %v6406 = vadd.f32 %v6367, %v6403
      %v6407 = vadd.f32 %v6368, %v6403
      %v6408 = vadd.f32 %v6369, %v6403
      %v6409 = vadd.f32 %v6370, %v6403
      %v6410 = vadd.f32 %v6371, %v6403
      %v6411 = vadd.f32 %v6372, %v6403
      %v6412 = vadd.f32 %v6373, %v6403
      %v6413 = vadd.f32 %v6374, %v6403
      %v6414 = vadd.f32 %v6375, %v6403
      %v6415 = vadd.f32 %v6376, %v6403
      %v6416 = vadd.f32 %v6377, %v6403
      %v6417 = vadd.f32 %v6378, %v6403
      %v6418 = vadd.f32 %v6379, %v6403
      %v6419 = vadd.f32 %v6380, %v6403
      %v6420 = vadd.f32 %v6381, %v6403
      %v6421 = vadd.f32 %v6382, %v6403
      %v6422 = vadd.f32 %v6383, %v6403
      %v6423 = vadd.f32 %v6384, %v6403
      %v6424 = vadd.f32 %v6385, %v6403
      %v6425 = vadd.f32 %v6386, %v6403
      %v6426 = vadd.f32 %v6387, %v6403
      %v6427 = vadd.f32 %v6388, %v6403
      %v6428 = vadd.f32 %v6389, %v6403
      %v6429 = vadd.f32 %v6390, %v6403
      %v6430 = vadd.f32 %v6391, %v6403
      %v6431 = vadd.f32 %v6392, %v6403
      %v6432 = vadd.f32 %v6393, %v6403
      %v6433 = vadd.f32 %v6394, %v6403
      %v6434 = vadd.f32 %v6395, %v6403
      %v6435 = vadd.f32 %v6396, %v6403
      %v6436 = vadd.f32 %v6397, %v6403
      %v6437 = vadd.f32 %v6405, %v3871
      %v6438 = vadd.f32 %v6406, %v3872
      %v6439 = vadd.f32 %v6407, %v3873
      %v6440 = vadd.f32 %v6408, %v3874
      %v6441 = vadd.f32 %v6409, %v3875
      %v6442 = vadd.f32 %v6410, %v3876
      %v6443 = vadd.f32 %v6411, %v3877
      %v6444 = vadd.f32 %v6412, %v3878
      %v6445 = vadd.f32 %v6413, %v3879
      %v6446 = vadd.f32 %v6414, %v3880
      %v6447 = vadd.f32 %v6415, %v3881
      %v6448 = vadd.f32 %v6416, %v3882
      %v6449 = vadd.f32 %v6417, %v3883
      %v6450 = vadd.f32 %v6418, %v3884
      %v6451 = vadd.f32 %v6419, %v3885
      %v6452 = vadd.f32 %v6420, %v3886
      %v6453 = vadd.f32 %v6421, %v3887
      %v6454 = vadd.f32 %v6422, %v3888
      %v6455 = vadd.f32 %v6423, %v3889
      %v6456 = vadd.f32 %v6424, %v3890
      %v6457 = vadd.f32 %v6425, %v3891
      %v6458 = vadd.f32 %v6426, %v3892
      %v6459 = vadd.f32 %v6427, %v3893
      %v6460 = vadd.f32 %v6428, %v3894
      %v6461 = vadd.f32 %v6429, %v3895
      %v6462 = vadd.f32 %v6430, %v3896
      %v6463 = vadd.f32 %v6431, %v3897
      %v6464 = vadd.f32 %v6432, %v3898
      %v6465 = vadd.f32 %v6433, %v3899
      %v6466 = vadd.f32 %v6434, %v3900
      %v6467 = vadd.f32 %v6435, %v3901
      %v6468 = vadd.f32 %v6436, %v3902
      %v6469 = vmul.f32 %v6437, 0.5
      %v6470 = vmul.f32 %v6438, 0.5
      %v6471 = vmul.f32 %v6439, 0.5
      %v6472 = vmul.f32 %v6440, 0.5
      %v6473 = vmul.f32 %v6441, 0.5
      %v6474 = vmul.f32 %v6442, 0.5
      %v6475 = vmul.f32 %v6443, 0.5
      %v6476 = vmul.f32 %v6444, 0.5
      %v6477 = vmul.f32 %v6445, 0.5
      %v6478 = vmul.f32 %v6446, 0.5
      %v6479 = vmul.f32 %v6447, 0.5
      %v6480 = vmul.f32 %v6448, 0.5
      %v6481 = vmul.f32 %v6449, 0.5
      %v6482 = vmul.f32 %v6450, 0.5
      %v6483 = vmul.f32 %v6451, 0.5
      %v6484 = vmul.f32 %v6452, 0.5
      %v6485 = vmul.f32 %v6453, 0.5
      %v6486 = vmul.f32 %v6454, 0.5
      %v6487 = vmul.f32 %v6455, 0.5
      %v6488 = vmul.f32 %v6456, 0.5
      %v6489 = vmul.f32 %v6457, 0.5
      %v6490 = vmul.f32 %v6458, 0.5
      %v6491 = vmul.f32 %v6459, 0.5
      %v6492 = vmul.f32 %v6460, 0.5
      %v6493 = vmul.f32 %v6461, 0.5
      %v6494 = vmul.f32 %v6462, 0.5
      %v6495 = vmul.f32 %v6463, 0.5
      %v6496 = vmul.f32 %v6464, 0.5
      %v6497 = vmul.f32 %v6465, 0.5
      %v6498 = vmul.f32 %v6466, 0.5
      %v6499 = vmul.f32 %v6467, 0.5
      %v6500 = vmul.f32 %v6468, 0.5
      %v6501 = vmul.f32 %v6437, 0.70710677
      %v6502 = vmul.f32 %v6438, 0.70710677
      %v6503 = vmul.f32 %v6439, 0.70710677
      %v6504 = vmul.f32 %v6440, 0.70710677
      %v6505 = vmul.f32 %v6441, 0.70710677
      %v6506 = vmul.f32 %v6442, 0.70710677
      %v6507 = vmul.f32 %v6443, 0.70710677
      %v6508 = vmul.f32 %v6444, 0.70710677
      %v6509 = vmul.f32 %v6445, 0.70710677
      %v6510 = vmul.f32 %v6446, 0.70710677
      %v6511 = vmul.f32 %v6447, 0.70710677
      %v6512 = vmul.f32 %v6448, 0.70710677
      %v6513 = vmul.f32 %v6449, 0.70710677
      %v6514 = vmul.f32 %v6450, 0.70710677
      %v6515 = vmul.f32 %v6451, 0.70710677
      %v6516 = vmul.f32 %v6452, 0.70710677
      %v6517 = vmul.f32 %v6453, 0.70710677
      %v6518 = vmul.f32 %v6454, 0.70710677
      %v6519 = vmul.f32 %v6455, 0.70710677
      %v6520 = vmul.f32 %v6456, 0.70710677
      %v6521 = vmul.f32 %v6457, 0.70710677
      %v6522 = vmul.f32 %v6458, 0.70710677
      %v6523 = vmul.f32 %v6459, 0.70710677
      %v6524 = vmul.f32 %v6460, 0.70710677
      %v6525 = vmul.f32 %v6461, 0.70710677
      %v6526 = vmul.f32 %v6462, 0.70710677
      %v6527 = vmul.f32 %v6463, 0.70710677
      %v6528 = vmul.f32 %v6464, 0.70710677
      %v6529 = vmul.f32 %v6465, 0.70710677
      %v6530 = vmul.f32 %v6466, 0.70710677
      %v6531 = vmul.f32 %v6467, 0.70710677
      %v6532 = vmul.f32 %v6468, 0.70710677
      %v6533 = verf.f32.pop %v6501
      %v6534 = verf.f32.pop %v6502
      %v6535 = verf.f32.pop %v6503
      %v6536 = verf.f32.pop %v6504
      %v6537 = verf.f32.pop %v6505
      %v6538 = verf.f32.pop %v6506
      %v6539 = verf.f32.pop %v6507
      %v6540 = verf.f32.pop %v6508
      %v6541 = verf.f32.pop %v6509
      %v6542 = verf.f32.pop %v6510
      %v6543 = verf.f32.pop %v6511
      %v6544 = verf.f32.pop %v6512
      %v6545 = verf.f32.pop %v6513
      %v6546 = verf.f32.pop %v6514
      %v6547 = verf.f32.pop %v6515
      %v6548 = verf.f32.pop %v6516
      %v6549 = verf.f32.pop %v6517
      %v6550 = verf.f32.pop %v6518
      %v6551 = verf.f32.pop %v6519
      %v6552 = verf.f32.pop %v6520
      %v6553 = verf.f32.pop %v6521
      %v6554 = verf.f32.pop %v6522
      %v6555 = verf.f32.pop %v6523
      %v6556 = verf.f32.pop %v6524
      %v6557 = verf.f32.pop %v6525
      %v6558 = verf.f32.pop %v6526
      %v6559 = verf.f32.pop %v6527
      %v6560 = verf.f32.pop %v6528
      %v6561 = verf.f32.pop %v6529
      %v6562 = verf.f32.pop %v6530
      %v6563 = verf.f32.pop %v6531
      %v6564 = verf.f32.pop %v6532
      %v6565 = vadd.f32 %v6533, 1.0
      %v6566 = vadd.f32 %v6534, 1.0
      %v6567 = vadd.f32 %v6535, 1.0
      %v6568 = vadd.f32 %v6536, 1.0
      %v6569 = vadd.f32 %v6537, 1.0
      %v6570 = vadd.f32 %v6538, 1.0
      %v6571 = vadd.f32 %v6539, 1.0
      %v6572 = vadd.f32 %v6540, 1.0
      %v6573 = vadd.f32 %v6541, 1.0
      %v6574 = vadd.f32 %v6542, 1.0
      %v6575 = vadd.f32 %v6543, 1.0
      %v6576 = vadd.f32 %v6544, 1.0
      %v6577 = vadd.f32 %v6545, 1.0
      %v6578 = vadd.f32 %v6546, 1.0
      %v6579 = vadd.f32 %v6547, 1.0
      %v6580 = vadd.f32 %v6548, 1.0
      %v6581 = vadd.f32 %v6549, 1.0
      %v6582 = vadd.f32 %v6550, 1.0
      %v6583 = vadd.f32 %v6551, 1.0
      %v6584 = vadd.f32 %v6552, 1.0
      %v6585 = vadd.f32 %v6553, 1.0
      %v6586 = vadd.f32 %v6554, 1.0
      %v6587 = vadd.f32 %v6555, 1.0
      %v6588 = vadd.f32 %v6556, 1.0
      %v6589 = vadd.f32 %v6557, 1.0
      %v6590 = vadd.f32 %v6558, 1.0
      %v6591 = vadd.f32 %v6559, 1.0
      %v6592 = vadd.f32 %v6560, 1.0
      %v6593 = vadd.f32 %v6561, 1.0
      %v6594 = vadd.f32 %v6562, 1.0
      %v6595 = vadd.f32 %v6563, 1.0
      %v6596 = vadd.f32 %v6564, 1.0
      %v6597 = vmul.f32 %v6469, %v6565
      %v6598 = vmul.f32 %v6470, %v6566
      %v6599 = vmul.f32 %v6471, %v6567
      %v6600 = vmul.f32 %v6472, %v6568
      %v6601 = vmul.f32 %v6473, %v6569
      %v6602 = vmul.f32 %v6474, %v6570
      %v6603 = vmul.f32 %v6475, %v6571
      %v6604 = vmul.f32 %v6476, %v6572
      %v6605 = vmul.f32 %v6477, %v6573
      %v6606 = vmul.f32 %v6478, %v6574
      %v6607 = vmul.f32 %v6479, %v6575
      %v6608 = vmul.f32 %v6480, %v6576
      %v6609 = vmul.f32 %v6481, %v6577
      %v6610 = vmul.f32 %v6482, %v6578
      %v6611 = vmul.f32 %v6483, %v6579
      %v6612 = vmul.f32 %v6484, %v6580
      %v6613 = vmul.f32 %v6485, %v6581
      %v6614 = vmul.f32 %v6486, %v6582
      %v6615 = vmul.f32 %v6487, %v6583
      %v6616 = vmul.f32 %v6488, %v6584
      %v6617 = vmul.f32 %v6489, %v6585
      %v6618 = vmul.f32 %v6490, %v6586
      %v6619 = vmul.f32 %v6491, %v6587
      %v6620 = vmul.f32 %v6492, %v6588
      %v6621 = vmul.f32 %v6493, %v6589
      %v6622 = vmul.f32 %v6494, %v6590
      %v6623 = vmul.f32 %v6495, %v6591
      %v6624 = vmul.f32 %v6496, %v6592
      %v6625 = vmul.f32 %v6497, %v6593
      %v6626 = vmul.f32 %v6498, %v6594
      %v6627 = vmul.f32 %v6499, %v6595
      %v6628 = vmul.f32 %v6500, %v6596
      %v6629 = vld [vmem:[%s6] sm:$0x1]
      %v6631 = vlaneseq
      %v6632 = vshrl.u32 %v6631, 7
      %v6633 = vsub.s32 0, %v6632
      %v6634 = vrot.slane %v6629, %v6633
      %v6636 = vmul.f32 %v6597, %v6634
      %v6637 = vmul.f32 %v6598, %v6634
      %v6638 = vmul.f32 %v6599, %v6634
      %v6639 = vmul.f32 %v6600, %v6634
      %v6640 = vmul.f32 %v6601, %v6634
      %v6641 = vmul.f32 %v6602, %v6634
      %v6642 = vmul.f32 %v6603, %v6634
      %v6643 = vmul.f32 %v6604, %v6634
      %v6644 = vmul.f32 %v6605, %v6634
      %v6645 = vmul.f32 %v6606, %v6634
      %v6646 = vmul.f32 %v6607, %v6634
      %v6647 = vmul.f32 %v6608, %v6634
      %v6648 = vmul.f32 %v6609, %v6634
      %v6649 = vmul.f32 %v6610, %v6634
      %v6650 = vmul.f32 %v6611, %v6634
      %v6651 = vmul.f32 %v6612, %v6634
      %v6652 = vmul.f32 %v6613, %v6634
      %v6653 = vmul.f32 %v6614, %v6634
      %v6654 = vmul.f32 %v6615, %v6634
      %v6655 = vmul.f32 %v6616, %v6634
      %v6656 = vmul.f32 %v6617, %v6634
      %v6657 = vmul.f32 %v6618, %v6634
      %v6658 = vmul.f32 %v6619, %v6634
      %v6659 = vmul.f32 %v6620, %v6634
      %v6660 = vmul.f32 %v6621, %v6634
      %v6661 = vmul.f32 %v6622, %v6634
      %v6662 = vmul.f32 %v6623, %v6634
      %v6663 = vmul.f32 %v6624, %v6634
      %v6664 = vmul.f32 %v6625, %v6634
      %v6665 = vmul.f32 %v6626, %v6634
      %v6666 = vmul.f32 %v6627, %v6634
      %v6667 = vmul.f32 %v6628, %v6634
      %v6668 = vld [vmem:[%s7] sm:$0x1]
      %v6670 = vlaneseq
      %v6671 = vshrl.u32 %v6670, 7
      %v6672 = vsub.s32 0, %v6671
      %v6673 = vrot.slane %v6668, %v6672
      %v6675 = vadd.f32 %v6636, %v6673
      %v6676 = vadd.f32 %v6637, %v6673
      %v6677 = vadd.f32 %v6638, %v6673
      %v6678 = vadd.f32 %v6639, %v6673
      %v6679 = vadd.f32 %v6640, %v6673
      %v6680 = vadd.f32 %v6641, %v6673
      %v6681 = vadd.f32 %v6642, %v6673
      %v6682 = vadd.f32 %v6643, %v6673
      %v6683 = vadd.f32 %v6644, %v6673
      %v6684 = vadd.f32 %v6645, %v6673
      %v6685 = vadd.f32 %v6646, %v6673
      %v6686 = vadd.f32 %v6647, %v6673
      %v6687 = vadd.f32 %v6648, %v6673
      %v6688 = vadd.f32 %v6649, %v6673
      %v6689 = vadd.f32 %v6650, %v6673
      %v6690 = vadd.f32 %v6651, %v6673
      %v6691 = vadd.f32 %v6652, %v6673
      %v6692 = vadd.f32 %v6653, %v6673
      %v6693 = vadd.f32 %v6654, %v6673
      %v6694 = vadd.f32 %v6655, %v6673
      %v6695 = vadd.f32 %v6656, %v6673
      %v6696 = vadd.f32 %v6657, %v6673
      %v6697 = vadd.f32 %v6658, %v6673
      %v6698 = vadd.f32 %v6659, %v6673
      %v6699 = vadd.f32 %v6660, %v6673
      %v6700 = vadd.f32 %v6661, %v6673
      %v6701 = vadd.f32 %v6662, %v6673
      %v6702 = vadd.f32 %v6663, %v6673
      %v6703 = vadd.f32 %v6664, %v6673
      %v6704 = vadd.f32 %v6665, %v6673
      %v6705 = vadd.f32 %v6666, %v6673
      %v6706 = vadd.f32 %v6667, %v6673
      %v6707 = vld [vmem:[%s8] sm:$0xff]
      %v6708 = vld [vmem:[%s8 + $0x8] sm:$0xff]
      %v6709 = vld [vmem:[%s8 + $0x10] sm:$0xff]
      %v6710 = vld [vmem:[%s8 + $0x18] sm:$0xff]
      %v6711 = vld [vmem:[%s9] sm:$0x1]
      %v6713 = vlaneseq
      %v6714 = vshrl.u32 %v6713, 7
      %v6715 = vsub.s32 0, %v6714
      %v6716 = vrot.slane %v6711, %v6715
      %v6719 = vsel %vm1354, %v6675, 0
      %v6722 = vsel %vm1354, %v6676, 0
      %v6725 = vsel %vm1354, %v6677, 0
      %v6728 = vsel %vm1354, %v6678, 0
      %v6731 = vsel %vm1354, %v6679, 0
      %v6734 = vsel %vm1354, %v6680, 0
      %v6737 = vsel %vm1354, %v6681, 0
      %v6740 = vsel %vm1354, %v6682, 0
      %v6743 = vsel %vm1354, %v6683, 0
      %v6746 = vsel %vm1354, %v6684, 0
      %v6749 = vsel %vm1354, %v6685, 0
      %v6752 = vsel %vm1354, %v6686, 0
      %v6755 = vsel %vm1354, %v6687, 0
      %v6758 = vsel %vm1354, %v6688, 0
      %v6761 = vsel %vm1354, %v6689, 0
      %v6764 = vsel %vm1354, %v6690, 0
      %v6767 = vsel %vm1354, %v6691, 0
      %v6770 = vsel %vm1354, %v6692, 0
      %v6773 = vsel %vm1354, %v6693, 0
      %v6776 = vsel %vm1354, %v6694, 0
      %v6779 = vsel %vm1354, %v6695, 0
      %v6782 = vsel %vm1354, %v6696, 0
      %v6785 = vsel %vm1354, %v6697, 0
      %v6788 = vsel %vm1354, %v6698, 0
      %v6791 = vsel %vm1354, %v6699, 0
      %v6794 = vsel %vm1354, %v6700, 0
      %v6797 = vsel %vm1354, %v6701, 0
      %v6800 = vsel %vm1354, %v6702, 0
      %v6803 = vsel %vm1354, %v6703, 0
      %v6806 = vsel %vm1354, %v6704, 0
      %v6809 = vsel %vm1354, %v6705, 0
      %v6812 = vsel %vm1354, %v6706, 0
      %6814 = vmatprep.subr.mxu0 0.0
      %6815 = vmatpush1.msra.mxu0 %v6707
      %6816 = vmatprep.subr.mxu0 0.0
      %6817 = vmatpush1.msra.mxu0 %v6708
      %6818 = vmatprep.subr.mxu0 0.0
      %6819 = vmatpush1.msra.mxu0 %v6709
      %6820 = vmatprep.subr.mxu0 0.0
      %6821 = vmatpush1.msra.mxu0 %v6710
      %6822 = vmatprep.subr.mxu0 0.0
      %6823 = vmatpush1.msra.mxu0 0.0
      %6824 = vmatprep.subr.mxu0 0.0
      %6825 = vmatpush1.msra.mxu0 0.0
      %6826 = vmatprep.subr.mxu0 0.0
      %6827 = vmatpush1.msra.mxu0 0.0
      %6828 = vmatprep.subr.mxu0 0.0
      %6829 = vmatpush1.msra.mxu0 0.0
      %6830 = vmatprep.subr.mxu0 0.0
      %6831 = vmatpush1.msra.mxu0 0.0
      %6832 = vmatprep.subr.mxu0 0.0
      %6833 = vmatpush1.msra.mxu0 0.0
      %6834 = vmatprep.subr.mxu0 0.0
      %6835 = vmatpush1.msra.mxu0 0.0
      %6836 = vmatprep.subr.mxu0 0.0
      %6837 = vmatpush1.msra.mxu0 0.0
      %6838 = vmatprep.subr.mxu0 0.0
      %6839 = vmatpush1.msra.mxu0 0.0
      %6840 = vmatprep.subr.mxu0 0.0
      %6841 = vmatpush1.msra.mxu0 0.0
      %6842 = vmatprep.subr.mxu0 0.0
      %6843 = vmatpush1.msra.mxu0 0.0
      %6844 = vmatprep.subr.mxu0 0.0
      %6845 = vmatpush1.msra.mxu0 0.0
      %6846 = vmatprep.subr.mxu0 0.0
      %6847 = vmatpush1.msra.mxu0 0.0
      %6848 = vmatprep.subr.mxu0 0.0
      %6849 = vmatpush1.msra.mxu0 0.0
      %6850 = vmatprep.subr.mxu0 0.0
      %6851 = vmatpush1.msra.mxu0 0.0
      %6852 = vmatprep.subr.mxu0 0.0
      %6853 = vmatpush1.msra.mxu0 0.0
      %6854 = vmatprep.subr.mxu0 0.0
      %6855 = vmatpush1.msra.mxu0 0.0
      %6856 = vmatprep.subr.mxu0 0.0
      %6857 = vmatpush1.msra.mxu0 0.0
      %6858 = vmatprep.subr.mxu0 0.0
      %6859 = vmatpush1.msra.mxu0 0.0
      %6860 = vmatprep.subr.mxu0 0.0
      %6861 = vmatpush1.msra.mxu0 0.0
      %6862 = vmatprep.subr.mxu0 0.0
      %6863 = vmatpush1.msra.mxu0 0.0
      %6864 = vmatprep.subr.mxu0 0.0
      %6865 = vmatpush1.msra.mxu0 0.0
      %6866 = vmatprep.subr.mxu0 0.0
      %6867 = vmatpush1.msra.mxu0 0.0
      %6868 = vmatprep.subr.mxu0 0.0
      %6869 = vmatpush1.msra.mxu0 0.0
      %6870 = vmatprep.subr.mxu0 0.0
      %6871 = vmatpush1.msra.mxu0 0.0
      %6872 = vmatprep.subr.mxu0 0.0
      %6873 = vmatpush1.msra.mxu0 0.0
      %6874 = vmatprep.subr.mxu0 0.0
      %6875 = vmatpush1.msra.mxu0 0.0
      %6876 = vmatprep.subr.mxu0 0.0
      %6877 = vmatpush1.msra.mxu0 0.0
      %6878 = vmatprep.mubr.f32.mxu0 0.0
      %6879 = vmatmul.mubr.f32.gmra.mrb[0].mxu0 %v6719
      %v6880 = vpop.f32.mrb[0].mxu0
      %v6881 = vadd.f32 %v6716, %v6880
      %v6882 = vpop.f32.mrb[0].mxu0
      %6883 = vmatprep.mubr.f32.mxu0 0.0
      %6884 = vmatmul.mubr.f32.gmra.mrb[0].mxu0 %v6722
      %v6885 = vpop.f32.mrb[0].mxu0
      %v6886 = vadd.f32 %v6716, %v6885
      %v6887 = vpop.f32.mrb[0].mxu0
      %6888 = vmatprep.mubr.f32.mxu0 0.0
      %6889 = vmatmul.mubr.f32.gmra.mrb[0].mxu0 %v6725
      %v6890 = vpop.f32.mrb[0].mxu0
      %v6891 = vadd.f32 %v6716, %v6890
      %v6892 = vpop.f32.mrb[0].mxu0
      %6893 = vmatprep.mubr.f32.mxu0 0.0
      %6894 = vmatmul.mubr.f32.gmra.mrb[0].mxu0 %v6728
      %v6895 = vpop.f32.mrb[0].mxu0
      %v6896 = vadd.f32 %v6716, %v6895
      %v6897 = vpop.f32.mrb[0].mxu0
      %6898 = vmatprep.mubr.f32.mxu0 0.0
      %6899 = vmatmul.mubr.f32.gmra.mrb[0].mxu0 %v6731
      %v6900 = vpop.f32.mrb[0].mxu0
      %v6901 = vadd.f32 %v6716, %v6900
      %v6902 = vpop.f32.mrb[0].mxu0
      %6903 = vmatprep.mubr.f32.mxu0 0.0
      %6904 = vmatmul.mubr.f32.gmra.mrb[0].mxu0 %v6734
      %v6905 = vpop.f32.mrb[0].mxu0
      %v6906 = vadd.f32 %v6716, %v6905
      %v6907 = vpop.f32.mrb[0].mxu0
      %6908 = vmatprep.mubr.f32.mxu0 0.0
      %6909 = vmatmul.mubr.f32.gmra.mrb[0].mxu0 %v6737
      %v6910 = vpop.f32.mrb[0].mxu0
      %v6911 = vadd.f32 %v6716, %v6910
      %v6912 = vpop.f32.mrb[0].mxu0
      %6913 = vmatprep.mubr.f32.mxu0 0.0
      %6914 = vmatmul.mubr.f32.gmra.mrb[0].mxu0 %v6740
      %v6915 = vpop.f32.mrb[0].mxu0
      %v6916 = vadd.f32 %v6716, %v6915
      %v6917 = vpop.f32.mrb[0].mxu0
      %6918 = vmatprep.mubr.f32.mxu0 0.0
      %6919 = vmatmul.mubr.f32.gmra.mrb[0].mxu0 %v6743
      %v6920 = vpop.f32.mrb[0].mxu0
      %v6921 = vadd.f32 %v6716, %v6920
      %v6922 = vpop.f32.mrb[0].mxu0
      %6923 = vmatprep.mubr.f32.mxu0 0.0
      %6924 = vmatmul.mubr.f32.gmra.mrb[0].mxu0 %v6746
      %v6925 = vpop.f32.mrb[0].mxu0
      %v6926 = vadd.f32 %v6716, %v6925
      %v6927 = vpop.f32.mrb[0].mxu0
      %6928 = vmatprep.mubr.f32.mxu0 0.0
      %6929 = vmatmul.mubr.f32.gmra.mrb[0].mxu0 %v6749
      %v6930 = vpop.f32.mrb[0].mxu0
      %v6931 = vadd.f32 %v6716, %v6930
      %v6932 = vpop.f32.mrb[0].mxu0
      %6933 = vmatprep.mubr.f32.mxu0 0.0
      %6934 = vmatmul.mubr.f32.gmra.mrb[0].mxu0 %v6752
      %v6935 = vpop.f32.mrb[0].mxu0
      %v6936 = vadd.f32 %v6716, %v6935
      %v6937 = vpop.f32.mrb[0].mxu0
      %6938 = vmatprep.mubr.f32.mxu0 0.0
      %6939 = vmatmul.mubr.f32.gmra.mrb[0].mxu0 %v6755
      %v6940 = vpop.f32.mrb[0].mxu0
      %v6941 = vadd.f32 %v6716, %v6940
      %v6942 = vpop.f32.mrb[0].mxu0
      %6943 = vmatprep.mubr.f32.mxu0 0.0
      %6944 = vmatmul.mubr.f32.gmra.mrb[0].mxu0 %v6758
      %v6945 = vpop.f32.mrb[0].mxu0
      %v6946 = vadd.f32 %v6716, %v6945
      %v6947 = vpop.f32.mrb[0].mxu0
      %6948 = vmatprep.mubr.f32.mxu0 0.0
      %6949 = vmatmul.mubr.f32.gmra.mrb[0].mxu0 %v6761
      %v6950 = vpop.f32.mrb[0].mxu0
      %v6951 = vadd.f32 %v6716, %v6950
      %v6952 = vpop.f32.mrb[0].mxu0
      %6953 = vmatprep.mubr.f32.mxu0 0.0
      %6954 = vmatmul.mubr.f32.gmra.mrb[0].mxu0 %v6764
      %v6955 = vpop.f32.mrb[0].mxu0
      %v6956 = vadd.f32 %v6716, %v6955
      %v6957 = vpop.f32.mrb[0].mxu0
      %6958 = vmatprep.mubr.f32.mxu0 0.0
      %6959 = vmatmul.mubr.f32.gmra.mrb[0].mxu0 %v6767
      %v6960 = vpop.f32.mrb[0].mxu0
      %v6961 = vadd.f32 %v6716, %v6960
      %v6962 = vpop.f32.mrb[0].mxu0
      %6963 = vmatprep.mubr.f32.mxu0 0.0
      %6964 = vmatmul.mubr.f32.gmra.mrb[0].mxu0 %v6770
      %v6965 = vpop.f32.mrb[0].mxu0
      %v6966 = vadd.f32 %v6716, %v6965
      %v6967 = vpop.f32.mrb[0].mxu0
      %6968 = vmatprep.mubr.f32.mxu0 0.0
      %6969 = vmatmul.mubr.f32.gmra.mrb[0].mxu0 %v6773
      %v6970 = vpop.f32.mrb[0].mxu0
      %v6971 = vadd.f32 %v6716, %v6970
      %v6972 = vpop.f32.mrb[0].mxu0
      %6973 = vmatprep.mubr.f32.mxu0 0.0
      %6974 = vmatmul.mubr.f32.gmra.mrb[0].mxu0 %v6776
      %v6975 = vpop.f32.mrb[0].mxu0
      %v6976 = vadd.f32 %v6716, %v6975
      %v6977 = vpop.f32.mrb[0].mxu0
      %6978 = vmatprep.mubr.f32.mxu0 0.0
      %6979 = vmatmul.mubr.f32.gmra.mrb[0].mxu0 %v6779
      %v6980 = vpop.f32.mrb[0].mxu0
      %v6981 = vadd.f32 %v6716, %v6980
      %v6982 = vpop.f32.mrb[0].mxu0
      %6983 = vmatprep.mubr.f32.mxu0 0.0
      %6984 = vmatmul.mubr.f32.gmra.mrb[0].mxu0 %v6782
      %v6985 = vpop.f32.mrb[0].mxu0
      %v6986 = vadd.f32 %v6716, %v6985
      %v6987 = vpop.f32.mrb[0].mxu0
      %6988 = vmatprep.mubr.f32.mxu0 0.0
      %6989 = vmatmul.mubr.f32.gmra.mrb[0].mxu0 %v6785
      %v6990 = vpop.f32.mrb[0].mxu0
      %v6991 = vadd.f32 %v6716, %v6990
      %v6992 = vpop.f32.mrb[0].mxu0
      %6993 = vmatprep.mubr.f32.mxu0 0.0
      %6994 = vmatmul.mubr.f32.gmra.mrb[0].mxu0 %v6788
      %v6995 = vpop.f32.mrb[0].mxu0
      %v6996 = vadd.f32 %v6716, %v6995
      %v6997 = vpop.f32.mrb[0].mxu0
      %6998 = vmatprep.mubr.f32.mxu0 0.0
      %6999 = vmatmul.mubr.f32.gmra.mrb[0].mxu0 %v6791
      %v7000 = vpop.f32.mrb[0].mxu0
      %v7001 = vadd.f32 %v6716, %v7000
      %v7002 = vpop.f32.mrb[0].mxu0
      %7003 = vmatprep.mubr.f32.mxu0 0.0
      %7004 = vmatmul.mubr.f32.gmra.mrb[0].mxu0 %v6794
      %v7005 = vpop.f32.mrb[0].mxu0
      %v7006 = vadd.f32 %v6716, %v7005
      %v7007 = vpop.f32.mrb[0].mxu0
      %7008 = vmatprep.mubr.f32.mxu0 0.0
      %7009 = vmatmul.mubr.f32.gmra.mrb[0].mxu0 %v6797
      %v7010 = vpop.f32.mrb[0].mxu0
      %v7011 = vadd.f32 %v6716, %v7010
      %v7012 = vpop.f32.mrb[0].mxu0
      %7013 = vmatprep.mubr.f32.mxu0 0.0
      %7014 = vmatmul.mubr.f32.gmra.mrb[0].mxu0 %v6800
      %v7015 = vpop.f32.mrb[0].mxu0
      %v7016 = vadd.f32 %v6716, %v7015
      %v7017 = vpop.f32.mrb[0].mxu0
      %7018 = vmatprep.mubr.f32.mxu0 0.0
      %7019 = vmatmul.mubr.f32.gmra.mrb[0].mxu0 %v6803
      %v7020 = vpop.f32.mrb[0].mxu0
      %v7021 = vadd.f32 %v6716, %v7020
      %v7022 = vpop.f32.mrb[0].mxu0
      %7023 = vmatprep.mubr.f32.mxu0 0.0
      %7024 = vmatmul.mubr.f32.gmra.mrb[0].mxu0 %v6806
      %v7025 = vpop.f32.mrb[0].mxu0
      %v7026 = vadd.f32 %v6716, %v7025
      %v7027 = vpop.f32.mrb[0].mxu0
      %7028 = vmatprep.mubr.f32.mxu0 0.0
      %7029 = vmatmul.mubr.f32.gmra.mrb[0].mxu0 %v6809
      %v7030 = vpop.f32.mrb[0].mxu0
      %v7031 = vadd.f32 %v6716, %v7030
      %v7032 = vpop.f32.mrb[0].mxu0
      %7033 = vmatprep.mubr.f32.mxu0 0.0
      %7034 = vmatmul.mubr.f32.gmra.mrb[0].mxu0 %v6812
      %v7035 = vpop.f32.mrb[0].mxu0
      %v7036 = vadd.f32 %v6716, %v7035
      %v7037 = vpop.f32.mrb[0].mxu0
      %7038 = vdwg.mxu0
      %7039 = vst.msk [vmem:[%s383] sm:$0xff] %vm433, %v6881
      %7040 = vst.msk [vmem:[%s383 + $0x8] sm:$0xff] %vm433, %v6886
      %7041 = vst.msk [vmem:[%s383 + $0x10] sm:$0xff] %vm433, %v6891
      %7042 = vst.msk [vmem:[%s383 + $0x18] sm:$0xff] %vm433, %v6896
      %7043 = vst.msk [vmem:[%s383 + $0x20] sm:$0xff] %vm433, %v6901
      %7044 = vst.msk [vmem:[%s383 + $0x28] sm:$0xff] %vm433, %v6906
      %7045 = vst.msk [vmem:[%s383 + $0x30] sm:$0xff] %vm433, %v6911
      %7046 = vst.msk [vmem:[%s383 + $0x38] sm:$0xff] %vm433, %v6916
      %7047 = vst.msk [vmem:[%s383 + $0x40] sm:$0xff] %vm433, %v6921
      %7048 = vst.msk [vmem:[%s383 + $0x48] sm:$0xff] %vm433, %v6926
      %7049 = vst.msk [vmem:[%s383 + $0x50] sm:$0xff] %vm433, %v6931
      %7050 = vst.msk [vmem:[%s383 + $0x58] sm:$0xff] %vm433, %v6936
      %7051 = vst.msk [vmem:[%s383 + $0x60] sm:$0xff] %vm433, %v6941
      %7052 = vst.msk [vmem:[%s383 + $0x68] sm:$0xff] %vm433, %v6946
      %7053 = vst.msk [vmem:[%s383 + $0x70] sm:$0xff] %vm433, %v6951
      %7054 = vst.msk [vmem:[%s383 + $0x78] sm:$0xff] %vm433, %v6956
      %7055 = vst.msk [vmem:[%s383 + $0x80] sm:$0xff] %vm433, %v6961
      %7056 = vst.msk [vmem:[%s383 + $0x88] sm:$0xff] %vm433, %v6966
      %7057 = vst.msk [vmem:[%s383 + $0x90] sm:$0xff] %vm433, %v6971
      %7058 = vst.msk [vmem:[%s383 + $0x98] sm:$0xff] %vm433, %v6976
      %7059 = vst.msk [vmem:[%s383 + $0xa0] sm:$0xff] %vm433, %v6981
      %7060 = vst.msk [vmem:[%s383 + $0xa8] sm:$0xff] %vm433, %v6986
      %7061 = vst.msk [vmem:[%s383 + $0xb0] sm:$0xff] %vm433, %v6991
      %7062 = vst.msk [vmem:[%s383 + $0xb8] sm:$0xff] %vm433, %v6996
      %7063 = vst.msk [vmem:[%s383 + $0xc0] sm:$0xff] %vm433, %v7001
      %7064 = vst.msk [vmem:[%s383 + $0xc8] sm:$0xff] %vm433, %v7006
      %7065 = vst.msk [vmem:[%s383 + $0xd0] sm:$0xff] %vm433, %v7011
      %7066 = vst.msk [vmem:[%s383 + $0xd8] sm:$0xff] %vm433, %v7016
      %7067 = vst.msk [vmem:[%s383 + $0xe0] sm:$0xff] %vm433, %v7021
      %7068 = vst.msk [vmem:[%s383 + $0xe8] sm:$0xff] %vm433, %v7026
      %7069 = vst.msk [vmem:[%s383 + $0xf0] sm:$0xff] %vm433, %v7031
      %7070 = vst.msk [vmem:[%s383 + $0xf8] sm:$0xff] %vm433, %v7036
      %s7071 = smul.u32 16, %s26
      %p7072 = scmp.lt.s32.totalorder %s25, 1
      %s7073 = scalar_select %p7072, %s25, 1
      %p7074 = scmp.lt.s32.totalorder %s7071, 15
      %s7075 = scalar_select %p7074, %s7071, 15
      %s7076 = smul.addr %s7075, 2
      %s7077 = smul.addr %s7073, 32
      %s7078 = sadd.s32 %s7076, %s7077
      %s7079 = smul.addr %s7078, 8
      %s7080 = scalar_lea.vmem %s10, %s7079
      // Predicated region
      $region61: #{tpu_custom_call.1} parent=59 // pred_check
        %p7081 = pneg %p268
      $region62: #{tpu_custom_call.1} parent=59 // pred_check_branch
        %7083 = sbr.rel (%p7081) target = $region64
      $region63: #{tpu_custom_call.1} parent=59 // pred_region
        %s7084 = smul.u32 16, %s26
      $region64: #{tpu_custom_call.1} parent=59 // pred_fallthru
        _
    $region60: #{tpu_custom_call.1} parent=5 // pred_fallthru
      _
    %p7085 = scmp.le.s32.totalorder 2, %s16
    // Predicated region
    $region65: #{tpu_custom_call.1} parent=5 // pred_check
      %p7086 = pneg %p7085
    $region66: #{tpu_custom_call.1} parent=5 // pred_check_branch
      %7088 = sbr.rel (%p7086) target = $region68
    $region67: #{tpu_custom_call.1} parent=5 // pred_region
      %s7089 = ssub.s32 %s16, 2
      // Predicated region
      $region69: #{tpu_custom_call.1} parent=67 // pred_check
        %p7090 = pneg %p274
      $region70: #{tpu_custom_call.1} parent=67 // pred_check_branch
        %7092 = sbr.rel (%p7090) target = $region72
      $region71: #{tpu_custom_call.1} parent=67 // pred_region
        %s7093 = smul.u32 16, %s28
        %p7094 = scmp.lt.s32.totalorder %s27, 1
        %s7095 = scalar_select %p7094, %s27, 1
        %p7096 = scmp.lt.s32.totalorder %s7093, 15
        %s7097 = scalar_select %p7096, %s7093, 15
        %s7098 = smul.addr %s7097, 2
        %s7099 = smul.addr %s7095, 32
        %s7100 = sadd.s32 %s7098, %s7099
        %s7101 = smul.addr %s7100, 8
        %s7102 = scalar_lea.vmem %s10, %s7101
      $region72: #{tpu_custom_call.1} parent=67 // pred_fallthru
        _
    $region68: #{tpu_custom_call.1} parent=5 // pred_fallthru
      _
  $region6: #{tpu_custom_call.1} parent=0 // loop_footer
    %s20 = sadd.s32 1, %s16
  $region7: #{tpu_custom_call.1} parent=0 // loop_footer_branch
    %15 = sbr.rel target = $region3
  $region8: #{tpu_custom_call.1} parent=0 // loop_exit
    _

</llo_original>
